<compile_context>
chip_gen: v7x
topology: tpu7x:2x2x1
jax: 0.10.0
libtpu: 0.0.40
codegen_flags: <defaults>
</compile_context>

<pallas_src>
import jax
import jax.numpy as jnp
import numpy as np
from jax.experimental import pallas as pl
from jax.experimental.pallas import tpu as pltpu


def _round_up(x, m):
    return ((x + m - 1) // m) * m


# ---------------------------------------------------------------------------
# Pallas kernel: bidirectional LSTM over time + linear head (one batch tile).
# ---------------------------------------------------------------------------
def bilstm_ctx_kernel(x_ref,        # (T, TB, Inp)  f32  context embeddings
                      wih_f_ref,    # (Inp, 4Hp)    bf16 forward  W_ih
                      whh_f_ref,    # (Hp, 4Hp)     bf16 forward  W_hh
                      b_f_ref,      # (1, 4Hp)      f32  forward  b_ih + b_hh
                      wih_b_ref,    # (Inp, 4Hp)    bf16 backward W_ih
                      whh_b_ref,    # (Hp, 4Hp)     bf16 backward W_hh
                      b_b_ref,      # (1, 4Hp)      f32  backward bias
                      wlin_ref,     # (2Hp, Cp)     bf16 linear weight (fwd rows | bwd rows)
                      blin_ref,     # (1, Cp)       f32  linear bias
                      out_ref,      # (T, TB, Cp)   f32  logits (lane-dense)
                      gin_f_scr,    # (T, TB, 4Hp)  f32  precomputed input gates, fwd
                      gin_b_scr,    # (T, TB, 4Hp)  f32  precomputed input gates, bwd
                      hs_scr):      # (T, TB, 2Hp)  f32  hidden states (fwd|bwd lanes)
    T, TB, Inp = x_ref.shape
    Hp = whh_f_ref.shape[0]
    G = 4 * Hp

    # --- 1) Hoisted input projection: one bf16 MXU matmul per direction over
    #        all timesteps (bias folded), written to VMEM scratch so the
    #        serial recurrence only reads one (TB, 4Hp) tile per step.
    x2d = x_ref[...].reshape(T * TB, Inp).astype(jnp.bfloat16)
    # TODO(synk): feed x already in bf16 from HBM to also halve its DMA.
    gin_f_scr[...] = (
        jnp.dot(x2d, wih_f_ref[...], preferred_element_type=jnp.float32)
        + b_f_ref[...]).reshape(T, TB, G)
    gin_b_scr[...] = (
        jnp.dot(x2d, wih_b_ref[...], preferred_element_type=jnp.float32)
        + b_b_ref[...]).reshape(T, TB, G)

    def sigmoid(v):
        # One EUP push (tanh) instead of exp + reciprocal; same function.
        return 0.5 * jnp.tanh(0.5 * v) + 0.5

    def gate_step(pre, c_prev):
        # PyTorch LSTM gate order i, f, g, o -- each a 128-aligned lane slice.
        i_g = sigmoid(pre[:, 0 * Hp:1 * Hp])
        f_g = sigmoid(pre[:, 1 * Hp:2 * Hp])
        g_g = jnp.tanh(pre[:, 2 * Hp:3 * Hp])
        o_g = sigmoid(pre[:, 3 * Hp:4 * Hp])
        c_new = f_g * c_prev + i_g * g_g
        h_new = o_g * jnp.tanh(c_new)
        return h_new, c_new

    # --- 2) Fused fwd/bwd recurrence, fully unrolled (short static T).
    #        MXU operands bf16; gate math and c stay f32.  gin tiles and the
    #        recurrent weights are read from VMEM per step (bounded vregs).
    # TODO(synk): pin whh_f/whh_b via pltpu.matmul_push_rhs if the compiler
    # re-pushes the same RHS each step.
    zeros = jnp.zeros((TB, Hp), jnp.float32)
    h_f, c_f, h_b, c_b = zeros, zeros, zeros, zeros
    for s in range(T):          # static Python unroll: T small & static
        tf, tb = s, T - 1 - s
        pre_f = gin_f_scr[tf] + jnp.dot(
            h_f.astype(jnp.bfloat16), whh_f_ref[...],
            preferred_element_type=jnp.float32)
        pre_b = gin_b_scr[tb] + jnp.dot(
            h_b.astype(jnp.bfloat16), whh_b_ref[...],
            preferred_element_type=jnp.float32)
        h_f, c_f = gate_step(pre_f, c_f)
        h_b, c_b = gate_step(pre_b, c_b)
        hs_scr[tf, :, 0:Hp] = h_f            # fwd half: lanes [0, Hp)
        hs_scr[tb, :, Hp:2 * Hp] = h_b       # bwd half: lanes [Hp, 2Hp)

    # --- 3) Head: single (T*TB, 2Hp) x (2Hp, Cp) bf16 MXU matmul; K = 2Hp
    #        exactly fills the 256-wide contraction on v6e/v7x.
    h2d = hs_scr[...].reshape(T * TB, 2 * Hp).astype(jnp.bfloat16)
    logits = (jnp.dot(h2d, wlin_ref[...], preferred_element_type=jnp.float32)
              + blin_ref[...])
    out_ref[...] = logits.reshape(T, TB, -1).astype(out_ref.dtype)


# ---------------------------------------------------------------------------
# Parameter padding: In -> Inp, H -> Hp, C -> Cp (mults of 128).  Exact.
# ---------------------------------------------------------------------------
def prepare_kernel_params(params, H, C):
    In = params['wih_f'].shape[0]
    Inp = _round_up(In, 128)
    Hp = _round_up(H, 128)
    Cp = _round_up(C, 128)

    def pad_gate_cols(w):                       # (..., 4H) -> (..., 4Hp)
        lead = w.shape[:-1]
        w4 = jnp.reshape(w, lead + (4, H))
        w4 = jnp.pad(w4, [(0, 0)] * len(lead) + [(0, 0), (0, Hp - H)])
        return jnp.reshape(w4, lead + (4 * Hp,))

    def pad_wih(w):                             # (In, 4H) -> (Inp, 4Hp) bf16
        w = jnp.pad(w, ((0, Inp - In), (0, 0)))
        return pad_gate_cols(w).astype(jnp.bfloat16)

    def pad_whh(w):                             # (H, 4H) -> (Hp, 4Hp) bf16
        w = jnp.pad(w, ((0, Hp - H), (0, 0)))
        return pad_gate_cols(w).astype(jnp.bfloat16)

    # linear: rows [0:H] act on the fwd hidden, rows [H:2H] on the bwd hidden.
    wlin = params['wlin']                       # (2H, C)
    wlin_f = jnp.pad(wlin[:H], ((0, Hp - H), (0, Cp - C)))
    wlin_b = jnp.pad(wlin[H:], ((0, Hp - H), (0, Cp - C)))
    wlin_full = jnp.concatenate([wlin_f, wlin_b], axis=0).astype(jnp.bfloat16)
    blin = jnp.pad(params['blin'], ((0, 0), (0, Cp - C)))

    return dict(
        wih_f=pad_wih(params['wih_f']), whh_f=pad_whh(params['whh_f']),
        b_f=pad_gate_cols(params['b_f']),
        wih_b=pad_wih(params['wih_b']), whh_b=pad_whh(params['whh_b']),
        b_b=pad_gate_cols(params['b_b']),
        wlin=wlin_full, blin=blin)


def _vmem_budget_bytes(T, TB, Inp, Hp, Cp):
    f32, bf16 = 4, 2
    io_blocks = (T * TB * Inp * f32                            # x
                 + 2 * (Inp * 4 * Hp + Hp * 4 * Hp) * bf16     # W_ih/W_hh both dirs
                 + 2 * 4 * Hp * f32                            # biases
                 + 2 * Hp * Cp * bf16 + Cp * f32               # head weights/bias
                 + T * TB * Cp * f32)                          # out
    scratch = (2 * T * TB * 4 * Hp + T * TB * 2 * Hp) * f32    # gin_f, gin_b, hs
    # Pallas double-buffers every BlockSpec'd operand.
    return 2 * io_blocks + scratch


def run_bilstm_kernel(x_tbf, kp, B, C):
    """x_tbf: (T, B, In) time-major f32.  kp: padded params.  -> (T, B, C)."""
    T, _, In = x_tbf.shape
    Inp = kp['wih_f'].shape[0]
    Hp = kp['whh_f'].shape[0]
    Cp = kp['wlin'].shape[1]

    B_pad = _round_up(max(B, 8), 8)
    if B_pad != B or Inp != In:
        x_tbf = jnp.pad(x_tbf, ((0, 0), (0, B_pad - B), (0, Inp - In)))

    # Tile selection: the grid is a SEQUENTIAL loop on one TensorCore, so a
    # batch split only pays off when each tile still fills the MXU M dim
    # (>=128 rows) and the tiles can shard across TensorCores (v7x megacore).
    # TODO(synk): also gate on pltpu.get_tpu_info() TensorCore count.
    if B_pad >= 256 and (B_pad // 2) % 8 == 0:
        TB = B_pad // 2
    else:
        TB = B_pad
    n_tiles = B_pad // TB

    vmem_limit = int(max(1.5 * _vmem_budget_bytes(T, TB, Inp, Hp, Cp) + (8 << 20),
                         32 << 20))
    # TODO(synk): for long T / big B on v7x (64 MiB VMEM) add a T-chunk grid
    # axis carrying h/c in persistent scratch instead of full-T residency.

    full2d = lambda b: (0, 0)
    grid_spec = pltpu.PrefetchScalarGridSpec(
        num_scalar_prefetch=0,
        grid=(n_tiles,),
        in_specs=[
            pl.BlockSpec((T, TB, Inp), lambda b: (0, b, 0)),
            pl.BlockSpec(kp['wih_f'].shape, full2d),
            pl.BlockSpec(kp['whh_f'].shape, full2d),
            pl.BlockSpec(kp['b_f'].shape, full2d),
            pl.BlockSpec(kp['wih_b'].shape, full2d),
            pl.BlockSpec(kp['whh_b'].shape, full2d),
            pl.BlockSpec(kp['b_b'].shape, full2d),
            pl.BlockSpec(kp['wlin'].shape, full2d),
            pl.BlockSpec(kp['blin'].shape, full2d),
        ],
        out_specs=pl.BlockSpec((T, TB, Cp), lambda b: (0, b, 0)),
        scratch_shapes=[
            pltpu.VMEM((T, TB, 4 * Hp), jnp.float32),   # gin_f
            pltpu.VMEM((T, TB, 4 * Hp), jnp.float32),   # gin_b
            pltpu.VMEM((T, TB, 2 * Hp), jnp.float32),   # hidden states fwd|bwd
        ],
    )
    out = pl.pallas_call(
        bilstm_ctx_kernel,
        out_shape=jax.ShapeDtypeStruct((T, B_pad, Cp), jnp.float32),
        grid_spec=grid_spec,
        compiler_params=pltpu.CompilerParams(
            dimension_semantics=("parallel",),
            vmem_limit_bytes=vmem_limit),
    )(x_tbf,
      kp['wih_f'], kp['whh_f'], kp['b_f'],
      kp['wih_b'], kp['whh_b'], kp['b_b'],
      kp['wlin'], kp['blin'])
    return out[:, :B, :C]


# ---------------------------------------------------------------------------
# Glue: embedding lookup + context gather (the context_embed method) + head.
# ---------------------------------------------------------------------------
def context_embed(emb, context_indices):
    """emb: (B, T, D); context_indices: (B, T, WS) with value T meaning 'pad'."""
    B, T, D = emb.shape
    # append a zero pad row per batch element (mirrors torch.cat((embed, pad), 0))
    emb_pad = jnp.concatenate([emb, jnp.zeros((B, 1, D), emb.dtype)], axis=1)
    ctx = emb_pad[jnp.arange(B)[:, None, None], context_indices]   # (B, T, WS, D)
    return ctx.reshape(B, T, -1)                                   # (B, T, WS*D)


def bilstm_context_forward(params, word, context_indices, desorted_indices, C):
    emb = params['embed'][word]                       # (B, T, D)
    x = context_embed(emb, context_indices)           # (B, T, WS*D)
    # dropout_embed: identity at inference
    B = x.shape[0]
    x_tbf = jnp.transpose(x, (1, 0, 2)).astype(jnp.float32)   # (T, B, In)
    H = params['whh_f'].shape[0]
    kp = prepare_kernel_params(params, H, C)
    out = run_bilstm_kernel(x_tbf, kp, B, C)          # (T, B, C)
    logit = jnp.transpose(out, (1, 0, 2))             # (B, T, C)
    # dropout: identity at inference
    logit = logit[desorted_indices]
    return logit


# ---------------------------------------------------------------------------
# Pure-JAX f32 reference (for correctness check).
# ---------------------------------------------------------------------------
def ref_forward(params, word, context_indices, desorted_indices):
    emb = params['embed'][word]
    x = context_embed(emb, context_indices)           # (B, T, In)
    B, T, In = x.shape
    H = params['whh_f'].shape[0]

    def lstm_dir(xs, wih, whh, b):
        h = jnp.zeros((B, H), jnp.float32)
        c = jnp.zeros((B, H), jnp.float32)
        hs = []
        for t in range(T):
            gates = xs[:, t, :] @ wih + h @ whh + b
            i_g = jax.nn.sigmoid(gates[:, :H])
            f_g = jax.nn.sigmoid(gates[:, H:2 * H])
            g_g = jnp.tanh(gates[:, 2 * H:3 * H])
            o_g = jax.nn.sigmoid(gates[:, 3 * H:])
            c = f_g * c + i_g * g_g
            h = o_g * jnp.tanh(c)
            hs.append(h)
        return jnp.stack(hs, axis=1)                  # (B, T, H)

    hf = lstm_dir(x, params['wih_f'], params['whh_f'], params['b_f'])
    hb = lstm_dir(x[:, ::-1], params['wih_b'], params['whh_b'], params['b_b'])[:, ::-1]
    hs = jnp.concatenate([hf, hb], axis=-1)           # (B, T, 2H)
    logit = hs @ params['wlin'] + params['blin']
    return logit[desorted_indices]


# ---------------------------------------------------------------------------
# Deterministic parameter / input construction.
# ---------------------------------------------------------------------------
def make_params(key, V, D, WS, H, C, padding_id):
    In = D * WS
    keys = jax.random.split(key, 10)
    embed = 0.1 * jax.random.normal(keys[0], (V, D), jnp.float32)
    embed = embed.at[padding_id].set(0.0)             # padding_idx row is zero

    def lstm_w(kx, kh, kb):
        wih = 0.1 * jax.random.normal(kx, (In, 4 * H), jnp.float32)
        whh = 0.1 * jax.random.normal(kh, (H, 4 * H), jnp.float32)
        b = 0.1 * jax.random.uniform(kb, (1, 4 * H), jnp.float32, -1.0, 1.0)
        return wih, whh, b

    wih_f, whh_f, b_f = lstm_w(keys[1], keys[2], keys[3])
    wih_b, whh_b, b_b = lstm_w(keys[4], keys[5], keys[6])

    # linear: xavier-ish weight, uniform bias in +-sqrt(6/(H+1))
    lim_w = float(np.sqrt(6.0 / (2 * H + C)))
    wlin = jax.random.uniform(keys[7], (2 * H, C), jnp.float32, -lim_w, lim_w)
    lim_b = float(np.sqrt(6.0 / (H + 1)))
    blin = jax.random.uniform(keys[8], (1, C), jnp.float32, -lim_b, lim_b)

    return dict(embed=embed, wih_f=wih_f, whh_f=whh_f, b_f=b_f,
                wih_b=wih_b, whh_b=whh_b, b_b=b_b, wlin=wlin, blin=blin)


def make_context_indices(B, T, WS):
    """Window of size WS centered at each position; out-of-range -> T (pad row)."""
    half = WS // 2
    idx = np.zeros((B, T, WS), dtype=np.int32)
    for t in range(T):
        for w in range(WS):
            p = t + (w - half)
            idx[:, t, w] = p if 0 <= p < T else T
    return jnp.asarray(idx)


if __name__ == "__main__":
    # small shapes consistent with the module
    B, T = 2, 8          # batch, sequence length
    V, D = 50, 16        # vocab, embed dim
    WS = 5               # windows_size (== cat_size)
    H = 32               # lstm_hiddens
    C = 5                # class_num
    padding_id = 0

    key = jax.random.PRNGKey(0)
    k_par, k_word = jax.random.split(key)

    params = make_params(k_par, V, D, WS, H, C, padding_id)
    word = jax.random.randint(k_word, (B, T), 1, V, dtype=jnp.int32)
    context_indices = make_context_indices(B, T, WS)
    desorted_indices = jnp.arange(B, dtype=jnp.int32)   # identity (already sorted)

    logit = bilstm_context_forward(params, word, context_indices,
                                   desorted_indices, C)
    logit = jax.block_until_ready(logit)

    ref = jax.block_until_ready(
        ref_forward(params, word, context_indices, desorted_indices))

    assert logit.shape == (B, T, C), logit.shape
    # bf16 MXU operands (f32 accumulation / gate math) vs pure-f32 reference.
    np.testing.assert_allclose(np.asarray(logit), np.asarray(ref),
                               rtol=2e-2, atol=2e-2)
    print("KERNEL_OK")
</pallas_src>

<mosaic_0001>
module attributes {stable_mosaic.version = 11 : i64} {
  func.func @bilstm_ctx_kernel(%arg0: i32, %arg1: memref<8x8x128xf32, #tpu.memory_space<vmem>>, %arg2: memref<128x512xbf16, #tpu.memory_space<vmem>>, %arg3: memref<128x512xbf16, #tpu.memory_space<vmem>>, %arg4: memref<1x512xf32, #tpu.memory_space<vmem>>, %arg5: memref<128x512xbf16, #tpu.memory_space<vmem>>, %arg6: memref<128x512xbf16, #tpu.memory_space<vmem>>, %arg7: memref<1x512xf32, #tpu.memory_space<vmem>>, %arg8: memref<256x128xbf16, #tpu.memory_space<vmem>>, %arg9: memref<1x128xf32, #tpu.memory_space<vmem>>, %arg10: memref<8x8x128xf32, #tpu.memory_space<vmem>>, %arg11: memref<8x8x512xf32, #tpu.memory_space<vmem>>, %arg12: memref<8x8x512xf32, #tpu.memory_space<vmem>>, %arg13: memref<8x8x256xf32, #tpu.memory_space<vmem>>) attributes {dimension_semantics = [#tpu.dimension_semantics<parallel>], iteration_bounds = array<i64: 1>, scalar_prefetch = 0 : i64, scratch_operands = 3 : i64, tpu.core_type = #tpu.core_type<tc>, window_params = [{transform_indices = @transform_0, window_bounds = array<i64: 8, 8, 128>}, {pipeline_mode = #tpu.pipeline_mode<synchronous>, transform_indices = @transform_1, window_bounds = array<i64: 128, 512>}, {pipeline_mode = #tpu.pipeline_mode<synchronous>, transform_indices = @transform_2, window_bounds = array<i64: 128, 512>}, {pipeline_mode = #tpu.pipeline_mode<synchronous>, transform_indices = @transform_3, window_bounds = array<i64: 1, 512>}, {pipeline_mode = #tpu.pipeline_mode<synchronous>, transform_indices = @transform_4, window_bounds = array<i64: 128, 512>}, {pipeline_mode = #tpu.pipeline_mode<synchronous>, transform_indices = @transform_5, window_bounds = array<i64: 128, 512>}, {pipeline_mode = #tpu.pipeline_mode<synchronous>, transform_indices = @transform_6, window_bounds = array<i64: 1, 512>}, {pipeline_mode = #tpu.pipeline_mode<synchronous>, transform_indices = @transform_7, window_bounds = array<i64: 256, 128>}, {pipeline_mode = #tpu.pipeline_mode<synchronous>, transform_indices = @transform_8, window_bounds = array<i64: 1, 128>}, {transform_indices = @transform_9, window_bounds = array<i64: 8, 8, 128>}]} {
    %c0 = arith.constant 0 : index
    %c0_0 = arith.constant 0 : index
    %c0_1 = arith.constant 0 : index
    %0 = vector.load %arg1[%c0, %c0_0, %c0_1] : memref<8x8x128xf32, #tpu.memory_space<vmem>>, vector<8x8x128xf32>
    %1 = vector.shape_cast %0 : vector<8x8x128xf32> to vector<64x128xf32>
    %2 = arith.truncf %1 : vector<64x128xf32> to vector<64x128xbf16>
    %c0_2 = arith.constant 0 : index
    %c0_3 = arith.constant 0 : index
    %3 = vector.load %arg2[%c0_2, %c0_3] : memref<128x512xbf16, #tpu.memory_space<vmem>>, vector<128x512xbf16>
    %cst = arith.constant dense<0.000000e+00> : vector<64x512xf32>
    %4 = tpu.matmul %2, %3, %cst {dimension_numbers = #tpu.dot_dimension_numbers<[1], [0], [0], [1], [0, 0, 1, 1], [], []>} : vector<64x128xbf16>, vector<128x512xbf16>, vector<64x512xf32> -> vector<64x512xf32>
    %c0_4 = arith.constant 0 : index
    %c0_5 = arith.constant 0 : index
    %5 = vector.load %arg4[%c0_4, %c0_5] : memref<1x512xf32, #tpu.memory_space<vmem>>, vector<1x512xf32>
    %6 = vector.broadcast %5 : vector<1x512xf32> to vector<64x512xf32>
    %7 = arith.addf %4, %6 : vector<64x512xf32>
    %8 = vector.shape_cast %7 : vector<64x512xf32> to vector<8x8x512xf32>
    %c0_6 = arith.constant 0 : index
    %c0_7 = arith.constant 0 : index
    %c0_8 = arith.constant 0 : index
    %9 = vector.load %arg11[%c0_6, %c0_7, %c0_8] : memref<8x8x512xf32, #tpu.memory_space<vmem>>, vector<8x8x512xf32>
    tpu.vector_store %arg11[%c0_6, %c0_7, %c0_8], %8 {strides = array<i32>} : memref<8x8x512xf32, #tpu.memory_space<vmem>>, vector<8x8x512xf32>,
    %c0_9 = arith.constant 0 : index
    %c0_10 = arith.constant 0 : index
    %10 = vector.load %arg5[%c0_9, %c0_10] : memref<128x512xbf16, #tpu.memory_space<vmem>>, vector<128x512xbf16>
    %cst_11 = arith.constant dense<0.000000e+00> : vector<64x512xf32>
    %11 = tpu.matmul %2, %10, %cst_11 {dimension_numbers = #tpu.dot_dimension_numbers<[1], [0], [0], [1], [0, 0, 1, 1], [], []>} : vector<64x128xbf16>, vector<128x512xbf16>, vector<64x512xf32> -> vector<64x512xf32>
    %c0_12 = arith.constant 0 : index
    %c0_13 = arith.constant 0 : index
    %12 = vector.load %arg7[%c0_12, %c0_13] : memref<1x512xf32, #tpu.memory_space<vmem>>, vector<1x512xf32>
    %13 = vector.broadcast %12 : vector<1x512xf32> to vector<64x512xf32>
    %14 = arith.addf %11, %13 : vector<64x512xf32>
    %15 = vector.shape_cast %14 : vector<64x512xf32> to vector<8x8x512xf32>
    %c0_14 = arith.constant 0 : index
    %c0_15 = arith.constant 0 : index
    %c0_16 = arith.constant 0 : index
    %16 = vector.load %arg12[%c0_14, %c0_15, %c0_16] : memref<8x8x512xf32, #tpu.memory_space<vmem>>, vector<8x8x512xf32>
    tpu.vector_store %arg12[%c0_14, %c0_15, %c0_16], %15 {strides = array<i32>} : memref<8x8x512xf32, #tpu.memory_space<vmem>>, vector<8x8x512xf32>,
    %cst_17 = arith.constant 0.000000e+00 : f32
    %17 = vector.broadcast %cst_17 : f32 to vector<8x128xf32>
    %c0_18 = arith.constant 0 : index
    %c0_19 = arith.constant 0 : index
    %c0_20 = arith.constant 0 : index
    %18 = vector.load %arg11[%c0_18, %c0_19, %c0_20] : memref<8x8x512xf32, #tpu.memory_space<vmem>>, vector<1x8x512xf32>
    %19 = vector.shape_cast %18 : vector<1x8x512xf32> to vector<8x512xf32>
    %20 = arith.truncf %17 : vector<8x128xf32> to vector<8x128xbf16>
    %c0_21 = arith.constant 0 : index
    %c0_22 = arith.constant 0 : index
    %21 = vector.load %arg3[%c0_21, %c0_22] : memref<128x512xbf16, #tpu.memory_space<vmem>>, vector<128x512xbf16>
    %cst_23 = arith.constant dense<0.000000e+00> : vector<8x512xf32>
    %22 = tpu.matmul %20, %21, %cst_23 {dimension_numbers = #tpu.dot_dimension_numbers<[1], [0], [0], [1], [0, 0, 1, 1], [], []>} : vector<8x128xbf16>, vector<128x512xbf16>, vector<8x512xf32> -> vector<8x512xf32>
    %23 = arith.addf %19, %22 : vector<8x512xf32>
    %c7 = arith.constant 7 : index
    %c0_24 = arith.constant 0 : index
    %c0_25 = arith.constant 0 : index
    %24 = vector.load %arg12[%c7, %c0_24, %c0_25] : memref<8x8x512xf32, #tpu.memory_space<vmem>>, vector<1x8x512xf32>
    %25 = vector.shape_cast %24 : vector<1x8x512xf32> to vector<8x512xf32>
    %26 = arith.truncf %17 : vector<8x128xf32> to vector<8x128xbf16>
    %c0_26 = arith.constant 0 : index
    %c0_27 = arith.constant 0 : index
    %27 = vector.load %arg6[%c0_26, %c0_27] : memref<128x512xbf16, #tpu.memory_space<vmem>>, vector<128x512xbf16>
    %cst_28 = arith.constant dense<0.000000e+00> : vector<8x512xf32>
    %28 = tpu.matmul %26, %27, %cst_28 {dimension_numbers = #tpu.dot_dimension_numbers<[1], [0], [0], [1], [0, 0, 1, 1], [], []>} : vector<8x128xbf16>, vector<128x512xbf16>, vector<8x512xf32> -> vector<8x512xf32>
    %29 = arith.addf %25, %28 : vector<8x512xf32>
    %30 = vector.extract_strided_slice %23 {offsets = [0, 0], sizes = [8, 128], strides = [1, 1]} : vector<8x512xf32> to vector<8x128xf32>
    %cst_29 = arith.constant 5.000000e-01 : f32
    %31 = vector.broadcast %cst_29 : f32 to vector<8x128xf32>
    %32 = arith.mulf %31, %30 : vector<8x128xf32>
    %33 = math.tanh %32 : vector<8x128xf32>
    %cst_30 = arith.constant 5.000000e-01 : f32
    %34 = vector.broadcast %cst_30 : f32 to vector<8x128xf32>
    %35 = arith.mulf %34, %33 : vector<8x128xf32>
    %cst_31 = arith.constant 5.000000e-01 : f32
    %36 = vector.broadcast %cst_31 : f32 to vector<8x128xf32>
    %37 = arith.addf %35, %36 : vector<8x128xf32>
    %38 = vector.extract_strided_slice %23 {offsets = [0, 128], sizes = [8, 128], strides = [1, 1]} : vector<8x512xf32> to vector<8x128xf32>
    %cst_32 = arith.constant 5.000000e-01 : f32
    %39 = vector.broadcast %cst_32 : f32 to vector<8x128xf32>
    %40 = arith.mulf %39, %38 : vector<8x128xf32>
    %41 = math.tanh %40 : vector<8x128xf32>
    %cst_33 = arith.constant 5.000000e-01 : f32
    %42 = vector.broadcast %cst_33 : f32 to vector<8x128xf32>
    %43 = arith.mulf %42, %41 : vector<8x128xf32>
    %cst_34 = arith.constant 5.000000e-01 : f32
    %44 = vector.broadcast %cst_34 : f32 to vector<8x128xf32>
    %45 = arith.addf %43, %44 : vector<8x128xf32>
    %46 = vector.extract_strided_slice %23 {offsets = [0, 256], sizes = [8, 128], strides = [1, 1]} : vector<8x512xf32> to vector<8x128xf32>
    %47 = math.tanh %46 : vector<8x128xf32>
    %48 = vector.extract_strided_slice %23 {offsets = [0, 384], sizes = [8, 128], strides = [1, 1]} : vector<8x512xf32> to vector<8x128xf32>
    %cst_35 = arith.constant 5.000000e-01 : f32
    %49 = vector.broadcast %cst_35 : f32 to vector<8x128xf32>
    %50 = arith.mulf %49, %48 : vector<8x128xf32>
    %51 = math.tanh %50 : vector<8x128xf32>
    %cst_36 = arith.constant 5.000000e-01 : f32
    %52 = vector.broadcast %cst_36 : f32 to vector<8x128xf32>
    %53 = arith.mulf %52, %51 : vector<8x128xf32>
    %cst_37 = arith.constant 5.000000e-01 : f32
    %54 = vector.broadcast %cst_37 : f32 to vector<8x128xf32>
    %55 = arith.addf %53, %54 : vector<8x128xf32>
    %56 = arith.mulf %45, %17 : vector<8x128xf32>
    %57 = arith.mulf %37, %47 : vector<8x128xf32>
    %58 = arith.addf %56, %57 : vector<8x128xf32>
    %59 = math.tanh %58 : vector<8x128xf32>
    %60 = arith.mulf %55, %59 : vector<8x128xf32>
    %61 = vector.extract_strided_slice %29 {offsets = [0, 0], sizes = [8, 128], strides = [1, 1]} : vector<8x512xf32> to vector<8x128xf32>
    %cst_38 = arith.constant 5.000000e-01 : f32
    %62 = vector.broadcast %cst_38 : f32 to vector<8x128xf32>
    %63 = arith.mulf %62, %61 : vector<8x128xf32>
    %64 = math.tanh %63 : vector<8x128xf32>
    %cst_39 = arith.constant 5.000000e-01 : f32
    %65 = vector.broadcast %cst_39 : f32 to vector<8x128xf32>
    %66 = arith.mulf %65, %64 : vector<8x128xf32>
    %cst_40 = arith.constant 5.000000e-01 : f32
    %67 = vector.broadcast %cst_40 : f32 to vector<8x128xf32>
    %68 = arith.addf %66, %67 : vector<8x128xf32>
    %69 = vector.extract_strided_slice %29 {offsets = [0, 128], sizes = [8, 128], strides = [1, 1]} : vector<8x512xf32> to vector<8x128xf32>
    %cst_41 = arith.constant 5.000000e-01 : f32
    %70 = vector.broadcast %cst_41 : f32 to vector<8x128xf32>
    %71 = arith.mulf %70, %69 : vector<8x128xf32>
    %72 = math.tanh %71 : vector<8x128xf32>
    %cst_42 = arith.constant 5.000000e-01 : f32
    %73 = vector.broadcast %cst_42 : f32 to vector<8x128xf32>
    %74 = arith.mulf %73, %72 : vector<8x128xf32>
    %cst_43 = arith.constant 5.000000e-01 : f32
    %75 = vector.broadcast %cst_43 : f32 to vector<8x128xf32>
    %76 = arith.addf %74, %75 : vector<8x128xf32>
    %77 = vector.extract_strided_slice %29 {offsets = [0, 256], sizes = [8, 128], strides = [1, 1]} : vector<8x512xf32> to vector<8x128xf32>
    %78 = math.tanh %77 : vector<8x128xf32>
    %79 = vector.extract_strided_slice %29 {offsets = [0, 384], sizes = [8, 128], strides = [1, 1]} : vector<8x512xf32> to vector<8x128xf32>
    %cst_44 = arith.constant 5.000000e-01 : f32
    %80 = vector.broadcast %cst_44 : f32 to vector<8x128xf32>
    %81 = arith.mulf %80, %79 : vector<8x128xf32>
    %82 = math.tanh %81 : vector<8x128xf32>
    %cst_45 = arith.constant 5.000000e-01 : f32
    %83 = vector.broadcast %cst_45 : f32 to vector<8x128xf32>
    %84 = arith.mulf %83, %82 : vector<8x128xf32>
    %cst_46 = arith.constant 5.000000e-01 : f32
    %85 = vector.broadcast %cst_46 : f32 to vector<8x128xf32>
    %86 = arith.addf %84, %85 : vector<8x128xf32>
    %87 = arith.mulf %76, %17 : vector<8x128xf32>
    %88 = arith.mulf %68, %78 : vector<8x128xf32>
    %89 = arith.addf %87, %88 : vector<8x128xf32>
    %90 = math.tanh %89 : vector<8x128xf32>
    %91 = arith.mulf %86, %90 : vector<8x128xf32>
    %c0_47 = arith.constant 0 : index
    %c0_48 = arith.constant 0 : index
    %c0_49 = arith.constant 0 : index
    %92 = vector.load %arg13[%c0_47, %c0_48, %c0_49] : memref<8x8x256xf32, #tpu.memory_space<vmem>>, vector<1x8x128xf32>
    %93 = vector.shape_cast %92 : vector<1x8x128xf32> to vector<8x128xf32>
    %94 = vector.shape_cast %60 : vector<8x128xf32> to vector<1x8x128xf32>
    tpu.vector_store %arg13[%c0_47, %c0_48, %c0_49], %94 {strides = array<i32>} : memref<8x8x256xf32, #tpu.memory_space<vmem>>, vector<1x8x128xf32>,
    %c7_50 = arith.constant 7 : index
    %c0_51 = arith.constant 0 : index
    %c128 = arith.constant 128 : index
    %95 = vector.load %arg13[%c7_50, %c0_51, %c128] : memref<8x8x256xf32, #tpu.memory_space<vmem>>, vector<1x8x128xf32>
    %96 = vector.shape_cast %95 : vector<1x8x128xf32> to vector<8x128xf32>
    %97 = vector.shape_cast %91 : vector<8x128xf32> to vector<1x8x128xf32>
    tpu.vector_store %arg13[%c7_50, %c0_51, %c128], %97 {strides = array<i32>} : memref<8x8x256xf32, #tpu.memory_space<vmem>>, vector<1x8x128xf32>,
    %c1 = arith.constant 1 : index
    %c0_52 = arith.constant 0 : index
    %c0_53 = arith.constant 0 : index
    %98 = vector.load %arg11[%c1, %c0_52, %c0_53] : memref<8x8x512xf32, #tpu.memory_space<vmem>>, vector<1x8x512xf32>
    %99 = vector.shape_cast %98 : vector<1x8x512xf32> to vector<8x512xf32>
    %100 = arith.truncf %60 : vector<8x128xf32> to vector<8x128xbf16>
    %c0_54 = arith.constant 0 : index
    %c0_55 = arith.constant 0 : index
    %101 = vector.load %arg3[%c0_54, %c0_55] : memref<128x512xbf16, #tpu.memory_space<vmem>>, vector<128x512xbf16>
    %cst_56 = arith.constant dense<0.000000e+00> : vector<8x512xf32>
    %102 = tpu.matmul %100, %101, %cst_56 {dimension_numbers = #tpu.dot_dimension_numbers<[1], [0], [0], [1], [0, 0, 1, 1], [], []>} : vector<8x128xbf16>, vector<128x512xbf16>, vector<8x512xf32> -> vector<8x512xf32>
    %103 = arith.addf %99, %102 : vector<8x512xf32>
    %c6 = arith.constant 6 : index
    %c0_57 = arith.constant 0 : index
    %c0_58 = arith.constant 0 : index
    %104 = vector.load %arg12[%c6, %c0_57, %c0_58] : memref<8x8x512xf32, #tpu.memory_space<vmem>>, vector<1x8x512xf32>
    %105 = vector.shape_cast %104 : vector<1x8x512xf32> to vector<8x512xf32>
    %106 = arith.truncf %91 : vector<8x128xf32> to vector<8x128xbf16>
    %c0_59 = arith.constant 0 : index
    %c0_60 = arith.constant 0 : index
    %107 = vector.load %arg6[%c0_59, %c0_60] : memref<128x512xbf16, #tpu.memory_space<vmem>>, vector<128x512xbf16>
    %cst_61 = arith.constant dense<0.000000e+00> : vector<8x512xf32>
    %108 = tpu.matmul %106, %107, %cst_61 {dimension_numbers = #tpu.dot_dimension_numbers<[1], [0], [0], [1], [0, 0, 1, 1], [], []>} : vector<8x128xbf16>, vector<128x512xbf16>, vector<8x512xf32> -> vector<8x512xf32>
    %109 = arith.addf %105, %108 : vector<8x512xf32>
    %110 = vector.extract_strided_slice %103 {offsets = [0, 0], sizes = [8, 128], strides = [1, 1]} : vector<8x512xf32> to vector<8x128xf32>
    %cst_62 = arith.constant 5.000000e-01 : f32
    %111 = vector.broadcast %cst_62 : f32 to vector<8x128xf32>
    %112 = arith.mulf %111, %110 : vector<8x128xf32>
    %113 = math.tanh %112 : vector<8x128xf32>
    %cst_63 = arith.constant 5.000000e-01 : f32
    %114 = vector.broadcast %cst_63 : f32 to vector<8x128xf32>
    %115 = arith.mulf %114, %113 : vector<8x128xf32>
    %cst_64 = arith.constant 5.000000e-01 : f32
    %116 = vector.broadcast %cst_64 : f32 to vector<8x128xf32>
    %117 = arith.addf %115, %116 : vector<8x128xf32>
    %118 = vector.extract_strided_slice %103 {offsets = [0, 128], sizes = [8, 128], strides = [1, 1]} : vector<8x512xf32> to vector<8x128xf32>
    %cst_65 = arith.constant 5.000000e-01 : f32
    %119 = vector.broadcast %cst_65 : f32 to vector<8x128xf32>
    %120 = arith.mulf %119, %118 : vector<8x128xf32>
    %121 = math.tanh %120 : vector<8x128xf32>
    %cst_66 = arith.constant 5.000000e-01 : f32
    %122 = vector.broadcast %cst_66 : f32 to vector<8x128xf32>
    %123 = arith.mulf %122, %121 : vector<8x128xf32>
    %cst_67 = arith.constant 5.000000e-01 : f32
    %124 = vector.broadcast %cst_67 : f32 to vector<8x128xf32>
    %125 = arith.addf %123, %124 : vector<8x128xf32>
    %126 = vector.extract_strided_slice %103 {offsets = [0, 256], sizes = [8, 128], strides = [1, 1]} : vector<8x512xf32> to vector<8x128xf32>
    %127 = math.tanh %126 : vector<8x128xf32>
    %128 = vector.extract_strided_slice %103 {offsets = [0, 384], sizes = [8, 128], strides = [1, 1]} : vector<8x512xf32> to vector<8x128xf32>
    %cst_68 = arith.constant 5.000000e-01 : f32
    %129 = vector.broadcast %cst_68 : f32 to vector<8x128xf32>
    %130 = arith.mulf %129, %128 : vector<8x128xf32>
    %131 = math.tanh %130 : vector<8x128xf32>
    %cst_69 = arith.constant 5.000000e-01 : f32
    %132 = vector.broadcast %cst_69 : f32 to vector<8x128xf32>
    %133 = arith.mulf %132, %131 : vector<8x128xf32>
    %cst_70 = arith.constant 5.000000e-01 : f32
    %134 = vector.broadcast %cst_70 : f32 to vector<8x128xf32>
    %135 = arith.addf %133, %134 : vector<8x128xf32>
    %136 = arith.mulf %125, %58 : vector<8x128xf32>
    %137 = arith.mulf %117, %127 : vector<8x128xf32>
    %138 = arith.addf %136, %137 : vector<8x128xf32>
    %139 = math.tanh %138 : vector<8x128xf32>
    %140 = arith.mulf %135, %139 : vector<8x128xf32>
    %141 = vector.extract_strided_slice %109 {offsets = [0, 0], sizes = [8, 128], strides = [1, 1]} : vector<8x512xf32> to vector<8x128xf32>
    %cst_71 = arith.constant 5.000000e-01 : f32
    %142 = vector.broadcast %cst_71 : f32 to vector<8x128xf32>
    %143 = arith.mulf %142, %141 : vector<8x128xf32>
    %144 = math.tanh %143 : vector<8x128xf32>
    %cst_72 = arith.constant 5.000000e-01 : f32
    %145 = vector.broadcast %cst_72 : f32 to vector<8x128xf32>
    %146 = arith.mulf %145, %144 : vector<8x128xf32>
    %cst_73 = arith.constant 5.000000e-01 : f32
    %147 = vector.broadcast %cst_73 : f32 to vector<8x128xf32>
    %148 = arith.addf %146, %147 : vector<8x128xf32>
    %149 = vector.extract_strided_slice %109 {offsets = [0, 128], sizes = [8, 128], strides = [1, 1]} : vector<8x512xf32> to vector<8x128xf32>
    %cst_74 = arith.constant 5.000000e-01 : f32
    %150 = vector.broadcast %cst_74 : f32 to vector<8x128xf32>
    %151 = arith.mulf %150, %149 : vector<8x128xf32>
    %152 = math.tanh %151 : vector<8x128xf32>
    %cst_75 = arith.constant 5.000000e-01 : f32
    %153 = vector.broadcast %cst_75 : f32 to vector<8x128xf32>
    %154 = arith.mulf %153, %152 : vector<8x128xf32>
    %cst_76 = arith.constant 5.000000e-01 : f32
    %155 = vector.broadcast %cst_76 : f32 to vector<8x128xf32>
    %156 = arith.addf %154, %155 : vector<8x128xf32>
    %157 = vector.extract_strided_slice %109 {offsets = [0, 256], sizes = [8, 128], strides = [1, 1]} : vector<8x512xf32> to vector<8x128xf32>
    %158 = math.tanh %157 : vector<8x128xf32>
    %159 = vector.extract_strided_slice %109 {offsets = [0, 384], sizes = [8, 128], strides = [1, 1]} : vector<8x512xf32> to vector<8x128xf32>
    %cst_77 = arith.constant 5.000000e-01 : f32
    %160 = vector.broadcast %cst_77 : f32 to vector<8x128xf32>
    %161 = arith.mulf %160, %159 : vector<8x128xf32>
    %162 = math.tanh %161 : vector<8x128xf32>
    %cst_78 = arith.constant 5.000000e-01 : f32
    %163 = vector.broadcast %cst_78 : f32 to vector<8x128xf32>
    %164 = arith.mulf %163, %162 : vector<8x128xf32>
    %cst_79 = arith.constant 5.000000e-01 : f32
    %165 = vector.broadcast %cst_79 : f32 to vector<8x128xf32>
    %166 = arith.addf %164, %165 : vector<8x128xf32>
    %167 = arith.mulf %156, %89 : vector<8x128xf32>
    %168 = arith.mulf %148, %158 : vector<8x128xf32>
    %169 = arith.addf %167, %168 : vector<8x128xf32>
    %170 = math.tanh %169 : vector<8x128xf32>
    %171 = arith.mulf %166, %170 : vector<8x128xf32>
    %c1_80 = arith.constant 1 : index
    %c0_81 = arith.constant 0 : index
    %c0_82 = arith.constant 0 : index
    %172 = vector.load %arg13[%c1_80, %c0_81, %c0_82] : memref<8x8x256xf32, #tpu.memory_space<vmem>>, vector<1x8x128xf32>
    %173 = vector.shape_cast %172 : vector<1x8x128xf32> to vector<8x128xf32>
    %174 = vector.shape_cast %140 : vector<8x128xf32> to vector<1x8x128xf32>
    tpu.vector_store %arg13[%c1_80, %c0_81, %c0_82], %174 {strides = array<i32>} : memref<8x8x256xf32, #tpu.memory_space<vmem>>, vector<1x8x128xf32>,
    %c6_83 = arith.constant 6 : index
    %c0_84 = arith.constant 0 : index
    %c128_85 = arith.constant 128 : index
    %175 = vector.load %arg13[%c6_83, %c0_84, %c128_85] : memref<8x8x256xf32, #tpu.memory_space<vmem>>, vector<1x8x128xf32>
    %176 = vector.shape_cast %175 : vector<1x8x128xf32> to vector<8x128xf32>
    %177 = vector.shape_cast %171 : vector<8x128xf32> to vector<1x8x128xf32>
    tpu.vector_store %arg13[%c6_83, %c0_84, %c128_85], %177 {strides = array<i32>} : memref<8x8x256xf32, #tpu.memory_space<vmem>>, vector<1x8x128xf32>,
    %c2 = arith.constant 2 : index
    %c0_86 = arith.constant 0 : index
    %c0_87 = arith.constant 0 : index
    %178 = vector.load %arg11[%c2, %c0_86, %c0_87] : memref<8x8x512xf32, #tpu.memory_space<vmem>>, vector<1x8x512xf32>
    %179 = vector.shape_cast %178 : vector<1x8x512xf32> to vector<8x512xf32>
    %180 = arith.truncf %140 : vector<8x128xf32> to vector<8x128xbf16>
    %c0_88 = arith.constant 0 : index
    %c0_89 = arith.constant 0 : index
    %181 = vector.load %arg3[%c0_88, %c0_89] : memref<128x512xbf16, #tpu.memory_space<vmem>>, vector<128x512xbf16>
    %cst_90 = arith.constant dense<0.000000e+00> : vector<8x512xf32>
    %182 = tpu.matmul %180, %181, %cst_90 {dimension_numbers = #tpu.dot_dimension_numbers<[1], [0], [0], [1], [0, 0, 1, 1], [], []>} : vector<8x128xbf16>, vector<128x512xbf16>, vector<8x512xf32> -> vector<8x512xf32>
    %183 = arith.addf %179, %182 : vector<8x512xf32>
    %c5 = arith.constant 5 : index
    %c0_91 = arith.constant 0 : index
    %c0_92 = arith.constant 0 : index
    %184 = vector.load %arg12[%c5, %c0_91, %c0_92] : memref<8x8x512xf32, #tpu.memory_space<vmem>>, vector<1x8x512xf32>
    %185 = vector.shape_cast %184 : vector<1x8x512xf32> to vector<8x512xf32>
    %186 = arith.truncf %171 : vector<8x128xf32> to vector<8x128xbf16>
    %c0_93 = arith.constant 0 : index
    %c0_94 = arith.constant 0 : index
    %187 = vector.load %arg6[%c0_93, %c0_94] : memref<128x512xbf16, #tpu.memory_space<vmem>>, vector<128x512xbf16>
    %cst_95 = arith.constant dense<0.000000e+00> : vector<8x512xf32>
    %188 = tpu.matmul %186, %187, %cst_95 {dimension_numbers = #tpu.dot_dimension_numbers<[1], [0], [0], [1], [0, 0, 1, 1], [], []>} : vector<8x128xbf16>, vector<128x512xbf16>, vector<8x512xf32> -> vector<8x512xf32>
    %189 = arith.addf %185, %188 : vector<8x512xf32>
    %190 = vector.extract_strided_slice %183 {offsets = [0, 0], sizes = [8, 128], strides = [1, 1]} : vector<8x512xf32> to vector<8x128xf32>
    %cst_96 = arith.constant 5.000000e-01 : f32
    %191 = vector.broadcast %cst_96 : f32 to vector<8x128xf32>
    %192 = arith.mulf %191, %190 : vector<8x128xf32>
    %193 = math.tanh %192 : vector<8x128xf32>
    %cst_97 = arith.constant 5.000000e-01 : f32
    %194 = vector.broadcast %cst_97 : f32 to vector<8x128xf32>
    %195 = arith.mulf %194, %193 : vector<8x128xf32>
    %cst_98 = arith.constant 5.000000e-01 : f32
    %196 = vector.broadcast %cst_98 : f32 to vector<8x128xf32>
    %197 = arith.addf %195, %196 : vector<8x128xf32>
    %198 = vector.extract_strided_slice %183 {offsets = [0, 128], sizes = [8, 128], strides = [1, 1]} : vector<8x512xf32> to vector<8x128xf32>
    %cst_99 = arith.constant 5.000000e-01 : f32
    %199 = vector.broadcast %cst_99 : f32 to vector<8x128xf32>
    %200 = arith.mulf %199, %198 : vector<8x128xf32>
    %201 = math.tanh %200 : vector<8x128xf32>
    %cst_100 = arith.constant 5.000000e-01 : f32
    %202 = vector.broadcast %cst_100 : f32 to vector<8x128xf32>
    %203 = arith.mulf %202, %201 : vector<8x128xf32>
    %cst_101 = arith.constant 5.000000e-01 : f32
    %204 = vector.broadcast %cst_101 : f32 to vector<8x128xf32>
    %205 = arith.addf %203, %204 : vector<8x128xf32>
    %206 = vector.extract_strided_slice %183 {offsets = [0, 256], sizes = [8, 128], strides = [1, 1]} : vector<8x512xf32> to vector<8x128xf32>
    %207 = math.tanh %206 : vector<8x128xf32>
    %208 = vector.extract_strided_slice %183 {offsets = [0, 384], sizes = [8, 128], strides = [1, 1]} : vector<8x512xf32> to vector<8x128xf32>
    %cst_102 = arith.constant 5.000000e-01 : f32
    %209 = vector.broadcast %cst_102 : f32 to vector<8x128xf32>
    %210 = arith.mulf %209, %208 : vector<8x128xf32>
    %211 = math.tanh %210 : vector<8x128xf32>
    %cst_103 = arith.constant 5.000000e-01 : f32
    %212 = vector.broadcast %cst_103 : f32 to vector<8x128xf32>
    %213 = arith.mulf %212, %211 : vector<8x128xf32>
    %cst_104 = arith.constant 5.000000e-01 : f32
    %214 = vector.broadcast %cst_104 : f32 to vector<8x128xf32>
    %215 = arith.addf %213, %214 : vector<8x128xf32>
    %216 = arith.mulf %205, %138 : vector<8x128xf32>
    %217 = arith.mulf %197, %207 : vector<8x128xf32>
    %218 = arith.addf %216, %217 : vector<8x128xf32>
    %219 = math.tanh %218 : vector<8x128xf32>
    %220 = arith.mulf %215, %219 : vector<8x128xf32>
    %221 = vector.extract_strided_slice %189 {offsets = [0, 0], sizes = [8, 128], strides = [1, 1]} : vector<8x512xf32> to vector<8x128xf32>
    %cst_105 = arith.constant 5.000000e-01 : f32
    %222 = vector.broadcast %cst_105 : f32 to vector<8x128xf32>
    %223 = arith.mulf %222, %221 : vector<8x128xf32>
    %224 = math.tanh %223 : vector<8x128xf32>
    %cst_106 = arith.constant 5.000000e-01 : f32
    %225 = vector.broadcast %cst_106 : f32 to vector<8x128xf32>
    %226 = arith.mulf %225, %224 : vector<8x128xf32>
    %cst_107 = arith.constant 5.000000e-01 : f32
    %227 = vector.broadcast %cst_107 : f32 to vector<8x128xf32>
    %228 = arith.addf %226, %227 : vector<8x128xf32>
    %229 = vector.extract_strided_slice %189 {offsets = [0, 128], sizes = [8, 128], strides = [1, 1]} : vector<8x512xf32> to vector<8x128xf32>
    %cst_108 = arith.constant 5.000000e-01 : f32
    %230 = vector.broadcast %cst_108 : f32 to vector<8x128xf32>
    %231 = arith.mulf %230, %229 : vector<8x128xf32>
    %232 = math.tanh %231 : vector<8x128xf32>
    %cst_109 = arith.constant 5.000000e-01 : f32
    %233 = vector.broadcast %cst_109 : f32 to vector<8x128xf32>
    %234 = arith.mulf %233, %232 : vector<8x128xf32>
    %cst_110 = arith.constant 5.000000e-01 : f32
    %235 = vector.broadcast %cst_110 : f32 to vector<8x128xf32>
    %236 = arith.addf %234, %235 : vector<8x128xf32>
    %237 = vector.extract_strided_slice %189 {offsets = [0, 256], sizes = [8, 128], strides = [1, 1]} : vector<8x512xf32> to vector<8x128xf32>
    %238 = math.tanh %237 : vector<8x128xf32>
    %239 = vector.extract_strided_slice %189 {offsets = [0, 384], sizes = [8, 128], strides = [1, 1]} : vector<8x512xf32> to vector<8x128xf32>
    %cst_111 = arith.constant 5.000000e-01 : f32
    %240 = vector.broadcast %cst_111 : f32 to vector<8x128xf32>
    %241 = arith.mulf %240, %239 : vector<8x128xf32>
    %242 = math.tanh %241 : vector<8x128xf32>
    %cst_112 = arith.constant 5.000000e-01 : f32
    %243 = vector.broadcast %cst_112 : f32 to vector<8x128xf32>
    %244 = arith.mulf %243, %242 : vector<8x128xf32>
    %cst_113 = arith.constant 5.000000e-01 : f32
    %245 = vector.broadcast %cst_113 : f32 to vector<8x128xf32>
    %246 = arith.addf %244, %245 : vector<8x128xf32>
    %247 = arith.mulf %236, %169 : vector<8x128xf32>
    %248 = arith.mulf %228, %238 : vector<8x128xf32>
    %249 = arith.addf %247, %248 : vector<8x128xf32>
    %250 = math.tanh %249 : vector<8x128xf32>
    %251 = arith.mulf %246, %250 : vector<8x128xf32>
    %c2_114 = arith.constant 2 : index
    %c0_115 = arith.constant 0 : index
    %c0_116 = arith.constant 0 : index
    %252 = vector.load %arg13[%c2_114, %c0_115, %c0_116] : memref<8x8x256xf32, #tpu.memory_space<vmem>>, vector<1x8x128xf32>
    %253 = vector.shape_cast %252 : vector<1x8x128xf32> to vector<8x128xf32>
    %254 = vector.shape_cast %220 : vector<8x128xf32> to vector<1x8x128xf32>
    tpu.vector_store %arg13[%c2_114, %c0_115, %c0_116], %254 {strides = array<i32>} : memref<8x8x256xf32, #tpu.memory_space<vmem>>, vector<1x8x128xf32>,
    %c5_117 = arith.constant 5 : index
    %c0_118 = arith.constant 0 : index
    %c128_119 = arith.constant 128 : index
    %255 = vector.load %arg13[%c5_117, %c0_118, %c128_119] : memref<8x8x256xf32, #tpu.memory_space<vmem>>, vector<1x8x128xf32>
    %256 = vector.shape_cast %255 : vector<1x8x128xf32> to vector<8x128xf32>
    %257 = vector.shape_cast %251 : vector<8x128xf32> to vector<1x8x128xf32>
    tpu.vector_store %arg13[%c5_117, %c0_118, %c128_119], %257 {strides = array<i32>} : memref<8x8x256xf32, #tpu.memory_space<vmem>>, vector<1x8x128xf32>,
    %c3 = arith.constant 3 : index
    %c0_120 = arith.constant 0 : index
    %c0_121 = arith.constant 0 : index
    %258 = vector.load %arg11[%c3, %c0_120, %c0_121] : memref<8x8x512xf32, #tpu.memory_space<vmem>>, vector<1x8x512xf32>
    %259 = vector.shape_cast %258 : vector<1x8x512xf32> to vector<8x512xf32>
    %260 = arith.truncf %220 : vector<8x128xf32> to vector<8x128xbf16>
    %c0_122 = arith.constant 0 : index
    %c0_123 = arith.constant 0 : index
    %261 = vector.load %arg3[%c0_122, %c0_123] : memref<128x512xbf16, #tpu.memory_space<vmem>>, vector<128x512xbf16>
    %cst_124 = arith.constant dense<0.000000e+00> : vector<8x512xf32>
    %262 = tpu.matmul %260, %261, %cst_124 {dimension_numbers = #tpu.dot_dimension_numbers<[1], [0], [0], [1], [0, 0, 1, 1], [], []>} : vector<8x128xbf16>, vector<128x512xbf16>, vector<8x512xf32> -> vector<8x512xf32>
    %263 = arith.addf %259, %262 : vector<8x512xf32>
    %c4 = arith.constant 4 : index
    %c0_125 = arith.constant 0 : index
    %c0_126 = arith.constant 0 : index
    %264 = vector.load %arg12[%c4, %c0_125, %c0_126] : memref<8x8x512xf32, #tpu.memory_space<vmem>>, vector<1x8x512xf32>
    %265 = vector.shape_cast %264 : vector<1x8x512xf32> to vector<8x512xf32>
    %266 = arith.truncf %251 : vector<8x128xf32> to vector<8x128xbf16>
    %c0_127 = arith.constant 0 : index
    %c0_128 = arith.constant 0 : index
    %267 = vector.load %arg6[%c0_127, %c0_128] : memref<128x512xbf16, #tpu.memory_space<vmem>>, vector<128x512xbf16>
    %cst_129 = arith.constant dense<0.000000e+00> : vector<8x512xf32>
    %268 = tpu.matmul %266, %267, %cst_129 {dimension_numbers = #tpu.dot_dimension_numbers<[1], [0], [0], [1], [0, 0, 1, 1], [], []>} : vector<8x128xbf16>, vector<128x512xbf16>, vector<8x512xf32> -> vector<8x512xf32>
    %269 = arith.addf %265, %268 : vector<8x512xf32>
    %270 = vector.extract_strided_slice %263 {offsets = [0, 0], sizes = [8, 128], strides = [1, 1]} : vector<8x512xf32> to vector<8x128xf32>
    %cst_130 = arith.constant 5.000000e-01 : f32
    %271 = vector.broadcast %cst_130 : f32 to vector<8x128xf32>
    %272 = arith.mulf %271, %270 : vector<8x128xf32>
    %273 = math.tanh %272 : vector<8x128xf32>
    %cst_131 = arith.constant 5.000000e-01 : f32
    %274 = vector.broadcast %cst_131 : f32 to vector<8x128xf32>
    %275 = arith.mulf %274, %273 : vector<8x128xf32>
    %cst_132 = arith.constant 5.000000e-01 : f32
    %276 = vector.broadcast %cst_132 : f32 to vector<8x128xf32>
    %277 = arith.addf %275, %276 : vector<8x128xf32>
    %278 = vector.extract_strided_slice %263 {offsets = [0, 128], sizes = [8, 128], strides = [1, 1]} : vector<8x512xf32> to vector<8x128xf32>
    %cst_133 = arith.constant 5.000000e-01 : f32
    %279 = vector.broadcast %cst_133 : f32 to vector<8x128xf32>
    %280 = arith.mulf %279, %278 : vector<8x128xf32>
    %281 = math.tanh %280 : vector<8x128xf32>
    %cst_134 = arith.constant 5.000000e-01 : f32
    %282 = vector.broadcast %cst_134 : f32 to vector<8x128xf32>
    %283 = arith.mulf %282, %281 : vector<8x128xf32>
    %cst_135 = arith.constant 5.000000e-01 : f32
    %284 = vector.broadcast %cst_135 : f32 to vector<8x128xf32>
    %285 = arith.addf %283, %284 : vector<8x128xf32>
    %286 = vector.extract_strided_slice %263 {offsets = [0, 256], sizes = [8, 128], strides = [1, 1]} : vector<8x512xf32> to vector<8x128xf32>
    %287 = math.tanh %286 : vector<8x128xf32>
    %288 = vector.extract_strided_slice %263 {offsets = [0, 384], sizes = [8, 128], strides = [1, 1]} : vector<8x512xf32> to vector<8x128xf32>
    %cst_136 = arith.constant 5.000000e-01 : f32
    %289 = vector.broadcast %cst_136 : f32 to vector<8x128xf32>
    %290 = arith.mulf %289, %288 : vector<8x128xf32>
    %291 = math.tanh %290 : vector<8x128xf32>
    %cst_137 = arith.constant 5.000000e-01 : f32
    %292 = vector.broadcast %cst_137 : f32 to vector<8x128xf32>
    %293 = arith.mulf %292, %291 : vector<8x128xf32>
    %cst_138 = arith.constant 5.000000e-01 : f32
    %294 = vector.broadcast %cst_138 : f32 to vector<8x128xf32>
    %295 = arith.addf %293, %294 : vector<8x128xf32>
    %296 = arith.mulf %285, %218 : vector<8x128xf32>
    %297 = arith.mulf %277, %287 : vector<8x128xf32>
    %298 = arith.addf %296, %297 : vector<8x128xf32>
    %299 = math.tanh %298 : vector<8x128xf32>
    %300 = arith.mulf %295, %299 : vector<8x128xf32>
    %301 = vector.extract_strided_slice %269 {offsets = [0, 0], sizes = [8, 128], strides = [1, 1]} : vector<8x512xf32> to vector<8x128xf32>
    %cst_139 = arith.constant 5.000000e-01 : f32
    %302 = vector.broadcast %cst_139 : f32 to vector<8x128xf32>
    %303 = arith.mulf %302, %301 : vector<8x128xf32>
    %304 = math.tanh %303 : vector<8x128xf32>
    %cst_140 = arith.constant 5.000000e-01 : f32
    %305 = vector.broadcast %cst_140 : f32 to vector<8x128xf32>
    %306 = arith.mulf %305, %304 : vector<8x128xf32>
    %cst_141 = arith.constant 5.000000e-01 : f32
    %307 = vector.broadcast %cst_141 : f32 to vector<8x128xf32>
    %308 = arith.addf %306, %307 : vector<8x128xf32>
    %309 = vector.extract_strided_slice %269 {offsets = [0, 128], sizes = [8, 128], strides = [1, 1]} : vector<8x512xf32> to vector<8x128xf32>
    %cst_142 = arith.constant 5.000000e-01 : f32
    %310 = vector.broadcast %cst_142 : f32 to vector<8x128xf32>
    %311 = arith.mulf %310, %309 : vector<8x128xf32>
    %312 = math.tanh %311 : vector<8x128xf32>
    %cst_143 = arith.constant 5.000000e-01 : f32
    %313 = vector.broadcast %cst_143 : f32 to vector<8x128xf32>
    %314 = arith.mulf %313, %312 : vector<8x128xf32>
    %cst_144 = arith.constant 5.000000e-01 : f32
    %315 = vector.broadcast %cst_144 : f32 to vector<8x128xf32>
    %316 = arith.addf %314, %315 : vector<8x128xf32>
    %317 = vector.extract_strided_slice %269 {offsets = [0, 256], sizes = [8, 128], strides = [1, 1]} : vector<8x512xf32> to vector<8x128xf32>
    %318 = math.tanh %317 : vector<8x128xf32>
    %319 = vector.extract_strided_slice %269 {offsets = [0, 384], sizes = [8, 128], strides = [1, 1]} : vector<8x512xf32> to vector<8x128xf32>
    %cst_145 = arith.constant 5.000000e-01 : f32
    %320 = vector.broadcast %cst_145 : f32 to vector<8x128xf32>
    %321 = arith.mulf %320, %319 : vector<8x128xf32>
    %322 = math.tanh %321 : vector<8x128xf32>
    %cst_146 = arith.constant 5.000000e-01 : f32
    %323 = vector.broadcast %cst_146 : f32 to vector<8x128xf32>
    %324 = arith.mulf %323, %322 : vector<8x128xf32>
    %cst_147 = arith.constant 5.000000e-01 : f32
    %325 = vector.broadcast %cst_147 : f32 to vector<8x128xf32>
    %326 = arith.addf %324, %325 : vector<8x128xf32>
    %327 = arith.mulf %316, %249 : vector<8x128xf32>
    %328 = arith.mulf %308, %318 : vector<8x128xf32>
    %329 = arith.addf %327, %328 : vector<8x128xf32>
    %330 = math.tanh %329 : vector<8x128xf32>
    %331 = arith.mulf %326, %330 : vector<8x128xf32>
    %c3_148 = arith.constant 3 : index
    %c0_149 = arith.constant 0 : index
    %c0_150 = arith.constant 0 : index
    %332 = vector.load %arg13[%c3_148, %c0_149, %c0_150] : memref<8x8x256xf32, #tpu.memory_space<vmem>>, vector<1x8x128xf32>
    %333 = vector.shape_cast %332 : vector<1x8x128xf32> to vector<8x128xf32>
    %334 = vector.shape_cast %300 : vector<8x128xf32> to vector<1x8x128xf32>
    tpu.vector_store %arg13[%c3_148, %c0_149, %c0_150], %334 {strides = array<i32>} : memref<8x8x256xf32, #tpu.memory_space<vmem>>, vector<1x8x128xf32>,
    %c4_151 = arith.constant 4 : index
    %c0_152 = arith.constant 0 : index
    %c128_153 = arith.constant 128 : index
    %335 = vector.load %arg13[%c4_151, %c0_152, %c128_153] : memref<8x8x256xf32, #tpu.memory_space<vmem>>, vector<1x8x128xf32>
    %336 = vector.shape_cast %335 : vector<1x8x128xf32> to vector<8x128xf32>
    %337 = vector.shape_cast %331 : vector<8x128xf32> to vector<1x8x128xf32>
    tpu.vector_store %arg13[%c4_151, %c0_152, %c128_153], %337 {strides = array<i32>} : memref<8x8x256xf32, #tpu.memory_space<vmem>>, vector<1x8x128xf32>,
    %c4_154 = arith.constant 4 : index
    %c0_155 = arith.constant 0 : index
    %c0_156 = arith.constant 0 : index
    %338 = vector.load %arg11[%c4_154, %c0_155, %c0_156] : memref<8x8x512xf32, #tpu.memory_space<vmem>>, vector<1x8x512xf32>
    %339 = vector.shape_cast %338 : vector<1x8x512xf32> to vector<8x512xf32>
    %340 = arith.truncf %300 : vector<8x128xf32> to vector<8x128xbf16>
    %c0_157 = arith.constant 0 : index
    %c0_158 = arith.constant 0 : index
    %341 = vector.load %arg3[%c0_157, %c0_158] : memref<128x512xbf16, #tpu.memory_space<vmem>>, vector<128x512xbf16>
    %cst_159 = arith.constant dense<0.000000e+00> : vector<8x512xf32>
    %342 = tpu.matmul %340, %341, %cst_159 {dimension_numbers = #tpu.dot_dimension_numbers<[1], [0], [0], [1], [0, 0, 1, 1], [], []>} : vector<8x128xbf16>, vector<128x512xbf16>, vector<8x512xf32> -> vector<8x512xf32>
    %343 = arith.addf %339, %342 : vector<8x512xf32>
    %c3_160 = arith.constant 3 : index
    %c0_161 = arith.constant 0 : index
    %c0_162 = arith.constant 0 : index
    %344 = vector.load %arg12[%c3_160, %c0_161, %c0_162] : memref<8x8x512xf32, #tpu.memory_space<vmem>>, vector<1x8x512xf32>
    %345 = vector.shape_cast %344 : vector<1x8x512xf32> to vector<8x512xf32>
    %346 = arith.truncf %331 : vector<8x128xf32> to vector<8x128xbf16>
    %c0_163 = arith.constant 0 : index
    %c0_164 = arith.constant 0 : index
    %347 = vector.load %arg6[%c0_163, %c0_164] : memref<128x512xbf16, #tpu.memory_space<vmem>>, vector<128x512xbf16>
    %cst_165 = arith.constant dense<0.000000e+00> : vector<8x512xf32>
    %348 = tpu.matmul %346, %347, %cst_165 {dimension_numbers = #tpu.dot_dimension_numbers<[1], [0], [0], [1], [0, 0, 1, 1], [], []>} : vector<8x128xbf16>, vector<128x512xbf16>, vector<8x512xf32> -> vector<8x512xf32>
    %349 = arith.addf %345, %348 : vector<8x512xf32>
    %350 = vector.extract_strided_slice %343 {offsets = [0, 0], sizes = [8, 128], strides = [1, 1]} : vector<8x512xf32> to vector<8x128xf32>
    %cst_166 = arith.constant 5.000000e-01 : f32
    %351 = vector.broadcast %cst_166 : f32 to vector<8x128xf32>
    %352 = arith.mulf %351, %350 : vector<8x128xf32>
    %353 = math.tanh %352 : vector<8x128xf32>
    %cst_167 = arith.constant 5.000000e-01 : f32
    %354 = vector.broadcast %cst_167 : f32 to vector<8x128xf32>
    %355 = arith.mulf %354, %353 : vector<8x128xf32>
    %cst_168 = arith.constant 5.000000e-01 : f32
    %356 = vector.broadcast %cst_168 : f32 to vector<8x128xf32>
    %357 = arith.addf %355, %356 : vector<8x128xf32>
    %358 = vector.extract_strided_slice %343 {offsets = [0, 128], sizes = [8, 128], strides = [1, 1]} : vector<8x512xf32> to vector<8x128xf32>
    %cst_169 = arith.constant 5.000000e-01 : f32
    %359 = vector.broadcast %cst_169 : f32 to vector<8x128xf32>
    %360 = arith.mulf %359, %358 : vector<8x128xf32>
    %361 = math.tanh %360 : vector<8x128xf32>
    %cst_170 = arith.constant 5.000000e-01 : f32
    %362 = vector.broadcast %cst_170 : f32 to vector<8x128xf32>
    %363 = arith.mulf %362, %361 : vector<8x128xf32>
    %cst_171 = arith.constant 5.000000e-01 : f32
    %364 = vector.broadcast %cst_171 : f32 to vector<8x128xf32>
    %365 = arith.addf %363, %364 : vector<8x128xf32>
    %366 = vector.extract_strided_slice %343 {offsets = [0, 256], sizes = [8, 128], strides = [1, 1]} : vector<8x512xf32> to vector<8x128xf32>
    %367 = math.tanh %366 : vector<8x128xf32>
    %368 = vector.extract_strided_slice %343 {offsets = [0, 384], sizes = [8, 128], strides = [1, 1]} : vector<8x512xf32> to vector<8x128xf32>
    %cst_172 = arith.constant 5.000000e-01 : f32
    %369 = vector.broadcast %cst_172 : f32 to vector<8x128xf32>
    %370 = arith.mulf %369, %368 : vector<8x128xf32>
    %371 = math.tanh %370 : vector<8x128xf32>
    %cst_173 = arith.constant 5.000000e-01 : f32
    %372 = vector.broadcast %cst_173 : f32 to vector<8x128xf32>
    %373 = arith.mulf %372, %371 : vector<8x128xf32>
    %cst_174 = arith.constant 5.000000e-01 : f32
    %374 = vector.broadcast %cst_174 : f32 to vector<8x128xf32>
    %375 = arith.addf %373, %374 : vector<8x128xf32>
    %376 = arith.mulf %365, %298 : vector<8x128xf32>
    %377 = arith.mulf %357, %367 : vector<8x128xf32>
    %378 = arith.addf %376, %377 : vector<8x128xf32>
    %379 = math.tanh %378 : vector<8x128xf32>
    %380 = arith.mulf %375, %379 : vector<8x128xf32>
    %381 = vector.extract_strided_slice %349 {offsets = [0, 0], sizes = [8, 128], strides = [1, 1]} : vector<8x512xf32> to vector<8x128xf32>
    %cst_175 = arith.constant 5.000000e-01 : f32
    %382 = vector.broadcast %cst_175 : f32 to vector<8x128xf32>
    %383 = arith.mulf %382, %381 : vector<8x128xf32>
    %384 = math.tanh %383 : vector<8x128xf32>
    %cst_176 = arith.constant 5.000000e-01 : f32
    %385 = vector.broadcast %cst_176 : f32 to vector<8x128xf32>
    %386 = arith.mulf %385, %384 : vector<8x128xf32>
    %cst_177 = arith.constant 5.000000e-01 : f32
    %387 = vector.broadcast %cst_177 : f32 to vector<8x128xf32>
    %388 = arith.addf %386, %387 : vector<8x128xf32>
    %389 = vector.extract_strided_slice %349 {offsets = [0, 128], sizes = [8, 128], strides = [1, 1]} : vector<8x512xf32> to vector<8x128xf32>
    %cst_178 = arith.constant 5.000000e-01 : f32
    %390 = vector.broadcast %cst_178 : f32 to vector<8x128xf32>
    %391 = arith.mulf %390, %389 : vector<8x128xf32>
    %392 = math.tanh %391 : vector<8x128xf32>
    %cst_179 = arith.constant 5.000000e-01 : f32
    %393 = vector.broadcast %cst_179 : f32 to vector<8x128xf32>
    %394 = arith.mulf %393, %392 : vector<8x128xf32>
    %cst_180 = arith.constant 5.000000e-01 : f32
    %395 = vector.broadcast %cst_180 : f32 to vector<8x128xf32>
    %396 = arith.addf %394, %395 : vector<8x128xf32>
    %397 = vector.extract_strided_slice %349 {offsets = [0, 256], sizes = [8, 128], strides = [1, 1]} : vector<8x512xf32> to vector<8x128xf32>
    %398 = math.tanh %397 : vector<8x128xf32>
    %399 = vector.extract_strided_slice %349 {offsets = [0, 384], sizes = [8, 128], strides = [1, 1]} : vector<8x512xf32> to vector<8x128xf32>
    %cst_181 = arith.constant 5.000000e-01 : f32
    %400 = vector.broadcast %cst_181 : f32 to vector<8x128xf32>
    %401 = arith.mulf %400, %399 : vector<8x128xf32>
    %402 = math.tanh %401 : vector<8x128xf32>
    %cst_182 = arith.constant 5.000000e-01 : f32
    %403 = vector.broadcast %cst_182 : f32 to vector<8x128xf32>
    %404 = arith.mulf %403, %402 : vector<8x128xf32>
    %cst_183 = arith.constant 5.000000e-01 : f32
    %405 = vector.broadcast %cst_183 : f32 to vector<8x128xf32>
    %406 = arith.addf %404, %405 : vector<8x128xf32>
    %407 = arith.mulf %396, %329 : vector<8x128xf32>
    %408 = arith.mulf %388, %398 : vector<8x128xf32>
    %409 = arith.addf %407, %408 : vector<8x128xf32>
    %410 = math.tanh %409 : vector<8x128xf32>
    %411 = arith.mulf %406, %410 : vector<8x128xf32>
    %c4_184 = arith.constant 4 : index
    %c0_185 = arith.constant 0 : index
    %c0_186 = arith.constant 0 : index
    %412 = vector.load %arg13[%c4_184, %c0_185, %c0_186] : memref<8x8x256xf32, #tpu.memory_space<vmem>>, vector<1x8x128xf32>
    %413 = vector.shape_cast %412 : vector<1x8x128xf32> to vector<8x128xf32>
    %414 = vector.shape_cast %380 : vector<8x128xf32> to vector<1x8x128xf32>
    tpu.vector_store %arg13[%c4_184, %c0_185, %c0_186], %414 {strides = array<i32>} : memref<8x8x256xf32, #tpu.memory_space<vmem>>, vector<1x8x128xf32>,
    %c3_187 = arith.constant 3 : index
    %c0_188 = arith.constant 0 : index
    %c128_189 = arith.constant 128 : index
    %415 = vector.load %arg13[%c3_187, %c0_188, %c128_189] : memref<8x8x256xf32, #tpu.memory_space<vmem>>, vector<1x8x128xf32>
    %416 = vector.shape_cast %415 : vector<1x8x128xf32> to vector<8x128xf32>
    %417 = vector.shape_cast %411 : vector<8x128xf32> to vector<1x8x128xf32>
    tpu.vector_store %arg13[%c3_187, %c0_188, %c128_189], %417 {strides = array<i32>} : memref<8x8x256xf32, #tpu.memory_space<vmem>>, vector<1x8x128xf32>,
    %c5_190 = arith.constant 5 : index
    %c0_191 = arith.constant 0 : index
    %c0_192 = arith.constant 0 : index
    %418 = vector.load %arg11[%c5_190, %c0_191, %c0_192] : memref<8x8x512xf32, #tpu.memory_space<vmem>>, vector<1x8x512xf32>
    %419 = vector.shape_cast %418 : vector<1x8x512xf32> to vector<8x512xf32>
    %420 = arith.truncf %380 : vector<8x128xf32> to vector<8x128xbf16>
    %c0_193 = arith.constant 0 : index
    %c0_194 = arith.constant 0 : index
    %421 = vector.load %arg3[%c0_193, %c0_194] : memref<128x512xbf16, #tpu.memory_space<vmem>>, vector<128x512xbf16>
    %cst_195 = arith.constant dense<0.000000e+00> : vector<8x512xf32>
    %422 = tpu.matmul %420, %421, %cst_195 {dimension_numbers = #tpu.dot_dimension_numbers<[1], [0], [0], [1], [0, 0, 1, 1], [], []>} : vector<8x128xbf16>, vector<128x512xbf16>, vector<8x512xf32> -> vector<8x512xf32>
    %423 = arith.addf %419, %422 : vector<8x512xf32>
    %c2_196 = arith.constant 2 : index
    %c0_197 = arith.constant 0 : index
    %c0_198 = arith.constant 0 : index
    %424 = vector.load %arg12[%c2_196, %c0_197, %c0_198] : memref<8x8x512xf32, #tpu.memory_space<vmem>>, vector<1x8x512xf32>
    %425 = vector.shape_cast %424 : vector<1x8x512xf32> to vector<8x512xf32>
    %426 = arith.truncf %411 : vector<8x128xf32> to vector<8x128xbf16>
    %c0_199 = arith.constant 0 : index
    %c0_200 = arith.constant 0 : index
    %427 = vector.load %arg6[%c0_199, %c0_200] : memref<128x512xbf16, #tpu.memory_space<vmem>>, vector<128x512xbf16>
    %cst_201 = arith.constant dense<0.000000e+00> : vector<8x512xf32>
    %428 = tpu.matmul %426, %427, %cst_201 {dimension_numbers = #tpu.dot_dimension_numbers<[1], [0], [0], [1], [0, 0, 1, 1], [], []>} : vector<8x128xbf16>, vector<128x512xbf16>, vector<8x512xf32> -> vector<8x512xf32>
    %429 = arith.addf %425, %428 : vector<8x512xf32>
    %430 = vector.extract_strided_slice %423 {offsets = [0, 0], sizes = [8, 128], strides = [1, 1]} : vector<8x512xf32> to vector<8x128xf32>
    %cst_202 = arith.constant 5.000000e-01 : f32
    %431 = vector.broadcast %cst_202 : f32 to vector<8x128xf32>
    %432 = arith.mulf %431, %430 : vector<8x128xf32>
    %433 = math.tanh %432 : vector<8x128xf32>
    %cst_203 = arith.constant 5.000000e-01 : f32
    %434 = vector.broadcast %cst_203 : f32 to vector<8x128xf32>
    %435 = arith.mulf %434, %433 : vector<8x128xf32>
    %cst_204 = arith.constant 5.000000e-01 : f32
    %436 = vector.broadcast %cst_204 : f32 to vector<8x128xf32>
    %437 = arith.addf %435, %436 : vector<8x128xf32>
    %438 = vector.extract_strided_slice %423 {offsets = [0, 128], sizes = [8, 128], strides = [1, 1]} : vector<8x512xf32> to vector<8x128xf32>
    %cst_205 = arith.constant 5.000000e-01 : f32
    %439 = vector.broadcast %cst_205 : f32 to vector<8x128xf32>
    %440 = arith.mulf %439, %438 : vector<8x128xf32>
    %441 = math.tanh %440 : vector<8x128xf32>
    %cst_206 = arith.constant 5.000000e-01 : f32
    %442 = vector.broadcast %cst_206 : f32 to vector<8x128xf32>
    %443 = arith.mulf %442, %441 : vector<8x128xf32>
    %cst_207 = arith.constant 5.000000e-01 : f32
    %444 = vector.broadcast %cst_207 : f32 to vector<8x128xf32>
    %445 = arith.addf %443, %444 : vector<8x128xf32>
    %446 = vector.extract_strided_slice %423 {offsets = [0, 256], sizes = [8, 128], strides = [1, 1]} : vector<8x512xf32> to vector<8x128xf32>
    %447 = math.tanh %446 : vector<8x128xf32>
    %448 = vector.extract_strided_slice %423 {offsets = [0, 384], sizes = [8, 128], strides = [1, 1]} : vector<8x512xf32> to vector<8x128xf32>
    %cst_208 = arith.constant 5.000000e-01 : f32
    %449 = vector.broadcast %cst_208 : f32 to vector<8x128xf32>
    %450 = arith.mulf %449, %448 : vector<8x128xf32>
    %451 = math.tanh %450 : vector<8x128xf32>
    %cst_209 = arith.constant 5.000000e-01 : f32
    %452 = vector.broadcast %cst_209 : f32 to vector<8x128xf32>
    %453 = arith.mulf %452, %451 : vector<8x128xf32>
    %cst_210 = arith.constant 5.000000e-01 : f32
    %454 = vector.broadcast %cst_210 : f32 to vector<8x128xf32>
    %455 = arith.addf %453, %454 : vector<8x128xf32>
    %456 = arith.mulf %445, %378 : vector<8x128xf32>
    %457 = arith.mulf %437, %447 : vector<8x128xf32>
    %458 = arith.addf %456, %457 : vector<8x128xf32>
    %459 = math.tanh %458 : vector<8x128xf32>
    %460 = arith.mulf %455, %459 : vector<8x128xf32>
    %461 = vector.extract_strided_slice %429 {offsets = [0, 0], sizes = [8, 128], strides = [1, 1]} : vector<8x512xf32> to vector<8x128xf32>
    %cst_211 = arith.constant 5.000000e-01 : f32
    %462 = vector.broadcast %cst_211 : f32 to vector<8x128xf32>
    %463 = arith.mulf %462, %461 : vector<8x128xf32>
    %464 = math.tanh %463 : vector<8x128xf32>
    %cst_212 = arith.constant 5.000000e-01 : f32
    %465 = vector.broadcast %cst_212 : f32 to vector<8x128xf32>
    %466 = arith.mulf %465, %464 : vector<8x128xf32>
    %cst_213 = arith.constant 5.000000e-01 : f32
    %467 = vector.broadcast %cst_213 : f32 to vector<8x128xf32>
    %468 = arith.addf %466, %467 : vector<8x128xf32>
    %469 = vector.extract_strided_slice %429 {offsets = [0, 128], sizes = [8, 128], strides = [1, 1]} : vector<8x512xf32> to vector<8x128xf32>
    %cst_214 = arith.constant 5.000000e-01 : f32
    %470 = vector.broadcast %cst_214 : f32 to vector<8x128xf32>
    %471 = arith.mulf %470, %469 : vector<8x128xf32>
    %472 = math.tanh %471 : vector<8x128xf32>
    %cst_215 = arith.constant 5.000000e-01 : f32
    %473 = vector.broadcast %cst_215 : f32 to vector<8x128xf32>
    %474 = arith.mulf %473, %472 : vector<8x128xf32>
    %cst_216 = arith.constant 5.000000e-01 : f32
    %475 = vector.broadcast %cst_216 : f32 to vector<8x128xf32>
    %476 = arith.addf %474, %475 : vector<8x128xf32>
    %477 = vector.extract_strided_slice %429 {offsets = [0, 256], sizes = [8, 128], strides = [1, 1]} : vector<8x512xf32> to vector<8x128xf32>
    %478 = math.tanh %477 : vector<8x128xf32>
    %479 = vector.extract_strided_slice %429 {offsets = [0, 384], sizes = [8, 128], strides = [1, 1]} : vector<8x512xf32> to vector<8x128xf32>
    %cst_217 = arith.constant 5.000000e-01 : f32
    %480 = vector.broadcast %cst_217 : f32 to vector<8x128xf32>
    %481 = arith.mulf %480, %479 : vector<8x128xf32>
    %482 = math.tanh %481 : vector<8x128xf32>
    %cst_218 = arith.constant 5.000000e-01 : f32
    %483 = vector.broadcast %cst_218 : f32 to vector<8x128xf32>
    %484 = arith.mulf %483, %482 : vector<8x128xf32>
    %cst_219 = arith.constant 5.000000e-01 : f32
    %485 = vector.broadcast %cst_219 : f32 to vector<8x128xf32>
    %486 = arith.addf %484, %485 : vector<8x128xf32>
    %487 = arith.mulf %476, %409 : vector<8x128xf32>
    %488 = arith.mulf %468, %478 : vector<8x128xf32>
    %489 = arith.addf %487, %488 : vector<8x128xf32>
    %490 = math.tanh %489 : vector<8x128xf32>
    %491 = arith.mulf %486, %490 : vector<8x128xf32>
    %c5_220 = arith.constant 5 : index
    %c0_221 = arith.constant 0 : index
    %c0_222 = arith.constant 0 : index
    %492 = vector.load %arg13[%c5_220, %c0_221, %c0_222] : memref<8x8x256xf32, #tpu.memory_space<vmem>>, vector<1x8x128xf32>
    %493 = vector.shape_cast %492 : vector<1x8x128xf32> to vector<8x128xf32>
    %494 = vector.shape_cast %460 : vector<8x128xf32> to vector<1x8x128xf32>
    tpu.vector_store %arg13[%c5_220, %c0_221, %c0_222], %494 {strides = array<i32>} : memref<8x8x256xf32, #tpu.memory_space<vmem>>, vector<1x8x128xf32>,
    %c2_223 = arith.constant 2 : index
    %c0_224 = arith.constant 0 : index
    %c128_225 = arith.constant 128 : index
    %495 = vector.load %arg13[%c2_223, %c0_224, %c128_225] : memref<8x8x256xf32, #tpu.memory_space<vmem>>, vector<1x8x128xf32>
    %496 = vector.shape_cast %495 : vector<1x8x128xf32> to vector<8x128xf32>
    %497 = vector.shape_cast %491 : vector<8x128xf32> to vector<1x8x128xf32>
    tpu.vector_store %arg13[%c2_223, %c0_224, %c128_225], %497 {strides = array<i32>} : memref<8x8x256xf32, #tpu.memory_space<vmem>>, vector<1x8x128xf32>,
    %c6_226 = arith.constant 6 : index
    %c0_227 = arith.constant 0 : index
    %c0_228 = arith.constant 0 : index
    %498 = vector.load %arg11[%c6_226, %c0_227, %c0_228] : memref<8x8x512xf32, #tpu.memory_space<vmem>>, vector<1x8x512xf32>
    %499 = vector.shape_cast %498 : vector<1x8x512xf32> to vector<8x512xf32>
    %500 = arith.truncf %460 : vector<8x128xf32> to vector<8x128xbf16>
    %c0_229 = arith.constant 0 : index
    %c0_230 = arith.constant 0 : index
    %501 = vector.load %arg3[%c0_229, %c0_230] : memref<128x512xbf16, #tpu.memory_space<vmem>>, vector<128x512xbf16>
    %cst_231 = arith.constant dense<0.000000e+00> : vector<8x512xf32>
    %502 = tpu.matmul %500, %501, %cst_231 {dimension_numbers = #tpu.dot_dimension_numbers<[1], [0], [0], [1], [0, 0, 1, 1], [], []>} : vector<8x128xbf16>, vector<128x512xbf16>, vector<8x512xf32> -> vector<8x512xf32>
    %503 = arith.addf %499, %502 : vector<8x512xf32>
    %c1_232 = arith.constant 1 : index
    %c0_233 = arith.constant 0 : index
    %c0_234 = arith.constant 0 : index
    %504 = vector.load %arg12[%c1_232, %c0_233, %c0_234] : memref<8x8x512xf32, #tpu.memory_space<vmem>>, vector<1x8x512xf32>
    %505 = vector.shape_cast %504 : vector<1x8x512xf32> to vector<8x512xf32>
    %506 = arith.truncf %491 : vector<8x128xf32> to vector<8x128xbf16>
    %c0_235 = arith.constant 0 : index
    %c0_236 = arith.constant 0 : index
    %507 = vector.load %arg6[%c0_235, %c0_236] : memref<128x512xbf16, #tpu.memory_space<vmem>>, vector<128x512xbf16>
    %cst_237 = arith.constant dense<0.000000e+00> : vector<8x512xf32>
    %508 = tpu.matmul %506, %507, %cst_237 {dimension_numbers = #tpu.dot_dimension_numbers<[1], [0], [0], [1], [0, 0, 1, 1], [], []>} : vector<8x128xbf16>, vector<128x512xbf16>, vector<8x512xf32> -> vector<8x512xf32>
    %509 = arith.addf %505, %508 : vector<8x512xf32>
    %510 = vector.extract_strided_slice %503 {offsets = [0, 0], sizes = [8, 128], strides = [1, 1]} : vector<8x512xf32> to vector<8x128xf32>
    %cst_238 = arith.constant 5.000000e-01 : f32
    %511 = vector.broadcast %cst_238 : f32 to vector<8x128xf32>
    %512 = arith.mulf %511, %510 : vector<8x128xf32>
    %513 = math.tanh %512 : vector<8x128xf32>
    %cst_239 = arith.constant 5.000000e-01 : f32
    %514 = vector.broadcast %cst_239 : f32 to vector<8x128xf32>
    %515 = arith.mulf %514, %513 : vector<8x128xf32>
    %cst_240 = arith.constant 5.000000e-01 : f32
    %516 = vector.broadcast %cst_240 : f32 to vector<8x128xf32>
    %517 = arith.addf %515, %516 : vector<8x128xf32>
    %518 = vector.extract_strided_slice %503 {offsets = [0, 128], sizes = [8, 128], strides = [1, 1]} : vector<8x512xf32> to vector<8x128xf32>
    %cst_241 = arith.constant 5.000000e-01 : f32
    %519 = vector.broadcast %cst_241 : f32 to vector<8x128xf32>
    %520 = arith.mulf %519, %518 : vector<8x128xf32>
    %521 = math.tanh %520 : vector<8x128xf32>
    %cst_242 = arith.constant 5.000000e-01 : f32
    %522 = vector.broadcast %cst_242 : f32 to vector<8x128xf32>
    %523 = arith.mulf %522, %521 : vector<8x128xf32>
    %cst_243 = arith.constant 5.000000e-01 : f32
    %524 = vector.broadcast %cst_243 : f32 to vector<8x128xf32>
    %525 = arith.addf %523, %524 : vector<8x128xf32>
    %526 = vector.extract_strided_slice %503 {offsets = [0, 256], sizes = [8, 128], strides = [1, 1]} : vector<8x512xf32> to vector<8x128xf32>
    %527 = math.tanh %526 : vector<8x128xf32>
    %528 = vector.extract_strided_slice %503 {offsets = [0, 384], sizes = [8, 128], strides = [1, 1]} : vector<8x512xf32> to vector<8x128xf32>
    %cst_244 = arith.constant 5.000000e-01 : f32
    %529 = vector.broadcast %cst_244 : f32 to vector<8x128xf32>
    %530 = arith.mulf %529, %528 : vector<8x128xf32>
    %531 = math.tanh %530 : vector<8x128xf32>
    %cst_245 = arith.constant 5.000000e-01 : f32
    %532 = vector.broadcast %cst_245 : f32 to vector<8x128xf32>
    %533 = arith.mulf %532, %531 : vector<8x128xf32>
    %cst_246 = arith.constant 5.000000e-01 : f32
    %534 = vector.broadcast %cst_246 : f32 to vector<8x128xf32>
    %535 = arith.addf %533, %534 : vector<8x128xf32>
    %536 = arith.mulf %525, %458 : vector<8x128xf32>
    %537 = arith.mulf %517, %527 : vector<8x128xf32>
    %538 = arith.addf %536, %537 : vector<8x128xf32>
    %539 = math.tanh %538 : vector<8x128xf32>
    %540 = arith.mulf %535, %539 : vector<8x128xf32>
    %541 = vector.extract_strided_slice %509 {offsets = [0, 0], sizes = [8, 128], strides = [1, 1]} : vector<8x512xf32> to vector<8x128xf32>
    %cst_247 = arith.constant 5.000000e-01 : f32
    %542 = vector.broadcast %cst_247 : f32 to vector<8x128xf32>
    %543 = arith.mulf %542, %541 : vector<8x128xf32>
    %544 = math.tanh %543 : vector<8x128xf32>
    %cst_248 = arith.constant 5.000000e-01 : f32
    %545 = vector.broadcast %cst_248 : f32 to vector<8x128xf32>
    %546 = arith.mulf %545, %544 : vector<8x128xf32>
    %cst_249 = arith.constant 5.000000e-01 : f32
    %547 = vector.broadcast %cst_249 : f32 to vector<8x128xf32>
    %548 = arith.addf %546, %547 : vector<8x128xf32>
    %549 = vector.extract_strided_slice %509 {offsets = [0, 128], sizes = [8, 128], strides = [1, 1]} : vector<8x512xf32> to vector<8x128xf32>
    %cst_250 = arith.constant 5.000000e-01 : f32
    %550 = vector.broadcast %cst_250 : f32 to vector<8x128xf32>
    %551 = arith.mulf %550, %549 : vector<8x128xf32>
    %552 = math.tanh %551 : vector<8x128xf32>
    %cst_251 = arith.constant 5.000000e-01 : f32
    %553 = vector.broadcast %cst_251 : f32 to vector<8x128xf32>
    %554 = arith.mulf %553, %552 : vector<8x128xf32>
    %cst_252 = arith.constant 5.000000e-01 : f32
    %555 = vector.broadcast %cst_252 : f32 to vector<8x128xf32>
    %556 = arith.addf %554, %555 : vector<8x128xf32>
    %557 = vector.extract_strided_slice %509 {offsets = [0, 256], sizes = [8, 128], strides = [1, 1]} : vector<8x512xf32> to vector<8x128xf32>
    %558 = math.tanh %557 : vector<8x128xf32>
    %559 = vector.extract_strided_slice %509 {offsets = [0, 384], sizes = [8, 128], strides = [1, 1]} : vector<8x512xf32> to vector<8x128xf32>
    %cst_253 = arith.constant 5.000000e-01 : f32
    %560 = vector.broadcast %cst_253 : f32 to vector<8x128xf32>
    %561 = arith.mulf %560, %559 : vector<8x128xf32>
    %562 = math.tanh %561 : vector<8x128xf32>
    %cst_254 = arith.constant 5.000000e-01 : f32
    %563 = vector.broadcast %cst_254 : f32 to vector<8x128xf32>
    %564 = arith.mulf %563, %562 : vector<8x128xf32>
    %cst_255 = arith.constant 5.000000e-01 : f32
    %565 = vector.broadcast %cst_255 : f32 to vector<8x128xf32>
    %566 = arith.addf %564, %565 : vector<8x128xf32>
    %567 = arith.mulf %556, %489 : vector<8x128xf32>
    %568 = arith.mulf %548, %558 : vector<8x128xf32>
    %569 = arith.addf %567, %568 : vector<8x128xf32>
    %570 = math.tanh %569 : vector<8x128xf32>
    %571 = arith.mulf %566, %570 : vector<8x128xf32>
    %c6_256 = arith.constant 6 : index
    %c0_257 = arith.constant 0 : index
    %c0_258 = arith.constant 0 : index
    %572 = vector.load %arg13[%c6_256, %c0_257, %c0_258] : memref<8x8x256xf32, #tpu.memory_space<vmem>>, vector<1x8x128xf32>
    %573 = vector.shape_cast %572 : vector<1x8x128xf32> to vector<8x128xf32>
    %574 = vector.shape_cast %540 : vector<8x128xf32> to vector<1x8x128xf32>
    tpu.vector_store %arg13[%c6_256, %c0_257, %c0_258], %574 {strides = array<i32>} : memref<8x8x256xf32, #tpu.memory_space<vmem>>, vector<1x8x128xf32>,
    %c1_259 = arith.constant 1 : index
    %c0_260 = arith.constant 0 : index
    %c128_261 = arith.constant 128 : index
    %575 = vector.load %arg13[%c1_259, %c0_260, %c128_261] : memref<8x8x256xf32, #tpu.memory_space<vmem>>, vector<1x8x128xf32>
    %576 = vector.shape_cast %575 : vector<1x8x128xf32> to vector<8x128xf32>
    %577 = vector.shape_cast %571 : vector<8x128xf32> to vector<1x8x128xf32>
    tpu.vector_store %arg13[%c1_259, %c0_260, %c128_261], %577 {strides = array<i32>} : memref<8x8x256xf32, #tpu.memory_space<vmem>>, vector<1x8x128xf32>,
    %c7_262 = arith.constant 7 : index
    %c0_263 = arith.constant 0 : index
    %c0_264 = arith.constant 0 : index
    %578 = vector.load %arg11[%c7_262, %c0_263, %c0_264] : memref<8x8x512xf32, #tpu.memory_space<vmem>>, vector<1x8x512xf32>
    %579 = vector.shape_cast %578 : vector<1x8x512xf32> to vector<8x512xf32>
    %580 = arith.truncf %540 : vector<8x128xf32> to vector<8x128xbf16>
    %c0_265 = arith.constant 0 : index
    %c0_266 = arith.constant 0 : index
    %581 = vector.load %arg3[%c0_265, %c0_266] : memref<128x512xbf16, #tpu.memory_space<vmem>>, vector<128x512xbf16>
    %cst_267 = arith.constant dense<0.000000e+00> : vector<8x512xf32>
    %582 = tpu.matmul %580, %581, %cst_267 {dimension_numbers = #tpu.dot_dimension_numbers<[1], [0], [0], [1], [0, 0, 1, 1], [], []>} : vector<8x128xbf16>, vector<128x512xbf16>, vector<8x512xf32> -> vector<8x512xf32>
    %583 = arith.addf %579, %582 : vector<8x512xf32>
    %c0_268 = arith.constant 0 : index
    %c0_269 = arith.constant 0 : index
    %c0_270 = arith.constant 0 : index
    %584 = vector.load %arg12[%c0_268, %c0_269, %c0_270] : memref<8x8x512xf32, #tpu.memory_space<vmem>>, vector<1x8x512xf32>
    %585 = vector.shape_cast %584 : vector<1x8x512xf32> to vector<8x512xf32>
    %586 = arith.truncf %571 : vector<8x128xf32> to vector<8x128xbf16>
    %c0_271 = arith.constant 0 : index
    %c0_272 = arith.constant 0 : index
    %587 = vector.load %arg6[%c0_271, %c0_272] : memref<128x512xbf16, #tpu.memory_space<vmem>>, vector<128x512xbf16>
    %cst_273 = arith.constant dense<0.000000e+00> : vector<8x512xf32>
    %588 = tpu.matmul %586, %587, %cst_273 {dimension_numbers = #tpu.dot_dimension_numbers<[1], [0], [0], [1], [0, 0, 1, 1], [], []>} : vector<8x128xbf16>, vector<128x512xbf16>, vector<8x512xf32> -> vector<8x512xf32>
    %589 = arith.addf %585, %588 : vector<8x512xf32>
    %590 = vector.extract_strided_slice %583 {offsets = [0, 0], sizes = [8, 128], strides = [1, 1]} : vector<8x512xf32> to vector<8x128xf32>
    %cst_274 = arith.constant 5.000000e-01 : f32
    %591 = vector.broadcast %cst_274 : f32 to vector<8x128xf32>
    %592 = arith.mulf %591, %590 : vector<8x128xf32>
    %593 = math.tanh %592 : vector<8x128xf32>
    %cst_275 = arith.constant 5.000000e-01 : f32
    %594 = vector.broadcast %cst_275 : f32 to vector<8x128xf32>
    %595 = arith.mulf %594, %593 : vector<8x128xf32>
    %cst_276 = arith.constant 5.000000e-01 : f32
    %596 = vector.broadcast %cst_276 : f32 to vector<8x128xf32>
    %597 = arith.addf %595, %596 : vector<8x128xf32>
    %598 = vector.extract_strided_slice %583 {offsets = [0, 128], sizes = [8, 128], strides = [1, 1]} : vector<8x512xf32> to vector<8x128xf32>
    %cst_277 = arith.constant 5.000000e-01 : f32
    %599 = vector.broadcast %cst_277 : f32 to vector<8x128xf32>
    %600 = arith.mulf %599, %598 : vector<8x128xf32>
    %601 = math.tanh %600 : vector<8x128xf32>
    %cst_278 = arith.constant 5.000000e-01 : f32
    %602 = vector.broadcast %cst_278 : f32 to vector<8x128xf32>
    %603 = arith.mulf %602, %601 : vector<8x128xf32>
    %cst_279 = arith.constant 5.000000e-01 : f32
    %604 = vector.broadcast %cst_279 : f32 to vector<8x128xf32>
    %605 = arith.addf %603, %604 : vector<8x128xf32>
    %606 = vector.extract_strided_slice %583 {offsets = [0, 256], sizes = [8, 128], strides = [1, 1]} : vector<8x512xf32> to vector<8x128xf32>
    %607 = math.tanh %606 : vector<8x128xf32>
    %608 = vector.extract_strided_slice %583 {offsets = [0, 384], sizes = [8, 128], strides = [1, 1]} : vector<8x512xf32> to vector<8x128xf32>
    %cst_280 = arith.constant 5.000000e-01 : f32
    %609 = vector.broadcast %cst_280 : f32 to vector<8x128xf32>
    %610 = arith.mulf %609, %608 : vector<8x128xf32>
    %611 = math.tanh %610 : vector<8x128xf32>
    %cst_281 = arith.constant 5.000000e-01 : f32
    %612 = vector.broadcast %cst_281 : f32 to vector<8x128xf32>
    %613 = arith.mulf %612, %611 : vector<8x128xf32>
    %cst_282 = arith.constant 5.000000e-01 : f32
    %614 = vector.broadcast %cst_282 : f32 to vector<8x128xf32>
    %615 = arith.addf %613, %614 : vector<8x128xf32>
    %616 = arith.mulf %605, %538 : vector<8x128xf32>
    %617 = arith.mulf %597, %607 : vector<8x128xf32>
    %618 = arith.addf %616, %617 : vector<8x128xf32>
    %619 = math.tanh %618 : vector<8x128xf32>
    %620 = arith.mulf %615, %619 : vector<8x128xf32>
    %621 = vector.extract_strided_slice %589 {offsets = [0, 0], sizes = [8, 128], strides = [1, 1]} : vector<8x512xf32> to vector<8x128xf32>
    %cst_283 = arith.constant 5.000000e-01 : f32
    %622 = vector.broadcast %cst_283 : f32 to vector<8x128xf32>
    %623 = arith.mulf %622, %621 : vector<8x128xf32>
    %624 = math.tanh %623 : vector<8x128xf32>
    %cst_284 = arith.constant 5.000000e-01 : f32
    %625 = vector.broadcast %cst_284 : f32 to vector<8x128xf32>
    %626 = arith.mulf %625, %624 : vector<8x128xf32>
    %cst_285 = arith.constant 5.000000e-01 : f32
    %627 = vector.broadcast %cst_285 : f32 to vector<8x128xf32>
    %628 = arith.addf %626, %627 : vector<8x128xf32>
    %629 = vector.extract_strided_slice %589 {offsets = [0, 128], sizes = [8, 128], strides = [1, 1]} : vector<8x512xf32> to vector<8x128xf32>
    %cst_286 = arith.constant 5.000000e-01 : f32
    %630 = vector.broadcast %cst_286 : f32 to vector<8x128xf32>
    %631 = arith.mulf %630, %629 : vector<8x128xf32>
    %632 = math.tanh %631 : vector<8x128xf32>
    %cst_287 = arith.constant 5.000000e-01 : f32
    %633 = vector.broadcast %cst_287 : f32 to vector<8x128xf32>
    %634 = arith.mulf %633, %632 : vector<8x128xf32>
    %cst_288 = arith.constant 5.000000e-01 : f32
    %635 = vector.broadcast %cst_288 : f32 to vector<8x128xf32>
    %636 = arith.addf %634, %635 : vector<8x128xf32>
    %637 = vector.extract_strided_slice %589 {offsets = [0, 256], sizes = [8, 128], strides = [1, 1]} : vector<8x512xf32> to vector<8x128xf32>
    %638 = math.tanh %637 : vector<8x128xf32>
    %639 = vector.extract_strided_slice %589 {offsets = [0, 384], sizes = [8, 128], strides = [1, 1]} : vector<8x512xf32> to vector<8x128xf32>
    %cst_289 = arith.constant 5.000000e-01 : f32
    %640 = vector.broadcast %cst_289 : f32 to vector<8x128xf32>
    %641 = arith.mulf %640, %639 : vector<8x128xf32>
    %642 = math.tanh %641 : vector<8x128xf32>
    %cst_290 = arith.constant 5.000000e-01 : f32
    %643 = vector.broadcast %cst_290 : f32 to vector<8x128xf32>
    %644 = arith.mulf %643, %642 : vector<8x128xf32>
    %cst_291 = arith.constant 5.000000e-01 : f32
    %645 = vector.broadcast %cst_291 : f32 to vector<8x128xf32>
    %646 = arith.addf %644, %645 : vector<8x128xf32>
    %647 = arith.mulf %636, %569 : vector<8x128xf32>
    %648 = arith.mulf %628, %638 : vector<8x128xf32>
    %649 = arith.addf %647, %648 : vector<8x128xf32>
    %650 = math.tanh %649 : vector<8x128xf32>
    %651 = arith.mulf %646, %650 : vector<8x128xf32>
    %c7_292 = arith.constant 7 : index
    %c0_293 = arith.constant 0 : index
    %c0_294 = arith.constant 0 : index
    %652 = vector.load %arg13[%c7_292, %c0_293, %c0_294] : memref<8x8x256xf32, #tpu.memory_space<vmem>>, vector<1x8x128xf32>
    %653 = vector.shape_cast %652 : vector<1x8x128xf32> to vector<8x128xf32>
    %654 = vector.shape_cast %620 : vector<8x128xf32> to vector<1x8x128xf32>
    tpu.vector_store %arg13[%c7_292, %c0_293, %c0_294], %654 {strides = array<i32>} : memref<8x8x256xf32, #tpu.memory_space<vmem>>, vector<1x8x128xf32>,
    %c0_295 = arith.constant 0 : index
    %c0_296 = arith.constant 0 : index
    %c128_297 = arith.constant 128 : index
    %655 = vector.load %arg13[%c0_295, %c0_296, %c128_297] : memref<8x8x256xf32, #tpu.memory_space<vmem>>, vector<1x8x128xf32>
    %656 = vector.shape_cast %655 : vector<1x8x128xf32> to vector<8x128xf32>
    %657 = vector.shape_cast %651 : vector<8x128xf32> to vector<1x8x128xf32>
    tpu.vector_store %arg13[%c0_295, %c0_296, %c128_297], %657 {strides = array<i32>} : memref<8x8x256xf32, #tpu.memory_space<vmem>>, vector<1x8x128xf32>,
    %c0_298 = arith.constant 0 : index
    %c0_299 = arith.constant 0 : index
    %c0_300 = arith.constant 0 : index
    %658 = vector.load %arg13[%c0_298, %c0_299, %c0_300] : memref<8x8x256xf32, #tpu.memory_space<vmem>>, vector<8x8x256xf32>
    %659 = vector.shape_cast %658 : vector<8x8x256xf32> to vector<64x256xf32>
    %660 = arith.truncf %659 : vector<64x256xf32> to vector<64x256xbf16>
    %c0_301 = arith.constant 0 : index
    %c0_302 = arith.constant 0 : index
    %661 = vector.load %arg8[%c0_301, %c0_302] : memref<256x128xbf16, #tpu.memory_space<vmem>>, vector<256x128xbf16>
    %cst_303 = arith.constant dense<0.000000e+00> : vector<64x128xf32>
    %662 = tpu.matmul %660, %661, %cst_303 {dimension_numbers = #tpu.dot_dimension_numbers<[1], [0], [0], [1], [0, 0, 1, 1], [], []>} : vector<64x256xbf16>, vector<256x128xbf16>, vector<64x128xf32> -> vector<64x128xf32>
    %c0_304 = arith.constant 0 : index
    %c0_305 = arith.constant 0 : index
    %663 = vector.load %arg9[%c0_304, %c0_305] : memref<1x128xf32, #tpu.memory_space<vmem>>, vector<1x128xf32>
    %664 = vector.broadcast %663 : vector<1x128xf32> to vector<64x128xf32>
    %665 = arith.addf %662, %664 : vector<64x128xf32>
    %666 = vector.shape_cast %665 : vector<64x128xf32> to vector<8x8x128xf32>
    %c0_306 = arith.constant 0 : index
    %c0_307 = arith.constant 0 : index
    %c0_308 = arith.constant 0 : index
    %667 = vector.load %arg10[%c0_306, %c0_307, %c0_308] : memref<8x8x128xf32, #tpu.memory_space<vmem>>, vector<8x8x128xf32>
    tpu.vector_store %arg10[%c0_306, %c0_307, %c0_308], %666 {strides = array<i32>} : memref<8x8x128xf32, #tpu.memory_space<vmem>>, vector<8x8x128xf32>,
    return
  }
  func.func @transform_0(%arg0: i32) -> (i32, i32, i32) {
    %c0_i32 = arith.constant 0 : i32
    %c0_i32_0 = arith.constant 0 : i32
    %c0_i32_1 = arith.constant 0 : i32
    return %c0_i32, %arg0, %c0_i32_0 : i32, i32, i32
  }
  func.func @transform_1(%arg0: i32) -> (i32, i32) {
    %c0_i32 = arith.constant 0 : i32
    %c0_i32_0 = arith.constant 0 : i32
    %c0_i32_1 = arith.constant 0 : i32
    return %c0_i32, %c0_i32_0 : i32, i32
  }
  func.func @transform_2(%arg0: i32) -> (i32, i32) {
    %c0_i32 = arith.constant 0 : i32
    %c0_i32_0 = arith.constant 0 : i32
    %c0_i32_1 = arith.constant 0 : i32
    return %c0_i32, %c0_i32_0 : i32, i32
  }
  func.func @transform_3(%arg0: i32) -> (i32, i32) {
    %c0_i32 = arith.constant 0 : i32
    %c0_i32_0 = arith.constant 0 : i32
    %c0_i32_1 = arith.constant 0 : i32
    return %c0_i32, %c0_i32_0 : i32, i32
  }
  func.func @transform_4(%arg0: i32) -> (i32, i32) {
    %c0_i32 = arith.constant 0 : i32
    %c0_i32_0 = arith.constant 0 : i32
    %c0_i32_1 = arith.constant 0 : i32
    return %c0_i32, %c0_i32_0 : i32, i32
  }
  func.func @transform_5(%arg0: i32) -> (i32, i32) {
    %c0_i32 = arith.constant 0 : i32
    %c0_i32_0 = arith.constant 0 : i32
    %c0_i32_1 = arith.constant 0 : i32
    return %c0_i32, %c0_i32_0 : i32, i32
  }
  func.func @transform_6(%arg0: i32) -> (i32, i32) {
    %c0_i32 = arith.constant 0 : i32
    %c0_i32_0 = arith.constant 0 : i32
    %c0_i32_1 = arith.constant 0 : i32
    return %c0_i32, %c0_i32_0 : i32, i32
  }
  func.func @transform_7(%arg0: i32) -> (i32, i32) {
    %c0_i32 = arith.constant 0 : i32
    %c0_i32_0 = arith.constant 0 : i32
    %c0_i32_1 = arith.constant 0 : i32
    return %c0_i32, %c0_i32_0 : i32, i32
  }
  func.func @transform_8(%arg0: i32) -> (i32, i32) {
    %c0_i32 = arith.constant 0 : i32
    %c0_i32_0 = arith.constant 0 : i32
    %c0_i32_1 = arith.constant 0 : i32
    return %c0_i32, %c0_i32_0 : i32, i32
  }
  func.func @transform_9(%arg0: i32) -> (i32, i32, i32) {
    %c0_i32 = arith.constant 0 : i32
    %c0_i32_0 = arith.constant 0 : i32
    %c0_i32_1 = arith.constant 0 : i32
    return %c0_i32, %arg0, %c0_i32_0 : i32, i32, i32
  }
}

</mosaic_0001>

<llo_original>
// kernel: tpu_custom_call.1
$region0: #{tpu_custom_call.1}
  #allocation0 [shape = 'u32[]', space=smem, size = 0x4, offset = 0x4, fixed_abs, tag = 'smem constant byte address 0x4 - core index']
  #allocation1 [shape = 'u32[144,128]{1,0:T(1,128)}', space=vmem, size = 0x12000, scoped, tag = 'internal scratch']
  #allocation2 [shape = 'f32[8,8,512]{2,1,0:T(8,128)}', space=vmem, size = 0x20000, scoped, tag = 'scratch operand']
  #allocation3 [shape = 'f32[8,8,512]{2,1,0:T(8,128)}', space=vmem, size = 0x20000, scoped, tag = 'scratch operand']
  #allocation4 [shape = 'f32[8,8,256]{2,1,0:T(8,128)}', space=vmem, size = 0x10000, scoped, tag = 'scratch operand']
  %s0 = inlined_call_operand.hbm [shape: f32[8,8,128], index: 0, kind: input, shape index: {}]
  %s1 = inlined_call_operand.hbm [shape: bf16[128,512], index: 1, kind: input, shape index: {}]
  %s2 = inlined_call_operand.hbm [shape: bf16[128,512], index: 2, kind: input, shape index: {}]
  %s3 = inlined_call_operand.vmem [shape: f32[1,512], index: 3, kind: input, shape index: {}]
  %s4 = inlined_call_operand.hbm [shape: bf16[128,512], index: 4, kind: input, shape index: {}]
  %s5 = inlined_call_operand.hbm [shape: bf16[128,512], index: 5, kind: input, shape index: {}]
  %s6 = inlined_call_operand.vmem [shape: f32[1,512], index: 6, kind: input, shape index: {}]
  %s7 = inlined_call_operand.hbm [shape: bf16[256,128], index: 7, kind: input, shape index: {}]
  %s8 = inlined_call_operand.vmem [shape: f32[1,128], index: 8, kind: input, shape index: {}]
  %s9 = inlined_call_operand.hbm [shape: f32[8,8,128], index: 9, kind: output, shape index: {}]
  %s10 = sld [smem:[#allocation0]]
  $region70: #{tpu_custom_call.1} parent=0
    _
  %s12 = ssub.s32 1, %s10
  %s13 = scalar_select 0, %s12, %s10
  $region1: #{tpu_custom_call.1} parent=0
    #allocation5 [shape = 'u8[32768]{0}', space=vmem, size = 0x8000, scoped, tag = 'input window, operand 0, single buffered']
    #allocation6 [shape = 's32[1]{0}', space=sflag, size = 0x4, scoped, tag = 'scoped memory for tpu_custom_call.1']
    #allocation7 [shape = 's32[1]{0}', space=sflag, size = 0x4, scoped, tag = 'scoped memory for tpu_custom_call.1']
    #allocation8 [shape = 'u8[131072]{0}', space=vmem, size = 0x20000, scoped, tag = 'input window, operand 1, single buffered']
    #allocation9 [shape = 's32[1]{0}', space=sflag, size = 0x4, scoped, tag = 'scoped memory for tpu_custom_call.1']
    #allocation10 [shape = 'u8[131072]{0}', space=vmem, size = 0x20000, scoped, tag = 'input window, operand 2, single buffered']
    #allocation11 [shape = 'u8[131072]{0}', space=vmem, size = 0x20000, scoped, tag = 'input window, operand 4, single buffered']
    #allocation12 [shape = 's32[1]{0}', space=sflag, size = 0x4, scoped, tag = 'scoped memory for tpu_custom_call.1']
    #allocation13 [shape = 'u8[131072]{0}', space=vmem, size = 0x20000, scoped, tag = 'input window, operand 5, single buffered']
    #allocation14 [shape = 'u8[65536]{0}', space=vmem, size = 0x10000, scoped, tag = 'input window, operand 7, single buffered']
    #allocation15 [shape = 's32[1]{0}', space=sflag, size = 0x4, scoped, tag = 'scoped memory for tpu_custom_call.1']
    #allocation16 [shape = 'u8[32768]{0}', space=vmem, size = 0x8000, scoped, tag = 'output window, operand 0, single buffered']
    %14 = vsyncpa [#allocation6], 0
    %15 = vsyncpa [#allocation9], 0
    %16 = vsyncpa [#allocation12], 0
    %17 = vsyncpa [#allocation15], 0
    %18 = vsyncpa [#allocation7], 0
    // Predicated region
    $region2: #{tpu_custom_call.1} parent=1 // pred_check
      _
    $region3: #{tpu_custom_call.1} parent=1 // pred_check_branch
      %20 = sbr.rel (0) target = $region5
    $region4: #{tpu_custom_call.1} parent=1 // pred_region
      %s22 = ssub.s32 1024, 1024
      %23 = vsyncadd [#allocation6], %s22
      %s24 = sshll.u32 [#allocation5], 4
      %s25 = int_to_ptr.vmem [resolvable:$true] %s24
      %30 = dma.hbm_to_vmem [thread:$0]  %s0, 1024, %s25, [#allocation6], 128, 128, 8
    $region5: #{tpu_custom_call.1} parent=1 // pred_fallthru
      _
    // Predicated region
    $region6: #{tpu_custom_call.1} parent=1 // pred_check
      _
    $region7: #{tpu_custom_call.1} parent=1 // pred_check_branch
      %32 = sbr.rel (0) target = $region9
    $region8: #{tpu_custom_call.1} parent=1 // pred_region
      %s34 = ssub.s32 4096, 4096
      %35 = vsyncadd [#allocation9], %s34
      %s36 = sshll.u32 [#allocation8], 4
      %s37 = int_to_ptr.vmem [resolvable:$true] %s36
      %42 = dma.hbm_to_vmem [thread:$0]  %s1, 4096, %s37, [#allocation9], 256, 256, 16
    $region9: #{tpu_custom_call.1} parent=1 // pred_fallthru
      _
    // Predicated region
    $region10: #{tpu_custom_call.1} parent=1 // pred_check
      _
    $region11: #{tpu_custom_call.1} parent=1 // pred_check_branch
      %44 = sbr.rel (0) target = $region13
    $region12: #{tpu_custom_call.1} parent=1 // pred_region
      %s46 = ssub.s32 4096, 4096
      %47 = vsyncadd [#allocation9], %s46
      %s48 = sshll.u32 [#allocation10], 4
      %s49 = int_to_ptr.vmem [resolvable:$true] %s48
      %54 = dma.hbm_to_vmem [thread:$0]  %s2, 4096, %s49, [#allocation9], 256, 256, 16
    $region13: #{tpu_custom_call.1} parent=1 // pred_fallthru
      _
    // Predicated region
    $region14: #{tpu_custom_call.1} parent=1 // pred_check
      _
    $region15: #{tpu_custom_call.1} parent=1 // pred_check_branch
      %56 = sbr.rel (0) target = $region17
    $region16: #{tpu_custom_call.1} parent=1 // pred_region
      _
    $region17: #{tpu_custom_call.1} parent=1 // pred_fallthru
      _
    // Predicated region
    $region18: #{tpu_custom_call.1} parent=1 // pred_check
      _
    $region19: #{tpu_custom_call.1} parent=1 // pred_check_branch
      %58 = sbr.rel (0) target = $region21
    $region20: #{tpu_custom_call.1} parent=1 // pred_region
      %s60 = ssub.s32 4096, 4096
      %61 = vsyncadd [#allocation12], %s60
      %s62 = sshll.u32 [#allocation11], 4
      %s63 = int_to_ptr.vmem [resolvable:$true] %s62
      %68 = dma.hbm_to_vmem [thread:$0]  %s4, 4096, %s63, [#allocation12], 256, 256, 16
    $region21: #{tpu_custom_call.1} parent=1 // pred_fallthru
      _
    // Predicated region
    $region22: #{tpu_custom_call.1} parent=1 // pred_check
      _
    $region23: #{tpu_custom_call.1} parent=1 // pred_check_branch
      %70 = sbr.rel (0) target = $region25
    $region24: #{tpu_custom_call.1} parent=1 // pred_region
      %s72 = ssub.s32 4096, 4096
      %73 = vsyncadd [#allocation12], %s72
      %s74 = sshll.u32 [#allocation13], 4
      %s75 = int_to_ptr.vmem [resolvable:$true] %s74
      %80 = dma.hbm_to_vmem [thread:$0]  %s5, 4096, %s75, [#allocation12], 256, 256, 16
    $region25: #{tpu_custom_call.1} parent=1 // pred_fallthru
      _
    // Predicated region
    $region26: #{tpu_custom_call.1} parent=1 // pred_check
      _
    $region27: #{tpu_custom_call.1} parent=1 // pred_check_branch
      %82 = sbr.rel (0) target = $region29
    $region28: #{tpu_custom_call.1} parent=1 // pred_region
      _
    $region29: #{tpu_custom_call.1} parent=1 // pred_fallthru
      _
    // Predicated region
    $region30: #{tpu_custom_call.1} parent=1 // pred_check
      _
    $region31: #{tpu_custom_call.1} parent=1 // pred_check_branch
      %84 = sbr.rel (0) target = $region33
    $region32: #{tpu_custom_call.1} parent=1 // pred_region
      %s86 = ssub.s32 2048, 2048
      %87 = vsyncadd [#allocation15], %s86
      %s88 = sshll.u32 [#allocation14], 4
      %s89 = int_to_ptr.vmem [resolvable:$true] %s88
      %94 = dma.hbm_to_vmem [thread:$0]  %s7, 2048, %s89, [#allocation15], 64, 64, 4
    $region33: #{tpu_custom_call.1} parent=1 // pred_fallthru
      _
    // Predicated region
    $region34: #{tpu_custom_call.1} parent=1 // pred_check
      _
    $region35: #{tpu_custom_call.1} parent=1 // pred_check_branch
      %96 = sbr.rel (0) target = $region37
    $region36: #{tpu_custom_call.1} parent=1 // pred_region
      _
    $region37: #{tpu_custom_call.1} parent=1 // pred_fallthru
      _
    // Predicated region
    $region38: #{tpu_custom_call.1} parent=1 // pred_check
      _
    $region39: #{tpu_custom_call.1} parent=1 // pred_check_branch
      %98 = sbr.rel (0) target = $region41
    $region40: #{tpu_custom_call.1} parent=1 // pred_region
      %99 = dma.done [#allocation6], 1024
    $region41: #{tpu_custom_call.1} parent=1 // pred_fallthru
      _
    // Predicated region
    $region42: #{tpu_custom_call.1} parent=1 // pred_check
      _
    $region43: #{tpu_custom_call.1} parent=1 // pred_check_branch
      %101 = sbr.rel (0) target = $region45
    $region44: #{tpu_custom_call.1} parent=1 // pred_region
      %102 = dma.done [#allocation9], 4096
    $region45: #{tpu_custom_call.1} parent=1 // pred_fallthru
      _
    // Predicated region
    $region46: #{tpu_custom_call.1} parent=1 // pred_check
      _
    $region47: #{tpu_custom_call.1} parent=1 // pred_check_branch
      %104 = sbr.rel (0) target = $region49
    $region48: #{tpu_custom_call.1} parent=1 // pred_region
      %105 = dma.done [#allocation9], 4096
    $region49: #{tpu_custom_call.1} parent=1 // pred_fallthru
      _
    // Predicated region
    $region50: #{tpu_custom_call.1} parent=1 // pred_check
      _
    $region51: #{tpu_custom_call.1} parent=1 // pred_check_branch
      %107 = sbr.rel (0) target = $region53
    $region52: #{tpu_custom_call.1} parent=1 // pred_region
      %108 = dma.done [#allocation12], 4096
    $region53: #{tpu_custom_call.1} parent=1 // pred_fallthru
      _
    // Predicated region
    $region54: #{tpu_custom_call.1} parent=1 // pred_check
      _
    $region55: #{tpu_custom_call.1} parent=1 // pred_check_branch
      %110 = sbr.rel (0) target = $region57
    $region56: #{tpu_custom_call.1} parent=1 // pred_region
      %111 = dma.done [#allocation12], 4096
    $region57: #{tpu_custom_call.1} parent=1 // pred_fallthru
      _
    // Predicated region
    $region58: #{tpu_custom_call.1} parent=1 // pred_check
      _
    $region59: #{tpu_custom_call.1} parent=1 // pred_check_branch
      %113 = sbr.rel (0) target = $region61
    $region60: #{tpu_custom_call.1} parent=1 // pred_region
      %114 = dma.done [#allocation15], 2048
    $region61: #{tpu_custom_call.1} parent=1 // pred_fallthru
      _
    %v116 = vld [vmem:[#allocation5] sm:$0xff]
    %v117 = vld [vmem:[#allocation5 + $0x8] sm:$0xff]
    %v118 = vld [vmem:[#allocation5 + $0x10] sm:$0xff]
    %v119 = vld [vmem:[#allocation5 + $0x18] sm:$0xff]
    %v120 = vld [vmem:[#allocation5 + $0x20] sm:$0xff]
    %v121 = vld [vmem:[#allocation5 + $0x28] sm:$0xff]
    %v122 = vld [vmem:[#allocation5 + $0x30] sm:$0xff]
    %v123 = vld [vmem:[#allocation5 + $0x38] sm:$0xff]
    %v124 = vpack.c.bf16 %v117, %v116
    %v125 = vpack.c.bf16 %v119, %v118
    %v126 = vpack.c.bf16 %v121, %v120
    %v127 = vpack.c.bf16 %v123, %v122
    %v128 = vld [vmem:[#allocation8] sm:$0xff]
    %v129 = vld [vmem:[#allocation8 + $0x8] sm:$0xff]
    %v130 = vld [vmem:[#allocation8 + $0x10] sm:$0xff]
    %v131 = vld [vmem:[#allocation8 + $0x18] sm:$0xff]
    %v132 = vld [vmem:[#allocation8 + $0x20] sm:$0xff]
    %v133 = vld [vmem:[#allocation8 + $0x28] sm:$0xff]
    %v134 = vld [vmem:[#allocation8 + $0x30] sm:$0xff]
    %v135 = vld [vmem:[#allocation8 + $0x38] sm:$0xff]
    %v136 = vld [vmem:[#allocation8 + $0x40] sm:$0xff]
    %v137 = vld [vmem:[#allocation8 + $0x48] sm:$0xff]
    %v138 = vld [vmem:[#allocation8 + $0x50] sm:$0xff]
    %v139 = vld [vmem:[#allocation8 + $0x58] sm:$0xff]
    %v140 = vld [vmem:[#allocation8 + $0x60] sm:$0xff]
    %v141 = vld [vmem:[#allocation8 + $0x68] sm:$0xff]
    %v142 = vld [vmem:[#allocation8 + $0x70] sm:$0xff]
    %v143 = vld [vmem:[#allocation8 + $0x78] sm:$0xff]
    %v144 = vld [vmem:[#allocation8 + $0x80] sm:$0xff]
    %v145 = vld [vmem:[#allocation8 + $0x88] sm:$0xff]
    %v146 = vld [vmem:[#allocation8 + $0x90] sm:$0xff]
    %v147 = vld [vmem:[#allocation8 + $0x98] sm:$0xff]
    %v148 = vld [vmem:[#allocation8 + $0xa0] sm:$0xff]
    %v149 = vld [vmem:[#allocation8 + $0xa8] sm:$0xff]
    %v150 = vld [vmem:[#allocation8 + $0xb0] sm:$0xff]
    %v151 = vld [vmem:[#allocation8 + $0xb8] sm:$0xff]
    %v152 = vld [vmem:[#allocation8 + $0xc0] sm:$0xff]
    %v153 = vld [vmem:[#allocation8 + $0xc8] sm:$0xff]
    %v154 = vld [vmem:[#allocation8 + $0xd0] sm:$0xff]
    %v155 = vld [vmem:[#allocation8 + $0xd8] sm:$0xff]
    %v156 = vld [vmem:[#allocation8 + $0xe0] sm:$0xff]
    %v157 = vld [vmem:[#allocation8 + $0xe8] sm:$0xff]
    %v158 = vld [vmem:[#allocation8 + $0xf0] sm:$0xff]
    %v159 = vld [vmem:[#allocation8 + $0xf8] sm:$0xff]
    %v160 = vld [vmem:[%s3] sm:$0xf]
    %v162 = vlaneseq
    %v163 = vshrl.u32 %v162, 7
    %v164 = vsub.s32 0, %v163
    %v165 = vrot.slane %v160, %v164
    %v166 = vlaneseq
    %v167 = vshrl.u32 %v166, 7
    %v168 = vsub.s32 1, %v167
    %v169 = vrot.slane %v160, %v168
    %v170 = vlaneseq
    %v171 = vshrl.u32 %v170, 7
    %v172 = vsub.s32 2, %v171
    %v173 = vrot.slane %v160, %v172
    %v174 = vlaneseq
    %v175 = vshrl.u32 %v174, 7
    %v176 = vsub.s32 3, %v175
    %v177 = vrot.slane %v160, %v176
    %v214 = vunpack.c.l.b16 %v128
    %v215 = vunpack.c.h.b16 %v128
    %v216 = vunpack.c.l.b16 %v129
    %v217 = vunpack.c.h.b16 %v129
    %v218 = vunpack.c.l.b16 %v130
    %v219 = vunpack.c.h.b16 %v130
    %v220 = vunpack.c.l.b16 %v131
    %v221 = vunpack.c.h.b16 %v131
    %v222 = vunpack.c.l.b16 %v132
    %v223 = vunpack.c.h.b16 %v132
    %v224 = vunpack.c.l.b16 %v133
    %v225 = vunpack.c.h.b16 %v133
    %v226 = vunpack.c.l.b16 %v134
    %v227 = vunpack.c.h.b16 %v134
    %v228 = vunpack.c.l.b16 %v135
    %v229 = vunpack.c.h.b16 %v135
    %v230 = vunpack.c.l.b16 %v136
    %v231 = vunpack.c.h.b16 %v136
    %v232 = vunpack.c.l.b16 %v137
    %v233 = vunpack.c.h.b16 %v137
    %v234 = vunpack.c.l.b16 %v138
    %v235 = vunpack.c.h.b16 %v138
    %v236 = vunpack.c.l.b16 %v139
    %v237 = vunpack.c.h.b16 %v139
    %v238 = vunpack.c.l.b16 %v140
    %v239 = vunpack.c.h.b16 %v140
    %v240 = vunpack.c.l.b16 %v141
    %v241 = vunpack.c.h.b16 %v141
    %v242 = vunpack.c.l.b16 %v142
    %v243 = vunpack.c.h.b16 %v142
    %v244 = vunpack.c.l.b16 %v143
    %v245 = vunpack.c.h.b16 %v143
    %v246 = vunpack.c.l.b16 %v144
    %v247 = vunpack.c.h.b16 %v144
    %v248 = vunpack.c.l.b16 %v145
    %v249 = vunpack.c.h.b16 %v145
    %v250 = vunpack.c.l.b16 %v146
    %v251 = vunpack.c.h.b16 %v146
    %v252 = vunpack.c.l.b16 %v147
    %v253 = vunpack.c.h.b16 %v147
    %v254 = vunpack.c.l.b16 %v148
    %v255 = vunpack.c.h.b16 %v148
    %v256 = vunpack.c.l.b16 %v149
    %v257 = vunpack.c.h.b16 %v149
    %v258 = vunpack.c.l.b16 %v150
    %v259 = vunpack.c.h.b16 %v150
    %v260 = vunpack.c.l.b16 %v151
    %v261 = vunpack.c.h.b16 %v151
    %v262 = vunpack.c.l.b16 %v152
    %v263 = vunpack.c.h.b16 %v152
    %v264 = vunpack.c.l.b16 %v153
    %v265 = vunpack.c.h.b16 %v153
    %v266 = vunpack.c.l.b16 %v154
    %v267 = vunpack.c.h.b16 %v154
    %v268 = vunpack.c.l.b16 %v155
    %v269 = vunpack.c.h.b16 %v155
    %v270 = vunpack.c.l.b16 %v156
    %v271 = vunpack.c.h.b16 %v156
    %v272 = vunpack.c.l.b16 %v157
    %v273 = vunpack.c.h.b16 %v157
    %v274 = vunpack.c.l.b16 %v158
    %v275 = vunpack.c.h.b16 %v158
    %v276 = vunpack.c.l.b16 %v159
    %v277 = vunpack.c.h.b16 %v159
    %v278 = vpack.c.b16 %v218, %v214
    %v279 = vpack.c.b16 %v219, %v215
    %v280 = vpack.c.b16 %v220, %v216
    %v281 = vpack.c.b16 %v221, %v217
    %v282 = vpack.c.b16 %v226, %v222
    %v283 = vpack.c.b16 %v227, %v223
    %v284 = vpack.c.b16 %v228, %v224
    %v285 = vpack.c.b16 %v229, %v225
    %v286 = vpack.c.b16 %v234, %v230
    %v287 = vpack.c.b16 %v235, %v231
    %v288 = vpack.c.b16 %v236, %v232
    %v289 = vpack.c.b16 %v237, %v233
    %v290 = vpack.c.b16 %v242, %v238
    %v291 = vpack.c.b16 %v243, %v239
    %v292 = vpack.c.b16 %v244, %v240
    %v293 = vpack.c.b16 %v245, %v241
    %v294 = vpack.c.b16 %v250, %v246
    %v295 = vpack.c.b16 %v251, %v247
    %v296 = vpack.c.b16 %v252, %v248
    %v297 = vpack.c.b16 %v253, %v249
    %v298 = vpack.c.b16 %v258, %v254
    %v299 = vpack.c.b16 %v259, %v255
    %v300 = vpack.c.b16 %v260, %v256
    %v301 = vpack.c.b16 %v261, %v257
    %v302 = vpack.c.b16 %v266, %v262
    %v303 = vpack.c.b16 %v267, %v263
    %v304 = vpack.c.b16 %v268, %v264
    %v305 = vpack.c.b16 %v269, %v265
    %v306 = vpack.c.b16 %v274, %v270
    %v307 = vpack.c.b16 %v275, %v271
    %v308 = vpack.c.b16 %v276, %v272
    %v309 = vpack.c.b16 %v277, %v273
    %342 = vmatprep.subr.bf16.mxu0 %v279
    %343 = vmatpush1.bf16.msra.mxu0 %v278
    %344 = vmatprep.subr.bf16.mxu0 %v283
    %345 = vmatpush1.bf16.msra.mxu0 %v282
    %346 = vmatprep.subr.bf16.mxu0 %v287
    %347 = vmatpush1.bf16.msra.mxu0 %v286
    %348 = vmatprep.subr.bf16.mxu0 %v291
    %349 = vmatpush1.bf16.msra.mxu0 %v290
    %350 = vmatprep.subr.bf16.mxu0 %v295
    %351 = vmatpush1.bf16.msra.mxu0 %v294
    %352 = vmatprep.subr.bf16.mxu0 %v299
    %353 = vmatpush1.bf16.msra.mxu0 %v298
    %354 = vmatprep.subr.bf16.mxu0 %v303
    %355 = vmatpush1.bf16.msra.mxu0 %v302
    %356 = vmatprep.subr.bf16.mxu0 %v307
    %357 = vmatpush1.bf16.msra.mxu0 %v306
    %358 = vmatprep.subr.bf16.mxu0 0
    %359 = vmatpush1.bf16.msra.mxu0 0
    %360 = vmatprep.subr.bf16.mxu0 0
    %361 = vmatpush1.bf16.msra.mxu0 0
    %362 = vmatprep.subr.bf16.mxu0 0
    %363 = vmatpush1.bf16.msra.mxu0 0
    %364 = vmatprep.subr.bf16.mxu0 0
    %365 = vmatpush1.bf16.msra.mxu0 0
    %366 = vmatprep.subr.bf16.mxu0 0
    %367 = vmatpush1.bf16.msra.mxu0 0
    %368 = vmatprep.subr.bf16.mxu0 0
    %369 = vmatpush1.bf16.msra.mxu0 0
    %370 = vmatprep.subr.bf16.mxu0 0
    %371 = vmatpush1.bf16.msra.mxu0 0
    %372 = vmatprep.subr.bf16.mxu0 0
    %373 = vmatpush1.bf16.msra.mxu0 0
    %374 = vmatprep.mubr.bf16.mxu0 0
    %375 = vmatmul.mubr.bf16.gmra.mrb[0].mxu0 %v124
    %v376 = vpop.f32.mrb[0].mxu0
    %v377 = vadd.f32 %v165, %v376
    %v378 = vpop.f32.mrb[0].mxu0
    %v379 = vadd.f32 %v169, %v378
    %v380 = vpop.f32.mrb[0].mxu0
    %v381 = vadd.f32 %v165, %v380
    %v382 = vpop.f32.mrb[0].mxu0
    %v383 = vadd.f32 %v169, %v382
    %384 = vmatprep.mubr.bf16.mxu0 0
    %385 = vmatmul.mubr.bf16.gmra.mrb[0].mxu0 %v125
    %v386 = vpop.f32.mrb[0].mxu0
    %v387 = vadd.f32 %v165, %v386
    %v388 = vpop.f32.mrb[0].mxu0
    %v389 = vadd.f32 %v169, %v388
    %v390 = vpop.f32.mrb[0].mxu0
    %v391 = vadd.f32 %v165, %v390
    %v392 = vpop.f32.mrb[0].mxu0
    %v393 = vadd.f32 %v169, %v392
    %394 = vmatprep.mubr.bf16.mxu0 0
    %395 = vmatmul.mubr.bf16.gmra.mrb[0].mxu0 %v126
    %v396 = vpop.f32.mrb[0].mxu0
    %v397 = vadd.f32 %v165, %v396
    %v398 = vpop.f32.mrb[0].mxu0
    %v399 = vadd.f32 %v169, %v398
    %v400 = vpop.f32.mrb[0].mxu0
    %v401 = vadd.f32 %v165, %v400
    %v402 = vpop.f32.mrb[0].mxu0
    %v403 = vadd.f32 %v169, %v402
    %404 = vmatprep.mubr.bf16.mxu0 0
    %405 = vmatmul.mubr.bf16.gmra.mrb[0].mxu0 %v127
    %v406 = vpop.f32.mrb[0].mxu0
    %v407 = vadd.f32 %v165, %v406
    %v408 = vpop.f32.mrb[0].mxu0
    %v409 = vadd.f32 %v169, %v408
    %v410 = vpop.f32.mrb[0].mxu0
    %v411 = vadd.f32 %v165, %v410
    %v412 = vpop.f32.mrb[0].mxu0
    %v413 = vadd.f32 %v169, %v412
    %414 = vdwg.mxu0
    %415 = vmatprep.subr.bf16.mxu0 %v281
    %416 = vmatpush1.bf16.msra.mxu0 %v280
    %417 = vmatprep.subr.bf16.mxu0 %v285
    %418 = vmatpush1.bf16.msra.mxu0 %v284
    %419 = vmatprep.subr.bf16.mxu0 %v289
    %420 = vmatpush1.bf16.msra.mxu0 %v288
    %421 = vmatprep.subr.bf16.mxu0 %v293
    %422 = vmatpush1.bf16.msra.mxu0 %v292
    %423 = vmatprep.subr.bf16.mxu0 %v297
    %424 = vmatpush1.bf16.msra.mxu0 %v296
    %425 = vmatprep.subr.bf16.mxu0 %v301
    %426 = vmatpush1.bf16.msra.mxu0 %v300
    %427 = vmatprep.subr.bf16.mxu0 %v305
    %428 = vmatpush1.bf16.msra.mxu0 %v304
    %429 = vmatprep.subr.bf16.mxu0 %v309
    %430 = vmatpush1.bf16.msra.mxu0 %v308
    %431 = vmatprep.subr.bf16.mxu0 0
    %432 = vmatpush1.bf16.msra.mxu0 0
    %433 = vmatprep.subr.bf16.mxu0 0
    %434 = vmatpush1.bf16.msra.mxu0 0
    %435 = vmatprep.subr.bf16.mxu0 0
    %436 = vmatpush1.bf16.msra.mxu0 0
    %437 = vmatprep.subr.bf16.mxu0 0
    %438 = vmatpush1.bf16.msra.mxu0 0
    %439 = vmatprep.subr.bf16.mxu0 0
    %440 = vmatpush1.bf16.msra.mxu0 0
    %441 = vmatprep.subr.bf16.mxu0 0
    %442 = vmatpush1.bf16.msra.mxu0 0
    %443 = vmatprep.subr.bf16.mxu0 0
    %444 = vmatpush1.bf16.msra.mxu0 0
    %445 = vmatprep.subr.bf16.mxu0 0
    %446 = vmatpush1.bf16.msra.mxu0 0
    %447 = vmatprep.mubr.bf16.mxu0 0
    %448 = vmatmul.mubr.bf16.gmra.mrb[0].mxu0 %v124
    %v449 = vpop.f32.mrb[0].mxu0
    %v450 = vadd.f32 %v173, %v449
    %v451 = vpop.f32.mrb[0].mxu0
    %v452 = vadd.f32 %v177, %v451
    %v453 = vpop.f32.mrb[0].mxu0
    %v454 = vadd.f32 %v173, %v453
    %v455 = vpop.f32.mrb[0].mxu0
    %v456 = vadd.f32 %v177, %v455
    %457 = vmatprep.mubr.bf16.mxu0 0
    %458 = vmatmul.mubr.bf16.gmra.mrb[0].mxu0 %v125
    %v459 = vpop.f32.mrb[0].mxu0
    %v460 = vadd.f32 %v173, %v459
    %v461 = vpop.f32.mrb[0].mxu0
    %v462 = vadd.f32 %v177, %v461
    %v463 = vpop.f32.mrb[0].mxu0
    %v464 = vadd.f32 %v173, %v463
    %v465 = vpop.f32.mrb[0].mxu0
    %v466 = vadd.f32 %v177, %v465
    %467 = vmatprep.mubr.bf16.mxu0 0
    %468 = vmatmul.mubr.bf16.gmra.mrb[0].mxu0 %v126
    %v469 = vpop.f32.mrb[0].mxu0
    %v470 = vadd.f32 %v173, %v469
    %v471 = vpop.f32.mrb[0].mxu0
    %v472 = vadd.f32 %v177, %v471
    %v473 = vpop.f32.mrb[0].mxu0
    %v474 = vadd.f32 %v173, %v473
    %v475 = vpop.f32.mrb[0].mxu0
    %v476 = vadd.f32 %v177, %v475
    %477 = vmatprep.mubr.bf16.mxu0 0
    %478 = vmatmul.mubr.bf16.gmra.mrb[0].mxu0 %v127
    %v479 = vpop.f32.mrb[0].mxu0
    %v480 = vadd.f32 %v173, %v479
    %v481 = vpop.f32.mrb[0].mxu0
    %v482 = vadd.f32 %v177, %v481
    %v483 = vpop.f32.mrb[0].mxu0
    %v484 = vadd.f32 %v173, %v483
    %v485 = vpop.f32.mrb[0].mxu0
    %v486 = vadd.f32 %v177, %v485
    %487 = vdwg.mxu0
    %488 = vst [vmem:[#allocation2] sm:$0xff] %v377
    %489 = vst [vmem:[#allocation2 + $0x8] sm:$0xff] %v379
    %490 = vst [vmem:[#allocation2 + $0x10] sm:$0xff] %v450
    %491 = vst [vmem:[#allocation2 + $0x18] sm:$0xff] %v452
    %492 = vst [vmem:[#allocation2 + $0x20] sm:$0xff] %v381
    %493 = vst [vmem:[#allocation2 + $0x28] sm:$0xff] %v383
    %494 = vst [vmem:[#allocation2 + $0x30] sm:$0xff] %v454
    %495 = vst [vmem:[#allocation2 + $0x38] sm:$0xff] %v456
    %496 = vst [vmem:[#allocation2 + $0x40] sm:$0xff] %v387
    %497 = vst [vmem:[#allocation2 + $0x48] sm:$0xff] %v389
    %498 = vst [vmem:[#allocation2 + $0x50] sm:$0xff] %v460
    %499 = vst [vmem:[#allocation2 + $0x58] sm:$0xff] %v462
    %500 = vst [vmem:[#allocation2 + $0x60] sm:$0xff] %v391
    %501 = vst [vmem:[#allocation2 + $0x68] sm:$0xff] %v393
    %502 = vst [vmem:[#allocation2 + $0x70] sm:$0xff] %v464
    %503 = vst [vmem:[#allocation2 + $0x78] sm:$0xff] %v466
    %504 = vst [vmem:[#allocation2 + $0x80] sm:$0xff] %v397
    %505 = vst [vmem:[#allocation2 + $0x88] sm:$0xff] %v399
    %506 = vst [vmem:[#allocation2 + $0x90] sm:$0xff] %v470
    %507 = vst [vmem:[#allocation2 + $0x98] sm:$0xff] %v472
    %508 = vst [vmem:[#allocation2 + $0xa0] sm:$0xff] %v401
    %509 = vst [vmem:[#allocation2 + $0xa8] sm:$0xff] %v403
    %510 = vst [vmem:[#allocation2 + $0xb0] sm:$0xff] %v474
    %511 = vst [vmem:[#allocation2 + $0xb8] sm:$0xff] %v476
    %512 = vst [vmem:[#allocation2 + $0xc0] sm:$0xff] %v407
    %513 = vst [vmem:[#allocation2 + $0xc8] sm:$0xff] %v409
    %514 = vst [vmem:[#allocation2 + $0xd0] sm:$0xff] %v480
    %515 = vst [vmem:[#allocation2 + $0xd8] sm:$0xff] %v482
    %516 = vst [vmem:[#allocation2 + $0xe0] sm:$0xff] %v411
    %517 = vst [vmem:[#allocation2 + $0xe8] sm:$0xff] %v413
    %518 = vst [vmem:[#allocation2 + $0xf0] sm:$0xff] %v484
    %519 = vst [vmem:[#allocation2 + $0xf8] sm:$0xff] %v486
    %v520 = vld [vmem:[#allocation11] sm:$0xff]
    %v521 = vld [vmem:[#allocation11 + $0x8] sm:$0xff]
    %v522 = vld [vmem:[#allocation11 + $0x10] sm:$0xff]
    %v523 = vld [vmem:[#allocation11 + $0x18] sm:$0xff]
    %v524 = vld [vmem:[#allocation11 + $0x20] sm:$0xff]
    %v525 = vld [vmem:[#allocation11 + $0x28] sm:$0xff]
    %v526 = vld [vmem:[#allocation11 + $0x30] sm:$0xff]
    %v527 = vld [vmem:[#allocation11 + $0x38] sm:$0xff]
    %v528 = vld [vmem:[#allocation11 + $0x40] sm:$0xff]
    %v529 = vld [vmem:[#allocation11 + $0x48] sm:$0xff]
    %v530 = vld [vmem:[#allocation11 + $0x50] sm:$0xff]
    %v531 = vld [vmem:[#allocation11 + $0x58] sm:$0xff]
    %v532 = vld [vmem:[#allocation11 + $0x60] sm:$0xff]
    %v533 = vld [vmem:[#allocation11 + $0x68] sm:$0xff]
    %v534 = vld [vmem:[#allocation11 + $0x70] sm:$0xff]
    %v535 = vld [vmem:[#allocation11 + $0x78] sm:$0xff]
    %v536 = vld [vmem:[#allocation11 + $0x80] sm:$0xff]
    %v537 = vld [vmem:[#allocation11 + $0x88] sm:$0xff]
    %v538 = vld [vmem:[#allocation11 + $0x90] sm:$0xff]
    %v539 = vld [vmem:[#allocation11 + $0x98] sm:$0xff]
    %v540 = vld [vmem:[#allocation11 + $0xa0] sm:$0xff]
    %v541 = vld [vmem:[#allocation11 + $0xa8] sm:$0xff]
    %v542 = vld [vmem:[#allocation11 + $0xb0] sm:$0xff]
    %v543 = vld [vmem:[#allocation11 + $0xb8] sm:$0xff]
    %v544 = vld [vmem:[#allocation11 + $0xc0] sm:$0xff]
    %v545 = vld [vmem:[#allocation11 + $0xc8] sm:$0xff]
    %v546 = vld [vmem:[#allocation11 + $0xd0] sm:$0xff]
    %v547 = vld [vmem:[#allocation11 + $0xd8] sm:$0xff]
    %v548 = vld [vmem:[#allocation11 + $0xe0] sm:$0xff]
    %v549 = vld [vmem:[#allocation11 + $0xe8] sm:$0xff]
    %v550 = vld [vmem:[#allocation11 + $0xf0] sm:$0xff]
    %v551 = vld [vmem:[#allocation11 + $0xf8] sm:$0xff]
    %v552 = vld [vmem:[%s6] sm:$0xf]
    %v554 = vlaneseq
    %v555 = vshrl.u32 %v554, 7
    %v556 = vsub.s32 0, %v555
    %v557 = vrot.slane %v552, %v556
    %v558 = vlaneseq
    %v559 = vshrl.u32 %v558, 7
    %v560 = vsub.s32 1, %v559
    %v561 = vrot.slane %v552, %v560
    %v562 = vlaneseq
    %v563 = vshrl.u32 %v562, 7
    %v564 = vsub.s32 2, %v563
    %v565 = vrot.slane %v552, %v564
    %v566 = vlaneseq
    %v567 = vshrl.u32 %v566, 7
    %v568 = vsub.s32 3, %v567
    %v569 = vrot.slane %v552, %v568
    %v606 = vunpack.c.l.b16 %v520
    %v607 = vunpack.c.h.b16 %v520
    %v608 = vunpack.c.l.b16 %v521
    %v609 = vunpack.c.h.b16 %v521
    %v610 = vunpack.c.l.b16 %v522
    %v611 = vunpack.c.h.b16 %v522
    %v612 = vunpack.c.l.b16 %v523
    %v613 = vunpack.c.h.b16 %v523
    %v614 = vunpack.c.l.b16 %v524
    %v615 = vunpack.c.h.b16 %v524
    %v616 = vunpack.c.l.b16 %v525
    %v617 = vunpack.c.h.b16 %v525
    %v618 = vunpack.c.l.b16 %v526
    %v619 = vunpack.c.h.b16 %v526
    %v620 = vunpack.c.l.b16 %v527
    %v621 = vunpack.c.h.b16 %v527
    %v622 = vunpack.c.l.b16 %v528
    %v623 = vunpack.c.h.b16 %v528
    %v624 = vunpack.c.l.b16 %v529
    %v625 = vunpack.c.h.b16 %v529
    %v626 = vunpack.c.l.b16 %v530
    %v627 = vunpack.c.h.b16 %v530
    %v628 = vunpack.c.l.b16 %v531
    %v629 = vunpack.c.h.b16 %v531
    %v630 = vunpack.c.l.b16 %v532
    %v631 = vunpack.c.h.b16 %v532
    %v632 = vunpack.c.l.b16 %v533
    %v633 = vunpack.c.h.b16 %v533
    %v634 = vunpack.c.l.b16 %v534
    %v635 = vunpack.c.h.b16 %v534
    %v636 = vunpack.c.l.b16 %v535
    %v637 = vunpack.c.h.b16 %v535
    %v638 = vunpack.c.l.b16 %v536
    %v639 = vunpack.c.h.b16 %v536
    %v640 = vunpack.c.l.b16 %v537
    %v641 = vunpack.c.h.b16 %v537
    %v642 = vunpack.c.l.b16 %v538
    %v643 = vunpack.c.h.b16 %v538
    %v644 = vunpack.c.l.b16 %v539
    %v645 = vunpack.c.h.b16 %v539
    %v646 = vunpack.c.l.b16 %v540
    %v647 = vunpack.c.h.b16 %v540
    %v648 = vunpack.c.l.b16 %v541
    %v649 = vunpack.c.h.b16 %v541
    %v650 = vunpack.c.l.b16 %v542
    %v651 = vunpack.c.h.b16 %v542
    %v652 = vunpack.c.l.b16 %v543
    %v653 = vunpack.c.h.b16 %v543
    %v654 = vunpack.c.l.b16 %v544
    %v655 = vunpack.c.h.b16 %v544
    %v656 = vunpack.c.l.b16 %v545
    %v657 = vunpack.c.h.b16 %v545
    %v658 = vunpack.c.l.b16 %v546
    %v659 = vunpack.c.h.b16 %v546
    %v660 = vunpack.c.l.b16 %v547
    %v661 = vunpack.c.h.b16 %v547
    %v662 = vunpack.c.l.b16 %v548
    %v663 = vunpack.c.h.b16 %v548
    %v664 = vunpack.c.l.b16 %v549
    %v665 = vunpack.c.h.b16 %v549
    %v666 = vunpack.c.l.b16 %v550
    %v667 = vunpack.c.h.b16 %v550
    %v668 = vunpack.c.l.b16 %v551
    %v669 = vunpack.c.h.b16 %v551
    %v670 = vpack.c.b16 %v610, %v606
    %v671 = vpack.c.b16 %v611, %v607
    %v672 = vpack.c.b16 %v612, %v608
    %v673 = vpack.c.b16 %v613, %v609
    %v674 = vpack.c.b16 %v618, %v614
    %v675 = vpack.c.b16 %v619, %v615
    %v676 = vpack.c.b16 %v620, %v616
    %v677 = vpack.c.b16 %v621, %v617
    %v678 = vpack.c.b16 %v626, %v622
    %v679 = vpack.c.b16 %v627, %v623
    %v680 = vpack.c.b16 %v628, %v624
    %v681 = vpack.c.b16 %v629, %v625
    %v682 = vpack.c.b16 %v634, %v630
    %v683 = vpack.c.b16 %v635, %v631
    %v684 = vpack.c.b16 %v636, %v632
    %v685 = vpack.c.b16 %v637, %v633
    %v686 = vpack.c.b16 %v642, %v638
    %v687 = vpack.c.b16 %v643, %v639
    %v688 = vpack.c.b16 %v644, %v640
    %v689 = vpack.c.b16 %v645, %v641
    %v690 = vpack.c.b16 %v650, %v646
    %v691 = vpack.c.b16 %v651, %v647
    %v692 = vpack.c.b16 %v652, %v648
    %v693 = vpack.c.b16 %v653, %v649
    %v694 = vpack.c.b16 %v658, %v654
    %v695 = vpack.c.b16 %v659, %v655
    %v696 = vpack.c.b16 %v660, %v656
    %v697 = vpack.c.b16 %v661, %v657
    %v698 = vpack.c.b16 %v666, %v662
    %v699 = vpack.c.b16 %v667, %v663
    %v700 = vpack.c.b16 %v668, %v664
    %v701 = vpack.c.b16 %v669, %v665
    %734 = vmatprep.subr.bf16.mxu0 %v671
    %735 = vmatpush1.bf16.msra.mxu0 %v670
    %736 = vmatprep.subr.bf16.mxu0 %v675
    %737 = vmatpush1.bf16.msra.mxu0 %v674
    %738 = vmatprep.subr.bf16.mxu0 %v679
    %739 = vmatpush1.bf16.msra.mxu0 %v678
    %740 = vmatprep.subr.bf16.mxu0 %v683
    %741 = vmatpush1.bf16.msra.mxu0 %v682
    %742 = vmatprep.subr.bf16.mxu0 %v687
    %743 = vmatpush1.bf16.msra.mxu0 %v686
    %744 = vmatprep.subr.bf16.mxu0 %v691
    %745 = vmatpush1.bf16.msra.mxu0 %v690
    %746 = vmatprep.subr.bf16.mxu0 %v695
    %747 = vmatpush1.bf16.msra.mxu0 %v694
    %748 = vmatprep.subr.bf16.mxu0 %v699
    %749 = vmatpush1.bf16.msra.mxu0 %v698
    %750 = vmatprep.subr.bf16.mxu0 0
    %751 = vmatpush1.bf16.msra.mxu0 0
    %752 = vmatprep.subr.bf16.mxu0 0
    %753 = vmatpush1.bf16.msra.mxu0 0
    %754 = vmatprep.subr.bf16.mxu0 0
    %755 = vmatpush1.bf16.msra.mxu0 0
    %756 = vmatprep.subr.bf16.mxu0 0
    %757 = vmatpush1.bf16.msra.mxu0 0
    %758 = vmatprep.subr.bf16.mxu0 0
    %759 = vmatpush1.bf16.msra.mxu0 0
    %760 = vmatprep.subr.bf16.mxu0 0
    %761 = vmatpush1.bf16.msra.mxu0 0
    %762 = vmatprep.subr.bf16.mxu0 0
    %763 = vmatpush1.bf16.msra.mxu0 0
    %764 = vmatprep.subr.bf16.mxu0 0
    %765 = vmatpush1.bf16.msra.mxu0 0
    %766 = vmatprep.mubr.bf16.mxu0 0
    %767 = vmatmul.mubr.bf16.gmra.mrb[0].mxu0 %v124
    %v768 = vpop.f32.mrb[0].mxu0
    %v769 = vadd.f32 %v557, %v768
    %v770 = vpop.f32.mrb[0].mxu0
    %v771 = vadd.f32 %v561, %v770
    %v772 = vpop.f32.mrb[0].mxu0
    %v773 = vadd.f32 %v557, %v772
    %v774 = vpop.f32.mrb[0].mxu0
    %v775 = vadd.f32 %v561, %v774
    %776 = vmatprep.mubr.bf16.mxu0 0
    %777 = vmatmul.mubr.bf16.gmra.mrb[0].mxu0 %v125
    %v778 = vpop.f32.mrb[0].mxu0
    %v779 = vadd.f32 %v557, %v778
    %v780 = vpop.f32.mrb[0].mxu0
    %v781 = vadd.f32 %v561, %v780
    %v782 = vpop.f32.mrb[0].mxu0
    %v783 = vadd.f32 %v557, %v782
    %v784 = vpop.f32.mrb[0].mxu0
    %v785 = vadd.f32 %v561, %v784
    %786 = vmatprep.mubr.bf16.mxu0 0
    %787 = vmatmul.mubr.bf16.gmra.mrb[0].mxu0 %v126
    %v788 = vpop.f32.mrb[0].mxu0
    %v789 = vadd.f32 %v557, %v788
    %v790 = vpop.f32.mrb[0].mxu0
    %v791 = vadd.f32 %v561, %v790
    %v792 = vpop.f32.mrb[0].mxu0
    %v793 = vadd.f32 %v557, %v792
    %v794 = vpop.f32.mrb[0].mxu0
    %v795 = vadd.f32 %v561, %v794
    %796 = vmatprep.mubr.bf16.mxu0 0
    %797 = vmatmul.mubr.bf16.gmra.mrb[0].mxu0 %v127
    %v798 = vpop.f32.mrb[0].mxu0
    %v799 = vadd.f32 %v557, %v798
    %v800 = vpop.f32.mrb[0].mxu0
    %v801 = vadd.f32 %v561, %v800
    %v802 = vpop.f32.mrb[0].mxu0
    %v803 = vadd.f32 %v557, %v802
    %v804 = vpop.f32.mrb[0].mxu0
    %v805 = vadd.f32 %v561, %v804
    %806 = vdwg.mxu0
    %807 = vmatprep.subr.bf16.mxu0 %v673
    %808 = vmatpush1.bf16.msra.mxu0 %v672
    %809 = vmatprep.subr.bf16.mxu0 %v677
    %810 = vmatpush1.bf16.msra.mxu0 %v676
    %811 = vmatprep.subr.bf16.mxu0 %v681
    %812 = vmatpush1.bf16.msra.mxu0 %v680
    %813 = vmatprep.subr.bf16.mxu0 %v685
    %814 = vmatpush1.bf16.msra.mxu0 %v684
    %815 = vmatprep.subr.bf16.mxu0 %v689
    %816 = vmatpush1.bf16.msra.mxu0 %v688
    %817 = vmatprep.subr.bf16.mxu0 %v693
    %818 = vmatpush1.bf16.msra.mxu0 %v692
    %819 = vmatprep.subr.bf16.mxu0 %v697
    %820 = vmatpush1.bf16.msra.mxu0 %v696
    %821 = vmatprep.subr.bf16.mxu0 %v701
    %822 = vmatpush1.bf16.msra.mxu0 %v700
    %823 = vmatprep.subr.bf16.mxu0 0
    %824 = vmatpush1.bf16.msra.mxu0 0
    %825 = vmatprep.subr.bf16.mxu0 0
    %826 = vmatpush1.bf16.msra.mxu0 0
    %827 = vmatprep.subr.bf16.mxu0 0
    %828 = vmatpush1.bf16.msra.mxu0 0
    %829 = vmatprep.subr.bf16.mxu0 0
    %830 = vmatpush1.bf16.msra.mxu0 0
    %831 = vmatprep.subr.bf16.mxu0 0
    %832 = vmatpush1.bf16.msra.mxu0 0
    %833 = vmatprep.subr.bf16.mxu0 0
    %834 = vmatpush1.bf16.msra.mxu0 0
    %835 = vmatprep.subr.bf16.mxu0 0
    %836 = vmatpush1.bf16.msra.mxu0 0
    %837 = vmatprep.subr.bf16.mxu0 0
    %838 = vmatpush1.bf16.msra.mxu0 0
    %839 = vmatprep.mubr.bf16.mxu0 0
    %840 = vmatmul.mubr.bf16.gmra.mrb[0].mxu0 %v124
    %v841 = vpop.f32.mrb[0].mxu0
    %v842 = vadd.f32 %v565, %v841
    %v843 = vpop.f32.mrb[0].mxu0
    %v844 = vadd.f32 %v569, %v843
    %v845 = vpop.f32.mrb[0].mxu0
    %v846 = vadd.f32 %v565, %v845
    %v847 = vpop.f32.mrb[0].mxu0
    %v848 = vadd.f32 %v569, %v847
    %849 = vmatprep.mubr.bf16.mxu0 0
    %850 = vmatmul.mubr.bf16.gmra.mrb[0].mxu0 %v125
    %v851 = vpop.f32.mrb[0].mxu0
    %v852 = vadd.f32 %v565, %v851
    %v853 = vpop.f32.mrb[0].mxu0
    %v854 = vadd.f32 %v569, %v853
    %v855 = vpop.f32.mrb[0].mxu0
    %v856 = vadd.f32 %v565, %v855
    %v857 = vpop.f32.mrb[0].mxu0
    %v858 = vadd.f32 %v569, %v857
    %859 = vmatprep.mubr.bf16.mxu0 0
    %860 = vmatmul.mubr.bf16.gmra.mrb[0].mxu0 %v126
    %v861 = vpop.f32.mrb[0].mxu0
    %v862 = vadd.f32 %v565, %v861
    %v863 = vpop.f32.mrb[0].mxu0
    %v864 = vadd.f32 %v569, %v863
    %v865 = vpop.f32.mrb[0].mxu0
    %v866 = vadd.f32 %v565, %v865
    %v867 = vpop.f32.mrb[0].mxu0
    %v868 = vadd.f32 %v569, %v867
    %869 = vmatprep.mubr.bf16.mxu0 0
    %870 = vmatmul.mubr.bf16.gmra.mrb[0].mxu0 %v127
    %v871 = vpop.f32.mrb[0].mxu0
    %v872 = vadd.f32 %v565, %v871
    %v873 = vpop.f32.mrb[0].mxu0
    %v874 = vadd.f32 %v569, %v873
    %v875 = vpop.f32.mrb[0].mxu0
    %v876 = vadd.f32 %v565, %v875
    %v877 = vpop.f32.mrb[0].mxu0
    %v878 = vadd.f32 %v569, %v877
    %879 = vdwg.mxu0
    %880 = vst [vmem:[#allocation3] sm:$0xff] %v769
    %881 = vst [vmem:[#allocation3 + $0x8] sm:$0xff] %v771
    %882 = vst [vmem:[#allocation3 + $0x10] sm:$0xff] %v842
    %883 = vst [vmem:[#allocation3 + $0x18] sm:$0xff] %v844
    %884 = vst [vmem:[#allocation3 + $0x20] sm:$0xff] %v773
    %885 = vst [vmem:[#allocation3 + $0x28] sm:$0xff] %v775
    %886 = vst [vmem:[#allocation3 + $0x30] sm:$0xff] %v846
    %887 = vst [vmem:[#allocation3 + $0x38] sm:$0xff] %v848
    %888 = vst [vmem:[#allocation3 + $0x40] sm:$0xff] %v779
    %889 = vst [vmem:[#allocation3 + $0x48] sm:$0xff] %v781
    %890 = vst [vmem:[#allocation3 + $0x50] sm:$0xff] %v852
    %891 = vst [vmem:[#allocation3 + $0x58] sm:$0xff] %v854
    %892 = vst [vmem:[#allocation3 + $0x60] sm:$0xff] %v783
    %893 = vst [vmem:[#allocation3 + $0x68] sm:$0xff] %v785
    %894 = vst [vmem:[#allocation3 + $0x70] sm:$0xff] %v856
    %895 = vst [vmem:[#allocation3 + $0x78] sm:$0xff] %v858
    %896 = vst [vmem:[#allocation3 + $0x80] sm:$0xff] %v789
    %897 = vst [vmem:[#allocation3 + $0x88] sm:$0xff] %v791
    %898 = vst [vmem:[#allocation3 + $0x90] sm:$0xff] %v862
    %899 = vst [vmem:[#allocation3 + $0x98] sm:$0xff] %v864
    %900 = vst [vmem:[#allocation3 + $0xa0] sm:$0xff] %v793
    %901 = vst [vmem:[#allocation3 + $0xa8] sm:$0xff] %v795
    %902 = vst [vmem:[#allocation3 + $0xb0] sm:$0xff] %v866
    %903 = vst [vmem:[#allocation3 + $0xb8] sm:$0xff] %v868
    %904 = vst [vmem:[#allocation3 + $0xc0] sm:$0xff] %v799
    %905 = vst [vmem:[#allocation3 + $0xc8] sm:$0xff] %v801
    %906 = vst [vmem:[#allocation3 + $0xd0] sm:$0xff] %v872
    %907 = vst [vmem:[#allocation3 + $0xd8] sm:$0xff] %v874
    %908 = vst [vmem:[#allocation3 + $0xe0] sm:$0xff] %v803
    %909 = vst [vmem:[#allocation3 + $0xe8] sm:$0xff] %v805
    %910 = vst [vmem:[#allocation3 + $0xf0] sm:$0xff] %v876
    %911 = vst [vmem:[#allocation3 + $0xf8] sm:$0xff] %v878
    %v912 = vld [vmem:[#allocation2] sm:$0xff]
    %v913 = vld [vmem:[#allocation2 + $0x8] sm:$0xff]
    %v914 = vld [vmem:[#allocation2 + $0x10] sm:$0xff]
    %v915 = vld [vmem:[#allocation2 + $0x18] sm:$0xff]
    %v916 = vld [vmem:[#allocation10] sm:$0xff]
    %v917 = vld [vmem:[#allocation10 + $0x8] sm:$0xff]
    %v918 = vld [vmem:[#allocation10 + $0x10] sm:$0xff]
    %v919 = vld [vmem:[#allocation10 + $0x18] sm:$0xff]
    %v920 = vld [vmem:[#allocation10 + $0x20] sm:$0xff]
    %v921 = vld [vmem:[#allocation10 + $0x28] sm:$0xff]
    %v922 = vld [vmem:[#allocation10 + $0x30] sm:$0xff]
    %v923 = vld [vmem:[#allocation10 + $0x38] sm:$0xff]
    %v924 = vld [vmem:[#allocation10 + $0x40] sm:$0xff]
    %v925 = vld [vmem:[#allocation10 + $0x48] sm:$0xff]
    %v926 = vld [vmem:[#allocation10 + $0x50] sm:$0xff]
    %v927 = vld [vmem:[#allocation10 + $0x58] sm:$0xff]
    %v928 = vld [vmem:[#allocation10 + $0x60] sm:$0xff]
    %v929 = vld [vmem:[#allocation10 + $0x68] sm:$0xff]
    %v930 = vld [vmem:[#allocation10 + $0x70] sm:$0xff]
    %v931 = vld [vmem:[#allocation10 + $0x78] sm:$0xff]
    %v932 = vld [vmem:[#allocation10 + $0x80] sm:$0xff]
    %v933 = vld [vmem:[#allocation10 + $0x88] sm:$0xff]
    %v934 = vld [vmem:[#allocation10 + $0x90] sm:$0xff]
    %v935 = vld [vmem:[#allocation10 + $0x98] sm:$0xff]
    %v936 = vld [vmem:[#allocation10 + $0xa0] sm:$0xff]
    %v937 = vld [vmem:[#allocation10 + $0xa8] sm:$0xff]
    %v938 = vld [vmem:[#allocation10 + $0xb0] sm:$0xff]
    %v939 = vld [vmem:[#allocation10 + $0xb8] sm:$0xff]
    %v940 = vld [vmem:[#allocation10 + $0xc0] sm:$0xff]
    %v941 = vld [vmem:[#allocation10 + $0xc8] sm:$0xff]
    %v942 = vld [vmem:[#allocation10 + $0xd0] sm:$0xff]
    %v943 = vld [vmem:[#allocation10 + $0xd8] sm:$0xff]
    %v944 = vld [vmem:[#allocation10 + $0xe0] sm:$0xff]
    %v945 = vld [vmem:[#allocation10 + $0xe8] sm:$0xff]
    %v946 = vld [vmem:[#allocation10 + $0xf0] sm:$0xff]
    %v947 = vld [vmem:[#allocation10 + $0xf8] sm:$0xff]
    %v980 = vunpack.c.l.b16 %v916
    %v981 = vunpack.c.h.b16 %v916
    %v982 = vunpack.c.l.b16 %v917
    %v983 = vunpack.c.h.b16 %v917
    %v984 = vunpack.c.l.b16 %v918
    %v985 = vunpack.c.h.b16 %v918
    %v986 = vunpack.c.l.b16 %v919
    %v987 = vunpack.c.h.b16 %v919
    %v988 = vunpack.c.l.b16 %v920
    %v989 = vunpack.c.h.b16 %v920
    %v990 = vunpack.c.l.b16 %v921
    %v991 = vunpack.c.h.b16 %v921
    %v992 = vunpack.c.l.b16 %v922
    %v993 = vunpack.c.h.b16 %v922
    %v994 = vunpack.c.l.b16 %v923
    %v995 = vunpack.c.h.b16 %v923
    %v996 = vunpack.c.l.b16 %v924
    %v997 = vunpack.c.h.b16 %v924
    %v998 = vunpack.c.l.b16 %v925
    %v999 = vunpack.c.h.b16 %v925
    %v1000 = vunpack.c.l.b16 %v926
    %v1001 = vunpack.c.h.b16 %v926
    %v1002 = vunpack.c.l.b16 %v927
    %v1003 = vunpack.c.h.b16 %v927
    %v1004 = vunpack.c.l.b16 %v928
    %v1005 = vunpack.c.h.b16 %v928
    %v1006 = vunpack.c.l.b16 %v929
    %v1007 = vunpack.c.h.b16 %v929
    %v1008 = vunpack.c.l.b16 %v930
    %v1009 = vunpack.c.h.b16 %v930
    %v1010 = vunpack.c.l.b16 %v931
    %v1011 = vunpack.c.h.b16 %v931
    %v1012 = vunpack.c.l.b16 %v932
    %v1013 = vunpack.c.h.b16 %v932
    %v1014 = vunpack.c.l.b16 %v933
    %v1015 = vunpack.c.h.b16 %v933
    %v1016 = vunpack.c.l.b16 %v934
    %v1017 = vunpack.c.h.b16 %v934
    %v1018 = vunpack.c.l.b16 %v935
    %v1019 = vunpack.c.h.b16 %v935
    %v1020 = vunpack.c.l.b16 %v936
    %v1021 = vunpack.c.h.b16 %v936
    %v1022 = vunpack.c.l.b16 %v937
    %v1023 = vunpack.c.h.b16 %v937
    %v1024 = vunpack.c.l.b16 %v938
    %v1025 = vunpack.c.h.b16 %v938
    %v1026 = vunpack.c.l.b16 %v939
    %v1027 = vunpack.c.h.b16 %v939
    %v1028 = vunpack.c.l.b16 %v940
    %v1029 = vunpack.c.h.b16 %v940
    %v1030 = vunpack.c.l.b16 %v941
    %v1031 = vunpack.c.h.b16 %v941
    %v1032 = vunpack.c.l.b16 %v942
    %v1033 = vunpack.c.h.b16 %v942
    %v1034 = vunpack.c.l.b16 %v943
    %v1035 = vunpack.c.h.b16 %v943
    %v1036 = vunpack.c.l.b16 %v944
    %v1037 = vunpack.c.h.b16 %v944
    %v1038 = vunpack.c.l.b16 %v945
    %v1039 = vunpack.c.h.b16 %v945
    %v1040 = vunpack.c.l.b16 %v946
    %v1041 = vunpack.c.h.b16 %v946
    %v1042 = vunpack.c.l.b16 %v947
    %v1043 = vunpack.c.h.b16 %v947
    %v1044 = vpack.c.b16 %v984, %v980
    %v1045 = vpack.c.b16 %v985, %v981
    %v1046 = vpack.c.b16 %v986, %v982
    %v1047 = vpack.c.b16 %v987, %v983
    %v1048 = vpack.c.b16 %v992, %v988
    %v1049 = vpack.c.b16 %v993, %v989
    %v1050 = vpack.c.b16 %v994, %v990
    %v1051 = vpack.c.b16 %v995, %v991
    %v1052 = vpack.c.b16 %v1000, %v996
    %v1053 = vpack.c.b16 %v1001, %v997
    %v1054 = vpack.c.b16 %v1002, %v998
    %v1055 = vpack.c.b16 %v1003, %v999
    %v1056 = vpack.c.b16 %v1008, %v1004
    %v1057 = vpack.c.b16 %v1009, %v1005
    %v1058 = vpack.c.b16 %v1010, %v1006
    %v1059 = vpack.c.b16 %v1011, %v1007
    %v1060 = vpack.c.b16 %v1016, %v1012
    %v1061 = vpack.c.b16 %v1017, %v1013
    %v1062 = vpack.c.b16 %v1018, %v1014
    %v1063 = vpack.c.b16 %v1019, %v1015
    %v1064 = vpack.c.b16 %v1024, %v1020
    %v1065 = vpack.c.b16 %v1025, %v1021
    %v1066 = vpack.c.b16 %v1026, %v1022
    %v1067 = vpack.c.b16 %v1027, %v1023
    %v1068 = vpack.c.b16 %v1032, %v1028
    %v1069 = vpack.c.b16 %v1033, %v1029
    %v1070 = vpack.c.b16 %v1034, %v1030
    %v1071 = vpack.c.b16 %v1035, %v1031
    %v1072 = vpack.c.b16 %v1040, %v1036
    %v1073 = vpack.c.b16 %v1041, %v1037
    %v1074 = vpack.c.b16 %v1042, %v1038
    %v1075 = vpack.c.b16 %v1043, %v1039
    %1108 = vmatprep.subr.bf16.mxu0 %v1045
    %1109 = vmatpush1.bf16.msra.mxu0 %v1044
    %1110 = vmatprep.subr.bf16.mxu0 %v1049
    %1111 = vmatpush1.bf16.msra.mxu0 %v1048
    %1112 = vmatprep.subr.bf16.mxu0 %v1053
    %1113 = vmatpush1.bf16.msra.mxu0 %v1052
    %1114 = vmatprep.subr.bf16.mxu0 %v1057
    %1115 = vmatpush1.bf16.msra.mxu0 %v1056
    %1116 = vmatprep.subr.bf16.mxu0 %v1061
    %1117 = vmatpush1.bf16.msra.mxu0 %v1060
    %1118 = vmatprep.subr.bf16.mxu0 %v1065
    %1119 = vmatpush1.bf16.msra.mxu0 %v1064
    %1120 = vmatprep.subr.bf16.mxu0 %v1069
    %1121 = vmatpush1.bf16.msra.mxu0 %v1068
    %1122 = vmatprep.subr.bf16.mxu0 %v1073
    %1123 = vmatpush1.bf16.msra.mxu0 %v1072
    %1124 = vmatprep.subr.bf16.mxu0 0
    %1125 = vmatpush1.bf16.msra.mxu0 0
    %1126 = vmatprep.subr.bf16.mxu0 0
    %1127 = vmatpush1.bf16.msra.mxu0 0
    %1128 = vmatprep.subr.bf16.mxu0 0
    %1129 = vmatpush1.bf16.msra.mxu0 0
    %1130 = vmatprep.subr.bf16.mxu0 0
    %1131 = vmatpush1.bf16.msra.mxu0 0
    %1132 = vmatprep.subr.bf16.mxu0 0
    %1133 = vmatpush1.bf16.msra.mxu0 0
    %1134 = vmatprep.subr.bf16.mxu0 0
    %1135 = vmatpush1.bf16.msra.mxu0 0
    %1136 = vmatprep.subr.bf16.mxu0 0
    %1137 = vmatpush1.bf16.msra.mxu0 0
    %1138 = vmatprep.subr.bf16.mxu0 0
    %1139 = vmatpush1.bf16.msra.mxu0 0
    %1140 = vmatprep.mubr.bf16.mxu0 0
    %1141 = vmatmul.mubr.bf16.gmra.mrb[0].mxu0 0
    %v1142 = vpop.f32.mrb[0].mxu0
    %v1143 = vadd.f32 0.0, %v1142
    %v1144 = vpop.f32.mrb[0].mxu0
    %v1145 = vadd.f32 0.0, %v1144
    %v1146 = vpop.f32.mrb[0].mxu0
    %v1147 = vpop.f32.mrb[0].mxu0
    %1148 = vdwg.mxu0
    %1149 = vmatprep.subr.bf16.mxu0 %v1047
    %1150 = vmatpush1.bf16.msra.mxu0 %v1046
    %1151 = vmatprep.subr.bf16.mxu0 %v1051
    %1152 = vmatpush1.bf16.msra.mxu0 %v1050
    %1153 = vmatprep.subr.bf16.mxu0 %v1055
    %1154 = vmatpush1.bf16.msra.mxu0 %v1054
    %1155 = vmatprep.subr.bf16.mxu0 %v1059
    %1156 = vmatpush1.bf16.msra.mxu0 %v1058
    %1157 = vmatprep.subr.bf16.mxu0 %v1063
    %1158 = vmatpush1.bf16.msra.mxu0 %v1062
    %1159 = vmatprep.subr.bf16.mxu0 %v1067
    %1160 = vmatpush1.bf16.msra.mxu0 %v1066
    %1161 = vmatprep.subr.bf16.mxu0 %v1071
    %1162 = vmatpush1.bf16.msra.mxu0 %v1070
    %1163 = vmatprep.subr.bf16.mxu0 %v1075
    %1164 = vmatpush1.bf16.msra.mxu0 %v1074
    %1165 = vmatprep.subr.bf16.mxu0 0
    %1166 = vmatpush1.bf16.msra.mxu0 0
    %1167 = vmatprep.subr.bf16.mxu0 0
    %1168 = vmatpush1.bf16.msra.mxu0 0
    %1169 = vmatprep.subr.bf16.mxu0 0
    %1170 = vmatpush1.bf16.msra.mxu0 0
    %1171 = vmatprep.subr.bf16.mxu0 0
    %1172 = vmatpush1.bf16.msra.mxu0 0
    %1173 = vmatprep.subr.bf16.mxu0 0
    %1174 = vmatpush1.bf16.msra.mxu0 0
    %1175 = vmatprep.subr.bf16.mxu0 0
    %1176 = vmatpush1.bf16.msra.mxu0 0
    %1177 = vmatprep.subr.bf16.mxu0 0
    %1178 = vmatpush1.bf16.msra.mxu0 0
    %1179 = vmatprep.subr.bf16.mxu0 0
    %1180 = vmatpush1.bf16.msra.mxu0 0
    %1181 = vmatprep.mubr.bf16.mxu0 0
    %1182 = vmatmul.mubr.bf16.gmra.mrb[0].mxu0 0
    %v1183 = vpop.f32.mrb[0].mxu0
    %v1184 = vadd.f32 0.0, %v1183
    %v1185 = vpop.f32.mrb[0].mxu0
    %v1186 = vadd.f32 0.0, %v1185
    %v1187 = vpop.f32.mrb[0].mxu0
    %v1188 = vpop.f32.mrb[0].mxu0
    %1189 = vdwg.mxu0
    %v1190 = vadd.f32 %v912, %v1143
    %v1191 = vadd.f32 %v913, %v1145
    %v1192 = vadd.f32 %v914, %v1184
    %v1193 = vadd.f32 %v915, %v1186
    %s1194 = scalar_lea.vmem [#allocation3], 224
    %v1195 = vld [vmem:[%s1194] sm:$0xff]
    %v1196 = vld [vmem:[%s1194 + $0x8] sm:$0xff]
    %v1197 = vld [vmem:[%s1194 + $0x10] sm:$0xff]
    %v1198 = vld [vmem:[%s1194 + $0x18] sm:$0xff]
    %v1199 = vld [vmem:[#allocation13] sm:$0xff]
    %v1200 = vld [vmem:[#allocation13 + $0x8] sm:$0xff]
    %v1201 = vld [vmem:[#allocation13 + $0x10] sm:$0xff]
    %v1202 = vld [vmem:[#allocation13 + $0x18] sm:$0xff]
    %v1203 = vld [vmem:[#allocation13 + $0x20] sm:$0xff]
    %v1204 = vld [vmem:[#allocation13 + $0x28] sm:$0xff]
    %v1205 = vld [vmem:[#allocation13 + $0x30] sm:$0xff]
    %v1206 = vld [vmem:[#allocation13 + $0x38] sm:$0xff]
    %v1207 = vld [vmem:[#allocation13 + $0x40] sm:$0xff]
    %v1208 = vld [vmem:[#allocation13 + $0x48] sm:$0xff]
    %v1209 = vld [vmem:[#allocation13 + $0x50] sm:$0xff]
    %v1210 = vld [vmem:[#allocation13 + $0x58] sm:$0xff]
    %v1211 = vld [vmem:[#allocation13 + $0x60] sm:$0xff]
    %v1212 = vld [vmem:[#allocation13 + $0x68] sm:$0xff]
    %v1213 = vld [vmem:[#allocation13 + $0x70] sm:$0xff]
    %v1214 = vld [vmem:[#allocation13 + $0x78] sm:$0xff]
    %v1215 = vld [vmem:[#allocation13 + $0x80] sm:$0xff]
    %v1216 = vld [vmem:[#allocation13 + $0x88] sm:$0xff]
    %v1217 = vld [vmem:[#allocation13 + $0x90] sm:$0xff]
    %v1218 = vld [vmem:[#allocation13 + $0x98] sm:$0xff]
    %v1219 = vld [vmem:[#allocation13 + $0xa0] sm:$0xff]
    %v1220 = vld [vmem:[#allocation13 + $0xa8] sm:$0xff]
    %v1221 = vld [vmem:[#allocation13 + $0xb0] sm:$0xff]
    %v1222 = vld [vmem:[#allocation13 + $0xb8] sm:$0xff]
    %v1223 = vld [vmem:[#allocation13 + $0xc0] sm:$0xff]
    %v1224 = vld [vmem:[#allocation13 + $0xc8] sm:$0xff]
    %v1225 = vld [vmem:[#allocation13 + $0xd0] sm:$0xff]
    %v1226 = vld [vmem:[#allocation13 + $0xd8] sm:$0xff]
    %v1227 = vld [vmem:[#allocation13 + $0xe0] sm:$0xff]
    %v1228 = vld [vmem:[#allocation13 + $0xe8] sm:$0xff]
    %v1229 = vld [vmem:[#allocation13 + $0xf0] sm:$0xff]
    %v1230 = vld [vmem:[#allocation13 + $0xf8] sm:$0xff]
    %v1263 = vunpack.c.l.b16 %v1199
    %v1264 = vunpack.c.h.b16 %v1199
    %v1265 = vunpack.c.l.b16 %v1200
    %v1266 = vunpack.c.h.b16 %v1200
    %v1267 = vunpack.c.l.b16 %v1201
    %v1268 = vunpack.c.h.b16 %v1201
    %v1269 = vunpack.c.l.b16 %v1202
    %v1270 = vunpack.c.h.b16 %v1202
    %v1271 = vunpack.c.l.b16 %v1203
    %v1272 = vunpack.c.h.b16 %v1203
    %v1273 = vunpack.c.l.b16 %v1204
    %v1274 = vunpack.c.h.b16 %v1204
    %v1275 = vunpack.c.l.b16 %v1205
    %v1276 = vunpack.c.h.b16 %v1205
    %v1277 = vunpack.c.l.b16 %v1206
    %v1278 = vunpack.c.h.b16 %v1206
    %v1279 = vunpack.c.l.b16 %v1207
    %v1280 = vunpack.c.h.b16 %v1207
    %v1281 = vunpack.c.l.b16 %v1208
    %v1282 = vunpack.c.h.b16 %v1208
    %v1283 = vunpack.c.l.b16 %v1209
    %v1284 = vunpack.c.h.b16 %v1209
    %v1285 = vunpack.c.l.b16 %v1210
    %v1286 = vunpack.c.h.b16 %v1210
    %v1287 = vunpack.c.l.b16 %v1211
    %v1288 = vunpack.c.h.b16 %v1211
    %v1289 = vunpack.c.l.b16 %v1212
    %v1290 = vunpack.c.h.b16 %v1212
    %v1291 = vunpack.c.l.b16 %v1213
    %v1292 = vunpack.c.h.b16 %v1213
    %v1293 = vunpack.c.l.b16 %v1214
    %v1294 = vunpack.c.h.b16 %v1214
    %v1295 = vunpack.c.l.b16 %v1215
    %v1296 = vunpack.c.h.b16 %v1215
    %v1297 = vunpack.c.l.b16 %v1216
    %v1298 = vunpack.c.h.b16 %v1216
    %v1299 = vunpack.c.l.b16 %v1217
    %v1300 = vunpack.c.h.b16 %v1217
    %v1301 = vunpack.c.l.b16 %v1218
    %v1302 = vunpack.c.h.b16 %v1218
    %v1303 = vunpack.c.l.b16 %v1219
    %v1304 = vunpack.c.h.b16 %v1219
    %v1305 = vunpack.c.l.b16 %v1220
    %v1306 = vunpack.c.h.b16 %v1220
    %v1307 = vunpack.c.l.b16 %v1221
    %v1308 = vunpack.c.h.b16 %v1221
    %v1309 = vunpack.c.l.b16 %v1222
    %v1310 = vunpack.c.h.b16 %v1222
    %v1311 = vunpack.c.l.b16 %v1223
    %v1312 = vunpack.c.h.b16 %v1223
    %v1313 = vunpack.c.l.b16 %v1224
    %v1314 = vunpack.c.h.b16 %v1224
    %v1315 = vunpack.c.l.b16 %v1225
    %v1316 = vunpack.c.h.b16 %v1225
    %v1317 = vunpack.c.l.b16 %v1226
    %v1318 = vunpack.c.h.b16 %v1226
    %v1319 = vunpack.c.l.b16 %v1227
    %v1320 = vunpack.c.h.b16 %v1227
    %v1321 = vunpack.c.l.b16 %v1228
    %v1322 = vunpack.c.h.b16 %v1228
    %v1323 = vunpack.c.l.b16 %v1229
    %v1324 = vunpack.c.h.b16 %v1229
    %v1325 = vunpack.c.l.b16 %v1230
    %v1326 = vunpack.c.h.b16 %v1230
    %v1327 = vpack.c.b16 %v1267, %v1263
    %v1328 = vpack.c.b16 %v1268, %v1264
    %v1329 = vpack.c.b16 %v1269, %v1265
    %v1330 = vpack.c.b16 %v1270, %v1266
    %v1331 = vpack.c.b16 %v1275, %v1271
    %v1332 = vpack.c.b16 %v1276, %v1272
    %v1333 = vpack.c.b16 %v1277, %v1273
    %v1334 = vpack.c.b16 %v1278, %v1274
    %v1335 = vpack.c.b16 %v1283, %v1279
    %v1336 = vpack.c.b16 %v1284, %v1280
    %v1337 = vpack.c.b16 %v1285, %v1281
    %v1338 = vpack.c.b16 %v1286, %v1282
    %v1339 = vpack.c.b16 %v1291, %v1287
    %v1340 = vpack.c.b16 %v1292, %v1288
    %v1341 = vpack.c.b16 %v1293, %v1289
    %v1342 = vpack.c.b16 %v1294, %v1290
    %v1343 = vpack.c.b16 %v1299, %v1295
    %v1344 = vpack.c.b16 %v1300, %v1296
    %v1345 = vpack.c.b16 %v1301, %v1297
    %v1346 = vpack.c.b16 %v1302, %v1298
    %v1347 = vpack.c.b16 %v1307, %v1303
    %v1348 = vpack.c.b16 %v1308, %v1304
    %v1349 = vpack.c.b16 %v1309, %v1305
    %v1350 = vpack.c.b16 %v1310, %v1306
    %v1351 = vpack.c.b16 %v1315, %v1311
    %v1352 = vpack.c.b16 %v1316, %v1312
    %v1353 = vpack.c.b16 %v1317, %v1313
    %v1354 = vpack.c.b16 %v1318, %v1314
    %v1355 = vpack.c.b16 %v1323, %v1319
    %v1356 = vpack.c.b16 %v1324, %v1320
    %v1357 = vpack.c.b16 %v1325, %v1321
    %v1358 = vpack.c.b16 %v1326, %v1322
    %1391 = vmatprep.subr.bf16.mxu0 %v1328
    %1392 = vmatpush1.bf16.msra.mxu0 %v1327
    %1393 = vmatprep.subr.bf16.mxu0 %v1332
    %1394 = vmatpush1.bf16.msra.mxu0 %v1331
    %1395 = vmatprep.subr.bf16.mxu0 %v1336
    %1396 = vmatpush1.bf16.msra.mxu0 %v1335
    %1397 = vmatprep.subr.bf16.mxu0 %v1340
    %1398 = vmatpush1.bf16.msra.mxu0 %v1339
    %1399 = vmatprep.subr.bf16.mxu0 %v1344
    %1400 = vmatpush1.bf16.msra.mxu0 %v1343
    %1401 = vmatprep.subr.bf16.mxu0 %v1348
    %1402 = vmatpush1.bf16.msra.mxu0 %v1347
    %1403 = vmatprep.subr.bf16.mxu0 %v1352
    %1404 = vmatpush1.bf16.msra.mxu0 %v1351
    %1405 = vmatprep.subr.bf16.mxu0 %v1356
    %1406 = vmatpush1.bf16.msra.mxu0 %v1355
    %1407 = vmatprep.subr.bf16.mxu0 0
    %1408 = vmatpush1.bf16.msra.mxu0 0
    %1409 = vmatprep.subr.bf16.mxu0 0
    %1410 = vmatpush1.bf16.msra.mxu0 0
    %1411 = vmatprep.subr.bf16.mxu0 0
    %1412 = vmatpush1.bf16.msra.mxu0 0
    %1413 = vmatprep.subr.bf16.mxu0 0
    %1414 = vmatpush1.bf16.msra.mxu0 0
    %1415 = vmatprep.subr.bf16.mxu0 0
    %1416 = vmatpush1.bf16.msra.mxu0 0
    %1417 = vmatprep.subr.bf16.mxu0 0
    %1418 = vmatpush1.bf16.msra.mxu0 0
    %1419 = vmatprep.subr.bf16.mxu0 0
    %1420 = vmatpush1.bf16.msra.mxu0 0
    %1421 = vmatprep.subr.bf16.mxu0 0
    %1422 = vmatpush1.bf16.msra.mxu0 0
    %1423 = vmatprep.mubr.bf16.mxu0 0
    %1424 = vmatmul.mubr.bf16.gmra.mrb[0].mxu0 0
    %v1425 = vpop.f32.mrb[0].mxu0
    %v1426 = vadd.f32 0.0, %v1425
    %v1427 = vpop.f32.mrb[0].mxu0
    %v1428 = vadd.f32 0.0, %v1427
    %v1429 = vpop.f32.mrb[0].mxu0
    %v1430 = vpop.f32.mrb[0].mxu0
    %1431 = vdwg.mxu0
    %1432 = vmatprep.subr.bf16.mxu0 %v1330
    %1433 = vmatpush1.bf16.msra.mxu0 %v1329
    %1434 = vmatprep.subr.bf16.mxu0 %v1334
    %1435 = vmatpush1.bf16.msra.mxu0 %v1333
    %1436 = vmatprep.subr.bf16.mxu0 %v1338
    %1437 = vmatpush1.bf16.msra.mxu0 %v1337
    %1438 = vmatprep.subr.bf16.mxu0 %v1342
    %1439 = vmatpush1.bf16.msra.mxu0 %v1341
    %1440 = vmatprep.subr.bf16.mxu0 %v1346
    %1441 = vmatpush1.bf16.msra.mxu0 %v1345
    %1442 = vmatprep.subr.bf16.mxu0 %v1350
    %1443 = vmatpush1.bf16.msra.mxu0 %v1349
    %1444 = vmatprep.subr.bf16.mxu0 %v1354
    %1445 = vmatpush1.bf16.msra.mxu0 %v1353
    %1446 = vmatprep.subr.bf16.mxu0 %v1358
    %1447 = vmatpush1.bf16.msra.mxu0 %v1357
    %1448 = vmatprep.subr.bf16.mxu0 0
    %1449 = vmatpush1.bf16.msra.mxu0 0
    %1450 = vmatprep.subr.bf16.mxu0 0
    %1451 = vmatpush1.bf16.msra.mxu0 0
    %1452 = vmatprep.subr.bf16.mxu0 0
    %1453 = vmatpush1.bf16.msra.mxu0 0
    %1454 = vmatprep.subr.bf16.mxu0 0
    %1455 = vmatpush1.bf16.msra.mxu0 0
    %1456 = vmatprep.subr.bf16.mxu0 0
    %1457 = vmatpush1.bf16.msra.mxu0 0
    %1458 = vmatprep.subr.bf16.mxu0 0
    %1459 = vmatpush1.bf16.msra.mxu0 0
    %1460 = vmatprep.subr.bf16.mxu0 0
    %1461 = vmatpush1.bf16.msra.mxu0 0
    %1462 = vmatprep.subr.bf16.mxu0 0
    %1463 = vmatpush1.bf16.msra.mxu0 0
    %1464 = vmatprep.mubr.bf16.mxu0 0
    %1465 = vmatmul.mubr.bf16.gmra.mrb[0].mxu0 0
    %v1466 = vpop.f32.mrb[0].mxu0
    %v1467 = vadd.f32 0.0, %v1466
    %v1468 = vpop.f32.mrb[0].mxu0
    %v1469 = vadd.f32 0.0, %v1468
    %v1470 = vpop.f32.mrb[0].mxu0
    %v1471 = vpop.f32.mrb[0].mxu0
    %1472 = vdwg.mxu0
    %v1473 = vadd.f32 %v1195, %v1426
    %v1474 = vadd.f32 %v1196, %v1428
    %v1475 = vadd.f32 %v1197, %v1467
    %v1476 = vadd.f32 %v1198, %v1469
    %v1477 = vmul.f32 %v1190, 0.5
    %v1478 = vtanh.pop %v1477
    %v1479 = vmul.f32 %v1478, 0.5
    %v1480 = vadd.f32 %v1479, 0.5
    %v1481 = vmul.f32 %v1191, 0.5
    %v1482 = vtanh.pop %v1481
    %v1483 = vmul.f32 %v1482, 0.5
    %v1484 = vadd.f32 %v1483, 0.5
    %v1485 = vtanh.pop %v1192
    %v1486 = vmul.f32 %v1193, 0.5
    %v1487 = vtanh.pop %v1486
    %v1488 = vmul.f32 %v1487, 0.5
    %v1489 = vadd.f32 %v1488, 0.5
    %v1490 = vmul.f32 %v1484, 0.0
    %v1491 = vmul.f32 %v1480, %v1485
    %v1492 = vadd.f32 %v1490, %v1491
    %v1493 = vtanh.pop %v1492
    %v1494 = vmul.f32 %v1489, %v1493
    %v1495 = vmul.f32 %v1473, 0.5
    %v1496 = vtanh.pop %v1495
    %v1497 = vmul.f32 %v1496, 0.5
    %v1498 = vadd.f32 %v1497, 0.5
    %v1499 = vmul.f32 %v1474, 0.5
    %v1500 = vtanh.pop %v1499
    %v1501 = vmul.f32 %v1500, 0.5
    %v1502 = vadd.f32 %v1501, 0.5
    %v1503 = vtanh.pop %v1475
    %v1504 = vmul.f32 %v1476, 0.5
    %v1505 = vtanh.pop %v1504
    %v1506 = vmul.f32 %v1505, 0.5
    %v1507 = vadd.f32 %v1506, 0.5
    %v1508 = vmul.f32 %v1502, 0.0
    %v1509 = vmul.f32 %v1498, %v1503
    %v1510 = vadd.f32 %v1508, %v1509
    %v1511 = vtanh.pop %v1510
    %v1512 = vmul.f32 %v1507, %v1511
    %1513 = vst [vmem:[#allocation4] sm:$0xff] %v1494
    %s1514 = scalar_lea.vmem [#allocation4], 112
    %1515 = vst [vmem:[%s1514 + $0x8] sm:$0xff] %v1512
    %s1516 = scalar_lea.vmem [#allocation2], 32
    %v1517 = vld [vmem:[%s1516] sm:$0xff]
    %v1518 = vld [vmem:[%s1516 + $0x8] sm:$0xff]
    %v1519 = vld [vmem:[%s1516 + $0x10] sm:$0xff]
    %v1520 = vld [vmem:[%s1516 + $0x18] sm:$0xff]
    %v1521 = vpack.c.bf16 %v1494, %v1494
    %v1522 = vld [vmem:[#allocation10] sm:$0xff]
    %v1523 = vld [vmem:[#allocation10 + $0x8] sm:$0xff]
    %v1524 = vld [vmem:[#allocation10 + $0x10] sm:$0xff]
    %v1525 = vld [vmem:[#allocation10 + $0x18] sm:$0xff]
    %v1526 = vld [vmem:[#allocation10 + $0x20] sm:$0xff]
    %v1527 = vld [vmem:[#allocation10 + $0x28] sm:$0xff]
    %v1528 = vld [vmem:[#allocation10 + $0x30] sm:$0xff]
    %v1529 = vld [vmem:[#allocation10 + $0x38] sm:$0xff]
    %v1530 = vld [vmem:[#allocation10 + $0x40] sm:$0xff]
    %v1531 = vld [vmem:[#allocation10 + $0x48] sm:$0xff]
    %v1532 = vld [vmem:[#allocation10 + $0x50] sm:$0xff]
    %v1533 = vld [vmem:[#allocation10 + $0x58] sm:$0xff]
    %v1534 = vld [vmem:[#allocation10 + $0x60] sm:$0xff]
    %v1535 = vld [vmem:[#allocation10 + $0x68] sm:$0xff]
    %v1536 = vld [vmem:[#allocation10 + $0x70] sm:$0xff]
    %v1537 = vld [vmem:[#allocation10 + $0x78] sm:$0xff]
    %v1538 = vld [vmem:[#allocation10 + $0x80] sm:$0xff]
    %v1539 = vld [vmem:[#allocation10 + $0x88] sm:$0xff]
    %v1540 = vld [vmem:[#allocation10 + $0x90] sm:$0xff]
    %v1541 = vld [vmem:[#allocation10 + $0x98] sm:$0xff]
    %v1542 = vld [vmem:[#allocation10 + $0xa0] sm:$0xff]
    %v1543 = vld [vmem:[#allocation10 + $0xa8] sm:$0xff]
    %v1544 = vld [vmem:[#allocation10 + $0xb0] sm:$0xff]
    %v1545 = vld [vmem:[#allocation10 + $0xb8] sm:$0xff]
    %v1546 = vld [vmem:[#allocation10 + $0xc0] sm:$0xff]
    %v1547 = vld [vmem:[#allocation10 + $0xc8] sm:$0xff]
    %v1548 = vld [vmem:[#allocation10 + $0xd0] sm:$0xff]
    %v1549 = vld [vmem:[#allocation10 + $0xd8] sm:$0xff]
    %v1550 = vld [vmem:[#allocation10 + $0xe0] sm:$0xff]
    %v1551 = vld [vmem:[#allocation10 + $0xe8] sm:$0xff]
    %v1552 = vld [vmem:[#allocation10 + $0xf0] sm:$0xff]
    %v1553 = vld [vmem:[#allocation10 + $0xf8] sm:$0xff]
    %v1586 = vunpack.c.l.b16 %v1522
    %v1587 = vunpack.c.h.b16 %v1522
    %v1588 = vunpack.c.l.b16 %v1523
    %v1589 = vunpack.c.h.b16 %v1523
    %v1590 = vunpack.c.l.b16 %v1524
    %v1591 = vunpack.c.h.b16 %v1524
    %v1592 = vunpack.c.l.b16 %v1525
    %v1593 = vunpack.c.h.b16 %v1525
    %v1594 = vunpack.c.l.b16 %v1526
    %v1595 = vunpack.c.h.b16 %v1526
    %v1596 = vunpack.c.l.b16 %v1527
    %v1597 = vunpack.c.h.b16 %v1527
    %v1598 = vunpack.c.l.b16 %v1528
    %v1599 = vunpack.c.h.b16 %v1528
    %v1600 = vunpack.c.l.b16 %v1529
    %v1601 = vunpack.c.h.b16 %v1529
    %v1602 = vunpack.c.l.b16 %v1530
    %v1603 = vunpack.c.h.b16 %v1530
    %v1604 = vunpack.c.l.b16 %v1531
    %v1605 = vunpack.c.h.b16 %v1531
    %v1606 = vunpack.c.l.b16 %v1532
    %v1607 = vunpack.c.h.b16 %v1532
    %v1608 = vunpack.c.l.b16 %v1533
    %v1609 = vunpack.c.h.b16 %v1533
    %v1610 = vunpack.c.l.b16 %v1534
    %v1611 = vunpack.c.h.b16 %v1534
    %v1612 = vunpack.c.l.b16 %v1535
    %v1613 = vunpack.c.h.b16 %v1535
    %v1614 = vunpack.c.l.b16 %v1536
    %v1615 = vunpack.c.h.b16 %v1536
    %v1616 = vunpack.c.l.b16 %v1537
    %v1617 = vunpack.c.h.b16 %v1537
    %v1618 = vunpack.c.l.b16 %v1538
    %v1619 = vunpack.c.h.b16 %v1538
    %v1620 = vunpack.c.l.b16 %v1539
    %v1621 = vunpack.c.h.b16 %v1539
    %v1622 = vunpack.c.l.b16 %v1540
    %v1623 = vunpack.c.h.b16 %v1540
    %v1624 = vunpack.c.l.b16 %v1541
    %v1625 = vunpack.c.h.b16 %v1541
    %v1626 = vunpack.c.l.b16 %v1542
    %v1627 = vunpack.c.h.b16 %v1542
    %v1628 = vunpack.c.l.b16 %v1543
    %v1629 = vunpack.c.h.b16 %v1543
    %v1630 = vunpack.c.l.b16 %v1544
    %v1631 = vunpack.c.h.b16 %v1544
    %v1632 = vunpack.c.l.b16 %v1545
    %v1633 = vunpack.c.h.b16 %v1545
    %v1634 = vunpack.c.l.b16 %v1546
    %v1635 = vunpack.c.h.b16 %v1546
    %v1636 = vunpack.c.l.b16 %v1547
    %v1637 = vunpack.c.h.b16 %v1547
    %v1638 = vunpack.c.l.b16 %v1548
    %v1639 = vunpack.c.h.b16 %v1548
    %v1640 = vunpack.c.l.b16 %v1549
    %v1641 = vunpack.c.h.b16 %v1549
    %v1642 = vunpack.c.l.b16 %v1550
    %v1643 = vunpack.c.h.b16 %v1550
    %v1644 = vunpack.c.l.b16 %v1551
    %v1645 = vunpack.c.h.b16 %v1551
    %v1646 = vunpack.c.l.b16 %v1552
    %v1647 = vunpack.c.h.b16 %v1552
    %v1648 = vunpack.c.l.b16 %v1553
    %v1649 = vunpack.c.h.b16 %v1553
    %v1650 = vpack.c.b16 %v1590, %v1586
    %v1651 = vpack.c.b16 %v1591, %v1587
    %v1652 = vpack.c.b16 %v1592, %v1588
    %v1653 = vpack.c.b16 %v1593, %v1589
    %v1654 = vpack.c.b16 %v1598, %v1594
    %v1655 = vpack.c.b16 %v1599, %v1595
    %v1656 = vpack.c.b16 %v1600, %v1596
    %v1657 = vpack.c.b16 %v1601, %v1597
    %v1658 = vpack.c.b16 %v1606, %v1602
    %v1659 = vpack.c.b16 %v1607, %v1603
    %v1660 = vpack.c.b16 %v1608, %v1604
    %v1661 = vpack.c.b16 %v1609, %v1605
    %v1662 = vpack.c.b16 %v1614, %v1610
    %v1663 = vpack.c.b16 %v1615, %v1611
    %v1664 = vpack.c.b16 %v1616, %v1612
    %v1665 = vpack.c.b16 %v1617, %v1613
    %v1666 = vpack.c.b16 %v1622, %v1618
    %v1667 = vpack.c.b16 %v1623, %v1619
    %v1668 = vpack.c.b16 %v1624, %v1620
    %v1669 = vpack.c.b16 %v1625, %v1621
    %v1670 = vpack.c.b16 %v1630, %v1626
    %v1671 = vpack.c.b16 %v1631, %v1627
    %v1672 = vpack.c.b16 %v1632, %v1628
    %v1673 = vpack.c.b16 %v1633, %v1629
    %v1674 = vpack.c.b16 %v1638, %v1634
    %v1675 = vpack.c.b16 %v1639, %v1635
    %v1676 = vpack.c.b16 %v1640, %v1636
    %v1677 = vpack.c.b16 %v1641, %v1637
    %v1678 = vpack.c.b16 %v1646, %v1642
    %v1679 = vpack.c.b16 %v1647, %v1643
    %v1680 = vpack.c.b16 %v1648, %v1644
    %v1681 = vpack.c.b16 %v1649, %v1645
    %1714 = vmatprep.subr.bf16.mxu0 %v1651
    %1715 = vmatpush1.bf16.msra.mxu0 %v1650
    %1716 = vmatprep.subr.bf16.mxu0 %v1655
    %1717 = vmatpush1.bf16.msra.mxu0 %v1654
    %1718 = vmatprep.subr.bf16.mxu0 %v1659
    %1719 = vmatpush1.bf16.msra.mxu0 %v1658
    %1720 = vmatprep.subr.bf16.mxu0 %v1663
    %1721 = vmatpush1.bf16.msra.mxu0 %v1662
    %1722 = vmatprep.subr.bf16.mxu0 %v1667
    %1723 = vmatpush1.bf16.msra.mxu0 %v1666
    %1724 = vmatprep.subr.bf16.mxu0 %v1671
    %1725 = vmatpush1.bf16.msra.mxu0 %v1670
    %1726 = vmatprep.subr.bf16.mxu0 %v1675
    %1727 = vmatpush1.bf16.msra.mxu0 %v1674
    %1728 = vmatprep.subr.bf16.mxu0 %v1679
    %1729 = vmatpush1.bf16.msra.mxu0 %v1678
    %1730 = vmatprep.subr.bf16.mxu0 0
    %1731 = vmatpush1.bf16.msra.mxu0 0
    %1732 = vmatprep.subr.bf16.mxu0 0
    %1733 = vmatpush1.bf16.msra.mxu0 0
    %1734 = vmatprep.subr.bf16.mxu0 0
    %1735 = vmatpush1.bf16.msra.mxu0 0
    %1736 = vmatprep.subr.bf16.mxu0 0
    %1737 = vmatpush1.bf16.msra.mxu0 0
    %1738 = vmatprep.subr.bf16.mxu0 0
    %1739 = vmatpush1.bf16.msra.mxu0 0
    %1740 = vmatprep.subr.bf16.mxu0 0
    %1741 = vmatpush1.bf16.msra.mxu0 0
    %1742 = vmatprep.subr.bf16.mxu0 0
    %1743 = vmatpush1.bf16.msra.mxu0 0
    %1744 = vmatprep.subr.bf16.mxu0 0
    %1745 = vmatpush1.bf16.msra.mxu0 0
    %1746 = vmatprep.mubr.bf16.mxu0 0
    %1747 = vmatmul.mubr.bf16.gmra.mrb[0].mxu0 %v1521
    %v1748 = vpop.f32.mrb[0].mxu0
    %v1749 = vadd.f32 0.0, %v1748
    %v1750 = vpop.f32.mrb[0].mxu0
    %v1751 = vadd.f32 0.0, %v1750
    %v1752 = vpop.f32.mrb[0].mxu0
    %v1753 = vpop.f32.mrb[0].mxu0
    %1754 = vdwg.mxu0
    %1755 = vmatprep.subr.bf16.mxu0 %v1653
    %1756 = vmatpush1.bf16.msra.mxu0 %v1652
    %1757 = vmatprep.subr.bf16.mxu0 %v1657
    %1758 = vmatpush1.bf16.msra.mxu0 %v1656
    %1759 = vmatprep.subr.bf16.mxu0 %v1661
    %1760 = vmatpush1.bf16.msra.mxu0 %v1660
    %1761 = vmatprep.subr.bf16.mxu0 %v1665
    %1762 = vmatpush1.bf16.msra.mxu0 %v1664
    %1763 = vmatprep.subr.bf16.mxu0 %v1669
    %1764 = vmatpush1.bf16.msra.mxu0 %v1668
    %1765 = vmatprep.subr.bf16.mxu0 %v1673
    %1766 = vmatpush1.bf16.msra.mxu0 %v1672
    %1767 = vmatprep.subr.bf16.mxu0 %v1677
    %1768 = vmatpush1.bf16.msra.mxu0 %v1676
    %1769 = vmatprep.subr.bf16.mxu0 %v1681
    %1770 = vmatpush1.bf16.msra.mxu0 %v1680
    %1771 = vmatprep.subr.bf16.mxu0 0
    %1772 = vmatpush1.bf16.msra.mxu0 0
    %1773 = vmatprep.subr.bf16.mxu0 0
    %1774 = vmatpush1.bf16.msra.mxu0 0
    %1775 = vmatprep.subr.bf16.mxu0 0
    %1776 = vmatpush1.bf16.msra.mxu0 0
    %1777 = vmatprep.subr.bf16.mxu0 0
    %1778 = vmatpush1.bf16.msra.mxu0 0
    %1779 = vmatprep.subr.bf16.mxu0 0
    %1780 = vmatpush1.bf16.msra.mxu0 0
    %1781 = vmatprep.subr.bf16.mxu0 0
    %1782 = vmatpush1.bf16.msra.mxu0 0
    %1783 = vmatprep.subr.bf16.mxu0 0
    %1784 = vmatpush1.bf16.msra.mxu0 0
    %1785 = vmatprep.subr.bf16.mxu0 0
    %1786 = vmatpush1.bf16.msra.mxu0 0
    %1787 = vmatprep.mubr.bf16.mxu0 0
    %1788 = vmatmul.mubr.bf16.gmra.mrb[0].mxu0 %v1521
    %v1789 = vpop.f32.mrb[0].mxu0
    %v1790 = vadd.f32 0.0, %v1789
    %v1791 = vpop.f32.mrb[0].mxu0
    %v1792 = vadd.f32 0.0, %v1791
    %v1793 = vpop.f32.mrb[0].mxu0
    %v1794 = vpop.f32.mrb[0].mxu0
    %1795 = vdwg.mxu0
    %v1796 = vadd.f32 %v1517, %v1749
    %v1797 = vadd.f32 %v1518, %v1751
    %v1798 = vadd.f32 %v1519, %v1790
    %v1799 = vadd.f32 %v1520, %v1792
    %s1800 = scalar_lea.vmem [#allocation3], 192
    %v1801 = vld [vmem:[%s1800] sm:$0xff]
    %v1802 = vld [vmem:[%s1800 + $0x8] sm:$0xff]
    %v1803 = vld [vmem:[%s1800 + $0x10] sm:$0xff]
    %v1804 = vld [vmem:[%s1800 + $0x18] sm:$0xff]
    %v1805 = vpack.c.bf16 %v1512, %v1512
    %v1806 = vld [vmem:[#allocation13] sm:$0xff]
    %v1807 = vld [vmem:[#allocation13 + $0x8] sm:$0xff]
    %v1808 = vld [vmem:[#allocation13 + $0x10] sm:$0xff]
    %v1809 = vld [vmem:[#allocation13 + $0x18] sm:$0xff]
    %v1810 = vld [vmem:[#allocation13 + $0x20] sm:$0xff]
    %v1811 = vld [vmem:[#allocation13 + $0x28] sm:$0xff]
    %v1812 = vld [vmem:[#allocation13 + $0x30] sm:$0xff]
    %v1813 = vld [vmem:[#allocation13 + $0x38] sm:$0xff]
    %v1814 = vld [vmem:[#allocation13 + $0x40] sm:$0xff]
    %v1815 = vld [vmem:[#allocation13 + $0x48] sm:$0xff]
    %v1816 = vld [vmem:[#allocation13 + $0x50] sm:$0xff]
    %v1817 = vld [vmem:[#allocation13 + $0x58] sm:$0xff]
    %v1818 = vld [vmem:[#allocation13 + $0x60] sm:$0xff]
    %v1819 = vld [vmem:[#allocation13 + $0x68] sm:$0xff]
    %v1820 = vld [vmem:[#allocation13 + $0x70] sm:$0xff]
    %v1821 = vld [vmem:[#allocation13 + $0x78] sm:$0xff]
    %v1822 = vld [vmem:[#allocation13 + $0x80] sm:$0xff]
    %v1823 = vld [vmem:[#allocation13 + $0x88] sm:$0xff]
    %v1824 = vld [vmem:[#allocation13 + $0x90] sm:$0xff]
    %v1825 = vld [vmem:[#allocation13 + $0x98] sm:$0xff]
    %v1826 = vld [vmem:[#allocation13 + $0xa0] sm:$0xff]
    %v1827 = vld [vmem:[#allocation13 + $0xa8] sm:$0xff]
    %v1828 = vld [vmem:[#allocation13 + $0xb0] sm:$0xff]
    %v1829 = vld [vmem:[#allocation13 + $0xb8] sm:$0xff]
    %v1830 = vld [vmem:[#allocation13 + $0xc0] sm:$0xff]
    %v1831 = vld [vmem:[#allocation13 + $0xc8] sm:$0xff]
    %v1832 = vld [vmem:[#allocation13 + $0xd0] sm:$0xff]
    %v1833 = vld [vmem:[#allocation13 + $0xd8] sm:$0xff]
    %v1834 = vld [vmem:[#allocation13 + $0xe0] sm:$0xff]
    %v1835 = vld [vmem:[#allocation13 + $0xe8] sm:$0xff]
    %v1836 = vld [vmem:[#allocation13 + $0xf0] sm:$0xff]
    %v1837 = vld [vmem:[#allocation13 + $0xf8] sm:$0xff]
    %v1870 = vunpack.c.l.b16 %v1806
    %v1871 = vunpack.c.h.b16 %v1806
    %v1872 = vunpack.c.l.b16 %v1807
    %v1873 = vunpack.c.h.b16 %v1807
    %v1874 = vunpack.c.l.b16 %v1808
    %v1875 = vunpack.c.h.b16 %v1808
    %v1876 = vunpack.c.l.b16 %v1809
    %v1877 = vunpack.c.h.b16 %v1809
    %v1878 = vunpack.c.l.b16 %v1810
    %v1879 = vunpack.c.h.b16 %v1810
    %v1880 = vunpack.c.l.b16 %v1811
    %v1881 = vunpack.c.h.b16 %v1811
    %v1882 = vunpack.c.l.b16 %v1812
    %v1883 = vunpack.c.h.b16 %v1812
    %v1884 = vunpack.c.l.b16 %v1813
    %v1885 = vunpack.c.h.b16 %v1813
    %v1886 = vunpack.c.l.b16 %v1814
    %v1887 = vunpack.c.h.b16 %v1814
    %v1888 = vunpack.c.l.b16 %v1815
    %v1889 = vunpack.c.h.b16 %v1815
    %v1890 = vunpack.c.l.b16 %v1816
    %v1891 = vunpack.c.h.b16 %v1816
    %v1892 = vunpack.c.l.b16 %v1817
    %v1893 = vunpack.c.h.b16 %v1817
    %v1894 = vunpack.c.l.b16 %v1818
    %v1895 = vunpack.c.h.b16 %v1818
    %v1896 = vunpack.c.l.b16 %v1819
    %v1897 = vunpack.c.h.b16 %v1819
    %v1898 = vunpack.c.l.b16 %v1820
    %v1899 = vunpack.c.h.b16 %v1820
    %v1900 = vunpack.c.l.b16 %v1821
    %v1901 = vunpack.c.h.b16 %v1821
    %v1902 = vunpack.c.l.b16 %v1822
    %v1903 = vunpack.c.h.b16 %v1822
    %v1904 = vunpack.c.l.b16 %v1823
    %v1905 = vunpack.c.h.b16 %v1823
    %v1906 = vunpack.c.l.b16 %v1824
    %v1907 = vunpack.c.h.b16 %v1824
    %v1908 = vunpack.c.l.b16 %v1825
    %v1909 = vunpack.c.h.b16 %v1825
    %v1910 = vunpack.c.l.b16 %v1826
    %v1911 = vunpack.c.h.b16 %v1826
    %v1912 = vunpack.c.l.b16 %v1827
    %v1913 = vunpack.c.h.b16 %v1827
    %v1914 = vunpack.c.l.b16 %v1828
    %v1915 = vunpack.c.h.b16 %v1828
    %v1916 = vunpack.c.l.b16 %v1829
    %v1917 = vunpack.c.h.b16 %v1829
    %v1918 = vunpack.c.l.b16 %v1830
    %v1919 = vunpack.c.h.b16 %v1830
    %v1920 = vunpack.c.l.b16 %v1831
    %v1921 = vunpack.c.h.b16 %v1831
    %v1922 = vunpack.c.l.b16 %v1832
    %v1923 = vunpack.c.h.b16 %v1832
    %v1924 = vunpack.c.l.b16 %v1833
    %v1925 = vunpack.c.h.b16 %v1833
    %v1926 = vunpack.c.l.b16 %v1834
    %v1927 = vunpack.c.h.b16 %v1834
    %v1928 = vunpack.c.l.b16 %v1835
    %v1929 = vunpack.c.h.b16 %v1835
    %v1930 = vunpack.c.l.b16 %v1836
    %v1931 = vunpack.c.h.b16 %v1836
    %v1932 = vunpack.c.l.b16 %v1837
    %v1933 = vunpack.c.h.b16 %v1837
    %v1934 = vpack.c.b16 %v1874, %v1870
    %v1935 = vpack.c.b16 %v1875, %v1871
    %v1936 = vpack.c.b16 %v1876, %v1872
    %v1937 = vpack.c.b16 %v1877, %v1873
    %v1938 = vpack.c.b16 %v1882, %v1878
    %v1939 = vpack.c.b16 %v1883, %v1879
    %v1940 = vpack.c.b16 %v1884, %v1880
    %v1941 = vpack.c.b16 %v1885, %v1881
    %v1942 = vpack.c.b16 %v1890, %v1886
    %v1943 = vpack.c.b16 %v1891, %v1887
    %v1944 = vpack.c.b16 %v1892, %v1888
    %v1945 = vpack.c.b16 %v1893, %v1889
    %v1946 = vpack.c.b16 %v1898, %v1894
    %v1947 = vpack.c.b16 %v1899, %v1895
    %v1948 = vpack.c.b16 %v1900, %v1896
    %v1949 = vpack.c.b16 %v1901, %v1897
    %v1950 = vpack.c.b16 %v1906, %v1902
    %v1951 = vpack.c.b16 %v1907, %v1903
    %v1952 = vpack.c.b16 %v1908, %v1904
    %v1953 = vpack.c.b16 %v1909, %v1905
    %v1954 = vpack.c.b16 %v1914, %v1910
    %v1955 = vpack.c.b16 %v1915, %v1911
    %v1956 = vpack.c.b16 %v1916, %v1912
    %v1957 = vpack.c.b16 %v1917, %v1913
    %v1958 = vpack.c.b16 %v1922, %v1918
    %v1959 = vpack.c.b16 %v1923, %v1919
    %v1960 = vpack.c.b16 %v1924, %v1920
    %v1961 = vpack.c.b16 %v1925, %v1921
    %v1962 = vpack.c.b16 %v1930, %v1926
    %v1963 = vpack.c.b16 %v1931, %v1927
    %v1964 = vpack.c.b16 %v1932, %v1928
    %v1965 = vpack.c.b16 %v1933, %v1929
    %1998 = vmatprep.subr.bf16.mxu0 %v1935
    %1999 = vmatpush1.bf16.msra.mxu0 %v1934
    %2000 = vmatprep.subr.bf16.mxu0 %v1939
    %2001 = vmatpush1.bf16.msra.mxu0 %v1938
    %2002 = vmatprep.subr.bf16.mxu0 %v1943
    %2003 = vmatpush1.bf16.msra.mxu0 %v1942
    %2004 = vmatprep.subr.bf16.mxu0 %v1947
    %2005 = vmatpush1.bf16.msra.mxu0 %v1946
    %2006 = vmatprep.subr.bf16.mxu0 %v1951
    %2007 = vmatpush1.bf16.msra.mxu0 %v1950
    %2008 = vmatprep.subr.bf16.mxu0 %v1955
    %2009 = vmatpush1.bf16.msra.mxu0 %v1954
    %2010 = vmatprep.subr.bf16.mxu0 %v1959
    %2011 = vmatpush1.bf16.msra.mxu0 %v1958
    %2012 = vmatprep.subr.bf16.mxu0 %v1963
    %2013 = vmatpush1.bf16.msra.mxu0 %v1962
    %2014 = vmatprep.subr.bf16.mxu0 0
    %2015 = vmatpush1.bf16.msra.mxu0 0
    %2016 = vmatprep.subr.bf16.mxu0 0
    %2017 = vmatpush1.bf16.msra.mxu0 0
    %2018 = vmatprep.subr.bf16.mxu0 0
    %2019 = vmatpush1.bf16.msra.mxu0 0
    %2020 = vmatprep.subr.bf16.mxu0 0
    %2021 = vmatpush1.bf16.msra.mxu0 0
    %2022 = vmatprep.subr.bf16.mxu0 0
    %2023 = vmatpush1.bf16.msra.mxu0 0
    %2024 = vmatprep.subr.bf16.mxu0 0
    %2025 = vmatpush1.bf16.msra.mxu0 0
    %2026 = vmatprep.subr.bf16.mxu0 0
    %2027 = vmatpush1.bf16.msra.mxu0 0
    %2028 = vmatprep.subr.bf16.mxu0 0
    %2029 = vmatpush1.bf16.msra.mxu0 0
    %2030 = vmatprep.mubr.bf16.mxu0 0
    %2031 = vmatmul.mubr.bf16.gmra.mrb[0].mxu0 %v1805
    %v2032 = vpop.f32.mrb[0].mxu0
    %v2033 = vadd.f32 0.0, %v2032
    %v2034 = vpop.f32.mrb[0].mxu0
    %v2035 = vadd.f32 0.0, %v2034
    %v2036 = vpop.f32.mrb[0].mxu0
    %v2037 = vpop.f32.mrb[0].mxu0
    %2038 = vdwg.mxu0
    %2039 = vmatprep.subr.bf16.mxu0 %v1937
    %2040 = vmatpush1.bf16.msra.mxu0 %v1936
    %2041 = vmatprep.subr.bf16.mxu0 %v1941
    %2042 = vmatpush1.bf16.msra.mxu0 %v1940
    %2043 = vmatprep.subr.bf16.mxu0 %v1945
    %2044 = vmatpush1.bf16.msra.mxu0 %v1944
    %2045 = vmatprep.subr.bf16.mxu0 %v1949
    %2046 = vmatpush1.bf16.msra.mxu0 %v1948
    %2047 = vmatprep.subr.bf16.mxu0 %v1953
    %2048 = vmatpush1.bf16.msra.mxu0 %v1952
    %2049 = vmatprep.subr.bf16.mxu0 %v1957
    %2050 = vmatpush1.bf16.msra.mxu0 %v1956
    %2051 = vmatprep.subr.bf16.mxu0 %v1961
    %2052 = vmatpush1.bf16.msra.mxu0 %v1960
    %2053 = vmatprep.subr.bf16.mxu0 %v1965
    %2054 = vmatpush1.bf16.msra.mxu0 %v1964
    %2055 = vmatprep.subr.bf16.mxu0 0
    %2056 = vmatpush1.bf16.msra.mxu0 0
    %2057 = vmatprep.subr.bf16.mxu0 0
    %2058 = vmatpush1.bf16.msra.mxu0 0
    %2059 = vmatprep.subr.bf16.mxu0 0
    %2060 = vmatpush1.bf16.msra.mxu0 0
    %2061 = vmatprep.subr.bf16.mxu0 0
    %2062 = vmatpush1.bf16.msra.mxu0 0
    %2063 = vmatprep.subr.bf16.mxu0 0
    %2064 = vmatpush1.bf16.msra.mxu0 0
    %2065 = vmatprep.subr.bf16.mxu0 0
    %2066 = vmatpush1.bf16.msra.mxu0 0
    %2067 = vmatprep.subr.bf16.mxu0 0
    %2068 = vmatpush1.bf16.msra.mxu0 0
    %2069 = vmatprep.subr.bf16.mxu0 0
    %2070 = vmatpush1.bf16.msra.mxu0 0
    %2071 = vmatprep.mubr.bf16.mxu0 0
    %2072 = vmatmul.mubr.bf16.gmra.mrb[0].mxu0 %v1805
    %v2073 = vpop.f32.mrb[0].mxu0
    %v2074 = vadd.f32 0.0, %v2073
    %v2075 = vpop.f32.mrb[0].mxu0
    %v2076 = vadd.f32 0.0, %v2075
    %v2077 = vpop.f32.mrb[0].mxu0
    %v2078 = vpop.f32.mrb[0].mxu0
    %2079 = vdwg.mxu0
    %v2080 = vadd.f32 %v1801, %v2033
    %v2081 = vadd.f32 %v1802, %v2035
    %v2082 = vadd.f32 %v1803, %v2074
    %v2083 = vadd.f32 %v1804, %v2076
    %v2084 = vmul.f32 %v1796, 0.5
    %v2085 = vtanh.pop %v2084
    %v2086 = vmul.f32 %v2085, 0.5
    %v2087 = vadd.f32 %v2086, 0.5
    %v2088 = vmul.f32 %v1797, 0.5
    %v2089 = vtanh.pop %v2088
    %v2090 = vmul.f32 %v2089, 0.5
    %v2091 = vadd.f32 %v2090, 0.5
    %v2092 = vtanh.pop %v1798
    %v2093 = vmul.f32 %v1799, 0.5
    %v2094 = vtanh.pop %v2093
    %v2095 = vmul.f32 %v2094, 0.5
    %v2096 = vadd.f32 %v2095, 0.5
    %v2097 = vmul.f32 %v2091, %v1492
    %v2098 = vmul.f32 %v2087, %v2092
    %v2099 = vadd.f32 %v2097, %v2098
    %v2100 = vtanh.pop %v2099
    %v2101 = vmul.f32 %v2096, %v2100
    %v2102 = vmul.f32 %v2080, 0.5
    %v2103 = vtanh.pop %v2102
    %v2104 = vmul.f32 %v2103, 0.5
    %v2105 = vadd.f32 %v2104, 0.5
    %v2106 = vmul.f32 %v2081, 0.5
    %v2107 = vtanh.pop %v2106
    %v2108 = vmul.f32 %v2107, 0.5
    %v2109 = vadd.f32 %v2108, 0.5
    %v2110 = vtanh.pop %v2082
    %v2111 = vmul.f32 %v2083, 0.5
    %v2112 = vtanh.pop %v2111
    %v2113 = vmul.f32 %v2112, 0.5
    %v2114 = vadd.f32 %v2113, 0.5
    %v2115 = vmul.f32 %v2109, %v1510
    %v2116 = vmul.f32 %v2105, %v2110
    %v2117 = vadd.f32 %v2115, %v2116
    %v2118 = vtanh.pop %v2117
    %v2119 = vmul.f32 %v2114, %v2118
    %s2120 = scalar_lea.vmem [#allocation4], 16
    %2121 = vst [vmem:[%s2120] sm:$0xff] %v2101
    %s2122 = scalar_lea.vmem [#allocation4], 96
    %2123 = vst [vmem:[%s2122 + $0x8] sm:$0xff] %v2119
    %s2124 = scalar_lea.vmem [#allocation2], 64
    %v2125 = vld [vmem:[%s2124] sm:$0xff]
    %v2126 = vld [vmem:[%s2124 + $0x8] sm:$0xff]
    %v2127 = vld [vmem:[%s2124 + $0x10] sm:$0xff]
    %v2128 = vld [vmem:[%s2124 + $0x18] sm:$0xff]
    %v2129 = vpack.c.bf16 %v2101, %v2101
    %v2130 = vld [vmem:[#allocation10] sm:$0xff]
    %v2131 = vld [vmem:[#allocation10 + $0x8] sm:$0xff]
    %v2132 = vld [vmem:[#allocation10 + $0x10] sm:$0xff]
    %v2133 = vld [vmem:[#allocation10 + $0x18] sm:$0xff]
    %v2134 = vld [vmem:[#allocation10 + $0x20] sm:$0xff]
    %v2135 = vld [vmem:[#allocation10 + $0x28] sm:$0xff]
    %v2136 = vld [vmem:[#allocation10 + $0x30] sm:$0xff]
    %v2137 = vld [vmem:[#allocation10 + $0x38] sm:$0xff]
    %v2138 = vld [vmem:[#allocation10 + $0x40] sm:$0xff]
    %v2139 = vld [vmem:[#allocation10 + $0x48] sm:$0xff]
    %v2140 = vld [vmem:[#allocation10 + $0x50] sm:$0xff]
    %v2141 = vld [vmem:[#allocation10 + $0x58] sm:$0xff]
    %v2142 = vld [vmem:[#allocation10 + $0x60] sm:$0xff]
    %v2143 = vld [vmem:[#allocation10 + $0x68] sm:$0xff]
    %v2144 = vld [vmem:[#allocation10 + $0x70] sm:$0xff]
    %v2145 = vld [vmem:[#allocation10 + $0x78] sm:$0xff]
    %v2146 = vld [vmem:[#allocation10 + $0x80] sm:$0xff]
    %v2147 = vld [vmem:[#allocation10 + $0x88] sm:$0xff]
    %v2148 = vld [vmem:[#allocation10 + $0x90] sm:$0xff]
    %v2149 = vld [vmem:[#allocation10 + $0x98] sm:$0xff]
    %v2150 = vld [vmem:[#allocation10 + $0xa0] sm:$0xff]
    %v2151 = vld [vmem:[#allocation10 + $0xa8] sm:$0xff]
    %v2152 = vld [vmem:[#allocation10 + $0xb0] sm:$0xff]
    %v2153 = vld [vmem:[#allocation10 + $0xb8] sm:$0xff]
    %v2154 = vld [vmem:[#allocation10 + $0xc0] sm:$0xff]
    %v2155 = vld [vmem:[#allocation10 + $0xc8] sm:$0xff]
    %v2156 = vld [vmem:[#allocation10 + $0xd0] sm:$0xff]
    %v2157 = vld [vmem:[#allocation10 + $0xd8] sm:$0xff]
    %v2158 = vld [vmem:[#allocation10 + $0xe0] sm:$0xff]
    %v2159 = vld [vmem:[#allocation10 + $0xe8] sm:$0xff]
    %v2160 = vld [vmem:[#allocation10 + $0xf0] sm:$0xff]
    %v2161 = vld [vmem:[#allocation10 + $0xf8] sm:$0xff]
    %v2194 = vunpack.c.l.b16 %v2130
    %v2195 = vunpack.c.h.b16 %v2130
    %v2196 = vunpack.c.l.b16 %v2131
    %v2197 = vunpack.c.h.b16 %v2131
    %v2198 = vunpack.c.l.b16 %v2132
    %v2199 = vunpack.c.h.b16 %v2132
    %v2200 = vunpack.c.l.b16 %v2133
    %v2201 = vunpack.c.h.b16 %v2133
    %v2202 = vunpack.c.l.b16 %v2134
    %v2203 = vunpack.c.h.b16 %v2134
    %v2204 = vunpack.c.l.b16 %v2135
    %v2205 = vunpack.c.h.b16 %v2135
    %v2206 = vunpack.c.l.b16 %v2136
    %v2207 = vunpack.c.h.b16 %v2136
    %v2208 = vunpack.c.l.b16 %v2137
    %v2209 = vunpack.c.h.b16 %v2137
    %v2210 = vunpack.c.l.b16 %v2138
    %v2211 = vunpack.c.h.b16 %v2138
    %v2212 = vunpack.c.l.b16 %v2139
    %v2213 = vunpack.c.h.b16 %v2139
    %v2214 = vunpack.c.l.b16 %v2140
    %v2215 = vunpack.c.h.b16 %v2140
    %v2216 = vunpack.c.l.b16 %v2141
    %v2217 = vunpack.c.h.b16 %v2141
    %v2218 = vunpack.c.l.b16 %v2142
    %v2219 = vunpack.c.h.b16 %v2142
    %v2220 = vunpack.c.l.b16 %v2143
    %v2221 = vunpack.c.h.b16 %v2143
    %v2222 = vunpack.c.l.b16 %v2144
    %v2223 = vunpack.c.h.b16 %v2144
    %v2224 = vunpack.c.l.b16 %v2145
    %v2225 = vunpack.c.h.b16 %v2145
    %v2226 = vunpack.c.l.b16 %v2146
    %v2227 = vunpack.c.h.b16 %v2146
    %v2228 = vunpack.c.l.b16 %v2147
    %v2229 = vunpack.c.h.b16 %v2147
    %v2230 = vunpack.c.l.b16 %v2148
    %v2231 = vunpack.c.h.b16 %v2148
    %v2232 = vunpack.c.l.b16 %v2149
    %v2233 = vunpack.c.h.b16 %v2149
    %v2234 = vunpack.c.l.b16 %v2150
    %v2235 = vunpack.c.h.b16 %v2150
    %v2236 = vunpack.c.l.b16 %v2151
    %v2237 = vunpack.c.h.b16 %v2151
    %v2238 = vunpack.c.l.b16 %v2152
    %v2239 = vunpack.c.h.b16 %v2152
    %v2240 = vunpack.c.l.b16 %v2153
    %v2241 = vunpack.c.h.b16 %v2153
    %v2242 = vunpack.c.l.b16 %v2154
    %v2243 = vunpack.c.h.b16 %v2154
    %v2244 = vunpack.c.l.b16 %v2155
    %v2245 = vunpack.c.h.b16 %v2155
    %v2246 = vunpack.c.l.b16 %v2156
    %v2247 = vunpack.c.h.b16 %v2156
    %v2248 = vunpack.c.l.b16 %v2157
    %v2249 = vunpack.c.h.b16 %v2157
    %v2250 = vunpack.c.l.b16 %v2158
    %v2251 = vunpack.c.h.b16 %v2158
    %v2252 = vunpack.c.l.b16 %v2159
    %v2253 = vunpack.c.h.b16 %v2159
    %v2254 = vunpack.c.l.b16 %v2160
    %v2255 = vunpack.c.h.b16 %v2160
    %v2256 = vunpack.c.l.b16 %v2161
    %v2257 = vunpack.c.h.b16 %v2161
    %v2258 = vpack.c.b16 %v2198, %v2194
    %v2259 = vpack.c.b16 %v2199, %v2195
    %v2260 = vpack.c.b16 %v2200, %v2196
    %v2261 = vpack.c.b16 %v2201, %v2197
    %v2262 = vpack.c.b16 %v2206, %v2202
    %v2263 = vpack.c.b16 %v2207, %v2203
    %v2264 = vpack.c.b16 %v2208, %v2204
    %v2265 = vpack.c.b16 %v2209, %v2205
    %v2266 = vpack.c.b16 %v2214, %v2210
    %v2267 = vpack.c.b16 %v2215, %v2211
    %v2268 = vpack.c.b16 %v2216, %v2212
    %v2269 = vpack.c.b16 %v2217, %v2213
    %v2270 = vpack.c.b16 %v2222, %v2218
    %v2271 = vpack.c.b16 %v2223, %v2219
    %v2272 = vpack.c.b16 %v2224, %v2220
    %v2273 = vpack.c.b16 %v2225, %v2221
    %v2274 = vpack.c.b16 %v2230, %v2226
    %v2275 = vpack.c.b16 %v2231, %v2227
    %v2276 = vpack.c.b16 %v2232, %v2228
    %v2277 = vpack.c.b16 %v2233, %v2229
    %v2278 = vpack.c.b16 %v2238, %v2234
    %v2279 = vpack.c.b16 %v2239, %v2235
    %v2280 = vpack.c.b16 %v2240, %v2236
    %v2281 = vpack.c.b16 %v2241, %v2237
    %v2282 = vpack.c.b16 %v2246, %v2242
    %v2283 = vpack.c.b16 %v2247, %v2243
    %v2284 = vpack.c.b16 %v2248, %v2244
    %v2285 = vpack.c.b16 %v2249, %v2245
    %v2286 = vpack.c.b16 %v2254, %v2250
    %v2287 = vpack.c.b16 %v2255, %v2251
    %v2288 = vpack.c.b16 %v2256, %v2252
    %v2289 = vpack.c.b16 %v2257, %v2253
    %2322 = vmatprep.subr.bf16.mxu0 %v2259
    %2323 = vmatpush1.bf16.msra.mxu0 %v2258
    %2324 = vmatprep.subr.bf16.mxu0 %v2263
    %2325 = vmatpush1.bf16.msra.mxu0 %v2262
    %2326 = vmatprep.subr.bf16.mxu0 %v2267
    %2327 = vmatpush1.bf16.msra.mxu0 %v2266
    %2328 = vmatprep.subr.bf16.mxu0 %v2271
    %2329 = vmatpush1.bf16.msra.mxu0 %v2270
    %2330 = vmatprep.subr.bf16.mxu0 %v2275
    %2331 = vmatpush1.bf16.msra.mxu0 %v2274
    %2332 = vmatprep.subr.bf16.mxu0 %v2279
    %2333 = vmatpush1.bf16.msra.mxu0 %v2278
    %2334 = vmatprep.subr.bf16.mxu0 %v2283
    %2335 = vmatpush1.bf16.msra.mxu0 %v2282
    %2336 = vmatprep.subr.bf16.mxu0 %v2287
    %2337 = vmatpush1.bf16.msra.mxu0 %v2286
    %2338 = vmatprep.subr.bf16.mxu0 0
    %2339 = vmatpush1.bf16.msra.mxu0 0
    %2340 = vmatprep.subr.bf16.mxu0 0
    %2341 = vmatpush1.bf16.msra.mxu0 0
    %2342 = vmatprep.subr.bf16.mxu0 0
    %2343 = vmatpush1.bf16.msra.mxu0 0
    %2344 = vmatprep.subr.bf16.mxu0 0
    %2345 = vmatpush1.bf16.msra.mxu0 0
    %2346 = vmatprep.subr.bf16.mxu0 0
    %2347 = vmatpush1.bf16.msra.mxu0 0
    %2348 = vmatprep.subr.bf16.mxu0 0
    %2349 = vmatpush1.bf16.msra.mxu0 0
    %2350 = vmatprep.subr.bf16.mxu0 0
    %2351 = vmatpush1.bf16.msra.mxu0 0
    %2352 = vmatprep.subr.bf16.mxu0 0
    %2353 = vmatpush1.bf16.msra.mxu0 0
    %2354 = vmatprep.mubr.bf16.mxu0 0
    %2355 = vmatmul.mubr.bf16.gmra.mrb[0].mxu0 %v2129
    %v2356 = vpop.f32.mrb[0].mxu0
    %v2357 = vadd.f32 0.0, %v2356
    %v2358 = vpop.f32.mrb[0].mxu0
    %v2359 = vadd.f32 0.0, %v2358
    %v2360 = vpop.f32.mrb[0].mxu0
    %v2361 = vpop.f32.mrb[0].mxu0
    %2362 = vdwg.mxu0
    %2363 = vmatprep.subr.bf16.mxu0 %v2261
    %2364 = vmatpush1.bf16.msra.mxu0 %v2260
    %2365 = vmatprep.subr.bf16.mxu0 %v2265
    %2366 = vmatpush1.bf16.msra.mxu0 %v2264
    %2367 = vmatprep.subr.bf16.mxu0 %v2269
    %2368 = vmatpush1.bf16.msra.mxu0 %v2268
    %2369 = vmatprep.subr.bf16.mxu0 %v2273
    %2370 = vmatpush1.bf16.msra.mxu0 %v2272
    %2371 = vmatprep.subr.bf16.mxu0 %v2277
    %2372 = vmatpush1.bf16.msra.mxu0 %v2276
    %2373 = vmatprep.subr.bf16.mxu0 %v2281
    %2374 = vmatpush1.bf16.msra.mxu0 %v2280
    %2375 = vmatprep.subr.bf16.mxu0 %v2285
    %2376 = vmatpush1.bf16.msra.mxu0 %v2284
    %2377 = vmatprep.subr.bf16.mxu0 %v2289
    %2378 = vmatpush1.bf16.msra.mxu0 %v2288
    %2379 = vmatprep.subr.bf16.mxu0 0
    %2380 = vmatpush1.bf16.msra.mxu0 0
    %2381 = vmatprep.subr.bf16.mxu0 0
    %2382 = vmatpush1.bf16.msra.mxu0 0
    %2383 = vmatprep.subr.bf16.mxu0 0
    %2384 = vmatpush1.bf16.msra.mxu0 0
    %2385 = vmatprep.subr.bf16.mxu0 0
    %2386 = vmatpush1.bf16.msra.mxu0 0
    %2387 = vmatprep.subr.bf16.mxu0 0
    %2388 = vmatpush1.bf16.msra.mxu0 0
    %2389 = vmatprep.subr.bf16.mxu0 0
    %2390 = vmatpush1.bf16.msra.mxu0 0
    %2391 = vmatprep.subr.bf16.mxu0 0
    %2392 = vmatpush1.bf16.msra.mxu0 0
    %2393 = vmatprep.subr.bf16.mxu0 0
    %2394 = vmatpush1.bf16.msra.mxu0 0
    %2395 = vmatprep.mubr.bf16.mxu0 0
    %2396 = vmatmul.mubr.bf16.gmra.mrb[0].mxu0 %v2129
    %v2397 = vpop.f32.mrb[0].mxu0
    %v2398 = vadd.f32 0.0, %v2397
    %v2399 = vpop.f32.mrb[0].mxu0
    %v2400 = vadd.f32 0.0, %v2399
    %v2401 = vpop.f32.mrb[0].mxu0
    %v2402 = vpop.f32.mrb[0].mxu0
    %2403 = vdwg.mxu0
    %v2404 = vadd.f32 %v2125, %v2357
    %v2405 = vadd.f32 %v2126, %v2359
    %v2406 = vadd.f32 %v2127, %v2398
    %v2407 = vadd.f32 %v2128, %v2400
    %s2408 = scalar_lea.vmem [#allocation3], 160
    %v2409 = vld [vmem:[%s2408] sm:$0xff]
    %v2410 = vld [vmem:[%s2408 + $0x8] sm:$0xff]
    %v2411 = vld [vmem:[%s2408 + $0x10] sm:$0xff]
    %v2412 = vld [vmem:[%s2408 + $0x18] sm:$0xff]
    %v2413 = vpack.c.bf16 %v2119, %v2119
    %v2414 = vld [vmem:[#allocation13] sm:$0xff]
    %v2415 = vld [vmem:[#allocation13 + $0x8] sm:$0xff]
    %v2416 = vld [vmem:[#allocation13 + $0x10] sm:$0xff]
    %v2417 = vld [vmem:[#allocation13 + $0x18] sm:$0xff]
    %v2418 = vld [vmem:[#allocation13 + $0x20] sm:$0xff]
    %v2419 = vld [vmem:[#allocation13 + $0x28] sm:$0xff]
    %v2420 = vld [vmem:[#allocation13 + $0x30] sm:$0xff]
    %v2421 = vld [vmem:[#allocation13 + $0x38] sm:$0xff]
    %v2422 = vld [vmem:[#allocation13 + $0x40] sm:$0xff]
    %v2423 = vld [vmem:[#allocation13 + $0x48] sm:$0xff]
    %v2424 = vld [vmem:[#allocation13 + $0x50] sm:$0xff]
    %v2425 = vld [vmem:[#allocation13 + $0x58] sm:$0xff]
    %v2426 = vld [vmem:[#allocation13 + $0x60] sm:$0xff]
    %v2427 = vld [vmem:[#allocation13 + $0x68] sm:$0xff]
    %v2428 = vld [vmem:[#allocation13 + $0x70] sm:$0xff]
    %v2429 = vld [vmem:[#allocation13 + $0x78] sm:$0xff]
    %v2430 = vld [vmem:[#allocation13 + $0x80] sm:$0xff]
    %v2431 = vld [vmem:[#allocation13 + $0x88] sm:$0xff]
    %v2432 = vld [vmem:[#allocation13 + $0x90] sm:$0xff]
    %v2433 = vld [vmem:[#allocation13 + $0x98] sm:$0xff]
    %v2434 = vld [vmem:[#allocation13 + $0xa0] sm:$0xff]
    %v2435 = vld [vmem:[#allocation13 + $0xa8] sm:$0xff]
    %v2436 = vld [vmem:[#allocation13 + $0xb0] sm:$0xff]
    %v2437 = vld [vmem:[#allocation13 + $0xb8] sm:$0xff]
    %v2438 = vld [vmem:[#allocation13 + $0xc0] sm:$0xff]
    %v2439 = vld [vmem:[#allocation13 + $0xc8] sm:$0xff]
    %v2440 = vld [vmem:[#allocation13 + $0xd0] sm:$0xff]
    %v2441 = vld [vmem:[#allocation13 + $0xd8] sm:$0xff]
    %v2442 = vld [vmem:[#allocation13 + $0xe0] sm:$0xff]
    %v2443 = vld [vmem:[#allocation13 + $0xe8] sm:$0xff]
    %v2444 = vld [vmem:[#allocation13 + $0xf0] sm:$0xff]
    %v2445 = vld [vmem:[#allocation13 + $0xf8] sm:$0xff]
    %v2478 = vunpack.c.l.b16 %v2414
    %v2479 = vunpack.c.h.b16 %v2414
    %v2480 = vunpack.c.l.b16 %v2415
    %v2481 = vunpack.c.h.b16 %v2415
    %v2482 = vunpack.c.l.b16 %v2416
    %v2483 = vunpack.c.h.b16 %v2416
    %v2484 = vunpack.c.l.b16 %v2417
    %v2485 = vunpack.c.h.b16 %v2417
    %v2486 = vunpack.c.l.b16 %v2418
    %v2487 = vunpack.c.h.b16 %v2418
    %v2488 = vunpack.c.l.b16 %v2419
    %v2489 = vunpack.c.h.b16 %v2419
    %v2490 = vunpack.c.l.b16 %v2420
    %v2491 = vunpack.c.h.b16 %v2420
    %v2492 = vunpack.c.l.b16 %v2421
    %v2493 = vunpack.c.h.b16 %v2421
    %v2494 = vunpack.c.l.b16 %v2422
    %v2495 = vunpack.c.h.b16 %v2422
    %v2496 = vunpack.c.l.b16 %v2423
    %v2497 = vunpack.c.h.b16 %v2423
    %v2498 = vunpack.c.l.b16 %v2424
    %v2499 = vunpack.c.h.b16 %v2424
    %v2500 = vunpack.c.l.b16 %v2425
    %v2501 = vunpack.c.h.b16 %v2425
    %v2502 = vunpack.c.l.b16 %v2426
    %v2503 = vunpack.c.h.b16 %v2426
    %v2504 = vunpack.c.l.b16 %v2427
    %v2505 = vunpack.c.h.b16 %v2427
    %v2506 = vunpack.c.l.b16 %v2428
    %v2507 = vunpack.c.h.b16 %v2428
    %v2508 = vunpack.c.l.b16 %v2429
    %v2509 = vunpack.c.h.b16 %v2429
    %v2510 = vunpack.c.l.b16 %v2430
    %v2511 = vunpack.c.h.b16 %v2430
    %v2512 = vunpack.c.l.b16 %v2431
    %v2513 = vunpack.c.h.b16 %v2431
    %v2514 = vunpack.c.l.b16 %v2432
    %v2515 = vunpack.c.h.b16 %v2432
    %v2516 = vunpack.c.l.b16 %v2433
    %v2517 = vunpack.c.h.b16 %v2433
    %v2518 = vunpack.c.l.b16 %v2434
    %v2519 = vunpack.c.h.b16 %v2434
    %v2520 = vunpack.c.l.b16 %v2435
    %v2521 = vunpack.c.h.b16 %v2435
    %v2522 = vunpack.c.l.b16 %v2436
    %v2523 = vunpack.c.h.b16 %v2436
    %v2524 = vunpack.c.l.b16 %v2437
    %v2525 = vunpack.c.h.b16 %v2437
    %v2526 = vunpack.c.l.b16 %v2438
    %v2527 = vunpack.c.h.b16 %v2438
    %v2528 = vunpack.c.l.b16 %v2439
    %v2529 = vunpack.c.h.b16 %v2439
    %v2530 = vunpack.c.l.b16 %v2440
    %v2531 = vunpack.c.h.b16 %v2440
    %v2532 = vunpack.c.l.b16 %v2441
    %v2533 = vunpack.c.h.b16 %v2441
    %v2534 = vunpack.c.l.b16 %v2442
    %v2535 = vunpack.c.h.b16 %v2442
    %v2536 = vunpack.c.l.b16 %v2443
    %v2537 = vunpack.c.h.b16 %v2443
    %v2538 = vunpack.c.l.b16 %v2444
    %v2539 = vunpack.c.h.b16 %v2444
    %v2540 = vunpack.c.l.b16 %v2445
    %v2541 = vunpack.c.h.b16 %v2445
    %v2542 = vpack.c.b16 %v2482, %v2478
    %v2543 = vpack.c.b16 %v2483, %v2479
    %v2544 = vpack.c.b16 %v2484, %v2480
    %v2545 = vpack.c.b16 %v2485, %v2481
    %v2546 = vpack.c.b16 %v2490, %v2486
    %v2547 = vpack.c.b16 %v2491, %v2487
    %v2548 = vpack.c.b16 %v2492, %v2488
    %v2549 = vpack.c.b16 %v2493, %v2489
    %v2550 = vpack.c.b16 %v2498, %v2494
    %v2551 = vpack.c.b16 %v2499, %v2495
    %v2552 = vpack.c.b16 %v2500, %v2496
    %v2553 = vpack.c.b16 %v2501, %v2497
    %v2554 = vpack.c.b16 %v2506, %v2502
    %v2555 = vpack.c.b16 %v2507, %v2503
    %v2556 = vpack.c.b16 %v2508, %v2504
    %v2557 = vpack.c.b16 %v2509, %v2505
    %v2558 = vpack.c.b16 %v2514, %v2510
    %v2559 = vpack.c.b16 %v2515, %v2511
    %v2560 = vpack.c.b16 %v2516, %v2512
    %v2561 = vpack.c.b16 %v2517, %v2513
    %v2562 = vpack.c.b16 %v2522, %v2518
    %v2563 = vpack.c.b16 %v2523, %v2519
    %v2564 = vpack.c.b16 %v2524, %v2520
    %v2565 = vpack.c.b16 %v2525, %v2521
    %v2566 = vpack.c.b16 %v2530, %v2526
    %v2567 = vpack.c.b16 %v2531, %v2527
    %v2568 = vpack.c.b16 %v2532, %v2528
    %v2569 = vpack.c.b16 %v2533, %v2529
    %v2570 = vpack.c.b16 %v2538, %v2534
    %v2571 = vpack.c.b16 %v2539, %v2535
    %v2572 = vpack.c.b16 %v2540, %v2536
    %v2573 = vpack.c.b16 %v2541, %v2537
    %2606 = vmatprep.subr.bf16.mxu0 %v2543
    %2607 = vmatpush1.bf16.msra.mxu0 %v2542
    %2608 = vmatprep.subr.bf16.mxu0 %v2547
    %2609 = vmatpush1.bf16.msra.mxu0 %v2546
    %2610 = vmatprep.subr.bf16.mxu0 %v2551
    %2611 = vmatpush1.bf16.msra.mxu0 %v2550
    %2612 = vmatprep.subr.bf16.mxu0 %v2555
    %2613 = vmatpush1.bf16.msra.mxu0 %v2554
    %2614 = vmatprep.subr.bf16.mxu0 %v2559
    %2615 = vmatpush1.bf16.msra.mxu0 %v2558
    %2616 = vmatprep.subr.bf16.mxu0 %v2563
    %2617 = vmatpush1.bf16.msra.mxu0 %v2562
    %2618 = vmatprep.subr.bf16.mxu0 %v2567
    %2619 = vmatpush1.bf16.msra.mxu0 %v2566
    %2620 = vmatprep.subr.bf16.mxu0 %v2571
    %2621 = vmatpush1.bf16.msra.mxu0 %v2570
    %2622 = vmatprep.subr.bf16.mxu0 0
    %2623 = vmatpush1.bf16.msra.mxu0 0
    %2624 = vmatprep.subr.bf16.mxu0 0
    %2625 = vmatpush1.bf16.msra.mxu0 0
    %2626 = vmatprep.subr.bf16.mxu0 0
    %2627 = vmatpush1.bf16.msra.mxu0 0
    %2628 = vmatprep.subr.bf16.mxu0 0
    %2629 = vmatpush1.bf16.msra.mxu0 0
    %2630 = vmatprep.subr.bf16.mxu0 0
    %2631 = vmatpush1.bf16.msra.mxu0 0
    %2632 = vmatprep.subr.bf16.mxu0 0
    %2633 = vmatpush1.bf16.msra.mxu0 0
    %2634 = vmatprep.subr.bf16.mxu0 0
    %2635 = vmatpush1.bf16.msra.mxu0 0
    %2636 = vmatprep.subr.bf16.mxu0 0
    %2637 = vmatpush1.bf16.msra.mxu0 0
    %2638 = vmatprep.mubr.bf16.mxu0 0
    %2639 = vmatmul.mubr.bf16.gmra.mrb[0].mxu0 %v2413
    %v2640 = vpop.f32.mrb[0].mxu0
    %v2641 = vadd.f32 0.0, %v2640
    %v2642 = vpop.f32.mrb[0].mxu0
    %v2643 = vadd.f32 0.0, %v2642
    %v2644 = vpop.f32.mrb[0].mxu0
    %v2645 = vpop.f32.mrb[0].mxu0
    %2646 = vdwg.mxu0
    %2647 = vmatprep.subr.bf16.mxu0 %v2545
    %2648 = vmatpush1.bf16.msra.mxu0 %v2544
    %2649 = vmatprep.subr.bf16.mxu0 %v2549
    %2650 = vmatpush1.bf16.msra.mxu0 %v2548
    %2651 = vmatprep.subr.bf16.mxu0 %v2553
    %2652 = vmatpush1.bf16.msra.mxu0 %v2552
    %2653 = vmatprep.subr.bf16.mxu0 %v2557
    %2654 = vmatpush1.bf16.msra.mxu0 %v2556
    %2655 = vmatprep.subr.bf16.mxu0 %v2561
    %2656 = vmatpush1.bf16.msra.mxu0 %v2560
    %2657 = vmatprep.subr.bf16.mxu0 %v2565
    %2658 = vmatpush1.bf16.msra.mxu0 %v2564
    %2659 = vmatprep.subr.bf16.mxu0 %v2569
    %2660 = vmatpush1.bf16.msra.mxu0 %v2568
    %2661 = vmatprep.subr.bf16.mxu0 %v2573
    %2662 = vmatpush1.bf16.msra.mxu0 %v2572
    %2663 = vmatprep.subr.bf16.mxu0 0
    %2664 = vmatpush1.bf16.msra.mxu0 0
    %2665 = vmatprep.subr.bf16.mxu0 0
    %2666 = vmatpush1.bf16.msra.mxu0 0
    %2667 = vmatprep.subr.bf16.mxu0 0
    %2668 = vmatpush1.bf16.msra.mxu0 0
    %2669 = vmatprep.subr.bf16.mxu0 0
    %2670 = vmatpush1.bf16.msra.mxu0 0
    %2671 = vmatprep.subr.bf16.mxu0 0
    %2672 = vmatpush1.bf16.msra.mxu0 0
    %2673 = vmatprep.subr.bf16.mxu0 0
    %2674 = vmatpush1.bf16.msra.mxu0 0
    %2675 = vmatprep.subr.bf16.mxu0 0
    %2676 = vmatpush1.bf16.msra.mxu0 0
    %2677 = vmatprep.subr.bf16.mxu0 0
    %2678 = vmatpush1.bf16.msra.mxu0 0
    %2679 = vmatprep.mubr.bf16.mxu0 0
    %2680 = vmatmul.mubr.bf16.gmra.mrb[0].mxu0 %v2413
    %v2681 = vpop.f32.mrb[0].mxu0
    %v2682 = vadd.f32 0.0, %v2681
    %v2683 = vpop.f32.mrb[0].mxu0
    %v2684 = vadd.f32 0.0, %v2683
    %v2685 = vpop.f32.mrb[0].mxu0
    %v2686 = vpop.f32.mrb[0].mxu0
    %2687 = vdwg.mxu0
    %v2688 = vadd.f32 %v2409, %v2641
    %v2689 = vadd.f32 %v2410, %v2643
    %v2690 = vadd.f32 %v2411, %v2682
    %v2691 = vadd.f32 %v2412, %v2684
    %v2692 = vmul.f32 %v2404, 0.5
    %v2693 = vtanh.pop %v2692
    %v2694 = vmul.f32 %v2693, 0.5
    %v2695 = vadd.f32 %v2694, 0.5
    %v2696 = vmul.f32 %v2405, 0.5
    %v2697 = vtanh.pop %v2696
    %v2698 = vmul.f32 %v2697, 0.5
    %v2699 = vadd.f32 %v2698, 0.5
    %v2700 = vtanh.pop %v2406
    %v2701 = vmul.f32 %v2407, 0.5
    %v2702 = vtanh.pop %v2701
    %v2703 = vmul.f32 %v2702, 0.5
    %v2704 = vadd.f32 %v2703, 0.5
    %v2705 = vmul.f32 %v2699, %v2099
    %v2706 = vmul.f32 %v2695, %v2700
    %v2707 = vadd.f32 %v2705, %v2706
    %v2708 = vtanh.pop %v2707
    %v2709 = vmul.f32 %v2704, %v2708
    %v2710 = vmul.f32 %v2688, 0.5
    %v2711 = vtanh.pop %v2710
    %v2712 = vmul.f32 %v2711, 0.5
    %v2713 = vadd.f32 %v2712, 0.5
    %v2714 = vmul.f32 %v2689, 0.5
    %v2715 = vtanh.pop %v2714
    %v2716 = vmul.f32 %v2715, 0.5
    %v2717 = vadd.f32 %v2716, 0.5
    %v2718 = vtanh.pop %v2690
    %v2719 = vmul.f32 %v2691, 0.5
    %v2720 = vtanh.pop %v2719
    %v2721 = vmul.f32 %v2720, 0.5
    %v2722 = vadd.f32 %v2721, 0.5
    %v2723 = vmul.f32 %v2717, %v2117
    %v2724 = vmul.f32 %v2713, %v2718
    %v2725 = vadd.f32 %v2723, %v2724
    %v2726 = vtanh.pop %v2725
    %v2727 = vmul.f32 %v2722, %v2726
    %s2728 = scalar_lea.vmem [#allocation4], 32
    %2729 = vst [vmem:[%s2728] sm:$0xff] %v2709
    %s2730 = scalar_lea.vmem [#allocation4], 80
    %2731 = vst [vmem:[%s2730 + $0x8] sm:$0xff] %v2727
    %s2732 = scalar_lea.vmem [#allocation2], 96
    %v2733 = vld [vmem:[%s2732] sm:$0xff]
    %v2734 = vld [vmem:[%s2732 + $0x8] sm:$0xff]
    %v2735 = vld [vmem:[%s2732 + $0x10] sm:$0xff]
    %v2736 = vld [vmem:[%s2732 + $0x18] sm:$0xff]
    %v2737 = vpack.c.bf16 %v2709, %v2709
    %v2738 = vld [vmem:[#allocation10] sm:$0xff]
    %v2739 = vld [vmem:[#allocation10 + $0x8] sm:$0xff]
    %v2740 = vld [vmem:[#allocation10 + $0x10] sm:$0xff]
    %v2741 = vld [vmem:[#allocation10 + $0x18] sm:$0xff]
    %v2742 = vld [vmem:[#allocation10 + $0x20] sm:$0xff]
    %v2743 = vld [vmem:[#allocation10 + $0x28] sm:$0xff]
    %v2744 = vld [vmem:[#allocation10 + $0x30] sm:$0xff]
    %v2745 = vld [vmem:[#allocation10 + $0x38] sm:$0xff]
    %v2746 = vld [vmem:[#allocation10 + $0x40] sm:$0xff]
    %v2747 = vld [vmem:[#allocation10 + $0x48] sm:$0xff]
    %v2748 = vld [vmem:[#allocation10 + $0x50] sm:$0xff]
    %v2749 = vld [vmem:[#allocation10 + $0x58] sm:$0xff]
    %v2750 = vld [vmem:[#allocation10 + $0x60] sm:$0xff]
    %v2751 = vld [vmem:[#allocation10 + $0x68] sm:$0xff]
    %v2752 = vld [vmem:[#allocation10 + $0x70] sm:$0xff]
    %v2753 = vld [vmem:[#allocation10 + $0x78] sm:$0xff]
    %v2754 = vld [vmem:[#allocation10 + $0x80] sm:$0xff]
    %v2755 = vld [vmem:[#allocation10 + $0x88] sm:$0xff]
    %v2756 = vld [vmem:[#allocation10 + $0x90] sm:$0xff]
    %v2757 = vld [vmem:[#allocation10 + $0x98] sm:$0xff]
    %v2758 = vld [vmem:[#allocation10 + $0xa0] sm:$0xff]
    %v2759 = vld [vmem:[#allocation10 + $0xa8] sm:$0xff]
    %v2760 = vld [vmem:[#allocation10 + $0xb0] sm:$0xff]
    %v2761 = vld [vmem:[#allocation10 + $0xb8] sm:$0xff]
    %v2762 = vld [vmem:[#allocation10 + $0xc0] sm:$0xff]
    %v2763 = vld [vmem:[#allocation10 + $0xc8] sm:$0xff]
    %v2764 = vld [vmem:[#allocation10 + $0xd0] sm:$0xff]
    %v2765 = vld [vmem:[#allocation10 + $0xd8] sm:$0xff]
    %v2766 = vld [vmem:[#allocation10 + $0xe0] sm:$0xff]
    %v2767 = vld [vmem:[#allocation10 + $0xe8] sm:$0xff]
    %v2768 = vld [vmem:[#allocation10 + $0xf0] sm:$0xff]
    %v2769 = vld [vmem:[#allocation10 + $0xf8] sm:$0xff]
    %v2802 = vunpack.c.l.b16 %v2738
    %v2803 = vunpack.c.h.b16 %v2738
    %v2804 = vunpack.c.l.b16 %v2739
    %v2805 = vunpack.c.h.b16 %v2739
    %v2806 = vunpack.c.l.b16 %v2740
    %v2807 = vunpack.c.h.b16 %v2740
    %v2808 = vunpack.c.l.b16 %v2741
    %v2809 = vunpack.c.h.b16 %v2741
    %v2810 = vunpack.c.l.b16 %v2742
    %v2811 = vunpack.c.h.b16 %v2742
    %v2812 = vunpack.c.l.b16 %v2743
    %v2813 = vunpack.c.h.b16 %v2743
    %v2814 = vunpack.c.l.b16 %v2744
    %v2815 = vunpack.c.h.b16 %v2744
    %v2816 = vunpack.c.l.b16 %v2745
    %v2817 = vunpack.c.h.b16 %v2745
    %v2818 = vunpack.c.l.b16 %v2746
    %v2819 = vunpack.c.h.b16 %v2746
    %v2820 = vunpack.c.l.b16 %v2747
    %v2821 = vunpack.c.h.b16 %v2747
    %v2822 = vunpack.c.l.b16 %v2748
    %v2823 = vunpack.c.h.b16 %v2748
    %v2824 = vunpack.c.l.b16 %v2749
    %v2825 = vunpack.c.h.b16 %v2749
    %v2826 = vunpack.c.l.b16 %v2750
    %v2827 = vunpack.c.h.b16 %v2750
    %v2828 = vunpack.c.l.b16 %v2751
    %v2829 = vunpack.c.h.b16 %v2751
    %v2830 = vunpack.c.l.b16 %v2752
    %v2831 = vunpack.c.h.b16 %v2752
    %v2832 = vunpack.c.l.b16 %v2753
    %v2833 = vunpack.c.h.b16 %v2753
    %v2834 = vunpack.c.l.b16 %v2754
    %v2835 = vunpack.c.h.b16 %v2754
    %v2836 = vunpack.c.l.b16 %v2755
    %v2837 = vunpack.c.h.b16 %v2755
    %v2838 = vunpack.c.l.b16 %v2756
    %v2839 = vunpack.c.h.b16 %v2756
    %v2840 = vunpack.c.l.b16 %v2757
    %v2841 = vunpack.c.h.b16 %v2757
    %v2842 = vunpack.c.l.b16 %v2758
    %v2843 = vunpack.c.h.b16 %v2758
    %v2844 = vunpack.c.l.b16 %v2759
    %v2845 = vunpack.c.h.b16 %v2759
    %v2846 = vunpack.c.l.b16 %v2760
    %v2847 = vunpack.c.h.b16 %v2760
    %v2848 = vunpack.c.l.b16 %v2761
    %v2849 = vunpack.c.h.b16 %v2761
    %v2850 = vunpack.c.l.b16 %v2762
    %v2851 = vunpack.c.h.b16 %v2762
    %v2852 = vunpack.c.l.b16 %v2763
    %v2853 = vunpack.c.h.b16 %v2763
    %v2854 = vunpack.c.l.b16 %v2764
    %v2855 = vunpack.c.h.b16 %v2764
    %v2856 = vunpack.c.l.b16 %v2765
    %v2857 = vunpack.c.h.b16 %v2765
    %v2858 = vunpack.c.l.b16 %v2766
    %v2859 = vunpack.c.h.b16 %v2766
    %v2860 = vunpack.c.l.b16 %v2767
    %v2861 = vunpack.c.h.b16 %v2767
    %v2862 = vunpack.c.l.b16 %v2768
    %v2863 = vunpack.c.h.b16 %v2768
    %v2864 = vunpack.c.l.b16 %v2769
    %v2865 = vunpack.c.h.b16 %v2769
    %v2866 = vpack.c.b16 %v2806, %v2802
    %v2867 = vpack.c.b16 %v2807, %v2803
    %v2868 = vpack.c.b16 %v2808, %v2804
    %v2869 = vpack.c.b16 %v2809, %v2805
    %v2870 = vpack.c.b16 %v2814, %v2810
    %v2871 = vpack.c.b16 %v2815, %v2811
    %v2872 = vpack.c.b16 %v2816, %v2812
    %v2873 = vpack.c.b16 %v2817, %v2813
    %v2874 = vpack.c.b16 %v2822, %v2818
    %v2875 = vpack.c.b16 %v2823, %v2819
    %v2876 = vpack.c.b16 %v2824, %v2820
    %v2877 = vpack.c.b16 %v2825, %v2821
    %v2878 = vpack.c.b16 %v2830, %v2826
    %v2879 = vpack.c.b16 %v2831, %v2827
    %v2880 = vpack.c.b16 %v2832, %v2828
    %v2881 = vpack.c.b16 %v2833, %v2829
    %v2882 = vpack.c.b16 %v2838, %v2834
    %v2883 = vpack.c.b16 %v2839, %v2835
    %v2884 = vpack.c.b16 %v2840, %v2836
    %v2885 = vpack.c.b16 %v2841, %v2837
    %v2886 = vpack.c.b16 %v2846, %v2842
    %v2887 = vpack.c.b16 %v2847, %v2843
    %v2888 = vpack.c.b16 %v2848, %v2844
    %v2889 = vpack.c.b16 %v2849, %v2845
    %v2890 = vpack.c.b16 %v2854, %v2850
    %v2891 = vpack.c.b16 %v2855, %v2851
    %v2892 = vpack.c.b16 %v2856, %v2852
    %v2893 = vpack.c.b16 %v2857, %v2853
    %v2894 = vpack.c.b16 %v2862, %v2858
    %v2895 = vpack.c.b16 %v2863, %v2859
    %v2896 = vpack.c.b16 %v2864, %v2860
    %v2897 = vpack.c.b16 %v2865, %v2861
    %2930 = vmatprep.subr.bf16.mxu0 %v2867
    %2931 = vmatpush1.bf16.msra.mxu0 %v2866
    %2932 = vmatprep.subr.bf16.mxu0 %v2871
    %2933 = vmatpush1.bf16.msra.mxu0 %v2870
    %2934 = vmatprep.subr.bf16.mxu0 %v2875
    %2935 = vmatpush1.bf16.msra.mxu0 %v2874
    %2936 = vmatprep.subr.bf16.mxu0 %v2879
    %2937 = vmatpush1.bf16.msra.mxu0 %v2878
    %2938 = vmatprep.subr.bf16.mxu0 %v2883
    %2939 = vmatpush1.bf16.msra.mxu0 %v2882
    %2940 = vmatprep.subr.bf16.mxu0 %v2887
    %2941 = vmatpush1.bf16.msra.mxu0 %v2886
    %2942 = vmatprep.subr.bf16.mxu0 %v2891
    %2943 = vmatpush1.bf16.msra.mxu0 %v2890
    %2944 = vmatprep.subr.bf16.mxu0 %v2895
    %2945 = vmatpush1.bf16.msra.mxu0 %v2894
    %2946 = vmatprep.subr.bf16.mxu0 0
    %2947 = vmatpush1.bf16.msra.mxu0 0
    %2948 = vmatprep.subr.bf16.mxu0 0
    %2949 = vmatpush1.bf16.msra.mxu0 0
    %2950 = vmatprep.subr.bf16.mxu0 0
    %2951 = vmatpush1.bf16.msra.mxu0 0
    %2952 = vmatprep.subr.bf16.mxu0 0
    %2953 = vmatpush1.bf16.msra.mxu0 0
    %2954 = vmatprep.subr.bf16.mxu0 0
    %2955 = vmatpush1.bf16.msra.mxu0 0
    %2956 = vmatprep.subr.bf16.mxu0 0
    %2957 = vmatpush1.bf16.msra.mxu0 0
    %2958 = vmatprep.subr.bf16.mxu0 0
    %2959 = vmatpush1.bf16.msra.mxu0 0
    %2960 = vmatprep.subr.bf16.mxu0 0
    %2961 = vmatpush1.bf16.msra.mxu0 0
    %2962 = vmatprep.mubr.bf16.mxu0 0
    %2963 = vmatmul.mubr.bf16.gmra.mrb[0].mxu0 %v2737
    %v2964 = vpop.f32.mrb[0].mxu0
    %v2965 = vadd.f32 0.0, %v2964
    %v2966 = vpop.f32.mrb[0].mxu0
    %v2967 = vadd.f32 0.0, %v2966
    %v2968 = vpop.f32.mrb[0].mxu0
    %v2969 = vpop.f32.mrb[0].mxu0
    %2970 = vdwg.mxu0
    %2971 = vmatprep.subr.bf16.mxu0 %v2869
    %2972 = vmatpush1.bf16.msra.mxu0 %v2868
    %2973 = vmatprep.subr.bf16.mxu0 %v2873
    %2974 = vmatpush1.bf16.msra.mxu0 %v2872
    %2975 = vmatprep.subr.bf16.mxu0 %v2877
    %2976 = vmatpush1.bf16.msra.mxu0 %v2876
    %2977 = vmatprep.subr.bf16.mxu0 %v2881
    %2978 = vmatpush1.bf16.msra.mxu0 %v2880
    %2979 = vmatprep.subr.bf16.mxu0 %v2885
    %2980 = vmatpush1.bf16.msra.mxu0 %v2884
    %2981 = vmatprep.subr.bf16.mxu0 %v2889
    %2982 = vmatpush1.bf16.msra.mxu0 %v2888
    %2983 = vmatprep.subr.bf16.mxu0 %v2893
    %2984 = vmatpush1.bf16.msra.mxu0 %v2892
    %2985 = vmatprep.subr.bf16.mxu0 %v2897
    %2986 = vmatpush1.bf16.msra.mxu0 %v2896
    %2987 = vmatprep.subr.bf16.mxu0 0
    %2988 = vmatpush1.bf16.msra.mxu0 0
    %2989 = vmatprep.subr.bf16.mxu0 0
    %2990 = vmatpush1.bf16.msra.mxu0 0
    %2991 = vmatprep.subr.bf16.mxu0 0
    %2992 = vmatpush1.bf16.msra.mxu0 0
    %2993 = vmatprep.subr.bf16.mxu0 0
    %2994 = vmatpush1.bf16.msra.mxu0 0
    %2995 = vmatprep.subr.bf16.mxu0 0
    %2996 = vmatpush1.bf16.msra.mxu0 0
    %2997 = vmatprep.subr.bf16.mxu0 0
    %2998 = vmatpush1.bf16.msra.mxu0 0
    %2999 = vmatprep.subr.bf16.mxu0 0
    %3000 = vmatpush1.bf16.msra.mxu0 0
    %3001 = vmatprep.subr.bf16.mxu0 0
    %3002 = vmatpush1.bf16.msra.mxu0 0
    %3003 = vmatprep.mubr.bf16.mxu0 0
    %3004 = vmatmul.mubr.bf16.gmra.mrb[0].mxu0 %v2737
    %v3005 = vpop.f32.mrb[0].mxu0
    %v3006 = vadd.f32 0.0, %v3005
    %v3007 = vpop.f32.mrb[0].mxu0
    %v3008 = vadd.f32 0.0, %v3007
    %v3009 = vpop.f32.mrb[0].mxu0
    %v3010 = vpop.f32.mrb[0].mxu0
    %3011 = vdwg.mxu0
    %v3012 = vadd.f32 %v2733, %v2965
    %v3013 = vadd.f32 %v2734, %v2967
    %v3014 = vadd.f32 %v2735, %v3006
    %v3015 = vadd.f32 %v2736, %v3008
    %s3016 = scalar_lea.vmem [#allocation3], 128
    %v3017 = vld [vmem:[%s3016] sm:$0xff]
    %v3018 = vld [vmem:[%s3016 + $0x8] sm:$0xff]
    %v3019 = vld [vmem:[%s3016 + $0x10] sm:$0xff]
    %v3020 = vld [vmem:[%s3016 + $0x18] sm:$0xff]
    %v3021 = vpack.c.bf16 %v2727, %v2727
    %v3022 = vld [vmem:[#allocation13] sm:$0xff]
    %v3023 = vld [vmem:[#allocation13 + $0x8] sm:$0xff]
    %v3024 = vld [vmem:[#allocation13 + $0x10] sm:$0xff]
    %v3025 = vld [vmem:[#allocation13 + $0x18] sm:$0xff]
    %v3026 = vld [vmem:[#allocation13 + $0x20] sm:$0xff]
    %v3027 = vld [vmem:[#allocation13 + $0x28] sm:$0xff]
    %v3028 = vld [vmem:[#allocation13 + $0x30] sm:$0xff]
    %v3029 = vld [vmem:[#allocation13 + $0x38] sm:$0xff]
    %v3030 = vld [vmem:[#allocation13 + $0x40] sm:$0xff]
    %v3031 = vld [vmem:[#allocation13 + $0x48] sm:$0xff]
    %v3032 = vld [vmem:[#allocation13 + $0x50] sm:$0xff]
    %v3033 = vld [vmem:[#allocation13 + $0x58] sm:$0xff]
    %v3034 = vld [vmem:[#allocation13 + $0x60] sm:$0xff]
    %v3035 = vld [vmem:[#allocation13 + $0x68] sm:$0xff]
    %v3036 = vld [vmem:[#allocation13 + $0x70] sm:$0xff]
    %v3037 = vld [vmem:[#allocation13 + $0x78] sm:$0xff]
    %v3038 = vld [vmem:[#allocation13 + $0x80] sm:$0xff]
    %v3039 = vld [vmem:[#allocation13 + $0x88] sm:$0xff]
    %v3040 = vld [vmem:[#allocation13 + $0x90] sm:$0xff]
    %v3041 = vld [vmem:[#allocation13 + $0x98] sm:$0xff]
    %v3042 = vld [vmem:[#allocation13 + $0xa0] sm:$0xff]
    %v3043 = vld [vmem:[#allocation13 + $0xa8] sm:$0xff]
    %v3044 = vld [vmem:[#allocation13 + $0xb0] sm:$0xff]
    %v3045 = vld [vmem:[#allocation13 + $0xb8] sm:$0xff]
    %v3046 = vld [vmem:[#allocation13 + $0xc0] sm:$0xff]
    %v3047 = vld [vmem:[#allocation13 + $0xc8] sm:$0xff]
    %v3048 = vld [vmem:[#allocation13 + $0xd0] sm:$0xff]
    %v3049 = vld [vmem:[#allocation13 + $0xd8] sm:$0xff]
    %v3050 = vld [vmem:[#allocation13 + $0xe0] sm:$0xff]
    %v3051 = vld [vmem:[#allocation13 + $0xe8] sm:$0xff]
    %v3052 = vld [vmem:[#allocation13 + $0xf0] sm:$0xff]
    %v3053 = vld [vmem:[#allocation13 + $0xf8] sm:$0xff]
    %v3086 = vunpack.c.l.b16 %v3022
    %v3087 = vunpack.c.h.b16 %v3022
    %v3088 = vunpack.c.l.b16 %v3023
    %v3089 = vunpack.c.h.b16 %v3023
    %v3090 = vunpack.c.l.b16 %v3024
    %v3091 = vunpack.c.h.b16 %v3024
    %v3092 = vunpack.c.l.b16 %v3025
    %v3093 = vunpack.c.h.b16 %v3025
    %v3094 = vunpack.c.l.b16 %v3026
    %v3095 = vunpack.c.h.b16 %v3026
    %v3096 = vunpack.c.l.b16 %v3027
    %v3097 = vunpack.c.h.b16 %v3027
    %v3098 = vunpack.c.l.b16 %v3028
    %v3099 = vunpack.c.h.b16 %v3028
    %v3100 = vunpack.c.l.b16 %v3029
    %v3101 = vunpack.c.h.b16 %v3029
    %v3102 = vunpack.c.l.b16 %v3030
    %v3103 = vunpack.c.h.b16 %v3030
    %v3104 = vunpack.c.l.b16 %v3031
    %v3105 = vunpack.c.h.b16 %v3031
    %v3106 = vunpack.c.l.b16 %v3032
    %v3107 = vunpack.c.h.b16 %v3032
    %v3108 = vunpack.c.l.b16 %v3033
    %v3109 = vunpack.c.h.b16 %v3033
    %v3110 = vunpack.c.l.b16 %v3034
    %v3111 = vunpack.c.h.b16 %v3034
    %v3112 = vunpack.c.l.b16 %v3035
    %v3113 = vunpack.c.h.b16 %v3035
    %v3114 = vunpack.c.l.b16 %v3036
    %v3115 = vunpack.c.h.b16 %v3036
    %v3116 = vunpack.c.l.b16 %v3037
    %v3117 = vunpack.c.h.b16 %v3037
    %v3118 = vunpack.c.l.b16 %v3038
    %v3119 = vunpack.c.h.b16 %v3038
    %v3120 = vunpack.c.l.b16 %v3039
    %v3121 = vunpack.c.h.b16 %v3039
    %v3122 = vunpack.c.l.b16 %v3040
    %v3123 = vunpack.c.h.b16 %v3040
    %v3124 = vunpack.c.l.b16 %v3041
    %v3125 = vunpack.c.h.b16 %v3041
    %v3126 = vunpack.c.l.b16 %v3042
    %v3127 = vunpack.c.h.b16 %v3042
    %v3128 = vunpack.c.l.b16 %v3043
    %v3129 = vunpack.c.h.b16 %v3043
    %v3130 = vunpack.c.l.b16 %v3044
    %v3131 = vunpack.c.h.b16 %v3044
    %v3132 = vunpack.c.l.b16 %v3045
    %v3133 = vunpack.c.h.b16 %v3045
    %v3134 = vunpack.c.l.b16 %v3046
    %v3135 = vunpack.c.h.b16 %v3046
    %v3136 = vunpack.c.l.b16 %v3047
    %v3137 = vunpack.c.h.b16 %v3047
    %v3138 = vunpack.c.l.b16 %v3048
    %v3139 = vunpack.c.h.b16 %v3048
    %v3140 = vunpack.c.l.b16 %v3049
    %v3141 = vunpack.c.h.b16 %v3049
    %v3142 = vunpack.c.l.b16 %v3050
    %v3143 = vunpack.c.h.b16 %v3050
    %v3144 = vunpack.c.l.b16 %v3051
    %v3145 = vunpack.c.h.b16 %v3051
    %v3146 = vunpack.c.l.b16 %v3052
    %v3147 = vunpack.c.h.b16 %v3052
    %v3148 = vunpack.c.l.b16 %v3053
    %v3149 = vunpack.c.h.b16 %v3053
    %v3150 = vpack.c.b16 %v3090, %v3086
    %v3151 = vpack.c.b16 %v3091, %v3087
    %v3152 = vpack.c.b16 %v3092, %v3088
    %v3153 = vpack.c.b16 %v3093, %v3089
    %v3154 = vpack.c.b16 %v3098, %v3094
    %v3155 = vpack.c.b16 %v3099, %v3095
    %v3156 = vpack.c.b16 %v3100, %v3096
    %v3157 = vpack.c.b16 %v3101, %v3097
    %v3158 = vpack.c.b16 %v3106, %v3102
    %v3159 = vpack.c.b16 %v3107, %v3103
    %v3160 = vpack.c.b16 %v3108, %v3104
    %v3161 = vpack.c.b16 %v3109, %v3105
    %v3162 = vpack.c.b16 %v3114, %v3110
    %v3163 = vpack.c.b16 %v3115, %v3111
    %v3164 = vpack.c.b16 %v3116, %v3112
    %v3165 = vpack.c.b16 %v3117, %v3113
    %v3166 = vpack.c.b16 %v3122, %v3118
    %v3167 = vpack.c.b16 %v3123, %v3119
    %v3168 = vpack.c.b16 %v3124, %v3120
    %v3169 = vpack.c.b16 %v3125, %v3121
    %v3170 = vpack.c.b16 %v3130, %v3126
    %v3171 = vpack.c.b16 %v3131, %v3127
    %v3172 = vpack.c.b16 %v3132, %v3128
    %v3173 = vpack.c.b16 %v3133, %v3129
    %v3174 = vpack.c.b16 %v3138, %v3134
    %v3175 = vpack.c.b16 %v3139, %v3135
    %v3176 = vpack.c.b16 %v3140, %v3136
    %v3177 = vpack.c.b16 %v3141, %v3137
    %v3178 = vpack.c.b16 %v3146, %v3142
    %v3179 = vpack.c.b16 %v3147, %v3143
    %v3180 = vpack.c.b16 %v3148, %v3144
    %v3181 = vpack.c.b16 %v3149, %v3145
    %3214 = vmatprep.subr.bf16.mxu0 %v3151
    %3215 = vmatpush1.bf16.msra.mxu0 %v3150
    %3216 = vmatprep.subr.bf16.mxu0 %v3155
    %3217 = vmatpush1.bf16.msra.mxu0 %v3154
    %3218 = vmatprep.subr.bf16.mxu0 %v3159
    %3219 = vmatpush1.bf16.msra.mxu0 %v3158
    %3220 = vmatprep.subr.bf16.mxu0 %v3163
    %3221 = vmatpush1.bf16.msra.mxu0 %v3162
    %3222 = vmatprep.subr.bf16.mxu0 %v3167
    %3223 = vmatpush1.bf16.msra.mxu0 %v3166
    %3224 = vmatprep.subr.bf16.mxu0 %v3171
    %3225 = vmatpush1.bf16.msra.mxu0 %v3170
    %3226 = vmatprep.subr.bf16.mxu0 %v3175
    %3227 = vmatpush1.bf16.msra.mxu0 %v3174
    %3228 = vmatprep.subr.bf16.mxu0 %v3179
    %3229 = vmatpush1.bf16.msra.mxu0 %v3178
    %3230 = vmatprep.subr.bf16.mxu0 0
    %3231 = vmatpush1.bf16.msra.mxu0 0
    %3232 = vmatprep.subr.bf16.mxu0 0
    %3233 = vmatpush1.bf16.msra.mxu0 0
    %3234 = vmatprep.subr.bf16.mxu0 0
    %3235 = vmatpush1.bf16.msra.mxu0 0
    %3236 = vmatprep.subr.bf16.mxu0 0
    %3237 = vmatpush1.bf16.msra.mxu0 0
    %3238 = vmatprep.subr.bf16.mxu0 0
    %3239 = vmatpush1.bf16.msra.mxu0 0
    %3240 = vmatprep.subr.bf16.mxu0 0
    %3241 = vmatpush1.bf16.msra.mxu0 0
    %3242 = vmatprep.subr.bf16.mxu0 0
    %3243 = vmatpush1.bf16.msra.mxu0 0
    %3244 = vmatprep.subr.bf16.mxu0 0
    %3245 = vmatpush1.bf16.msra.mxu0 0
    %3246 = vmatprep.mubr.bf16.mxu0 0
    %3247 = vmatmul.mubr.bf16.gmra.mrb[0].mxu0 %v3021
    %v3248 = vpop.f32.mrb[0].mxu0
    %v3249 = vadd.f32 0.0, %v3248
    %v3250 = vpop.f32.mrb[0].mxu0
    %v3251 = vadd.f32 0.0, %v3250
    %v3252 = vpop.f32.mrb[0].mxu0
    %v3253 = vpop.f32.mrb[0].mxu0
    %3254 = vdwg.mxu0
    %3255 = vmatprep.subr.bf16.mxu0 %v3153
    %3256 = vmatpush1.bf16.msra.mxu0 %v3152
    %3257 = vmatprep.subr.bf16.mxu0 %v3157
    %3258 = vmatpush1.bf16.msra.mxu0 %v3156
    %3259 = vmatprep.subr.bf16.mxu0 %v3161
    %3260 = vmatpush1.bf16.msra.mxu0 %v3160
    %3261 = vmatprep.subr.bf16.mxu0 %v3165
    %3262 = vmatpush1.bf16.msra.mxu0 %v3164
    %3263 = vmatprep.subr.bf16.mxu0 %v3169
    %3264 = vmatpush1.bf16.msra.mxu0 %v3168
    %3265 = vmatprep.subr.bf16.mxu0 %v3173
    %3266 = vmatpush1.bf16.msra.mxu0 %v3172
    %3267 = vmatprep.subr.bf16.mxu0 %v3177
    %3268 = vmatpush1.bf16.msra.mxu0 %v3176
    %3269 = vmatprep.subr.bf16.mxu0 %v3181
    %3270 = vmatpush1.bf16.msra.mxu0 %v3180
    %3271 = vmatprep.subr.bf16.mxu0 0
    %3272 = vmatpush1.bf16.msra.mxu0 0
    %3273 = vmatprep.subr.bf16.mxu0 0
    %3274 = vmatpush1.bf16.msra.mxu0 0
    %3275 = vmatprep.subr.bf16.mxu0 0
    %3276 = vmatpush1.bf16.msra.mxu0 0
    %3277 = vmatprep.subr.bf16.mxu0 0
    %3278 = vmatpush1.bf16.msra.mxu0 0
    %3279 = vmatprep.subr.bf16.mxu0 0
    %3280 = vmatpush1.bf16.msra.mxu0 0
    %3281 = vmatprep.subr.bf16.mxu0 0
    %3282 = vmatpush1.bf16.msra.mxu0 0
    %3283 = vmatprep.subr.bf16.mxu0 0
    %3284 = vmatpush1.bf16.msra.mxu0 0
    %3285 = vmatprep.subr.bf16.mxu0 0
    %3286 = vmatpush1.bf16.msra.mxu0 0
    %3287 = vmatprep.mubr.bf16.mxu0 0
    %3288 = vmatmul.mubr.bf16.gmra.mrb[0].mxu0 %v3021
    %v3289 = vpop.f32.mrb[0].mxu0
    %v3290 = vadd.f32 0.0, %v3289
    %v3291 = vpop.f32.mrb[0].mxu0
    %v3292 = vadd.f32 0.0, %v3291
    %v3293 = vpop.f32.mrb[0].mxu0
    %v3294 = vpop.f32.mrb[0].mxu0
    %3295 = vdwg.mxu0
    %v3296 = vadd.f32 %v3017, %v3249
    %v3297 = vadd.f32 %v3018, %v3251
    %v3298 = vadd.f32 %v3019, %v3290
    %v3299 = vadd.f32 %v3020, %v3292
    %v3300 = vmul.f32 %v3012, 0.5
    %v3301 = vtanh.pop %v3300
    %v3302 = vmul.f32 %v3301, 0.5
    %v3303 = vadd.f32 %v3302, 0.5
    %v3304 = vmul.f32 %v3013, 0.5
    %v3305 = vtanh.pop %v3304
    %v3306 = vmul.f32 %v3305, 0.5
    %v3307 = vadd.f32 %v3306, 0.5
    %v3308 = vtanh.pop %v3014
    %v3309 = vmul.f32 %v3015, 0.5
    %v3310 = vtanh.pop %v3309
    %v3311 = vmul.f32 %v3310, 0.5
    %v3312 = vadd.f32 %v3311, 0.5
    %v3313 = vmul.f32 %v3307, %v2707
    %v3314 = vmul.f32 %v3303, %v3308
    %v3315 = vadd.f32 %v3313, %v3314
    %v3316 = vtanh.pop %v3315
    %v3317 = vmul.f32 %v3312, %v3316
    %v3318 = vmul.f32 %v3296, 0.5
    %v3319 = vtanh.pop %v3318
    %v3320 = vmul.f32 %v3319, 0.5
    %v3321 = vadd.f32 %v3320, 0.5
    %v3322 = vmul.f32 %v3297, 0.5
    %v3323 = vtanh.pop %v3322
    %v3324 = vmul.f32 %v3323, 0.5
    %v3325 = vadd.f32 %v3324, 0.5
    %v3326 = vtanh.pop %v3298
    %v3327 = vmul.f32 %v3299, 0.5
    %v3328 = vtanh.pop %v3327
    %v3329 = vmul.f32 %v3328, 0.5
    %v3330 = vadd.f32 %v3329, 0.5
    %v3331 = vmul.f32 %v3325, %v2725
    %v3332 = vmul.f32 %v3321, %v3326
    %v3333 = vadd.f32 %v3331, %v3332
    %v3334 = vtanh.pop %v3333
    %v3335 = vmul.f32 %v3330, %v3334
    %s3336 = scalar_lea.vmem [#allocation4], 48
    %3337 = vst [vmem:[%s3336] sm:$0xff] %v3317
    %s3338 = scalar_lea.vmem [#allocation4], 64
    %3339 = vst [vmem:[%s3338 + $0x8] sm:$0xff] %v3335
    %s3340 = scalar_lea.vmem [#allocation2], 128
    %v3341 = vld [vmem:[%s3340] sm:$0xff]
    %v3342 = vld [vmem:[%s3340 + $0x8] sm:$0xff]
    %v3343 = vld [vmem:[%s3340 + $0x10] sm:$0xff]
    %v3344 = vld [vmem:[%s3340 + $0x18] sm:$0xff]
    %v3345 = vpack.c.bf16 %v3317, %v3317
    %v3346 = vld [vmem:[#allocation10] sm:$0xff]
    %v3347 = vld [vmem:[#allocation10 + $0x8] sm:$0xff]
    %v3348 = vld [vmem:[#allocation10 + $0x10] sm:$0xff]
    %v3349 = vld [vmem:[#allocation10 + $0x18] sm:$0xff]
    %v3350 = vld [vmem:[#allocation10 + $0x20] sm:$0xff]
    %v3351 = vld [vmem:[#allocation10 + $0x28] sm:$0xff]
    %v3352 = vld [vmem:[#allocation10 + $0x30] sm:$0xff]
    %v3353 = vld [vmem:[#allocation10 + $0x38] sm:$0xff]
    %v3354 = vld [vmem:[#allocation10 + $0x40] sm:$0xff]
    %v3355 = vld [vmem:[#allocation10 + $0x48] sm:$0xff]
    %v3356 = vld [vmem:[#allocation10 + $0x50] sm:$0xff]
    %v3357 = vld [vmem:[#allocation10 + $0x58] sm:$0xff]
    %v3358 = vld [vmem:[#allocation10 + $0x60] sm:$0xff]
    %v3359 = vld [vmem:[#allocation10 + $0x68] sm:$0xff]
    %v3360 = vld [vmem:[#allocation10 + $0x70] sm:$0xff]
    %v3361 = vld [vmem:[#allocation10 + $0x78] sm:$0xff]
    %v3362 = vld [vmem:[#allocation10 + $0x80] sm:$0xff]
    %v3363 = vld [vmem:[#allocation10 + $0x88] sm:$0xff]
    %v3364 = vld [vmem:[#allocation10 + $0x90] sm:$0xff]
    %v3365 = vld [vmem:[#allocation10 + $0x98] sm:$0xff]
    %v3366 = vld [vmem:[#allocation10 + $0xa0] sm:$0xff]
    %v3367 = vld [vmem:[#allocation10 + $0xa8] sm:$0xff]
    %v3368 = vld [vmem:[#allocation10 + $0xb0] sm:$0xff]
    %v3369 = vld [vmem:[#allocation10 + $0xb8] sm:$0xff]
    %v3370 = vld [vmem:[#allocation10 + $0xc0] sm:$0xff]
    %v3371 = vld [vmem:[#allocation10 + $0xc8] sm:$0xff]
    %v3372 = vld [vmem:[#allocation10 + $0xd0] sm:$0xff]
    %v3373 = vld [vmem:[#allocation10 + $0xd8] sm:$0xff]
    %v3374 = vld [vmem:[#allocation10 + $0xe0] sm:$0xff]
    %v3375 = vld [vmem:[#allocation10 + $0xe8] sm:$0xff]
    %v3376 = vld [vmem:[#allocation10 + $0xf0] sm:$0xff]
    %v3377 = vld [vmem:[#allocation10 + $0xf8] sm:$0xff]
    %v3410 = vunpack.c.l.b16 %v3346
    %v3411 = vunpack.c.h.b16 %v3346
    %v3412 = vunpack.c.l.b16 %v3347
    %v3413 = vunpack.c.h.b16 %v3347
    %v3414 = vunpack.c.l.b16 %v3348
    %v3415 = vunpack.c.h.b16 %v3348
    %v3416 = vunpack.c.l.b16 %v3349
    %v3417 = vunpack.c.h.b16 %v3349
    %v3418 = vunpack.c.l.b16 %v3350
    %v3419 = vunpack.c.h.b16 %v3350
    %v3420 = vunpack.c.l.b16 %v3351
    %v3421 = vunpack.c.h.b16 %v3351
    %v3422 = vunpack.c.l.b16 %v3352
    %v3423 = vunpack.c.h.b16 %v3352
    %v3424 = vunpack.c.l.b16 %v3353
    %v3425 = vunpack.c.h.b16 %v3353
    %v3426 = vunpack.c.l.b16 %v3354
    %v3427 = vunpack.c.h.b16 %v3354
    %v3428 = vunpack.c.l.b16 %v3355
    %v3429 = vunpack.c.h.b16 %v3355
    %v3430 = vunpack.c.l.b16 %v3356
    %v3431 = vunpack.c.h.b16 %v3356
    %v3432 = vunpack.c.l.b16 %v3357
    %v3433 = vunpack.c.h.b16 %v3357
    %v3434 = vunpack.c.l.b16 %v3358
    %v3435 = vunpack.c.h.b16 %v3358
    %v3436 = vunpack.c.l.b16 %v3359
    %v3437 = vunpack.c.h.b16 %v3359
    %v3438 = vunpack.c.l.b16 %v3360
    %v3439 = vunpack.c.h.b16 %v3360
    %v3440 = vunpack.c.l.b16 %v3361
    %v3441 = vunpack.c.h.b16 %v3361
    %v3442 = vunpack.c.l.b16 %v3362
    %v3443 = vunpack.c.h.b16 %v3362
    %v3444 = vunpack.c.l.b16 %v3363
    %v3445 = vunpack.c.h.b16 %v3363
    %v3446 = vunpack.c.l.b16 %v3364
    %v3447 = vunpack.c.h.b16 %v3364
    %v3448 = vunpack.c.l.b16 %v3365
    %v3449 = vunpack.c.h.b16 %v3365
    %v3450 = vunpack.c.l.b16 %v3366
    %v3451 = vunpack.c.h.b16 %v3366
    %v3452 = vunpack.c.l.b16 %v3367
    %v3453 = vunpack.c.h.b16 %v3367
    %v3454 = vunpack.c.l.b16 %v3368
    %v3455 = vunpack.c.h.b16 %v3368
    %v3456 = vunpack.c.l.b16 %v3369
    %v3457 = vunpack.c.h.b16 %v3369
    %v3458 = vunpack.c.l.b16 %v3370
    %v3459 = vunpack.c.h.b16 %v3370
    %v3460 = vunpack.c.l.b16 %v3371
    %v3461 = vunpack.c.h.b16 %v3371
    %v3462 = vunpack.c.l.b16 %v3372
    %v3463 = vunpack.c.h.b16 %v3372
    %v3464 = vunpack.c.l.b16 %v3373
    %v3465 = vunpack.c.h.b16 %v3373
    %v3466 = vunpack.c.l.b16 %v3374
    %v3467 = vunpack.c.h.b16 %v3374
    %v3468 = vunpack.c.l.b16 %v3375
    %v3469 = vunpack.c.h.b16 %v3375
    %v3470 = vunpack.c.l.b16 %v3376
    %v3471 = vunpack.c.h.b16 %v3376
    %v3472 = vunpack.c.l.b16 %v3377
    %v3473 = vunpack.c.h.b16 %v3377
    %v3474 = vpack.c.b16 %v3414, %v3410
    %v3475 = vpack.c.b16 %v3415, %v3411
    %v3476 = vpack.c.b16 %v3416, %v3412
    %v3477 = vpack.c.b16 %v3417, %v3413
    %v3478 = vpack.c.b16 %v3422, %v3418
    %v3479 = vpack.c.b16 %v3423, %v3419
    %v3480 = vpack.c.b16 %v3424, %v3420
    %v3481 = vpack.c.b16 %v3425, %v3421
    %v3482 = vpack.c.b16 %v3430, %v3426
    %v3483 = vpack.c.b16 %v3431, %v3427
    %v3484 = vpack.c.b16 %v3432, %v3428
    %v3485 = vpack.c.b16 %v3433, %v3429
    %v3486 = vpack.c.b16 %v3438, %v3434
    %v3487 = vpack.c.b16 %v3439, %v3435
    %v3488 = vpack.c.b16 %v3440, %v3436
    %v3489 = vpack.c.b16 %v3441, %v3437
    %v3490 = vpack.c.b16 %v3446, %v3442
    %v3491 = vpack.c.b16 %v3447, %v3443
    %v3492 = vpack.c.b16 %v3448, %v3444
    %v3493 = vpack.c.b16 %v3449, %v3445
    %v3494 = vpack.c.b16 %v3454, %v3450
    %v3495 = vpack.c.b16 %v3455, %v3451
    %v3496 = vpack.c.b16 %v3456, %v3452
    %v3497 = vpack.c.b16 %v3457, %v3453
    %v3498 = vpack.c.b16 %v3462, %v3458
    %v3499 = vpack.c.b16 %v3463, %v3459
    %v3500 = vpack.c.b16 %v3464, %v3460
    %v3501 = vpack.c.b16 %v3465, %v3461
    %v3502 = vpack.c.b16 %v3470, %v3466
    %v3503 = vpack.c.b16 %v3471, %v3467
    %v3504 = vpack.c.b16 %v3472, %v3468
    %v3505 = vpack.c.b16 %v3473, %v3469
    %3538 = vmatprep.subr.bf16.mxu0 %v3475
    %3539 = vmatpush1.bf16.msra.mxu0 %v3474
    %3540 = vmatprep.subr.bf16.mxu0 %v3479
    %3541 = vmatpush1.bf16.msra.mxu0 %v3478
    %3542 = vmatprep.subr.bf16.mxu0 %v3483
    %3543 = vmatpush1.bf16.msra.mxu0 %v3482
    %3544 = vmatprep.subr.bf16.mxu0 %v3487
    %3545 = vmatpush1.bf16.msra.mxu0 %v3486
    %3546 = vmatprep.subr.bf16.mxu0 %v3491
    %3547 = vmatpush1.bf16.msra.mxu0 %v3490
    %3548 = vmatprep.subr.bf16.mxu0 %v3495
    %3549 = vmatpush1.bf16.msra.mxu0 %v3494
    %3550 = vmatprep.subr.bf16.mxu0 %v3499
    %3551 = vmatpush1.bf16.msra.mxu0 %v3498
    %3552 = vmatprep.subr.bf16.mxu0 %v3503
    %3553 = vmatpush1.bf16.msra.mxu0 %v3502
    %3554 = vmatprep.subr.bf16.mxu0 0
    %3555 = vmatpush1.bf16.msra.mxu0 0
    %3556 = vmatprep.subr.bf16.mxu0 0
    %3557 = vmatpush1.bf16.msra.mxu0 0
    %3558 = vmatprep.subr.bf16.mxu0 0
    %3559 = vmatpush1.bf16.msra.mxu0 0
    %3560 = vmatprep.subr.bf16.mxu0 0
    %3561 = vmatpush1.bf16.msra.mxu0 0
    %3562 = vmatprep.subr.bf16.mxu0 0
    %3563 = vmatpush1.bf16.msra.mxu0 0
    %3564 = vmatprep.subr.bf16.mxu0 0
    %3565 = vmatpush1.bf16.msra.mxu0 0
    %3566 = vmatprep.subr.bf16.mxu0 0
    %3567 = vmatpush1.bf16.msra.mxu0 0
    %3568 = vmatprep.subr.bf16.mxu0 0
    %3569 = vmatpush1.bf16.msra.mxu0 0
    %3570 = vmatprep.mubr.bf16.mxu0 0
    %3571 = vmatmul.mubr.bf16.gmra.mrb[0].mxu0 %v3345
    %v3572 = vpop.f32.mrb[0].mxu0
    %v3573 = vadd.f32 0.0, %v3572
    %v3574 = vpop.f32.mrb[0].mxu0
    %v3575 = vadd.f32 0.0, %v3574
    %v3576 = vpop.f32.mrb[0].mxu0
    %v3577 = vpop.f32.mrb[0].mxu0
    %3578 = vdwg.mxu0
    %3579 = vmatprep.subr.bf16.mxu0 %v3477
    %3580 = vmatpush1.bf16.msra.mxu0 %v3476
    %3581 = vmatprep.subr.bf16.mxu0 %v3481
    %3582 = vmatpush1.bf16.msra.mxu0 %v3480
    %3583 = vmatprep.subr.bf16.mxu0 %v3485
    %3584 = vmatpush1.bf16.msra.mxu0 %v3484
    %3585 = vmatprep.subr.bf16.mxu0 %v3489
    %3586 = vmatpush1.bf16.msra.mxu0 %v3488
    %3587 = vmatprep.subr.bf16.mxu0 %v3493
    %3588 = vmatpush1.bf16.msra.mxu0 %v3492
    %3589 = vmatprep.subr.bf16.mxu0 %v3497
    %3590 = vmatpush1.bf16.msra.mxu0 %v3496
    %3591 = vmatprep.subr.bf16.mxu0 %v3501
    %3592 = vmatpush1.bf16.msra.mxu0 %v3500
    %3593 = vmatprep.subr.bf16.mxu0 %v3505
    %3594 = vmatpush1.bf16.msra.mxu0 %v3504
    %3595 = vmatprep.subr.bf16.mxu0 0
    %3596 = vmatpush1.bf16.msra.mxu0 0
    %3597 = vmatprep.subr.bf16.mxu0 0
    %3598 = vmatpush1.bf16.msra.mxu0 0
    %3599 = vmatprep.subr.bf16.mxu0 0
    %3600 = vmatpush1.bf16.msra.mxu0 0
    %3601 = vmatprep.subr.bf16.mxu0 0
    %3602 = vmatpush1.bf16.msra.mxu0 0
    %3603 = vmatprep.subr.bf16.mxu0 0
    %3604 = vmatpush1.bf16.msra.mxu0 0
    %3605 = vmatprep.subr.bf16.mxu0 0
    %3606 = vmatpush1.bf16.msra.mxu0 0
    %3607 = vmatprep.subr.bf16.mxu0 0
    %3608 = vmatpush1.bf16.msra.mxu0 0
    %3609 = vmatprep.subr.bf16.mxu0 0
    %3610 = vmatpush1.bf16.msra.mxu0 0
    %3611 = vmatprep.mubr.bf16.mxu0 0
    %3612 = vmatmul.mubr.bf16.gmra.mrb[0].mxu0 %v3345
    %v3613 = vpop.f32.mrb[0].mxu0
    %v3614 = vadd.f32 0.0, %v3613
    %v3615 = vpop.f32.mrb[0].mxu0
    %v3616 = vadd.f32 0.0, %v3615
    %v3617 = vpop.f32.mrb[0].mxu0
    %v3618 = vpop.f32.mrb[0].mxu0
    %3619 = vdwg.mxu0
    %v3620 = vadd.f32 %v3341, %v3573
    %v3621 = vadd.f32 %v3342, %v3575
    %v3622 = vadd.f32 %v3343, %v3614
    %v3623 = vadd.f32 %v3344, %v3616
    %s3624 = scalar_lea.vmem [#allocation3], 96
    %v3625 = vld [vmem:[%s3624] sm:$0xff]
    %v3626 = vld [vmem:[%s3624 + $0x8] sm:$0xff]
    %v3627 = vld [vmem:[%s3624 + $0x10] sm:$0xff]
    %v3628 = vld [vmem:[%s3624 + $0x18] sm:$0xff]
    %v3629 = vpack.c.bf16 %v3335, %v3335
    %v3630 = vld [vmem:[#allocation13] sm:$0xff]
    %v3631 = vld [vmem:[#allocation13 + $0x8] sm:$0xff]
    %v3632 = vld [vmem:[#allocation13 + $0x10] sm:$0xff]
    %v3633 = vld [vmem:[#allocation13 + $0x18] sm:$0xff]
    %v3634 = vld [vmem:[#allocation13 + $0x20] sm:$0xff]
    %v3635 = vld [vmem:[#allocation13 + $0x28] sm:$0xff]
    %v3636 = vld [vmem:[#allocation13 + $0x30] sm:$0xff]
    %v3637 = vld [vmem:[#allocation13 + $0x38] sm:$0xff]
    %v3638 = vld [vmem:[#allocation13 + $0x40] sm:$0xff]
    %v3639 = vld [vmem:[#allocation13 + $0x48] sm:$0xff]
    %v3640 = vld [vmem:[#allocation13 + $0x50] sm:$0xff]
    %v3641 = vld [vmem:[#allocation13 + $0x58] sm:$0xff]
    %v3642 = vld [vmem:[#allocation13 + $0x60] sm:$0xff]
    %v3643 = vld [vmem:[#allocation13 + $0x68] sm:$0xff]
    %v3644 = vld [vmem:[#allocation13 + $0x70] sm:$0xff]
    %v3645 = vld [vmem:[#allocation13 + $0x78] sm:$0xff]
    %v3646 = vld [vmem:[#allocation13 + $0x80] sm:$0xff]
    %v3647 = vld [vmem:[#allocation13 + $0x88] sm:$0xff]
    %v3648 = vld [vmem:[#allocation13 + $0x90] sm:$0xff]
    %v3649 = vld [vmem:[#allocation13 + $0x98] sm:$0xff]
    %v3650 = vld [vmem:[#allocation13 + $0xa0] sm:$0xff]
    %v3651 = vld [vmem:[#allocation13 + $0xa8] sm:$0xff]
    %v3652 = vld [vmem:[#allocation13 + $0xb0] sm:$0xff]
    %v3653 = vld [vmem:[#allocation13 + $0xb8] sm:$0xff]
    %v3654 = vld [vmem:[#allocation13 + $0xc0] sm:$0xff]
    %v3655 = vld [vmem:[#allocation13 + $0xc8] sm:$0xff]
    %v3656 = vld [vmem:[#allocation13 + $0xd0] sm:$0xff]
    %v3657 = vld [vmem:[#allocation13 + $0xd8] sm:$0xff]
    %v3658 = vld [vmem:[#allocation13 + $0xe0] sm:$0xff]
    %v3659 = vld [vmem:[#allocation13 + $0xe8] sm:$0xff]
    %v3660 = vld [vmem:[#allocation13 + $0xf0] sm:$0xff]
    %v3661 = vld [vmem:[#allocation13 + $0xf8] sm:$0xff]
    %v3694 = vunpack.c.l.b16 %v3630
    %v3695 = vunpack.c.h.b16 %v3630
    %v3696 = vunpack.c.l.b16 %v3631
    %v3697 = vunpack.c.h.b16 %v3631
    %v3698 = vunpack.c.l.b16 %v3632
    %v3699 = vunpack.c.h.b16 %v3632
    %v3700 = vunpack.c.l.b16 %v3633
    %v3701 = vunpack.c.h.b16 %v3633
    %v3702 = vunpack.c.l.b16 %v3634
    %v3703 = vunpack.c.h.b16 %v3634
    %v3704 = vunpack.c.l.b16 %v3635
    %v3705 = vunpack.c.h.b16 %v3635
    %v3706 = vunpack.c.l.b16 %v3636
    %v3707 = vunpack.c.h.b16 %v3636
    %v3708 = vunpack.c.l.b16 %v3637
    %v3709 = vunpack.c.h.b16 %v3637
    %v3710 = vunpack.c.l.b16 %v3638
    %v3711 = vunpack.c.h.b16 %v3638
    %v3712 = vunpack.c.l.b16 %v3639
    %v3713 = vunpack.c.h.b16 %v3639
    %v3714 = vunpack.c.l.b16 %v3640
    %v3715 = vunpack.c.h.b16 %v3640
    %v3716 = vunpack.c.l.b16 %v3641
    %v3717 = vunpack.c.h.b16 %v3641
    %v3718 = vunpack.c.l.b16 %v3642
    %v3719 = vunpack.c.h.b16 %v3642
    %v3720 = vunpack.c.l.b16 %v3643
    %v3721 = vunpack.c.h.b16 %v3643
    %v3722 = vunpack.c.l.b16 %v3644
    %v3723 = vunpack.c.h.b16 %v3644
    %v3724 = vunpack.c.l.b16 %v3645
    %v3725 = vunpack.c.h.b16 %v3645
    %v3726 = vunpack.c.l.b16 %v3646
    %v3727 = vunpack.c.h.b16 %v3646
    %v3728 = vunpack.c.l.b16 %v3647
    %v3729 = vunpack.c.h.b16 %v3647
    %v3730 = vunpack.c.l.b16 %v3648
    %v3731 = vunpack.c.h.b16 %v3648
    %v3732 = vunpack.c.l.b16 %v3649
    %v3733 = vunpack.c.h.b16 %v3649
    %v3734 = vunpack.c.l.b16 %v3650
    %v3735 = vunpack.c.h.b16 %v3650
    %v3736 = vunpack.c.l.b16 %v3651
    %v3737 = vunpack.c.h.b16 %v3651
    %v3738 = vunpack.c.l.b16 %v3652
    %v3739 = vunpack.c.h.b16 %v3652
    %v3740 = vunpack.c.l.b16 %v3653
    %v3741 = vunpack.c.h.b16 %v3653
    %v3742 = vunpack.c.l.b16 %v3654
    %v3743 = vunpack.c.h.b16 %v3654
    %v3744 = vunpack.c.l.b16 %v3655
    %v3745 = vunpack.c.h.b16 %v3655
    %v3746 = vunpack.c.l.b16 %v3656
    %v3747 = vunpack.c.h.b16 %v3656
    %v3748 = vunpack.c.l.b16 %v3657
    %v3749 = vunpack.c.h.b16 %v3657
    %v3750 = vunpack.c.l.b16 %v3658
    %v3751 = vunpack.c.h.b16 %v3658
    %v3752 = vunpack.c.l.b16 %v3659
    %v3753 = vunpack.c.h.b16 %v3659
    %v3754 = vunpack.c.l.b16 %v3660
    %v3755 = vunpack.c.h.b16 %v3660
    %v3756 = vunpack.c.l.b16 %v3661
    %v3757 = vunpack.c.h.b16 %v3661
    %v3758 = vpack.c.b16 %v3698, %v3694
    %v3759 = vpack.c.b16 %v3699, %v3695
    %v3760 = vpack.c.b16 %v3700, %v3696
    %v3761 = vpack.c.b16 %v3701, %v3697
    %v3762 = vpack.c.b16 %v3706, %v3702
    %v3763 = vpack.c.b16 %v3707, %v3703
    %v3764 = vpack.c.b16 %v3708, %v3704
    %v3765 = vpack.c.b16 %v3709, %v3705
    %v3766 = vpack.c.b16 %v3714, %v3710
    %v3767 = vpack.c.b16 %v3715, %v3711
    %v3768 = vpack.c.b16 %v3716, %v3712
    %v3769 = vpack.c.b16 %v3717, %v3713
    %v3770 = vpack.c.b16 %v3722, %v3718
    %v3771 = vpack.c.b16 %v3723, %v3719
    %v3772 = vpack.c.b16 %v3724, %v3720
    %v3773 = vpack.c.b16 %v3725, %v3721
    %v3774 = vpack.c.b16 %v3730, %v3726
    %v3775 = vpack.c.b16 %v3731, %v3727
    %v3776 = vpack.c.b16 %v3732, %v3728
    %v3777 = vpack.c.b16 %v3733, %v3729
    %v3778 = vpack.c.b16 %v3738, %v3734
    %v3779 = vpack.c.b16 %v3739, %v3735
    %v3780 = vpack.c.b16 %v3740, %v3736
    %v3781 = vpack.c.b16 %v3741, %v3737
    %v3782 = vpack.c.b16 %v3746, %v3742
    %v3783 = vpack.c.b16 %v3747, %v3743
    %v3784 = vpack.c.b16 %v3748, %v3744
    %v3785 = vpack.c.b16 %v3749, %v3745
    %v3786 = vpack.c.b16 %v3754, %v3750
    %v3787 = vpack.c.b16 %v3755, %v3751
    %v3788 = vpack.c.b16 %v3756, %v3752
    %v3789 = vpack.c.b16 %v3757, %v3753
    %3822 = vmatprep.subr.bf16.mxu0 %v3759
    %3823 = vmatpush1.bf16.msra.mxu0 %v3758
    %3824 = vmatprep.subr.bf16.mxu0 %v3763
    %3825 = vmatpush1.bf16.msra.mxu0 %v3762
    %3826 = vmatprep.subr.bf16.mxu0 %v3767
    %3827 = vmatpush1.bf16.msra.mxu0 %v3766
    %3828 = vmatprep.subr.bf16.mxu0 %v3771
    %3829 = vmatpush1.bf16.msra.mxu0 %v3770
    %3830 = vmatprep.subr.bf16.mxu0 %v3775
    %3831 = vmatpush1.bf16.msra.mxu0 %v3774
    %3832 = vmatprep.subr.bf16.mxu0 %v3779
    %3833 = vmatpush1.bf16.msra.mxu0 %v3778
    %3834 = vmatprep.subr.bf16.mxu0 %v3783
    %3835 = vmatpush1.bf16.msra.mxu0 %v3782
    %3836 = vmatprep.subr.bf16.mxu0 %v3787
    %3837 = vmatpush1.bf16.msra.mxu0 %v3786
    %3838 = vmatprep.subr.bf16.mxu0 0
    %3839 = vmatpush1.bf16.msra.mxu0 0
    %3840 = vmatprep.subr.bf16.mxu0 0
    %3841 = vmatpush1.bf16.msra.mxu0 0
    %3842 = vmatprep.subr.bf16.mxu0 0
    %3843 = vmatpush1.bf16.msra.mxu0 0
    %3844 = vmatprep.subr.bf16.mxu0 0
    %3845 = vmatpush1.bf16.msra.mxu0 0
    %3846 = vmatprep.subr.bf16.mxu0 0
    %3847 = vmatpush1.bf16.msra.mxu0 0
    %3848 = vmatprep.subr.bf16.mxu0 0
    %3849 = vmatpush1.bf16.msra.mxu0 0
    %3850 = vmatprep.subr.bf16.mxu0 0
    %3851 = vmatpush1.bf16.msra.mxu0 0
    %3852 = vmatprep.subr.bf16.mxu0 0
    %3853 = vmatpush1.bf16.msra.mxu0 0
    %3854 = vmatprep.mubr.bf16.mxu0 0
    %3855 = vmatmul.mubr.bf16.gmra.mrb[0].mxu0 %v3629
    %v3856 = vpop.f32.mrb[0].mxu0
    %v3857 = vadd.f32 0.0, %v3856
    %v3858 = vpop.f32.mrb[0].mxu0
    %v3859 = vadd.f32 0.0, %v3858
    %v3860 = vpop.f32.mrb[0].mxu0
    %v3861 = vpop.f32.mrb[0].mxu0
    %3862 = vdwg.mxu0
    %3863 = vmatprep.subr.bf16.mxu0 %v3761
    %3864 = vmatpush1.bf16.msra.mxu0 %v3760
    %3865 = vmatprep.subr.bf16.mxu0 %v3765
    %3866 = vmatpush1.bf16.msra.mxu0 %v3764
    %3867 = vmatprep.subr.bf16.mxu0 %v3769
    %3868 = vmatpush1.bf16.msra.mxu0 %v3768
    %3869 = vmatprep.subr.bf16.mxu0 %v3773
    %3870 = vmatpush1.bf16.msra.mxu0 %v3772
    %3871 = vmatprep.subr.bf16.mxu0 %v3777
    %3872 = vmatpush1.bf16.msra.mxu0 %v3776
    %3873 = vmatprep.subr.bf16.mxu0 %v3781
    %3874 = vmatpush1.bf16.msra.mxu0 %v3780
    %3875 = vmatprep.subr.bf16.mxu0 %v3785
    %3876 = vmatpush1.bf16.msra.mxu0 %v3784
    %3877 = vmatprep.subr.bf16.mxu0 %v3789
    %3878 = vmatpush1.bf16.msra.mxu0 %v3788
    %3879 = vmatprep.subr.bf16.mxu0 0
    %3880 = vmatpush1.bf16.msra.mxu0 0
    %3881 = vmatprep.subr.bf16.mxu0 0
    %3882 = vmatpush1.bf16.msra.mxu0 0
    %3883 = vmatprep.subr.bf16.mxu0 0
    %3884 = vmatpush1.bf16.msra.mxu0 0
    %3885 = vmatprep.subr.bf16.mxu0 0
    %3886 = vmatpush1.bf16.msra.mxu0 0
    %3887 = vmatprep.subr.bf16.mxu0 0
    %3888 = vmatpush1.bf16.msra.mxu0 0
    %3889 = vmatprep.subr.bf16.mxu0 0
    %3890 = vmatpush1.bf16.msra.mxu0 0
    %3891 = vmatprep.subr.bf16.mxu0 0
    %3892 = vmatpush1.bf16.msra.mxu0 0
    %3893 = vmatprep.subr.bf16.mxu0 0
    %3894 = vmatpush1.bf16.msra.mxu0 0
    %3895 = vmatprep.mubr.bf16.mxu0 0
    %3896 = vmatmul.mubr.bf16.gmra.mrb[0].mxu0 %v3629
    %v3897 = vpop.f32.mrb[0].mxu0
    %v3898 = vadd.f32 0.0, %v3897
    %v3899 = vpop.f32.mrb[0].mxu0
    %v3900 = vadd.f32 0.0, %v3899
    %v3901 = vpop.f32.mrb[0].mxu0
    %v3902 = vpop.f32.mrb[0].mxu0
    %3903 = vdwg.mxu0
    %v3904 = vadd.f32 %v3625, %v3857
    %v3905 = vadd.f32 %v3626, %v3859
    %v3906 = vadd.f32 %v3627, %v3898
    %v3907 = vadd.f32 %v3628, %v3900
    %v3908 = vmul.f32 %v3620, 0.5
    %v3909 = vtanh.pop %v3908
    %v3910 = vmul.f32 %v3909, 0.5
    %v3911 = vadd.f32 %v3910, 0.5
    %v3912 = vmul.f32 %v3621, 0.5
    %v3913 = vtanh.pop %v3912
    %v3914 = vmul.f32 %v3913, 0.5
    %v3915 = vadd.f32 %v3914, 0.5
    %v3916 = vtanh.pop %v3622
    %v3917 = vmul.f32 %v3623, 0.5
    %v3918 = vtanh.pop %v3917
    %v3919 = vmul.f32 %v3918, 0.5
    %v3920 = vadd.f32 %v3919, 0.5
    %v3921 = vmul.f32 %v3915, %v3315
    %v3922 = vmul.f32 %v3911, %v3916
    %v3923 = vadd.f32 %v3921, %v3922
    %v3924 = vtanh.pop %v3923
    %v3925 = vmul.f32 %v3920, %v3924
    %v3926 = vmul.f32 %v3904, 0.5
    %v3927 = vtanh.pop %v3926
    %v3928 = vmul.f32 %v3927, 0.5
    %v3929 = vadd.f32 %v3928, 0.5
    %v3930 = vmul.f32 %v3905, 0.5
    %v3931 = vtanh.pop %v3930
    %v3932 = vmul.f32 %v3931, 0.5
    %v3933 = vadd.f32 %v3932, 0.5
    %v3934 = vtanh.pop %v3906
    %v3935 = vmul.f32 %v3907, 0.5
    %v3936 = vtanh.pop %v3935
    %v3937 = vmul.f32 %v3936, 0.5
    %v3938 = vadd.f32 %v3937, 0.5
    %v3939 = vmul.f32 %v3933, %v3333
    %v3940 = vmul.f32 %v3929, %v3934
    %v3941 = vadd.f32 %v3939, %v3940
    %v3942 = vtanh.pop %v3941
    %v3943 = vmul.f32 %v3938, %v3942
    %3944 = vst [vmem:[%s3338] sm:$0xff] %v3925
    %3945 = vst [vmem:[%s3336 + $0x8] sm:$0xff] %v3943
    %s3946 = scalar_lea.vmem [#allocation2], 160
    %v3947 = vld [vmem:[%s3946] sm:$0xff]
    %v3948 = vld [vmem:[%s3946 + $0x8] sm:$0xff]
    %v3949 = vld [vmem:[%s3946 + $0x10] sm:$0xff]
    %v3950 = vld [vmem:[%s3946 + $0x18] sm:$0xff]
    %v3951 = vpack.c.bf16 %v3925, %v3925
    %v3952 = vld [vmem:[#allocation10] sm:$0xff]
    %v3953 = vld [vmem:[#allocation10 + $0x8] sm:$0xff]
    %v3954 = vld [vmem:[#allocation10 + $0x10] sm:$0xff]
    %v3955 = vld [vmem:[#allocation10 + $0x18] sm:$0xff]
    %v3956 = vld [vmem:[#allocation10 + $0x20] sm:$0xff]
    %v3957 = vld [vmem:[#allocation10 + $0x28] sm:$0xff]
    %v3958 = vld [vmem:[#allocation10 + $0x30] sm:$0xff]
    %v3959 = vld [vmem:[#allocation10 + $0x38] sm:$0xff]
    %v3960 = vld [vmem:[#allocation10 + $0x40] sm:$0xff]
    %v3961 = vld [vmem:[#allocation10 + $0x48] sm:$0xff]
    %v3962 = vld [vmem:[#allocation10 + $0x50] sm:$0xff]
    %v3963 = vld [vmem:[#allocation10 + $0x58] sm:$0xff]
    %v3964 = vld [vmem:[#allocation10 + $0x60] sm:$0xff]
    %v3965 = vld [vmem:[#allocation10 + $0x68] sm:$0xff]
    %v3966 = vld [vmem:[#allocation10 + $0x70] sm:$0xff]
    %v3967 = vld [vmem:[#allocation10 + $0x78] sm:$0xff]
    %v3968 = vld [vmem:[#allocation10 + $0x80] sm:$0xff]
    %v3969 = vld [vmem:[#allocation10 + $0x88] sm:$0xff]
    %v3970 = vld [vmem:[#allocation10 + $0x90] sm:$0xff]
    %v3971 = vld [vmem:[#allocation10 + $0x98] sm:$0xff]
    %v3972 = vld [vmem:[#allocation10 + $0xa0] sm:$0xff]
    %v3973 = vld [vmem:[#allocation10 + $0xa8] sm:$0xff]
    %v3974 = vld [vmem:[#allocation10 + $0xb0] sm:$0xff]
    %v3975 = vld [vmem:[#allocation10 + $0xb8] sm:$0xff]
    %v3976 = vld [vmem:[#allocation10 + $0xc0] sm:$0xff]
    %v3977 = vld [vmem:[#allocation10 + $0xc8] sm:$0xff]
    %v3978 = vld [vmem:[#allocation10 + $0xd0] sm:$0xff]
    %v3979 = vld [vmem:[#allocation10 + $0xd8] sm:$0xff]
    %v3980 = vld [vmem:[#allocation10 + $0xe0] sm:$0xff]
    %v3981 = vld [vmem:[#allocation10 + $0xe8] sm:$0xff]
    %v3982 = vld [vmem:[#allocation10 + $0xf0] sm:$0xff]
    %v3983 = vld [vmem:[#allocation10 + $0xf8] sm:$0xff]
    %v4016 = vunpack.c.l.b16 %v3952
    %v4017 = vunpack.c.h.b16 %v3952
    %v4018 = vunpack.c.l.b16 %v3953
    %v4019 = vunpack.c.h.b16 %v3953
    %v4020 = vunpack.c.l.b16 %v3954
    %v4021 = vunpack.c.h.b16 %v3954
    %v4022 = vunpack.c.l.b16 %v3955
    %v4023 = vunpack.c.h.b16 %v3955
    %v4024 = vunpack.c.l.b16 %v3956
    %v4025 = vunpack.c.h.b16 %v3956
    %v4026 = vunpack.c.l.b16 %v3957
    %v4027 = vunpack.c.h.b16 %v3957
    %v4028 = vunpack.c.l.b16 %v3958
    %v4029 = vunpack.c.h.b16 %v3958
    %v4030 = vunpack.c.l.b16 %v3959
    %v4031 = vunpack.c.h.b16 %v3959
    %v4032 = vunpack.c.l.b16 %v3960
    %v4033 = vunpack.c.h.b16 %v3960
    %v4034 = vunpack.c.l.b16 %v3961
    %v4035 = vunpack.c.h.b16 %v3961
    %v4036 = vunpack.c.l.b16 %v3962
    %v4037 = vunpack.c.h.b16 %v3962
    %v4038 = vunpack.c.l.b16 %v3963
    %v4039 = vunpack.c.h.b16 %v3963
    %v4040 = vunpack.c.l.b16 %v3964
    %v4041 = vunpack.c.h.b16 %v3964
    %v4042 = vunpack.c.l.b16 %v3965
    %v4043 = vunpack.c.h.b16 %v3965
    %v4044 = vunpack.c.l.b16 %v3966
    %v4045 = vunpack.c.h.b16 %v3966
    %v4046 = vunpack.c.l.b16 %v3967
    %v4047 = vunpack.c.h.b16 %v3967
    %v4048 = vunpack.c.l.b16 %v3968
    %v4049 = vunpack.c.h.b16 %v3968
    %v4050 = vunpack.c.l.b16 %v3969
    %v4051 = vunpack.c.h.b16 %v3969
    %v4052 = vunpack.c.l.b16 %v3970
    %v4053 = vunpack.c.h.b16 %v3970
    %v4054 = vunpack.c.l.b16 %v3971
    %v4055 = vunpack.c.h.b16 %v3971
    %v4056 = vunpack.c.l.b16 %v3972
    %v4057 = vunpack.c.h.b16 %v3972
    %v4058 = vunpack.c.l.b16 %v3973
    %v4059 = vunpack.c.h.b16 %v3973
    %v4060 = vunpack.c.l.b16 %v3974
    %v4061 = vunpack.c.h.b16 %v3974
    %v4062 = vunpack.c.l.b16 %v3975
    %v4063 = vunpack.c.h.b16 %v3975
    %v4064 = vunpack.c.l.b16 %v3976
    %v4065 = vunpack.c.h.b16 %v3976
    %v4066 = vunpack.c.l.b16 %v3977
    %v4067 = vunpack.c.h.b16 %v3977
    %v4068 = vunpack.c.l.b16 %v3978
    %v4069 = vunpack.c.h.b16 %v3978
    %v4070 = vunpack.c.l.b16 %v3979
    %v4071 = vunpack.c.h.b16 %v3979
    %v4072 = vunpack.c.l.b16 %v3980
    %v4073 = vunpack.c.h.b16 %v3980
    %v4074 = vunpack.c.l.b16 %v3981
    %v4075 = vunpack.c.h.b16 %v3981
    %v4076 = vunpack.c.l.b16 %v3982
    %v4077 = vunpack.c.h.b16 %v3982
    %v4078 = vunpack.c.l.b16 %v3983
    %v4079 = vunpack.c.h.b16 %v3983
    %v4080 = vpack.c.b16 %v4020, %v4016
    %v4081 = vpack.c.b16 %v4021, %v4017
    %v4082 = vpack.c.b16 %v4022, %v4018
    %v4083 = vpack.c.b16 %v4023, %v4019
    %v4084 = vpack.c.b16 %v4028, %v4024
    %v4085 = vpack.c.b16 %v4029, %v4025
    %v4086 = vpack.c.b16 %v4030, %v4026
    %v4087 = vpack.c.b16 %v4031, %v4027
    %v4088 = vpack.c.b16 %v4036, %v4032
    %v4089 = vpack.c.b16 %v4037, %v4033
    %v4090 = vpack.c.b16 %v4038, %v4034
    %v4091 = vpack.c.b16 %v4039, %v4035
    %v4092 = vpack.c.b16 %v4044, %v4040
    %v4093 = vpack.c.b16 %v4045, %v4041
    %v4094 = vpack.c.b16 %v4046, %v4042
    %v4095 = vpack.c.b16 %v4047, %v4043
    %v4096 = vpack.c.b16 %v4052, %v4048
    %v4097 = vpack.c.b16 %v4053, %v4049
    %v4098 = vpack.c.b16 %v4054, %v4050
    %v4099 = vpack.c.b16 %v4055, %v4051
    %v4100 = vpack.c.b16 %v4060, %v4056
    %v4101 = vpack.c.b16 %v4061, %v4057
    %v4102 = vpack.c.b16 %v4062, %v4058
    %v4103 = vpack.c.b16 %v4063, %v4059
    %v4104 = vpack.c.b16 %v4068, %v4064
    %v4105 = vpack.c.b16 %v4069, %v4065
    %v4106 = vpack.c.b16 %v4070, %v4066
    %v4107 = vpack.c.b16 %v4071, %v4067
    %v4108 = vpack.c.b16 %v4076, %v4072
    %v4109 = vpack.c.b16 %v4077, %v4073
    %v4110 = vpack.c.b16 %v4078, %v4074
    %v4111 = vpack.c.b16 %v4079, %v4075
    %4144 = vmatprep.subr.bf16.mxu0 %v4081
    %4145 = vmatpush1.bf16.msra.mxu0 %v4080
    %4146 = vmatprep.subr.bf16.mxu0 %v4085
    %4147 = vmatpush1.bf16.msra.mxu0 %v4084
    %4148 = vmatprep.subr.bf16.mxu0 %v4089
    %4149 = vmatpush1.bf16.msra.mxu0 %v4088
    %4150 = vmatprep.subr.bf16.mxu0 %v4093
    %4151 = vmatpush1.bf16.msra.mxu0 %v4092
    %4152 = vmatprep.subr.bf16.mxu0 %v4097
    %4153 = vmatpush1.bf16.msra.mxu0 %v4096
    %4154 = vmatprep.subr.bf16.mxu0 %v4101
    %4155 = vmatpush1.bf16.msra.mxu0 %v4100
    %4156 = vmatprep.subr.bf16.mxu0 %v4105
    %4157 = vmatpush1.bf16.msra.mxu0 %v4104
    %4158 = vmatprep.subr.bf16.mxu0 %v4109
    %4159 = vmatpush1.bf16.msra.mxu0 %v4108
    %4160 = vmatprep.subr.bf16.mxu0 0
    %4161 = vmatpush1.bf16.msra.mxu0 0
    %4162 = vmatprep.subr.bf16.mxu0 0
    %4163 = vmatpush1.bf16.msra.mxu0 0
    %4164 = vmatprep.subr.bf16.mxu0 0
    %4165 = vmatpush1.bf16.msra.mxu0 0
    %4166 = vmatprep.subr.bf16.mxu0 0
    %4167 = vmatpush1.bf16.msra.mxu0 0
    %4168 = vmatprep.subr.bf16.mxu0 0
    %4169 = vmatpush1.bf16.msra.mxu0 0
    %4170 = vmatprep.subr.bf16.mxu0 0
    %4171 = vmatpush1.bf16.msra.mxu0 0
    %4172 = vmatprep.subr.bf16.mxu0 0
    %4173 = vmatpush1.bf16.msra.mxu0 0
    %4174 = vmatprep.subr.bf16.mxu0 0
    %4175 = vmatpush1.bf16.msra.mxu0 0
    %4176 = vmatprep.mubr.bf16.mxu0 0
    %4177 = vmatmul.mubr.bf16.gmra.mrb[0].mxu0 %v3951
    %v4178 = vpop.f32.mrb[0].mxu0
    %v4179 = vadd.f32 0.0, %v4178
    %v4180 = vpop.f32.mrb[0].mxu0
    %v4181 = vadd.f32 0.0, %v4180
    %v4182 = vpop.f32.mrb[0].mxu0
    %v4183 = vpop.f32.mrb[0].mxu0
    %4184 = vdwg.mxu0
    %4185 = vmatprep.subr.bf16.mxu0 %v4083
    %4186 = vmatpush1.bf16.msra.mxu0 %v4082
    %4187 = vmatprep.subr.bf16.mxu0 %v4087
    %4188 = vmatpush1.bf16.msra.mxu0 %v4086
    %4189 = vmatprep.subr.bf16.mxu0 %v4091
    %4190 = vmatpush1.bf16.msra.mxu0 %v4090
    %4191 = vmatprep.subr.bf16.mxu0 %v4095
    %4192 = vmatpush1.bf16.msra.mxu0 %v4094
    %4193 = vmatprep.subr.bf16.mxu0 %v4099
    %4194 = vmatpush1.bf16.msra.mxu0 %v4098
    %4195 = vmatprep.subr.bf16.mxu0 %v4103
    %4196 = vmatpush1.bf16.msra.mxu0 %v4102
    %4197 = vmatprep.subr.bf16.mxu0 %v4107
    %4198 = vmatpush1.bf16.msra.mxu0 %v4106
    %4199 = vmatprep.subr.bf16.mxu0 %v4111
    %4200 = vmatpush1.bf16.msra.mxu0 %v4110
    %4201 = vmatprep.subr.bf16.mxu0 0
    %4202 = vmatpush1.bf16.msra.mxu0 0
    %4203 = vmatprep.subr.bf16.mxu0 0
    %4204 = vmatpush1.bf16.msra.mxu0 0
    %4205 = vmatprep.subr.bf16.mxu0 0
    %4206 = vmatpush1.bf16.msra.mxu0 0
    %4207 = vmatprep.subr.bf16.mxu0 0
    %4208 = vmatpush1.bf16.msra.mxu0 0
    %4209 = vmatprep.subr.bf16.mxu0 0
    %4210 = vmatpush1.bf16.msra.mxu0 0
    %4211 = vmatprep.subr.bf16.mxu0 0
    %4212 = vmatpush1.bf16.msra.mxu0 0
    %4213 = vmatprep.subr.bf16.mxu0 0
    %4214 = vmatpush1.bf16.msra.mxu0 0
    %4215 = vmatprep.subr.bf16.mxu0 0
    %4216 = vmatpush1.bf16.msra.mxu0 0
    %4217 = vmatprep.mubr.bf16.mxu0 0
    %4218 = vmatmul.mubr.bf16.gmra.mrb[0].mxu0 %v3951
    %v4219 = vpop.f32.mrb[0].mxu0
    %v4220 = vadd.f32 0.0, %v4219
    %v4221 = vpop.f32.mrb[0].mxu0
    %v4222 = vadd.f32 0.0, %v4221
    %v4223 = vpop.f32.mrb[0].mxu0
    %v4224 = vpop.f32.mrb[0].mxu0
    %4225 = vdwg.mxu0
    %v4226 = vadd.f32 %v3947, %v4179
    %v4227 = vadd.f32 %v3948, %v4181
    %v4228 = vadd.f32 %v3949, %v4220
    %v4229 = vadd.f32 %v3950, %v4222
    %s4230 = scalar_lea.vmem [#allocation3], 64
    %v4231 = vld [vmem:[%s4230] sm:$0xff]
    %v4232 = vld [vmem:[%s4230 + $0x8] sm:$0xff]
    %v4233 = vld [vmem:[%s4230 + $0x10] sm:$0xff]
    %v4234 = vld [vmem:[%s4230 + $0x18] sm:$0xff]
    %v4235 = vpack.c.bf16 %v3943, %v3943
    %v4236 = vld [vmem:[#allocation13] sm:$0xff]
    %v4237 = vld [vmem:[#allocation13 + $0x8] sm:$0xff]
    %v4238 = vld [vmem:[#allocation13 + $0x10] sm:$0xff]
    %v4239 = vld [vmem:[#allocation13 + $0x18] sm:$0xff]
    %v4240 = vld [vmem:[#allocation13 + $0x20] sm:$0xff]
    %v4241 = vld [vmem:[#allocation13 + $0x28] sm:$0xff]
    %v4242 = vld [vmem:[#allocation13 + $0x30] sm:$0xff]
    %v4243 = vld [vmem:[#allocation13 + $0x38] sm:$0xff]
    %v4244 = vld [vmem:[#allocation13 + $0x40] sm:$0xff]
    %v4245 = vld [vmem:[#allocation13 + $0x48] sm:$0xff]
    %v4246 = vld [vmem:[#allocation13 + $0x50] sm:$0xff]
    %v4247 = vld [vmem:[#allocation13 + $0x58] sm:$0xff]
    %v4248 = vld [vmem:[#allocation13 + $0x60] sm:$0xff]
    %v4249 = vld [vmem:[#allocation13 + $0x68] sm:$0xff]
    %v4250 = vld [vmem:[#allocation13 + $0x70] sm:$0xff]
    %v4251 = vld [vmem:[#allocation13 + $0x78] sm:$0xff]
    %v4252 = vld [vmem:[#allocation13 + $0x80] sm:$0xff]
    %v4253 = vld [vmem:[#allocation13 + $0x88] sm:$0xff]
    %v4254 = vld [vmem:[#allocation13 + $0x90] sm:$0xff]
    %v4255 = vld [vmem:[#allocation13 + $0x98] sm:$0xff]
    %v4256 = vld [vmem:[#allocation13 + $0xa0] sm:$0xff]
    %v4257 = vld [vmem:[#allocation13 + $0xa8] sm:$0xff]
    %v4258 = vld [vmem:[#allocation13 + $0xb0] sm:$0xff]
    %v4259 = vld [vmem:[#allocation13 + $0xb8] sm:$0xff]
    %v4260 = vld [vmem:[#allocation13 + $0xc0] sm:$0xff]
    %v4261 = vld [vmem:[#allocation13 + $0xc8] sm:$0xff]
    %v4262 = vld [vmem:[#allocation13 + $0xd0] sm:$0xff]
    %v4263 = vld [vmem:[#allocation13 + $0xd8] sm:$0xff]
    %v4264 = vld [vmem:[#allocation13 + $0xe0] sm:$0xff]
    %v4265 = vld [vmem:[#allocation13 + $0xe8] sm:$0xff]
    %v4266 = vld [vmem:[#allocation13 + $0xf0] sm:$0xff]
    %v4267 = vld [vmem:[#allocation13 + $0xf8] sm:$0xff]
    %v4300 = vunpack.c.l.b16 %v4236
    %v4301 = vunpack.c.h.b16 %v4236
    %v4302 = vunpack.c.l.b16 %v4237
    %v4303 = vunpack.c.h.b16 %v4237
    %v4304 = vunpack.c.l.b16 %v4238
    %v4305 = vunpack.c.h.b16 %v4238
    %v4306 = vunpack.c.l.b16 %v4239
    %v4307 = vunpack.c.h.b16 %v4239
    %v4308 = vunpack.c.l.b16 %v4240
    %v4309 = vunpack.c.h.b16 %v4240
    %v4310 = vunpack.c.l.b16 %v4241
    %v4311 = vunpack.c.h.b16 %v4241
    %v4312 = vunpack.c.l.b16 %v4242
    %v4313 = vunpack.c.h.b16 %v4242
    %v4314 = vunpack.c.l.b16 %v4243
    %v4315 = vunpack.c.h.b16 %v4243
    %v4316 = vunpack.c.l.b16 %v4244
    %v4317 = vunpack.c.h.b16 %v4244
    %v4318 = vunpack.c.l.b16 %v4245
    %v4319 = vunpack.c.h.b16 %v4245
    %v4320 = vunpack.c.l.b16 %v4246
    %v4321 = vunpack.c.h.b16 %v4246
    %v4322 = vunpack.c.l.b16 %v4247
    %v4323 = vunpack.c.h.b16 %v4247
    %v4324 = vunpack.c.l.b16 %v4248
    %v4325 = vunpack.c.h.b16 %v4248
    %v4326 = vunpack.c.l.b16 %v4249
    %v4327 = vunpack.c.h.b16 %v4249
    %v4328 = vunpack.c.l.b16 %v4250
    %v4329 = vunpack.c.h.b16 %v4250
    %v4330 = vunpack.c.l.b16 %v4251
    %v4331 = vunpack.c.h.b16 %v4251
    %v4332 = vunpack.c.l.b16 %v4252
    %v4333 = vunpack.c.h.b16 %v4252
    %v4334 = vunpack.c.l.b16 %v4253
    %v4335 = vunpack.c.h.b16 %v4253
    %v4336 = vunpack.c.l.b16 %v4254
    %v4337 = vunpack.c.h.b16 %v4254
    %v4338 = vunpack.c.l.b16 %v4255
    %v4339 = vunpack.c.h.b16 %v4255
    %v4340 = vunpack.c.l.b16 %v4256
    %v4341 = vunpack.c.h.b16 %v4256
    %v4342 = vunpack.c.l.b16 %v4257
    %v4343 = vunpack.c.h.b16 %v4257
    %v4344 = vunpack.c.l.b16 %v4258
    %v4345 = vunpack.c.h.b16 %v4258
    %v4346 = vunpack.c.l.b16 %v4259
    %v4347 = vunpack.c.h.b16 %v4259
    %v4348 = vunpack.c.l.b16 %v4260
    %v4349 = vunpack.c.h.b16 %v4260
    %v4350 = vunpack.c.l.b16 %v4261
    %v4351 = vunpack.c.h.b16 %v4261
    %v4352 = vunpack.c.l.b16 %v4262
    %v4353 = vunpack.c.h.b16 %v4262
    %v4354 = vunpack.c.l.b16 %v4263
    %v4355 = vunpack.c.h.b16 %v4263
    %v4356 = vunpack.c.l.b16 %v4264
    %v4357 = vunpack.c.h.b16 %v4264
    %v4358 = vunpack.c.l.b16 %v4265
    %v4359 = vunpack.c.h.b16 %v4265
    %v4360 = vunpack.c.l.b16 %v4266
    %v4361 = vunpack.c.h.b16 %v4266
    %v4362 = vunpack.c.l.b16 %v4267
    %v4363 = vunpack.c.h.b16 %v4267
    %v4364 = vpack.c.b16 %v4304, %v4300
    %v4365 = vpack.c.b16 %v4305, %v4301
    %v4366 = vpack.c.b16 %v4306, %v4302
    %v4367 = vpack.c.b16 %v4307, %v4303
    %v4368 = vpack.c.b16 %v4312, %v4308
    %v4369 = vpack.c.b16 %v4313, %v4309
    %v4370 = vpack.c.b16 %v4314, %v4310
    %v4371 = vpack.c.b16 %v4315, %v4311
    %v4372 = vpack.c.b16 %v4320, %v4316
    %v4373 = vpack.c.b16 %v4321, %v4317
    %v4374 = vpack.c.b16 %v4322, %v4318
    %v4375 = vpack.c.b16 %v4323, %v4319
    %v4376 = vpack.c.b16 %v4328, %v4324
    %v4377 = vpack.c.b16 %v4329, %v4325
    %v4378 = vpack.c.b16 %v4330, %v4326
    %v4379 = vpack.c.b16 %v4331, %v4327
    %v4380 = vpack.c.b16 %v4336, %v4332
    %v4381 = vpack.c.b16 %v4337, %v4333
    %v4382 = vpack.c.b16 %v4338, %v4334
    %v4383 = vpack.c.b16 %v4339, %v4335
    %v4384 = vpack.c.b16 %v4344, %v4340
    %v4385 = vpack.c.b16 %v4345, %v4341
    %v4386 = vpack.c.b16 %v4346, %v4342
    %v4387 = vpack.c.b16 %v4347, %v4343
    %v4388 = vpack.c.b16 %v4352, %v4348
    %v4389 = vpack.c.b16 %v4353, %v4349
    %v4390 = vpack.c.b16 %v4354, %v4350
    %v4391 = vpack.c.b16 %v4355, %v4351
    %v4392 = vpack.c.b16 %v4360, %v4356
    %v4393 = vpack.c.b16 %v4361, %v4357
    %v4394 = vpack.c.b16 %v4362, %v4358
    %v4395 = vpack.c.b16 %v4363, %v4359
    %4428 = vmatprep.subr.bf16.mxu0 %v4365
    %4429 = vmatpush1.bf16.msra.mxu0 %v4364
    %4430 = vmatprep.subr.bf16.mxu0 %v4369
    %4431 = vmatpush1.bf16.msra.mxu0 %v4368
    %4432 = vmatprep.subr.bf16.mxu0 %v4373
    %4433 = vmatpush1.bf16.msra.mxu0 %v4372
    %4434 = vmatprep.subr.bf16.mxu0 %v4377
    %4435 = vmatpush1.bf16.msra.mxu0 %v4376
    %4436 = vmatprep.subr.bf16.mxu0 %v4381
    %4437 = vmatpush1.bf16.msra.mxu0 %v4380
    %4438 = vmatprep.subr.bf16.mxu0 %v4385
    %4439 = vmatpush1.bf16.msra.mxu0 %v4384
    %4440 = vmatprep.subr.bf16.mxu0 %v4389
    %4441 = vmatpush1.bf16.msra.mxu0 %v4388
    %4442 = vmatprep.subr.bf16.mxu0 %v4393
    %4443 = vmatpush1.bf16.msra.mxu0 %v4392
    %4444 = vmatprep.subr.bf16.mxu0 0
    %4445 = vmatpush1.bf16.msra.mxu0 0
    %4446 = vmatprep.subr.bf16.mxu0 0
    %4447 = vmatpush1.bf16.msra.mxu0 0
    %4448 = vmatprep.subr.bf16.mxu0 0
    %4449 = vmatpush1.bf16.msra.mxu0 0
    %4450 = vmatprep.subr.bf16.mxu0 0
    %4451 = vmatpush1.bf16.msra.mxu0 0
    %4452 = vmatprep.subr.bf16.mxu0 0
    %4453 = vmatpush1.bf16.msra.mxu0 0
    %4454 = vmatprep.subr.bf16.mxu0 0
    %4455 = vmatpush1.bf16.msra.mxu0 0
    %4456 = vmatprep.subr.bf16.mxu0 0
    %4457 = vmatpush1.bf16.msra.mxu0 0
    %4458 = vmatprep.subr.bf16.mxu0 0
    %4459 = vmatpush1.bf16.msra.mxu0 0
    %4460 = vmatprep.mubr.bf16.mxu0 0
    %4461 = vmatmul.mubr.bf16.gmra.mrb[0].mxu0 %v4235
    %v4462 = vpop.f32.mrb[0].mxu0
    %v4463 = vadd.f32 0.0, %v4462
    %v4464 = vpop.f32.mrb[0].mxu0
    %v4465 = vadd.f32 0.0, %v4464
    %v4466 = vpop.f32.mrb[0].mxu0
    %v4467 = vpop.f32.mrb[0].mxu0
    %4468 = vdwg.mxu0
    %4469 = vmatprep.subr.bf16.mxu0 %v4367
    %4470 = vmatpush1.bf16.msra.mxu0 %v4366
    %4471 = vmatprep.subr.bf16.mxu0 %v4371
    %4472 = vmatpush1.bf16.msra.mxu0 %v4370
    %4473 = vmatprep.subr.bf16.mxu0 %v4375
    %4474 = vmatpush1.bf16.msra.mxu0 %v4374
    %4475 = vmatprep.subr.bf16.mxu0 %v4379
    %4476 = vmatpush1.bf16.msra.mxu0 %v4378
    %4477 = vmatprep.subr.bf16.mxu0 %v4383
    %4478 = vmatpush1.bf16.msra.mxu0 %v4382
    %4479 = vmatprep.subr.bf16.mxu0 %v4387
    %4480 = vmatpush1.bf16.msra.mxu0 %v4386
    %4481 = vmatprep.subr.bf16.mxu0 %v4391
    %4482 = vmatpush1.bf16.msra.mxu0 %v4390
    %4483 = vmatprep.subr.bf16.mxu0 %v4395
    %4484 = vmatpush1.bf16.msra.mxu0 %v4394
    %4485 = vmatprep.subr.bf16.mxu0 0
    %4486 = vmatpush1.bf16.msra.mxu0 0
    %4487 = vmatprep.subr.bf16.mxu0 0
    %4488 = vmatpush1.bf16.msra.mxu0 0
    %4489 = vmatprep.subr.bf16.mxu0 0
    %4490 = vmatpush1.bf16.msra.mxu0 0
    %4491 = vmatprep.subr.bf16.mxu0 0
    %4492 = vmatpush1.bf16.msra.mxu0 0
    %4493 = vmatprep.subr.bf16.mxu0 0
    %4494 = vmatpush1.bf16.msra.mxu0 0
    %4495 = vmatprep.subr.bf16.mxu0 0
    %4496 = vmatpush1.bf16.msra.mxu0 0
    %4497 = vmatprep.subr.bf16.mxu0 0
    %4498 = vmatpush1.bf16.msra.mxu0 0
    %4499 = vmatprep.subr.bf16.mxu0 0
    %4500 = vmatpush1.bf16.msra.mxu0 0
    %4501 = vmatprep.mubr.bf16.mxu0 0
    %4502 = vmatmul.mubr.bf16.gmra.mrb[0].mxu0 %v4235
    %v4503 = vpop.f32.mrb[0].mxu0
    %v4504 = vadd.f32 0.0, %v4503
    %v4505 = vpop.f32.mrb[0].mxu0
    %v4506 = vadd.f32 0.0, %v4505
    %v4507 = vpop.f32.mrb[0].mxu0
    %v4508 = vpop.f32.mrb[0].mxu0
    %4509 = vdwg.mxu0
    %v4510 = vadd.f32 %v4231, %v4463
    %v4511 = vadd.f32 %v4232, %v4465
    %v4512 = vadd.f32 %v4233, %v4504
    %v4513 = vadd.f32 %v4234, %v4506
    %v4514 = vmul.f32 %v4226, 0.5
    %v4515 = vtanh.pop %v4514
    %v4516 = vmul.f32 %v4515, 0.5
    %v4517 = vadd.f32 %v4516, 0.5
    %v4518 = vmul.f32 %v4227, 0.5
    %v4519 = vtanh.pop %v4518
    %v4520 = vmul.f32 %v4519, 0.5
    %v4521 = vadd.f32 %v4520, 0.5
    %v4522 = vtanh.pop %v4228
    %v4523 = vmul.f32 %v4229, 0.5
    %v4524 = vtanh.pop %v4523
    %v4525 = vmul.f32 %v4524, 0.5
    %v4526 = vadd.f32 %v4525, 0.5
    %v4527 = vmul.f32 %v4521, %v3923
    %v4528 = vmul.f32 %v4517, %v4522
    %v4529 = vadd.f32 %v4527, %v4528
    %v4530 = vtanh.pop %v4529
    %v4531 = vmul.f32 %v4526, %v4530
    %v4532 = vmul.f32 %v4510, 0.5
    %v4533 = vtanh.pop %v4532
    %v4534 = vmul.f32 %v4533, 0.5
    %v4535 = vadd.f32 %v4534, 0.5
    %v4536 = vmul.f32 %v4511, 0.5
    %v4537 = vtanh.pop %v4536
    %v4538 = vmul.f32 %v4537, 0.5
    %v4539 = vadd.f32 %v4538, 0.5
    %v4540 = vtanh.pop %v4512
    %v4541 = vmul.f32 %v4513, 0.5
    %v4542 = vtanh.pop %v4541
    %v4543 = vmul.f32 %v4542, 0.5
    %v4544 = vadd.f32 %v4543, 0.5
    %v4545 = vmul.f32 %v4539, %v3941
    %v4546 = vmul.f32 %v4535, %v4540
    %v4547 = vadd.f32 %v4545, %v4546
    %v4548 = vtanh.pop %v4547
    %v4549 = vmul.f32 %v4544, %v4548
    %4550 = vst [vmem:[%s2730] sm:$0xff] %v4531
    %4551 = vst [vmem:[%s2728 + $0x8] sm:$0xff] %v4549
    %s4552 = scalar_lea.vmem [#allocation2], 192
    %v4553 = vld [vmem:[%s4552] sm:$0xff]
    %v4554 = vld [vmem:[%s4552 + $0x8] sm:$0xff]
    %v4555 = vld [vmem:[%s4552 + $0x10] sm:$0xff]
    %v4556 = vld [vmem:[%s4552 + $0x18] sm:$0xff]
    %v4557 = vpack.c.bf16 %v4531, %v4531
    %v4558 = vld [vmem:[#allocation10] sm:$0xff]
    %v4559 = vld [vmem:[#allocation10 + $0x8] sm:$0xff]
    %v4560 = vld [vmem:[#allocation10 + $0x10] sm:$0xff]
    %v4561 = vld [vmem:[#allocation10 + $0x18] sm:$0xff]
    %v4562 = vld [vmem:[#allocation10 + $0x20] sm:$0xff]
    %v4563 = vld [vmem:[#allocation10 + $0x28] sm:$0xff]
    %v4564 = vld [vmem:[#allocation10 + $0x30] sm:$0xff]
    %v4565 = vld [vmem:[#allocation10 + $0x38] sm:$0xff]
    %v4566 = vld [vmem:[#allocation10 + $0x40] sm:$0xff]
    %v4567 = vld [vmem:[#allocation10 + $0x48] sm:$0xff]
    %v4568 = vld [vmem:[#allocation10 + $0x50] sm:$0xff]
    %v4569 = vld [vmem:[#allocation10 + $0x58] sm:$0xff]
    %v4570 = vld [vmem:[#allocation10 + $0x60] sm:$0xff]
    %v4571 = vld [vmem:[#allocation10 + $0x68] sm:$0xff]
    %v4572 = vld [vmem:[#allocation10 + $0x70] sm:$0xff]
    %v4573 = vld [vmem:[#allocation10 + $0x78] sm:$0xff]
    %v4574 = vld [vmem:[#allocation10 + $0x80] sm:$0xff]
    %v4575 = vld [vmem:[#allocation10 + $0x88] sm:$0xff]
    %v4576 = vld [vmem:[#allocation10 + $0x90] sm:$0xff]
    %v4577 = vld [vmem:[#allocation10 + $0x98] sm:$0xff]
    %v4578 = vld [vmem:[#allocation10 + $0xa0] sm:$0xff]
    %v4579 = vld [vmem:[#allocation10 + $0xa8] sm:$0xff]
    %v4580 = vld [vmem:[#allocation10 + $0xb0] sm:$0xff]
    %v4581 = vld [vmem:[#allocation10 + $0xb8] sm:$0xff]
    %v4582 = vld [vmem:[#allocation10 + $0xc0] sm:$0xff]
    %v4583 = vld [vmem:[#allocation10 + $0xc8] sm:$0xff]
    %v4584 = vld [vmem:[#allocation10 + $0xd0] sm:$0xff]
    %v4585 = vld [vmem:[#allocation10 + $0xd8] sm:$0xff]
    %v4586 = vld [vmem:[#allocation10 + $0xe0] sm:$0xff]
    %v4587 = vld [vmem:[#allocation10 + $0xe8] sm:$0xff]
    %v4588 = vld [vmem:[#allocation10 + $0xf0] sm:$0xff]
    %v4589 = vld [vmem:[#allocation10 + $0xf8] sm:$0xff]
    %v4622 = vunpack.c.l.b16 %v4558
    %v4623 = vunpack.c.h.b16 %v4558
    %v4624 = vunpack.c.l.b16 %v4559
    %v4625 = vunpack.c.h.b16 %v4559
    %v4626 = vunpack.c.l.b16 %v4560
    %v4627 = vunpack.c.h.b16 %v4560
    %v4628 = vunpack.c.l.b16 %v4561
    %v4629 = vunpack.c.h.b16 %v4561
    %v4630 = vunpack.c.l.b16 %v4562
    %v4631 = vunpack.c.h.b16 %v4562
    %v4632 = vunpack.c.l.b16 %v4563
    %v4633 = vunpack.c.h.b16 %v4563
    %v4634 = vunpack.c.l.b16 %v4564
    %v4635 = vunpack.c.h.b16 %v4564
    %v4636 = vunpack.c.l.b16 %v4565
    %v4637 = vunpack.c.h.b16 %v4565
    %v4638 = vunpack.c.l.b16 %v4566
    %v4639 = vunpack.c.h.b16 %v4566
    %v4640 = vunpack.c.l.b16 %v4567
    %v4641 = vunpack.c.h.b16 %v4567
    %v4642 = vunpack.c.l.b16 %v4568
    %v4643 = vunpack.c.h.b16 %v4568
    %v4644 = vunpack.c.l.b16 %v4569
    %v4645 = vunpack.c.h.b16 %v4569
    %v4646 = vunpack.c.l.b16 %v4570
    %v4647 = vunpack.c.h.b16 %v4570
    %v4648 = vunpack.c.l.b16 %v4571
    %v4649 = vunpack.c.h.b16 %v4571
    %v4650 = vunpack.c.l.b16 %v4572
    %v4651 = vunpack.c.h.b16 %v4572
    %v4652 = vunpack.c.l.b16 %v4573
    %v4653 = vunpack.c.h.b16 %v4573
    %v4654 = vunpack.c.l.b16 %v4574
    %v4655 = vunpack.c.h.b16 %v4574
    %v4656 = vunpack.c.l.b16 %v4575
    %v4657 = vunpack.c.h.b16 %v4575
    %v4658 = vunpack.c.l.b16 %v4576
    %v4659 = vunpack.c.h.b16 %v4576
    %v4660 = vunpack.c.l.b16 %v4577
    %v4661 = vunpack.c.h.b16 %v4577
    %v4662 = vunpack.c.l.b16 %v4578
    %v4663 = vunpack.c.h.b16 %v4578
    %v4664 = vunpack.c.l.b16 %v4579
    %v4665 = vunpack.c.h.b16 %v4579
    %v4666 = vunpack.c.l.b16 %v4580
    %v4667 = vunpack.c.h.b16 %v4580
    %v4668 = vunpack.c.l.b16 %v4581
    %v4669 = vunpack.c.h.b16 %v4581
    %v4670 = vunpack.c.l.b16 %v4582
    %v4671 = vunpack.c.h.b16 %v4582
    %v4672 = vunpack.c.l.b16 %v4583
    %v4673 = vunpack.c.h.b16 %v4583
    %v4674 = vunpack.c.l.b16 %v4584
    %v4675 = vunpack.c.h.b16 %v4584
    %v4676 = vunpack.c.l.b16 %v4585
    %v4677 = vunpack.c.h.b16 %v4585
    %v4678 = vunpack.c.l.b16 %v4586
    %v4679 = vunpack.c.h.b16 %v4586
    %v4680 = vunpack.c.l.b16 %v4587
    %v4681 = vunpack.c.h.b16 %v4587
    %v4682 = vunpack.c.l.b16 %v4588
    %v4683 = vunpack.c.h.b16 %v4588
    %v4684 = vunpack.c.l.b16 %v4589
    %v4685 = vunpack.c.h.b16 %v4589
    %v4686 = vpack.c.b16 %v4626, %v4622
    %v4687 = vpack.c.b16 %v4627, %v4623
    %v4688 = vpack.c.b16 %v4628, %v4624
    %v4689 = vpack.c.b16 %v4629, %v4625
    %v4690 = vpack.c.b16 %v4634, %v4630
    %v4691 = vpack.c.b16 %v4635, %v4631
    %v4692 = vpack.c.b16 %v4636, %v4632
    %v4693 = vpack.c.b16 %v4637, %v4633
    %v4694 = vpack.c.b16 %v4642, %v4638
    %v4695 = vpack.c.b16 %v4643, %v4639
    %v4696 = vpack.c.b16 %v4644, %v4640
    %v4697 = vpack.c.b16 %v4645, %v4641
    %v4698 = vpack.c.b16 %v4650, %v4646
    %v4699 = vpack.c.b16 %v4651, %v4647
    %v4700 = vpack.c.b16 %v4652, %v4648
    %v4701 = vpack.c.b16 %v4653, %v4649
    %v4702 = vpack.c.b16 %v4658, %v4654
    %v4703 = vpack.c.b16 %v4659, %v4655
    %v4704 = vpack.c.b16 %v4660, %v4656
    %v4705 = vpack.c.b16 %v4661, %v4657
    %v4706 = vpack.c.b16 %v4666, %v4662
    %v4707 = vpack.c.b16 %v4667, %v4663
    %v4708 = vpack.c.b16 %v4668, %v4664
    %v4709 = vpack.c.b16 %v4669, %v4665
    %v4710 = vpack.c.b16 %v4674, %v4670
    %v4711 = vpack.c.b16 %v4675, %v4671
    %v4712 = vpack.c.b16 %v4676, %v4672
    %v4713 = vpack.c.b16 %v4677, %v4673
    %v4714 = vpack.c.b16 %v4682, %v4678
    %v4715 = vpack.c.b16 %v4683, %v4679
    %v4716 = vpack.c.b16 %v4684, %v4680
    %v4717 = vpack.c.b16 %v4685, %v4681
    %4750 = vmatprep.subr.bf16.mxu0 %v4687
    %4751 = vmatpush1.bf16.msra.mxu0 %v4686
    %4752 = vmatprep.subr.bf16.mxu0 %v4691
    %4753 = vmatpush1.bf16.msra.mxu0 %v4690
    %4754 = vmatprep.subr.bf16.mxu0 %v4695
    %4755 = vmatpush1.bf16.msra.mxu0 %v4694
    %4756 = vmatprep.subr.bf16.mxu0 %v4699
    %4757 = vmatpush1.bf16.msra.mxu0 %v4698
    %4758 = vmatprep.subr.bf16.mxu0 %v4703
    %4759 = vmatpush1.bf16.msra.mxu0 %v4702
    %4760 = vmatprep.subr.bf16.mxu0 %v4707
    %4761 = vmatpush1.bf16.msra.mxu0 %v4706
    %4762 = vmatprep.subr.bf16.mxu0 %v4711
    %4763 = vmatpush1.bf16.msra.mxu0 %v4710
    %4764 = vmatprep.subr.bf16.mxu0 %v4715
    %4765 = vmatpush1.bf16.msra.mxu0 %v4714
    %4766 = vmatprep.subr.bf16.mxu0 0
    %4767 = vmatpush1.bf16.msra.mxu0 0
    %4768 = vmatprep.subr.bf16.mxu0 0
    %4769 = vmatpush1.bf16.msra.mxu0 0
    %4770 = vmatprep.subr.bf16.mxu0 0
    %4771 = vmatpush1.bf16.msra.mxu0 0
    %4772 = vmatprep.subr.bf16.mxu0 0
    %4773 = vmatpush1.bf16.msra.mxu0 0
    %4774 = vmatprep.subr.bf16.mxu0 0
    %4775 = vmatpush1.bf16.msra.mxu0 0
    %4776 = vmatprep.subr.bf16.mxu0 0
    %4777 = vmatpush1.bf16.msra.mxu0 0
    %4778 = vmatprep.subr.bf16.mxu0 0
    %4779 = vmatpush1.bf16.msra.mxu0 0
    %4780 = vmatprep.subr.bf16.mxu0 0
    %4781 = vmatpush1.bf16.msra.mxu0 0
    %4782 = vmatprep.mubr.bf16.mxu0 0
    %4783 = vmatmul.mubr.bf16.gmra.mrb[0].mxu0 %v4557
    %v4784 = vpop.f32.mrb[0].mxu0
    %v4785 = vadd.f32 0.0, %v4784
    %v4786 = vpop.f32.mrb[0].mxu0
    %v4787 = vadd.f32 0.0, %v4786
    %v4788 = vpop.f32.mrb[0].mxu0
    %v4789 = vpop.f32.mrb[0].mxu0
    %4790 = vdwg.mxu0
    %4791 = vmatprep.subr.bf16.mxu0 %v4689
    %4792 = vmatpush1.bf16.msra.mxu0 %v4688
    %4793 = vmatprep.subr.bf16.mxu0 %v4693
    %4794 = vmatpush1.bf16.msra.mxu0 %v4692
    %4795 = vmatprep.subr.bf16.mxu0 %v4697
    %4796 = vmatpush1.bf16.msra.mxu0 %v4696
    %4797 = vmatprep.subr.bf16.mxu0 %v4701
    %4798 = vmatpush1.bf16.msra.mxu0 %v4700
    %4799 = vmatprep.subr.bf16.mxu0 %v4705
    %4800 = vmatpush1.bf16.msra.mxu0 %v4704
    %4801 = vmatprep.subr.bf16.mxu0 %v4709
    %4802 = vmatpush1.bf16.msra.mxu0 %v4708
    %4803 = vmatprep.subr.bf16.mxu0 %v4713
    %4804 = vmatpush1.bf16.msra.mxu0 %v4712
    %4805 = vmatprep.subr.bf16.mxu0 %v4717
    %4806 = vmatpush1.bf16.msra.mxu0 %v4716
    %4807 = vmatprep.subr.bf16.mxu0 0
    %4808 = vmatpush1.bf16.msra.mxu0 0
    %4809 = vmatprep.subr.bf16.mxu0 0
    %4810 = vmatpush1.bf16.msra.mxu0 0
    %4811 = vmatprep.subr.bf16.mxu0 0
    %4812 = vmatpush1.bf16.msra.mxu0 0
    %4813 = vmatprep.subr.bf16.mxu0 0
    %4814 = vmatpush1.bf16.msra.mxu0 0
    %4815 = vmatprep.subr.bf16.mxu0 0
    %4816 = vmatpush1.bf16.msra.mxu0 0
    %4817 = vmatprep.subr.bf16.mxu0 0
    %4818 = vmatpush1.bf16.msra.mxu0 0
    %4819 = vmatprep.subr.bf16.mxu0 0
    %4820 = vmatpush1.bf16.msra.mxu0 0
    %4821 = vmatprep.subr.bf16.mxu0 0
    %4822 = vmatpush1.bf16.msra.mxu0 0
    %4823 = vmatprep.mubr.bf16.mxu0 0
    %4824 = vmatmul.mubr.bf16.gmra.mrb[0].mxu0 %v4557
    %v4825 = vpop.f32.mrb[0].mxu0
    %v4826 = vadd.f32 0.0, %v4825
    %v4827 = vpop.f32.mrb[0].mxu0
    %v4828 = vadd.f32 0.0, %v4827
    %v4829 = vpop.f32.mrb[0].mxu0
    %v4830 = vpop.f32.mrb[0].mxu0
    %4831 = vdwg.mxu0
    %v4832 = vadd.f32 %v4553, %v4785
    %v4833 = vadd.f32 %v4554, %v4787
    %v4834 = vadd.f32 %v4555, %v4826
    %v4835 = vadd.f32 %v4556, %v4828
    %s4836 = scalar_lea.vmem [#allocation3], 32
    %v4837 = vld [vmem:[%s4836] sm:$0xff]
    %v4838 = vld [vmem:[%s4836 + $0x8] sm:$0xff]
    %v4839 = vld [vmem:[%s4836 + $0x10] sm:$0xff]
    %v4840 = vld [vmem:[%s4836 + $0x18] sm:$0xff]
    %v4841 = vpack.c.bf16 %v4549, %v4549
    %v4842 = vld [vmem:[#allocation13] sm:$0xff]
    %v4843 = vld [vmem:[#allocation13 + $0x8] sm:$0xff]
    %v4844 = vld [vmem:[#allocation13 + $0x10] sm:$0xff]
    %v4845 = vld [vmem:[#allocation13 + $0x18] sm:$0xff]
    %v4846 = vld [vmem:[#allocation13 + $0x20] sm:$0xff]
    %v4847 = vld [vmem:[#allocation13 + $0x28] sm:$0xff]
    %v4848 = vld [vmem:[#allocation13 + $0x30] sm:$0xff]
    %v4849 = vld [vmem:[#allocation13 + $0x38] sm:$0xff]
    %v4850 = vld [vmem:[#allocation13 + $0x40] sm:$0xff]
    %v4851 = vld [vmem:[#allocation13 + $0x48] sm:$0xff]
    %v4852 = vld [vmem:[#allocation13 + $0x50] sm:$0xff]
    %v4853 = vld [vmem:[#allocation13 + $0x58] sm:$0xff]
    %v4854 = vld [vmem:[#allocation13 + $0x60] sm:$0xff]
    %v4855 = vld [vmem:[#allocation13 + $0x68] sm:$0xff]
    %v4856 = vld [vmem:[#allocation13 + $0x70] sm:$0xff]
    %v4857 = vld [vmem:[#allocation13 + $0x78] sm:$0xff]
    %v4858 = vld [vmem:[#allocation13 + $0x80] sm:$0xff]
    %v4859 = vld [vmem:[#allocation13 + $0x88] sm:$0xff]
    %v4860 = vld [vmem:[#allocation13 + $0x90] sm:$0xff]
    %v4861 = vld [vmem:[#allocation13 + $0x98] sm:$0xff]
    %v4862 = vld [vmem:[#allocation13 + $0xa0] sm:$0xff]
    %v4863 = vld [vmem:[#allocation13 + $0xa8] sm:$0xff]
    %v4864 = vld [vmem:[#allocation13 + $0xb0] sm:$0xff]
    %v4865 = vld [vmem:[#allocation13 + $0xb8] sm:$0xff]
    %v4866 = vld [vmem:[#allocation13 + $0xc0] sm:$0xff]
    %v4867 = vld [vmem:[#allocation13 + $0xc8] sm:$0xff]
    %v4868 = vld [vmem:[#allocation13 + $0xd0] sm:$0xff]
    %v4869 = vld [vmem:[#allocation13 + $0xd8] sm:$0xff]
    %v4870 = vld [vmem:[#allocation13 + $0xe0] sm:$0xff]
    %v4871 = vld [vmem:[#allocation13 + $0xe8] sm:$0xff]
    %v4872 = vld [vmem:[#allocation13 + $0xf0] sm:$0xff]
    %v4873 = vld [vmem:[#allocation13 + $0xf8] sm:$0xff]
    %v4906 = vunpack.c.l.b16 %v4842
    %v4907 = vunpack.c.h.b16 %v4842
    %v4908 = vunpack.c.l.b16 %v4843
    %v4909 = vunpack.c.h.b16 %v4843
    %v4910 = vunpack.c.l.b16 %v4844
    %v4911 = vunpack.c.h.b16 %v4844
    %v4912 = vunpack.c.l.b16 %v4845
    %v4913 = vunpack.c.h.b16 %v4845
    %v4914 = vunpack.c.l.b16 %v4846
    %v4915 = vunpack.c.h.b16 %v4846
    %v4916 = vunpack.c.l.b16 %v4847
    %v4917 = vunpack.c.h.b16 %v4847
    %v4918 = vunpack.c.l.b16 %v4848
    %v4919 = vunpack.c.h.b16 %v4848
    %v4920 = vunpack.c.l.b16 %v4849
    %v4921 = vunpack.c.h.b16 %v4849
    %v4922 = vunpack.c.l.b16 %v4850
    %v4923 = vunpack.c.h.b16 %v4850
    %v4924 = vunpack.c.l.b16 %v4851
    %v4925 = vunpack.c.h.b16 %v4851
    %v4926 = vunpack.c.l.b16 %v4852
    %v4927 = vunpack.c.h.b16 %v4852
    %v4928 = vunpack.c.l.b16 %v4853
    %v4929 = vunpack.c.h.b16 %v4853
    %v4930 = vunpack.c.l.b16 %v4854
    %v4931 = vunpack.c.h.b16 %v4854
    %v4932 = vunpack.c.l.b16 %v4855
    %v4933 = vunpack.c.h.b16 %v4855
    %v4934 = vunpack.c.l.b16 %v4856
    %v4935 = vunpack.c.h.b16 %v4856
    %v4936 = vunpack.c.l.b16 %v4857
    %v4937 = vunpack.c.h.b16 %v4857
    %v4938 = vunpack.c.l.b16 %v4858
    %v4939 = vunpack.c.h.b16 %v4858
    %v4940 = vunpack.c.l.b16 %v4859
    %v4941 = vunpack.c.h.b16 %v4859
    %v4942 = vunpack.c.l.b16 %v4860
    %v4943 = vunpack.c.h.b16 %v4860
    %v4944 = vunpack.c.l.b16 %v4861
    %v4945 = vunpack.c.h.b16 %v4861
    %v4946 = vunpack.c.l.b16 %v4862
    %v4947 = vunpack.c.h.b16 %v4862
    %v4948 = vunpack.c.l.b16 %v4863
    %v4949 = vunpack.c.h.b16 %v4863
    %v4950 = vunpack.c.l.b16 %v4864
    %v4951 = vunpack.c.h.b16 %v4864
    %v4952 = vunpack.c.l.b16 %v4865
    %v4953 = vunpack.c.h.b16 %v4865
    %v4954 = vunpack.c.l.b16 %v4866
    %v4955 = vunpack.c.h.b16 %v4866
    %v4956 = vunpack.c.l.b16 %v4867
    %v4957 = vunpack.c.h.b16 %v4867
    %v4958 = vunpack.c.l.b16 %v4868
    %v4959 = vunpack.c.h.b16 %v4868
    %v4960 = vunpack.c.l.b16 %v4869
    %v4961 = vunpack.c.h.b16 %v4869
    %v4962 = vunpack.c.l.b16 %v4870
    %v4963 = vunpack.c.h.b16 %v4870
    %v4964 = vunpack.c.l.b16 %v4871
    %v4965 = vunpack.c.h.b16 %v4871
    %v4966 = vunpack.c.l.b16 %v4872
    %v4967 = vunpack.c.h.b16 %v4872
    %v4968 = vunpack.c.l.b16 %v4873
    %v4969 = vunpack.c.h.b16 %v4873
    %v4970 = vpack.c.b16 %v4910, %v4906
    %v4971 = vpack.c.b16 %v4911, %v4907
    %v4972 = vpack.c.b16 %v4912, %v4908
    %v4973 = vpack.c.b16 %v4913, %v4909
    %v4974 = vpack.c.b16 %v4918, %v4914
    %v4975 = vpack.c.b16 %v4919, %v4915
    %v4976 = vpack.c.b16 %v4920, %v4916
    %v4977 = vpack.c.b16 %v4921, %v4917
    %v4978 = vpack.c.b16 %v4926, %v4922
    %v4979 = vpack.c.b16 %v4927, %v4923
    %v4980 = vpack.c.b16 %v4928, %v4924
    %v4981 = vpack.c.b16 %v4929, %v4925
    %v4982 = vpack.c.b16 %v4934, %v4930
    %v4983 = vpack.c.b16 %v4935, %v4931
    %v4984 = vpack.c.b16 %v4936, %v4932
    %v4985 = vpack.c.b16 %v4937, %v4933
    %v4986 = vpack.c.b16 %v4942, %v4938
    %v4987 = vpack.c.b16 %v4943, %v4939
    %v4988 = vpack.c.b16 %v4944, %v4940
    %v4989 = vpack.c.b16 %v4945, %v4941
    %v4990 = vpack.c.b16 %v4950, %v4946
    %v4991 = vpack.c.b16 %v4951, %v4947
    %v4992 = vpack.c.b16 %v4952, %v4948
    %v4993 = vpack.c.b16 %v4953, %v4949
    %v4994 = vpack.c.b16 %v4958, %v4954
    %v4995 = vpack.c.b16 %v4959, %v4955
    %v4996 = vpack.c.b16 %v4960, %v4956
    %v4997 = vpack.c.b16 %v4961, %v4957
    %v4998 = vpack.c.b16 %v4966, %v4962
    %v4999 = vpack.c.b16 %v4967, %v4963
    %v5000 = vpack.c.b16 %v4968, %v4964
    %v5001 = vpack.c.b16 %v4969, %v4965
    %5034 = vmatprep.subr.bf16.mxu0 %v4971
    %5035 = vmatpush1.bf16.msra.mxu0 %v4970
    %5036 = vmatprep.subr.bf16.mxu0 %v4975
    %5037 = vmatpush1.bf16.msra.mxu0 %v4974
    %5038 = vmatprep.subr.bf16.mxu0 %v4979
    %5039 = vmatpush1.bf16.msra.mxu0 %v4978
    %5040 = vmatprep.subr.bf16.mxu0 %v4983
    %5041 = vmatpush1.bf16.msra.mxu0 %v4982
    %5042 = vmatprep.subr.bf16.mxu0 %v4987
    %5043 = vmatpush1.bf16.msra.mxu0 %v4986
    %5044 = vmatprep.subr.bf16.mxu0 %v4991
    %5045 = vmatpush1.bf16.msra.mxu0 %v4990
    %5046 = vmatprep.subr.bf16.mxu0 %v4995
    %5047 = vmatpush1.bf16.msra.mxu0 %v4994
    %5048 = vmatprep.subr.bf16.mxu0 %v4999
    %5049 = vmatpush1.bf16.msra.mxu0 %v4998
    %5050 = vmatprep.subr.bf16.mxu0 0
    %5051 = vmatpush1.bf16.msra.mxu0 0
    %5052 = vmatprep.subr.bf16.mxu0 0
    %5053 = vmatpush1.bf16.msra.mxu0 0
    %5054 = vmatprep.subr.bf16.mxu0 0
    %5055 = vmatpush1.bf16.msra.mxu0 0
    %5056 = vmatprep.subr.bf16.mxu0 0
    %5057 = vmatpush1.bf16.msra.mxu0 0
    %5058 = vmatprep.subr.bf16.mxu0 0
    %5059 = vmatpush1.bf16.msra.mxu0 0
    %5060 = vmatprep.subr.bf16.mxu0 0
    %5061 = vmatpush1.bf16.msra.mxu0 0
    %5062 = vmatprep.subr.bf16.mxu0 0
    %5063 = vmatpush1.bf16.msra.mxu0 0
    %5064 = vmatprep.subr.bf16.mxu0 0
    %5065 = vmatpush1.bf16.msra.mxu0 0
    %5066 = vmatprep.mubr.bf16.mxu0 0
    %5067 = vmatmul.mubr.bf16.gmra.mrb[0].mxu0 %v4841
    %v5068 = vpop.f32.mrb[0].mxu0
    %v5069 = vadd.f32 0.0, %v5068
    %v5070 = vpop.f32.mrb[0].mxu0
    %v5071 = vadd.f32 0.0, %v5070
    %v5072 = vpop.f32.mrb[0].mxu0
    %v5073 = vpop.f32.mrb[0].mxu0
    %5074 = vdwg.mxu0
    %5075 = vmatprep.subr.bf16.mxu0 %v4973
    %5076 = vmatpush1.bf16.msra.mxu0 %v4972
    %5077 = vmatprep.subr.bf16.mxu0 %v4977
    %5078 = vmatpush1.bf16.msra.mxu0 %v4976
    %5079 = vmatprep.subr.bf16.mxu0 %v4981
    %5080 = vmatpush1.bf16.msra.mxu0 %v4980
    %5081 = vmatprep.subr.bf16.mxu0 %v4985
    %5082 = vmatpush1.bf16.msra.mxu0 %v4984
    %5083 = vmatprep.subr.bf16.mxu0 %v4989
    %5084 = vmatpush1.bf16.msra.mxu0 %v4988
    %5085 = vmatprep.subr.bf16.mxu0 %v4993
    %5086 = vmatpush1.bf16.msra.mxu0 %v4992
    %5087 = vmatprep.subr.bf16.mxu0 %v4997
    %5088 = vmatpush1.bf16.msra.mxu0 %v4996
    %5089 = vmatprep.subr.bf16.mxu0 %v5001
    %5090 = vmatpush1.bf16.msra.mxu0 %v5000
    %5091 = vmatprep.subr.bf16.mxu0 0
    %5092 = vmatpush1.bf16.msra.mxu0 0
    %5093 = vmatprep.subr.bf16.mxu0 0
    %5094 = vmatpush1.bf16.msra.mxu0 0
    %5095 = vmatprep.subr.bf16.mxu0 0
    %5096 = vmatpush1.bf16.msra.mxu0 0
    %5097 = vmatprep.subr.bf16.mxu0 0
    %5098 = vmatpush1.bf16.msra.mxu0 0
    %5099 = vmatprep.subr.bf16.mxu0 0
    %5100 = vmatpush1.bf16.msra.mxu0 0
    %5101 = vmatprep.subr.bf16.mxu0 0
    %5102 = vmatpush1.bf16.msra.mxu0 0
    %5103 = vmatprep.subr.bf16.mxu0 0
    %5104 = vmatpush1.bf16.msra.mxu0 0
    %5105 = vmatprep.subr.bf16.mxu0 0
    %5106 = vmatpush1.bf16.msra.mxu0 0
    %5107 = vmatprep.mubr.bf16.mxu0 0
    %5108 = vmatmul.mubr.bf16.gmra.mrb[0].mxu0 %v4841
    %v5109 = vpop.f32.mrb[0].mxu0
    %v5110 = vadd.f32 0.0, %v5109
    %v5111 = vpop.f32.mrb[0].mxu0
    %v5112 = vadd.f32 0.0, %v5111
    %v5113 = vpop.f32.mrb[0].mxu0
    %v5114 = vpop.f32.mrb[0].mxu0
    %5115 = vdwg.mxu0
    %v5116 = vadd.f32 %v4837, %v5069
    %v5117 = vadd.f32 %v4838, %v5071
    %v5118 = vadd.f32 %v4839, %v5110
    %v5119 = vadd.f32 %v4840, %v5112
    %v5120 = vmul.f32 %v4832, 0.5
    %v5121 = vtanh.pop %v5120
    %v5122 = vmul.f32 %v5121, 0.5
    %v5123 = vadd.f32 %v5122, 0.5
    %v5124 = vmul.f32 %v4833, 0.5
    %v5125 = vtanh.pop %v5124
    %v5126 = vmul.f32 %v5125, 0.5
    %v5127 = vadd.f32 %v5126, 0.5
    %v5128 = vtanh.pop %v4834
    %v5129 = vmul.f32 %v4835, 0.5
    %v5130 = vtanh.pop %v5129
    %v5131 = vmul.f32 %v5130, 0.5
    %v5132 = vadd.f32 %v5131, 0.5
    %v5133 = vmul.f32 %v5127, %v4529
    %v5134 = vmul.f32 %v5123, %v5128
    %v5135 = vadd.f32 %v5133, %v5134
    %v5136 = vtanh.pop %v5135
    %v5137 = vmul.f32 %v5132, %v5136
    %v5138 = vmul.f32 %v5116, 0.5
    %v5139 = vtanh.pop %v5138
    %v5140 = vmul.f32 %v5139, 0.5
    %v5141 = vadd.f32 %v5140, 0.5
    %v5142 = vmul.f32 %v5117, 0.5
    %v5143 = vtanh.pop %v5142
    %v5144 = vmul.f32 %v5143, 0.5
    %v5145 = vadd.f32 %v5144, 0.5
    %v5146 = vtanh.pop %v5118
    %v5147 = vmul.f32 %v5119, 0.5
    %v5148 = vtanh.pop %v5147
    %v5149 = vmul.f32 %v5148, 0.5
    %v5150 = vadd.f32 %v5149, 0.5
    %v5151 = vmul.f32 %v5145, %v4547
    %v5152 = vmul.f32 %v5141, %v5146
    %v5153 = vadd.f32 %v5151, %v5152
    %v5154 = vtanh.pop %v5153
    %v5155 = vmul.f32 %v5150, %v5154
    %5156 = vst [vmem:[%s2122] sm:$0xff] %v5137
    %5157 = vst [vmem:[%s2120 + $0x8] sm:$0xff] %v5155
    %s5158 = scalar_lea.vmem [#allocation2], 224
    %v5159 = vld [vmem:[%s5158] sm:$0xff]
    %v5160 = vld [vmem:[%s5158 + $0x8] sm:$0xff]
    %v5161 = vld [vmem:[%s5158 + $0x10] sm:$0xff]
    %v5162 = vld [vmem:[%s5158 + $0x18] sm:$0xff]
    %v5163 = vpack.c.bf16 %v5137, %v5137
    %v5164 = vld [vmem:[#allocation10] sm:$0xff]
    %v5165 = vld [vmem:[#allocation10 + $0x8] sm:$0xff]
    %v5166 = vld [vmem:[#allocation10 + $0x10] sm:$0xff]
    %v5167 = vld [vmem:[#allocation10 + $0x18] sm:$0xff]
    %v5168 = vld [vmem:[#allocation10 + $0x20] sm:$0xff]
    %v5169 = vld [vmem:[#allocation10 + $0x28] sm:$0xff]
    %v5170 = vld [vmem:[#allocation10 + $0x30] sm:$0xff]
    %v5171 = vld [vmem:[#allocation10 + $0x38] sm:$0xff]
    %v5172 = vld [vmem:[#allocation10 + $0x40] sm:$0xff]
    %v5173 = vld [vmem:[#allocation10 + $0x48] sm:$0xff]
    %v5174 = vld [vmem:[#allocation10 + $0x50] sm:$0xff]
    %v5175 = vld [vmem:[#allocation10 + $0x58] sm:$0xff]
    %v5176 = vld [vmem:[#allocation10 + $0x60] sm:$0xff]
    %v5177 = vld [vmem:[#allocation10 + $0x68] sm:$0xff]
    %v5178 = vld [vmem:[#allocation10 + $0x70] sm:$0xff]
    %v5179 = vld [vmem:[#allocation10 + $0x78] sm:$0xff]
    %v5180 = vld [vmem:[#allocation10 + $0x80] sm:$0xff]
    %v5181 = vld [vmem:[#allocation10 + $0x88] sm:$0xff]
    %v5182 = vld [vmem:[#allocation10 + $0x90] sm:$0xff]
    %v5183 = vld [vmem:[#allocation10 + $0x98] sm:$0xff]
    %v5184 = vld [vmem:[#allocation10 + $0xa0] sm:$0xff]
    %v5185 = vld [vmem:[#allocation10 + $0xa8] sm:$0xff]
    %v5186 = vld [vmem:[#allocation10 + $0xb0] sm:$0xff]
    %v5187 = vld [vmem:[#allocation10 + $0xb8] sm:$0xff]
    %v5188 = vld [vmem:[#allocation10 + $0xc0] sm:$0xff]
    %v5189 = vld [vmem:[#allocation10 + $0xc8] sm:$0xff]
    %v5190 = vld [vmem:[#allocation10 + $0xd0] sm:$0xff]
    %v5191 = vld [vmem:[#allocation10 + $0xd8] sm:$0xff]
    %v5192 = vld [vmem:[#allocation10 + $0xe0] sm:$0xff]
    %v5193 = vld [vmem:[#allocation10 + $0xe8] sm:$0xff]
    %v5194 = vld [vmem:[#allocation10 + $0xf0] sm:$0xff]
    %v5195 = vld [vmem:[#allocation10 + $0xf8] sm:$0xff]
    %v5228 = vunpack.c.l.b16 %v5164
    %v5229 = vunpack.c.h.b16 %v5164
    %v5230 = vunpack.c.l.b16 %v5165
    %v5231 = vunpack.c.h.b16 %v5165
    %v5232 = vunpack.c.l.b16 %v5166
    %v5233 = vunpack.c.h.b16 %v5166
    %v5234 = vunpack.c.l.b16 %v5167
    %v5235 = vunpack.c.h.b16 %v5167
    %v5236 = vunpack.c.l.b16 %v5168
    %v5237 = vunpack.c.h.b16 %v5168
    %v5238 = vunpack.c.l.b16 %v5169
    %v5239 = vunpack.c.h.b16 %v5169
    %v5240 = vunpack.c.l.b16 %v5170
    %v5241 = vunpack.c.h.b16 %v5170
    %v5242 = vunpack.c.l.b16 %v5171
    %v5243 = vunpack.c.h.b16 %v5171
    %v5244 = vunpack.c.l.b16 %v5172
    %v5245 = vunpack.c.h.b16 %v5172
    %v5246 = vunpack.c.l.b16 %v5173
    %v5247 = vunpack.c.h.b16 %v5173
    %v5248 = vunpack.c.l.b16 %v5174
    %v5249 = vunpack.c.h.b16 %v5174
    %v5250 = vunpack.c.l.b16 %v5175
    %v5251 = vunpack.c.h.b16 %v5175
    %v5252 = vunpack.c.l.b16 %v5176
    %v5253 = vunpack.c.h.b16 %v5176
    %v5254 = vunpack.c.l.b16 %v5177
    %v5255 = vunpack.c.h.b16 %v5177
    %v5256 = vunpack.c.l.b16 %v5178
    %v5257 = vunpack.c.h.b16 %v5178
    %v5258 = vunpack.c.l.b16 %v5179
    %v5259 = vunpack.c.h.b16 %v5179
    %v5260 = vunpack.c.l.b16 %v5180
    %v5261 = vunpack.c.h.b16 %v5180
    %v5262 = vunpack.c.l.b16 %v5181
    %v5263 = vunpack.c.h.b16 %v5181
    %v5264 = vunpack.c.l.b16 %v5182
    %v5265 = vunpack.c.h.b16 %v5182
    %v5266 = vunpack.c.l.b16 %v5183
    %v5267 = vunpack.c.h.b16 %v5183
    %v5268 = vunpack.c.l.b16 %v5184
    %v5269 = vunpack.c.h.b16 %v5184
    %v5270 = vunpack.c.l.b16 %v5185
    %v5271 = vunpack.c.h.b16 %v5185
    %v5272 = vunpack.c.l.b16 %v5186
    %v5273 = vunpack.c.h.b16 %v5186
    %v5274 = vunpack.c.l.b16 %v5187
    %v5275 = vunpack.c.h.b16 %v5187
    %v5276 = vunpack.c.l.b16 %v5188
    %v5277 = vunpack.c.h.b16 %v5188
    %v5278 = vunpack.c.l.b16 %v5189
    %v5279 = vunpack.c.h.b16 %v5189
    %v5280 = vunpack.c.l.b16 %v5190
    %v5281 = vunpack.c.h.b16 %v5190
    %v5282 = vunpack.c.l.b16 %v5191
    %v5283 = vunpack.c.h.b16 %v5191
    %v5284 = vunpack.c.l.b16 %v5192
    %v5285 = vunpack.c.h.b16 %v5192
    %v5286 = vunpack.c.l.b16 %v5193
    %v5287 = vunpack.c.h.b16 %v5193
    %v5288 = vunpack.c.l.b16 %v5194
    %v5289 = vunpack.c.h.b16 %v5194
    %v5290 = vunpack.c.l.b16 %v5195
    %v5291 = vunpack.c.h.b16 %v5195
    %v5292 = vpack.c.b16 %v5232, %v5228
    %v5293 = vpack.c.b16 %v5233, %v5229
    %v5294 = vpack.c.b16 %v5234, %v5230
    %v5295 = vpack.c.b16 %v5235, %v5231
    %v5296 = vpack.c.b16 %v5240, %v5236
    %v5297 = vpack.c.b16 %v5241, %v5237
    %v5298 = vpack.c.b16 %v5242, %v5238
    %v5299 = vpack.c.b16 %v5243, %v5239
    %v5300 = vpack.c.b16 %v5248, %v5244
    %v5301 = vpack.c.b16 %v5249, %v5245
    %v5302 = vpack.c.b16 %v5250, %v5246
    %v5303 = vpack.c.b16 %v5251, %v5247
    %v5304 = vpack.c.b16 %v5256, %v5252
    %v5305 = vpack.c.b16 %v5257, %v5253
    %v5306 = vpack.c.b16 %v5258, %v5254
    %v5307 = vpack.c.b16 %v5259, %v5255
    %v5308 = vpack.c.b16 %v5264, %v5260
    %v5309 = vpack.c.b16 %v5265, %v5261
    %v5310 = vpack.c.b16 %v5266, %v5262
    %v5311 = vpack.c.b16 %v5267, %v5263
    %v5312 = vpack.c.b16 %v5272, %v5268
    %v5313 = vpack.c.b16 %v5273, %v5269
    %v5314 = vpack.c.b16 %v5274, %v5270
    %v5315 = vpack.c.b16 %v5275, %v5271
    %v5316 = vpack.c.b16 %v5280, %v5276
    %v5317 = vpack.c.b16 %v5281, %v5277
    %v5318 = vpack.c.b16 %v5282, %v5278
    %v5319 = vpack.c.b16 %v5283, %v5279
    %v5320 = vpack.c.b16 %v5288, %v5284
    %v5321 = vpack.c.b16 %v5289, %v5285
    %v5322 = vpack.c.b16 %v5290, %v5286
    %v5323 = vpack.c.b16 %v5291, %v5287
    %5356 = vmatprep.subr.bf16.mxu0 %v5293
    %5357 = vmatpush1.bf16.msra.mxu0 %v5292
    %5358 = vmatprep.subr.bf16.mxu0 %v5297
    %5359 = vmatpush1.bf16.msra.mxu0 %v5296
    %5360 = vmatprep.subr.bf16.mxu0 %v5301
    %5361 = vmatpush1.bf16.msra.mxu0 %v5300
    %5362 = vmatprep.subr.bf16.mxu0 %v5305
    %5363 = vmatpush1.bf16.msra.mxu0 %v5304
    %5364 = vmatprep.subr.bf16.mxu0 %v5309
    %5365 = vmatpush1.bf16.msra.mxu0 %v5308
    %5366 = vmatprep.subr.bf16.mxu0 %v5313
    %5367 = vmatpush1.bf16.msra.mxu0 %v5312
    %5368 = vmatprep.subr.bf16.mxu0 %v5317
    %5369 = vmatpush1.bf16.msra.mxu0 %v5316
    %5370 = vmatprep.subr.bf16.mxu0 %v5321
    %5371 = vmatpush1.bf16.msra.mxu0 %v5320
    %5372 = vmatprep.subr.bf16.mxu0 0
    %5373 = vmatpush1.bf16.msra.mxu0 0
    %5374 = vmatprep.subr.bf16.mxu0 0
    %5375 = vmatpush1.bf16.msra.mxu0 0
    %5376 = vmatprep.subr.bf16.mxu0 0
    %5377 = vmatpush1.bf16.msra.mxu0 0
    %5378 = vmatprep.subr.bf16.mxu0 0
    %5379 = vmatpush1.bf16.msra.mxu0 0
    %5380 = vmatprep.subr.bf16.mxu0 0
    %5381 = vmatpush1.bf16.msra.mxu0 0
    %5382 = vmatprep.subr.bf16.mxu0 0
    %5383 = vmatpush1.bf16.msra.mxu0 0
    %5384 = vmatprep.subr.bf16.mxu0 0
    %5385 = vmatpush1.bf16.msra.mxu0 0
    %5386 = vmatprep.subr.bf16.mxu0 0
    %5387 = vmatpush1.bf16.msra.mxu0 0
    %5388 = vmatprep.mubr.bf16.mxu0 0
    %5389 = vmatmul.mubr.bf16.gmra.mrb[0].mxu0 %v5163
    %v5390 = vpop.f32.mrb[0].mxu0
    %v5391 = vadd.f32 0.0, %v5390
    %v5392 = vpop.f32.mrb[0].mxu0
    %v5393 = vadd.f32 0.0, %v5392
    %v5394 = vpop.f32.mrb[0].mxu0
    %v5395 = vpop.f32.mrb[0].mxu0
    %5396 = vdwg.mxu0
    %5397 = vmatprep.subr.bf16.mxu0 %v5295
    %5398 = vmatpush1.bf16.msra.mxu0 %v5294
    %5399 = vmatprep.subr.bf16.mxu0 %v5299
    %5400 = vmatpush1.bf16.msra.mxu0 %v5298
    %5401 = vmatprep.subr.bf16.mxu0 %v5303
    %5402 = vmatpush1.bf16.msra.mxu0 %v5302
    %5403 = vmatprep.subr.bf16.mxu0 %v5307
    %5404 = vmatpush1.bf16.msra.mxu0 %v5306
    %5405 = vmatprep.subr.bf16.mxu0 %v5311
    %5406 = vmatpush1.bf16.msra.mxu0 %v5310
    %5407 = vmatprep.subr.bf16.mxu0 %v5315
    %5408 = vmatpush1.bf16.msra.mxu0 %v5314
    %5409 = vmatprep.subr.bf16.mxu0 %v5319
    %5410 = vmatpush1.bf16.msra.mxu0 %v5318
    %5411 = vmatprep.subr.bf16.mxu0 %v5323
    %5412 = vmatpush1.bf16.msra.mxu0 %v5322
    %5413 = vmatprep.subr.bf16.mxu0 0
    %5414 = vmatpush1.bf16.msra.mxu0 0
    %5415 = vmatprep.subr.bf16.mxu0 0
    %5416 = vmatpush1.bf16.msra.mxu0 0
    %5417 = vmatprep.subr.bf16.mxu0 0
    %5418 = vmatpush1.bf16.msra.mxu0 0
    %5419 = vmatprep.subr.bf16.mxu0 0
    %5420 = vmatpush1.bf16.msra.mxu0 0
    %5421 = vmatprep.subr.bf16.mxu0 0
    %5422 = vmatpush1.bf16.msra.mxu0 0
    %5423 = vmatprep.subr.bf16.mxu0 0
    %5424 = vmatpush1.bf16.msra.mxu0 0
    %5425 = vmatprep.subr.bf16.mxu0 0
    %5426 = vmatpush1.bf16.msra.mxu0 0
    %5427 = vmatprep.subr.bf16.mxu0 0
    %5428 = vmatpush1.bf16.msra.mxu0 0
    %5429 = vmatprep.mubr.bf16.mxu0 0
    %5430 = vmatmul.mubr.bf16.gmra.mrb[0].mxu0 %v5163
    %v5431 = vpop.f32.mrb[0].mxu0
    %v5432 = vadd.f32 0.0, %v5431
    %v5433 = vpop.f32.mrb[0].mxu0
    %v5434 = vadd.f32 0.0, %v5433
    %v5435 = vpop.f32.mrb[0].mxu0
    %v5436 = vpop.f32.mrb[0].mxu0
    %5437 = vdwg.mxu0
    %v5438 = vadd.f32 %v5159, %v5391
    %v5439 = vadd.f32 %v5160, %v5393
    %v5440 = vadd.f32 %v5161, %v5432
    %v5441 = vadd.f32 %v5162, %v5434
    %v5442 = vld [vmem:[#allocation3] sm:$0xff]
    %v5443 = vld [vmem:[#allocation3 + $0x8] sm:$0xff]
    %v5444 = vld [vmem:[#allocation3 + $0x10] sm:$0xff]
    %v5445 = vld [vmem:[#allocation3 + $0x18] sm:$0xff]
    %v5446 = vpack.c.bf16 %v5155, %v5155
    %v5447 = vld [vmem:[#allocation13] sm:$0xff]
    %v5448 = vld [vmem:[#allocation13 + $0x8] sm:$0xff]
    %v5449 = vld [vmem:[#allocation13 + $0x10] sm:$0xff]
    %v5450 = vld [vmem:[#allocation13 + $0x18] sm:$0xff]
    %v5451 = vld [vmem:[#allocation13 + $0x20] sm:$0xff]
    %v5452 = vld [vmem:[#allocation13 + $0x28] sm:$0xff]
    %v5453 = vld [vmem:[#allocation13 + $0x30] sm:$0xff]
    %v5454 = vld [vmem:[#allocation13 + $0x38] sm:$0xff]
    %v5455 = vld [vmem:[#allocation13 + $0x40] sm:$0xff]
    %v5456 = vld [vmem:[#allocation13 + $0x48] sm:$0xff]
    %v5457 = vld [vmem:[#allocation13 + $0x50] sm:$0xff]
    %v5458 = vld [vmem:[#allocation13 + $0x58] sm:$0xff]
    %v5459 = vld [vmem:[#allocation13 + $0x60] sm:$0xff]
    %v5460 = vld [vmem:[#allocation13 + $0x68] sm:$0xff]
    %v5461 = vld [vmem:[#allocation13 + $0x70] sm:$0xff]
    %v5462 = vld [vmem:[#allocation13 + $0x78] sm:$0xff]
    %v5463 = vld [vmem:[#allocation13 + $0x80] sm:$0xff]
    %v5464 = vld [vmem:[#allocation13 + $0x88] sm:$0xff]
    %v5465 = vld [vmem:[#allocation13 + $0x90] sm:$0xff]
    %v5466 = vld [vmem:[#allocation13 + $0x98] sm:$0xff]
    %v5467 = vld [vmem:[#allocation13 + $0xa0] sm:$0xff]
    %v5468 = vld [vmem:[#allocation13 + $0xa8] sm:$0xff]
    %v5469 = vld [vmem:[#allocation13 + $0xb0] sm:$0xff]
    %v5470 = vld [vmem:[#allocation13 + $0xb8] sm:$0xff]
    %v5471 = vld [vmem:[#allocation13 + $0xc0] sm:$0xff]
    %v5472 = vld [vmem:[#allocation13 + $0xc8] sm:$0xff]
    %v5473 = vld [vmem:[#allocation13 + $0xd0] sm:$0xff]
    %v5474 = vld [vmem:[#allocation13 + $0xd8] sm:$0xff]
    %v5475 = vld [vmem:[#allocation13 + $0xe0] sm:$0xff]
    %v5476 = vld [vmem:[#allocation13 + $0xe8] sm:$0xff]
    %v5477 = vld [vmem:[#allocation13 + $0xf0] sm:$0xff]
    %v5478 = vld [vmem:[#allocation13 + $0xf8] sm:$0xff]
    %v5511 = vunpack.c.l.b16 %v5447
    %v5512 = vunpack.c.h.b16 %v5447
    %v5513 = vunpack.c.l.b16 %v5448
    %v5514 = vunpack.c.h.b16 %v5448
    %v5515 = vunpack.c.l.b16 %v5449
    %v5516 = vunpack.c.h.b16 %v5449
    %v5517 = vunpack.c.l.b16 %v5450
    %v5518 = vunpack.c.h.b16 %v5450
    %v5519 = vunpack.c.l.b16 %v5451
    %v5520 = vunpack.c.h.b16 %v5451
    %v5521 = vunpack.c.l.b16 %v5452
    %v5522 = vunpack.c.h.b16 %v5452
    %v5523 = vunpack.c.l.b16 %v5453
    %v5524 = vunpack.c.h.b16 %v5453
    %v5525 = vunpack.c.l.b16 %v5454
    %v5526 = vunpack.c.h.b16 %v5454
    %v5527 = vunpack.c.l.b16 %v5455
    %v5528 = vunpack.c.h.b16 %v5455
    %v5529 = vunpack.c.l.b16 %v5456
    %v5530 = vunpack.c.h.b16 %v5456
    %v5531 = vunpack.c.l.b16 %v5457
    %v5532 = vunpack.c.h.b16 %v5457
    %v5533 = vunpack.c.l.b16 %v5458
    %v5534 = vunpack.c.h.b16 %v5458
    %v5535 = vunpack.c.l.b16 %v5459
    %v5536 = vunpack.c.h.b16 %v5459
    %v5537 = vunpack.c.l.b16 %v5460
    %v5538 = vunpack.c.h.b16 %v5460
    %v5539 = vunpack.c.l.b16 %v5461
    %v5540 = vunpack.c.h.b16 %v5461
    %v5541 = vunpack.c.l.b16 %v5462
    %v5542 = vunpack.c.h.b16 %v5462
    %v5543 = vunpack.c.l.b16 %v5463
    %v5544 = vunpack.c.h.b16 %v5463
    %v5545 = vunpack.c.l.b16 %v5464
    %v5546 = vunpack.c.h.b16 %v5464
    %v5547 = vunpack.c.l.b16 %v5465
    %v5548 = vunpack.c.h.b16 %v5465
    %v5549 = vunpack.c.l.b16 %v5466
    %v5550 = vunpack.c.h.b16 %v5466
    %v5551 = vunpack.c.l.b16 %v5467
    %v5552 = vunpack.c.h.b16 %v5467
    %v5553 = vunpack.c.l.b16 %v5468
    %v5554 = vunpack.c.h.b16 %v5468
    %v5555 = vunpack.c.l.b16 %v5469
    %v5556 = vunpack.c.h.b16 %v5469
    %v5557 = vunpack.c.l.b16 %v5470
    %v5558 = vunpack.c.h.b16 %v5470
    %v5559 = vunpack.c.l.b16 %v5471
    %v5560 = vunpack.c.h.b16 %v5471
    %v5561 = vunpack.c.l.b16 %v5472
    %v5562 = vunpack.c.h.b16 %v5472
    %v5563 = vunpack.c.l.b16 %v5473
    %v5564 = vunpack.c.h.b16 %v5473
    %v5565 = vunpack.c.l.b16 %v5474
    %v5566 = vunpack.c.h.b16 %v5474
    %v5567 = vunpack.c.l.b16 %v5475
    %v5568 = vunpack.c.h.b16 %v5475
    %v5569 = vunpack.c.l.b16 %v5476
    %v5570 = vunpack.c.h.b16 %v5476
    %v5571 = vunpack.c.l.b16 %v5477
    %v5572 = vunpack.c.h.b16 %v5477
    %v5573 = vunpack.c.l.b16 %v5478
    %v5574 = vunpack.c.h.b16 %v5478
    %v5575 = vpack.c.b16 %v5515, %v5511
    %v5576 = vpack.c.b16 %v5516, %v5512
    %v5577 = vpack.c.b16 %v5517, %v5513
    %v5578 = vpack.c.b16 %v5518, %v5514
    %v5579 = vpack.c.b16 %v5523, %v5519
    %v5580 = vpack.c.b16 %v5524, %v5520
    %v5581 = vpack.c.b16 %v5525, %v5521
    %v5582 = vpack.c.b16 %v5526, %v5522
    %v5583 = vpack.c.b16 %v5531, %v5527
    %v5584 = vpack.c.b16 %v5532, %v5528
    %v5585 = vpack.c.b16 %v5533, %v5529
    %v5586 = vpack.c.b16 %v5534, %v5530
    %v5587 = vpack.c.b16 %v5539, %v5535
    %v5588 = vpack.c.b16 %v5540, %v5536
    %v5589 = vpack.c.b16 %v5541, %v5537
    %v5590 = vpack.c.b16 %v5542, %v5538
    %v5591 = vpack.c.b16 %v5547, %v5543
    %v5592 = vpack.c.b16 %v5548, %v5544
    %v5593 = vpack.c.b16 %v5549, %v5545
    %v5594 = vpack.c.b16 %v5550, %v5546
    %v5595 = vpack.c.b16 %v5555, %v5551
    %v5596 = vpack.c.b16 %v5556, %v5552
    %v5597 = vpack.c.b16 %v5557, %v5553
    %v5598 = vpack.c.b16 %v5558, %v5554
    %v5599 = vpack.c.b16 %v5563, %v5559
    %v5600 = vpack.c.b16 %v5564, %v5560
    %v5601 = vpack.c.b16 %v5565, %v5561
    %v5602 = vpack.c.b16 %v5566, %v5562
    %v5603 = vpack.c.b16 %v5571, %v5567
    %v5604 = vpack.c.b16 %v5572, %v5568
    %v5605 = vpack.c.b16 %v5573, %v5569
    %v5606 = vpack.c.b16 %v5574, %v5570
    %5639 = vmatprep.subr.bf16.mxu0 %v5576
    %5640 = vmatpush1.bf16.msra.mxu0 %v5575
    %5641 = vmatprep.subr.bf16.mxu0 %v5580
    %5642 = vmatpush1.bf16.msra.mxu0 %v5579
    %5643 = vmatprep.subr.bf16.mxu0 %v5584
    %5644 = vmatpush1.bf16.msra.mxu0 %v5583
    %5645 = vmatprep.subr.bf16.mxu0 %v5588
    %5646 = vmatpush1.bf16.msra.mxu0 %v5587
    %5647 = vmatprep.subr.bf16.mxu0 %v5592
    %5648 = vmatpush1.bf16.msra.mxu0 %v5591
    %5649 = vmatprep.subr.bf16.mxu0 %v5596
    %5650 = vmatpush1.bf16.msra.mxu0 %v5595
    %5651 = vmatprep.subr.bf16.mxu0 %v5600
    %5652 = vmatpush1.bf16.msra.mxu0 %v5599
    %5653 = vmatprep.subr.bf16.mxu0 %v5604
    %5654 = vmatpush1.bf16.msra.mxu0 %v5603
    %5655 = vmatprep.subr.bf16.mxu0 0
    %5656 = vmatpush1.bf16.msra.mxu0 0
    %5657 = vmatprep.subr.bf16.mxu0 0
    %5658 = vmatpush1.bf16.msra.mxu0 0
    %5659 = vmatprep.subr.bf16.mxu0 0
    %5660 = vmatpush1.bf16.msra.mxu0 0
    %5661 = vmatprep.subr.bf16.mxu0 0
    %5662 = vmatpush1.bf16.msra.mxu0 0
    %5663 = vmatprep.subr.bf16.mxu0 0
    %5664 = vmatpush1.bf16.msra.mxu0 0
    %5665 = vmatprep.subr.bf16.mxu0 0
    %5666 = vmatpush1.bf16.msra.mxu0 0
    %5667 = vmatprep.subr.bf16.mxu0 0
    %5668 = vmatpush1.bf16.msra.mxu0 0
    %5669 = vmatprep.subr.bf16.mxu0 0
    %5670 = vmatpush1.bf16.msra.mxu0 0
    %5671 = vmatprep.mubr.bf16.mxu0 0
    %5672 = vmatmul.mubr.bf16.gmra.mrb[0].mxu0 %v5446
    %v5673 = vpop.f32.mrb[0].mxu0
    %v5674 = vadd.f32 0.0, %v5673
    %v5675 = vpop.f32.mrb[0].mxu0
    %v5676 = vadd.f32 0.0, %v5675
    %v5677 = vpop.f32.mrb[0].mxu0
    %v5678 = vpop.f32.mrb[0].mxu0
    %5679 = vdwg.mxu0
    %5680 = vmatprep.subr.bf16.mxu0 %v5578
    %5681 = vmatpush1.bf16.msra.mxu0 %v5577
    %5682 = vmatprep.subr.bf16.mxu0 %v5582
    %5683 = vmatpush1.bf16.msra.mxu0 %v5581
    %5684 = vmatprep.subr.bf16.mxu0 %v5586
    %5685 = vmatpush1.bf16.msra.mxu0 %v5585
    %5686 = vmatprep.subr.bf16.mxu0 %v5590
    %5687 = vmatpush1.bf16.msra.mxu0 %v5589
    %5688 = vmatprep.subr.bf16.mxu0 %v5594
    %5689 = vmatpush1.bf16.msra.mxu0 %v5593
    %5690 = vmatprep.subr.bf16.mxu0 %v5598
    %5691 = vmatpush1.bf16.msra.mxu0 %v5597
    %5692 = vmatprep.subr.bf16.mxu0 %v5602
    %5693 = vmatpush1.bf16.msra.mxu0 %v5601
    %5694 = vmatprep.subr.bf16.mxu0 %v5606
    %5695 = vmatpush1.bf16.msra.mxu0 %v5605
    %5696 = vmatprep.subr.bf16.mxu0 0
    %5697 = vmatpush1.bf16.msra.mxu0 0
    %5698 = vmatprep.subr.bf16.mxu0 0
    %5699 = vmatpush1.bf16.msra.mxu0 0
    %5700 = vmatprep.subr.bf16.mxu0 0
    %5701 = vmatpush1.bf16.msra.mxu0 0
    %5702 = vmatprep.subr.bf16.mxu0 0
    %5703 = vmatpush1.bf16.msra.mxu0 0
    %5704 = vmatprep.subr.bf16.mxu0 0
    %5705 = vmatpush1.bf16.msra.mxu0 0
    %5706 = vmatprep.subr.bf16.mxu0 0
    %5707 = vmatpush1.bf16.msra.mxu0 0
    %5708 = vmatprep.subr.bf16.mxu0 0
    %5709 = vmatpush1.bf16.msra.mxu0 0
    %5710 = vmatprep.subr.bf16.mxu0 0
    %5711 = vmatpush1.bf16.msra.mxu0 0
    %5712 = vmatprep.mubr.bf16.mxu0 0
    %5713 = vmatmul.mubr.bf16.gmra.mrb[0].mxu0 %v5446
    %v5714 = vpop.f32.mrb[0].mxu0
    %v5715 = vadd.f32 0.0, %v5714
    %v5716 = vpop.f32.mrb[0].mxu0
    %v5717 = vadd.f32 0.0, %v5716
    %v5718 = vpop.f32.mrb[0].mxu0
    %v5719 = vpop.f32.mrb[0].mxu0
    %5720 = vdwg.mxu0
    %v5721 = vadd.f32 %v5442, %v5674
    %v5722 = vadd.f32 %v5443, %v5676
    %v5723 = vadd.f32 %v5444, %v5715
    %v5724 = vadd.f32 %v5445, %v5717
    %v5725 = vmul.f32 %v5438, 0.5
    %v5726 = vtanh.pop %v5725
    %v5727 = vmul.f32 %v5726, 0.5
    %v5728 = vadd.f32 %v5727, 0.5
    %v5729 = vmul.f32 %v5439, 0.5
    %v5730 = vtanh.pop %v5729
    %v5731 = vmul.f32 %v5730, 0.5
    %v5732 = vadd.f32 %v5731, 0.5
    %v5733 = vtanh.pop %v5440
    %v5734 = vmul.f32 %v5441, 0.5
    %v5735 = vtanh.pop %v5734
    %v5736 = vmul.f32 %v5735, 0.5
    %v5737 = vadd.f32 %v5736, 0.5
    %v5738 = vmul.f32 %v5732, %v5135
    %v5739 = vmul.f32 %v5728, %v5733
    %v5740 = vadd.f32 %v5738, %v5739
    %v5741 = vtanh.pop %v5740
    %v5742 = vmul.f32 %v5737, %v5741
    %v5743 = vmul.f32 %v5721, 0.5
    %v5744 = vtanh.pop %v5743
    %v5745 = vmul.f32 %v5744, 0.5
    %v5746 = vadd.f32 %v5745, 0.5
    %v5747 = vmul.f32 %v5722, 0.5
    %v5748 = vtanh.pop %v5747
    %v5749 = vmul.f32 %v5748, 0.5
    %v5750 = vadd.f32 %v5749, 0.5
    %v5751 = vtanh.pop %v5723
    %v5752 = vmul.f32 %v5724, 0.5
    %v5753 = vtanh.pop %v5752
    %v5754 = vmul.f32 %v5753, 0.5
    %v5755 = vadd.f32 %v5754, 0.5
    %v5756 = vmul.f32 %v5750, %v5153
    %v5757 = vmul.f32 %v5746, %v5751
    %v5758 = vadd.f32 %v5756, %v5757
    %v5759 = vtanh.pop %v5758
    %v5760 = vmul.f32 %v5755, %v5759
    %5761 = vst [vmem:[%s1514] sm:$0xff] %v5742
    %5762 = vst [vmem:[#allocation4 + $0x8] sm:$0xff] %v5760
    %v5763 = vld [vmem:[#allocation4] sm:$0xff]
    %v5764 = vld [vmem:[#allocation4 + $0x8] sm:$0xff]
    %v5765 = vld [vmem:[#allocation4 + $0x10] sm:$0xff]
    %v5766 = vld [vmem:[#allocation4 + $0x18] sm:$0xff]
    %v5767 = vld [vmem:[#allocation4 + $0x20] sm:$0xff]
    %v5768 = vld [vmem:[#allocation4 + $0x28] sm:$0xff]
    %v5769 = vld [vmem:[#allocation4 + $0x30] sm:$0xff]
    %v5770 = vld [vmem:[#allocation4 + $0x38] sm:$0xff]
    %v5771 = vld [vmem:[#allocation4 + $0x40] sm:$0xff]
    %v5772 = vld [vmem:[#allocation4 + $0x48] sm:$0xff]
    %v5773 = vld [vmem:[#allocation4 + $0x50] sm:$0xff]
    %v5774 = vld [vmem:[#allocation4 + $0x58] sm:$0xff]
    %v5775 = vld [vmem:[#allocation4 + $0x60] sm:$0xff]
    %v5776 = vld [vmem:[#allocation4 + $0x68] sm:$0xff]
    %v5777 = vld [vmem:[#allocation4 + $0x70] sm:$0xff]
    %v5778 = vld [vmem:[#allocation4 + $0x78] sm:$0xff]
    %v5779 = vpack.c.bf16 %v5765, %v5763
    %v5780 = vpack.c.bf16 %v5766, %v5764
    %v5781 = vpack.c.bf16 %v5769, %v5767
    %v5782 = vpack.c.bf16 %v5770, %v5768
    %v5783 = vpack.c.bf16 %v5773, %v5771
    %v5784 = vpack.c.bf16 %v5774, %v5772
    %v5785 = vpack.c.bf16 %v5777, %v5775
    %v5786 = vpack.c.bf16 %v5778, %v5776
    %v5787 = vld [vmem:[#allocation14] sm:$0xf]
    %v5788 = vld [vmem:[#allocation14 + $0x4] sm:$0xf]
    %v5789 = vld [vmem:[#allocation14 + $0x8] sm:$0xf]
    %v5790 = vld [vmem:[#allocation14 + $0xc] sm:$0xf]
    %v5791 = vld [vmem:[#allocation14 + $0x10] sm:$0xf]
    %v5792 = vld [vmem:[#allocation14 + $0x14] sm:$0xf]
    %v5793 = vld [vmem:[#allocation14 + $0x18] sm:$0xf]
    %v5794 = vld [vmem:[#allocation14 + $0x1c] sm:$0xf]
    %v5795 = vld [vmem:[#allocation14 + $0x20] sm:$0xf]
    %v5796 = vld [vmem:[#allocation14 + $0x24] sm:$0xf]
    %v5797 = vld [vmem:[#allocation14 + $0x28] sm:$0xf]
    %v5798 = vld [vmem:[#allocation14 + $0x2c] sm:$0xf]
    %v5799 = vld [vmem:[#allocation14 + $0x30] sm:$0xf]
    %v5800 = vld [vmem:[#allocation14 + $0x34] sm:$0xf]
    %v5801 = vld [vmem:[#allocation14 + $0x38] sm:$0xf]
    %v5802 = vld [vmem:[#allocation14 + $0x3c] sm:$0xf]
    %v5803 = vld [vmem:[#allocation14 + $0x40] sm:$0xf]
    %v5804 = vld [vmem:[#allocation14 + $0x44] sm:$0xf]
    %v5805 = vld [vmem:[#allocation14 + $0x48] sm:$0xf]
    %v5806 = vld [vmem:[#allocation14 + $0x4c] sm:$0xf]
    %v5807 = vld [vmem:[#allocation14 + $0x50] sm:$0xf]
    %v5808 = vld [vmem:[#allocation14 + $0x54] sm:$0xf]
    %v5809 = vld [vmem:[#allocation14 + $0x58] sm:$0xf]
    %v5810 = vld [vmem:[#allocation14 + $0x5c] sm:$0xf]
    %v5811 = vld [vmem:[#allocation14 + $0x60] sm:$0xf]
    %v5812 = vld [vmem:[#allocation14 + $0x64] sm:$0xf]
    %v5813 = vld [vmem:[#allocation14 + $0x68] sm:$0xf]
    %v5814 = vld [vmem:[#allocation14 + $0x6c] sm:$0xf]
    %v5815 = vld [vmem:[#allocation14 + $0x70] sm:$0xf]
    %v5816 = vld [vmem:[#allocation14 + $0x74] sm:$0xf]
    %v5817 = vld [vmem:[#allocation14 + $0x78] sm:$0xf]
    %v5818 = vld [vmem:[#allocation14 + $0x7c] sm:$0xf]
    %v5819 = vld [vmem:[%s8] sm:$0x1]
    %v5821 = vlaneseq
    %v5822 = vshrl.u32 %v5821, 7
    %v5823 = vsub.s32 0, %v5822
    %v5824 = vrot.slane %v5819, %v5823
    %v5858 = vunpack.c.l.b16 %v5787
    %v5859 = vunpack.c.l.b16 %v5788
    %v5860 = vunpack.c.l.b16 %v5789
    %v5861 = vunpack.c.l.b16 %v5790
    %v5862 = vunpack.c.l.b16 %v5791
    %v5863 = vunpack.c.l.b16 %v5792
    %v5864 = vunpack.c.l.b16 %v5793
    %v5865 = vunpack.c.l.b16 %v5794
    %v5866 = vunpack.c.l.b16 %v5795
    %v5867 = vunpack.c.l.b16 %v5796
    %v5868 = vunpack.c.l.b16 %v5797
    %v5869 = vunpack.c.l.b16 %v5798
    %v5870 = vunpack.c.l.b16 %v5799
    %v5871 = vunpack.c.l.b16 %v5800
    %v5872 = vunpack.c.l.b16 %v5801
    %v5873 = vunpack.c.l.b16 %v5802
    %v5874 = vunpack.c.l.b16 %v5803
    %v5875 = vunpack.c.l.b16 %v5804
    %v5876 = vunpack.c.l.b16 %v5805
    %v5877 = vunpack.c.l.b16 %v5806
    %v5878 = vunpack.c.l.b16 %v5807
    %v5879 = vunpack.c.l.b16 %v5808
    %v5880 = vunpack.c.l.b16 %v5809
    %v5881 = vunpack.c.l.b16 %v5810
    %v5882 = vunpack.c.l.b16 %v5811
    %v5883 = vunpack.c.l.b16 %v5812
    %v5884 = vunpack.c.l.b16 %v5813
    %v5885 = vunpack.c.l.b16 %v5814
    %v5886 = vunpack.c.l.b16 %v5815
    %v5887 = vunpack.c.l.b16 %v5816
    %v5888 = vunpack.c.l.b16 %v5817
    %v5889 = vunpack.c.l.b16 %v5818
    %v5890 = vpack.c.b16 %v5859, %v5858
    %v5891 = vpack.c.b16 %v5861, %v5860
    %v5892 = vpack.c.b16 %v5863, %v5862
    %v5893 = vpack.c.b16 %v5865, %v5864
    %v5894 = vpack.c.b16 %v5867, %v5866
    %v5895 = vpack.c.b16 %v5869, %v5868
    %v5896 = vpack.c.b16 %v5871, %v5870
    %v5897 = vpack.c.b16 %v5873, %v5872
    %v5898 = vpack.c.b16 %v5875, %v5874
    %v5899 = vpack.c.b16 %v5877, %v5876
    %v5900 = vpack.c.b16 %v5879, %v5878
    %v5901 = vpack.c.b16 %v5881, %v5880
    %v5902 = vpack.c.b16 %v5883, %v5882
    %v5903 = vpack.c.b16 %v5885, %v5884
    %v5904 = vpack.c.b16 %v5887, %v5886
    %v5905 = vpack.c.b16 %v5889, %v5888
    %5922 = vmatprep.subr.bf16.mxu0 0
    %5923 = vmatpush1.bf16.msra.mxu0 %v5890
    %5924 = vmatprep.subr.bf16.mxu0 0
    %5925 = vmatpush1.bf16.msra.mxu0 %v5891
    %5926 = vmatprep.subr.bf16.mxu0 0
    %5927 = vmatpush1.bf16.msra.mxu0 %v5892
    %5928 = vmatprep.subr.bf16.mxu0 0
    %5929 = vmatpush1.bf16.msra.mxu0 %v5893
    %5930 = vmatprep.subr.bf16.mxu0 0
    %5931 = vmatpush1.bf16.msra.mxu0 %v5894
    %5932 = vmatprep.subr.bf16.mxu0 0
    %5933 = vmatpush1.bf16.msra.mxu0 %v5895
    %5934 = vmatprep.subr.bf16.mxu0 0
    %5935 = vmatpush1.bf16.msra.mxu0 %v5896
    %5936 = vmatprep.subr.bf16.mxu0 0
    %5937 = vmatpush1.bf16.msra.mxu0 %v5897
    %5938 = vmatprep.subr.bf16.mxu0 0
    %5939 = vmatpush1.bf16.msra.mxu0 %v5898
    %5940 = vmatprep.subr.bf16.mxu0 0
    %5941 = vmatpush1.bf16.msra.mxu0 %v5899
    %5942 = vmatprep.subr.bf16.mxu0 0
    %5943 = vmatpush1.bf16.msra.mxu0 %v5900
    %5944 = vmatprep.subr.bf16.mxu0 0
    %5945 = vmatpush1.bf16.msra.mxu0 %v5901
    %5946 = vmatprep.subr.bf16.mxu0 0
    %5947 = vmatpush1.bf16.msra.mxu0 %v5902
    %5948 = vmatprep.subr.bf16.mxu0 0
    %5949 = vmatpush1.bf16.msra.mxu0 %v5903
    %5950 = vmatprep.subr.bf16.mxu0 0
    %5951 = vmatpush1.bf16.msra.mxu0 %v5904
    %5952 = vmatprep.subr.bf16.mxu0 0
    %5953 = vmatpush1.bf16.msra.mxu0 %v5905
    %5954 = vmatprep.mubr.bf16.mxu0 %v5780
    %5955 = vmatmul.mubr.bf16.gmra.mrb[0].mxu0 %v5779
    %v5956 = vpop.f32.mrb[0].mxu0
    %v5957 = vadd.f32 %v5824, %v5956
    %v5958 = vpop.f32.mrb[0].mxu0
    %v5959 = vpop.f32.mrb[0].mxu0
    %v5960 = vadd.f32 %v5824, %v5959
    %v5961 = vpop.f32.mrb[0].mxu0
    %5962 = vmatprep.mubr.bf16.mxu0 %v5782
    %5963 = vmatmul.mubr.bf16.gmra.mrb[0].mxu0 %v5781
    %v5964 = vpop.f32.mrb[0].mxu0
    %v5965 = vadd.f32 %v5824, %v5964
    %v5966 = vpop.f32.mrb[0].mxu0
    %v5967 = vpop.f32.mrb[0].mxu0
    %v5968 = vadd.f32 %v5824, %v5967
    %v5969 = vpop.f32.mrb[0].mxu0
    %5970 = vmatprep.mubr.bf16.mxu0 %v5784
    %5971 = vmatmul.mubr.bf16.gmra.mrb[0].mxu0 %v5783
    %v5972 = vpop.f32.mrb[0].mxu0
    %v5973 = vadd.f32 %v5824, %v5972
    %v5974 = vpop.f32.mrb[0].mxu0
    %v5975 = vpop.f32.mrb[0].mxu0
    %v5976 = vadd.f32 %v5824, %v5975
    %v5977 = vpop.f32.mrb[0].mxu0
    %5978 = vmatprep.mubr.bf16.mxu0 %v5786
    %5979 = vmatmul.mubr.bf16.gmra.mrb[0].mxu0 %v5785
    %v5980 = vpop.f32.mrb[0].mxu0
    %v5981 = vadd.f32 %v5824, %v5980
    %v5982 = vpop.f32.mrb[0].mxu0
    %v5983 = vpop.f32.mrb[0].mxu0
    %v5984 = vadd.f32 %v5824, %v5983
    %v5985 = vpop.f32.mrb[0].mxu0
    %5986 = vdwg.mxu0
    %5987 = vst [vmem:[#allocation16] sm:$0xff] %v5957
    %5988 = vst [vmem:[#allocation16 + $0x8] sm:$0xff] %v5960
    %5989 = vst [vmem:[#allocation16 + $0x10] sm:$0xff] %v5965
    %5990 = vst [vmem:[#allocation16 + $0x18] sm:$0xff] %v5968
    %5991 = vst [vmem:[#allocation16 + $0x20] sm:$0xff] %v5973
    %5992 = vst [vmem:[#allocation16 + $0x28] sm:$0xff] %v5976
    %5993 = vst [vmem:[#allocation16 + $0x30] sm:$0xff] %v5981
    %5994 = vst [vmem:[#allocation16 + $0x38] sm:$0xff] %v5984
    // Predicated region
    $region62: #{tpu_custom_call.1} parent=1 // pred_check
      _
    $region63: #{tpu_custom_call.1} parent=1 // pred_check_branch
      %5996 = sbr.rel (0) target = $region65
    $region64: #{tpu_custom_call.1} parent=1 // pred_region
      %s5998 = ssub.s32 1024, 1024
      %5999 = vsyncadd [#allocation7], %s5998
      %s6000 = sshll.u32 [#allocation16], 4
      %s6001 = int_to_ptr.vmem [resolvable:$true] %s6000
      %6006 = dma.vmem_to_hbm [thread:$0]  %s6001, 1024, %s9, [#allocation7], 128, 128, 8
    $region65: #{tpu_custom_call.1} parent=1 // pred_fallthru
      _
    // Predicated region
    $region66: #{tpu_custom_call.1} parent=1 // pred_check
      _
    $region67: #{tpu_custom_call.1} parent=1 // pred_check_branch
      %6008 = sbr.rel (0) target = $region69
    $region68: #{tpu_custom_call.1} parent=1 // pred_region
      %6009 = dma.done [#allocation7], 1024
    $region69: #{tpu_custom_call.1} parent=1 // pred_fallthru
      _
    %6010 = vsyncpa [#allocation6], 1
    %6011 = vsyncpa [#allocation9], 1
    %6012 = vsyncpa [#allocation12], 1
    %6013 = vsyncpa [#allocation15], 1
    %6014 = vsyncpa [#allocation7], 1

</llo_original>
